<compile_context>
chip_gen: v7x
topology: tpu7x:2x2x1
jax: 0.10.0
libtpu: 0.0.40
codegen_flags: <defaults>
</compile_context>

<pallas_src>
import functools
import math

import jax
import jax.numpy as jnp
from jax.experimental import pallas as pl
from jax.experimental.pallas import tpu as pltpu


# ----------------------------------------------------------------------------
# Fused kernel: [3x3 conv + folded-BN] -> bf16 VMEM intermediate -> [3x3 conv
# + bias + ReLU].  One batch element per grid step; im2col + single big-K
# matmul per conv, f32 MXU accumulation.
# ----------------------------------------------------------------------------
def _conv3_fused_kernel(x_ref, w1_ref, b1_ref, w2_ref, b2_ref, o_ref,
                        xpad_ref, ypad_ref, col_ref, *, H, W, Cin, Cout):
    """
    x_ref   : (1, H, W, Cin)    f32   input block (this image)
    w1_ref  : (9*Cin, Cout)     bf16  tap-major im2col weights (BN scale folded)
    b1_ref  : (1, Cout)         f32   conv1 bias + folded BN shift
    w2_ref  : (9*Cout, Cout)    bf16
    b2_ref  : (1, Cout)         f32
    o_ref   : (1, H, W, Cout)   f32
    xpad_ref: (H+2, W+2, Cin)   bf16  scratch: zero-padded conv1 input
    ypad_ref: (H+2, W+2, Cout)  bf16  scratch: zero-padded conv1 output
    col_ref : (H*W, 9*Cin)      bf16  scratch: im2col (reused by both convs)
    """
    # ---- conv1: in-kernel zero padding + cast to bf16 ----
    xpad_ref[...] = jnp.zeros_like(xpad_ref)
    xpad_ref[1:H + 1, 1:W + 1, :] = x_ref[0].astype(jnp.bfloat16)

    # im2col (9 contiguous copies into scratch), then ONE K=9*Cin matmul.
    for dy in range(3):
        for dx in range(3):
            k = 3 * dy + dx
            col_ref[:, k * Cin:(k + 1) * Cin] = (
                xpad_ref[dy:dy + H, dx:dx + W, :].reshape(H * W, Cin))
    y1 = jnp.dot(col_ref[...], w1_ref[...],
                 preferred_element_type=jnp.float32)              # (H*W, Cout)
    y1 = (y1 + b1_ref[...]).reshape(H, W, Cout)

    # ---- conv2: pad the bf16 intermediate in VMEM (no HBM round trip) ----
    ypad_ref[...] = jnp.zeros_like(ypad_ref)
    ypad_ref[1:H + 1, 1:W + 1, :] = y1.astype(jnp.bfloat16)
    for dy in range(3):
        for dx in range(3):
            k = 3 * dy + dx
            col_ref[:, k * Cout:(k + 1) * Cout] = (
                ypad_ref[dy:dy + H, dx:dx + W, :].reshape(H * W, Cout))
    y2 = jnp.dot(col_ref[...], w2_ref[...],
                 preferred_element_type=jnp.float32)              # (H*W, Cout)
    y2 = jnp.maximum(y2 + b2_ref[...], 0.0)
    o_ref[...] = y2.reshape(1, H, W, Cout).astype(o_ref.dtype)


# ----------------------------------------------------------------------------
# conv3 forward: one fused pallas_call per forward pass.
# ----------------------------------------------------------------------------
def conv3_forward(P, x_nchw):
    N, Cin, H, W = x_nchw.shape
    w1, b1, w2, b2 = P["w1"], P["b1"], P["w2"], P["b2"]
    Cout = w1.shape[-1]
    assert Cin == Cout, "conv3's Sequential is only runnable when in_ch == out_ch"
    assert (H * W) % 8 == 0 and Cout % 128 == 0

    x = jnp.transpose(x_nchw, (0, 2, 3, 1))                 # NCHW -> NHWC
    # (3,3,Cin,Cout) -> (9*Cin, Cout): row index = (3*dy+dx)*Cin + cin, which
    # matches the im2col column order built in the kernel.
    w1k = w1.reshape(9 * Cin, Cout).astype(jnp.bfloat16)
    w2k = w2.reshape(9 * Cout, Cout).astype(jnp.bfloat16)
    b1k = b1.reshape(1, Cout).astype(jnp.float32)
    b2k = b2.reshape(1, Cout).astype(jnp.float32)

    flops = 2 * 2 * 9 * N * H * W * Cin * Cout               # 2 convs, FMA=2
    bytes_accessed = (N * H * W * Cin * 4 + w1k.size * 2 + w2k.size * 2
                      + N * H * W * Cout * 4)
    cost = pl.CostEstimate(flops=flops, transcendentals=0,
                           bytes_accessed=bytes_accessed)

    y = pl.pallas_call(
        functools.partial(_conv3_fused_kernel, H=H, W=W, Cin=Cin, Cout=Cout),
        out_shape=jax.ShapeDtypeStruct((N, H, W, Cout), jnp.float32),
        grid=(N,),
        in_specs=[
            pl.BlockSpec((1, H, W, Cin), lambda n: (n, 0, 0, 0)),
            pl.BlockSpec((9 * Cin, Cout), lambda n: (0, 0)),
            pl.BlockSpec((1, Cout), lambda n: (0, 0)),
            pl.BlockSpec((9 * Cout, Cout), lambda n: (0, 0)),
            pl.BlockSpec((1, Cout), lambda n: (0, 0)),
        ],
        out_specs=pl.BlockSpec((1, H, W, Cout), lambda n: (n, 0, 0, 0)),
        scratch_shapes=[
            pltpu.VMEM((H + 2, W + 2, Cin), jnp.bfloat16),    # padded input
            pltpu.VMEM((H + 2, W + 2, Cout), jnp.bfloat16),   # padded conv1 out
            pltpu.VMEM((H * W, 9 * Cin), jnp.bfloat16),       # im2col scratch
        ],
        compiler_params=pltpu.CompilerParams(
            dimension_semantics=("parallel",)),
        cost_estimate=cost,
    )(x, w1k, b1k, w2k, b2k)
    return jnp.transpose(y, (0, 3, 1, 2))                    # NHWC -> NCHW


# ----------------------------------------------------------------------------
# deterministic parameters (BN in eval mode, folded into conv1 scale/bias)
# ----------------------------------------------------------------------------
def make_params(key, in_ch, out_ch):
    assert in_ch == out_ch, "conv3's Sequential is only runnable when in_ch == out_ch"
    k1, k2, k3, k4, k5 = jax.random.split(key, 5)

    def he(k, cin, cout):
        return jax.random.normal(k, (3, 3, cin, cout), jnp.float32) * math.sqrt(2.0 / (9 * cin))

    w1 = he(k1, in_ch, out_ch)
    b1 = jax.random.normal(k2, (out_ch,), jnp.float32) * 0.01
    # BatchNorm2d(out_ch) eval-mode running stats
    gamma = jnp.ones((out_ch,), jnp.float32)
    beta = jnp.zeros((out_ch,), jnp.float32)
    mean = jax.random.normal(k3, (out_ch,), jnp.float32) * 0.01
    var = jnp.ones((out_ch,), jnp.float32)
    s = gamma / jnp.sqrt(var + 1e-5)
    w1f = (w1 * s).astype(jnp.bfloat16)       # fold BN scale into conv1 weights
    b1f = (b1 - mean) * s + beta              # fold BN shift into conv1 bias

    w2 = he(k4, out_ch, out_ch).astype(jnp.bfloat16)
    b2 = jax.random.normal(k5, (out_ch,), jnp.float32) * 0.01
    return dict(w1=w1f, b1=b1f, w2=w2, b2=b2)


# ----------------------------------------------------------------------------
# pure-XLA reference (same bf16 weights / f32 accumulation) for validation
# ----------------------------------------------------------------------------
def _ref_forward(P, x_nchw):
    x = jnp.transpose(x_nchw, (0, 2, 3, 1)).astype(jnp.bfloat16)

    def conv(xin, w, b):
        y = jax.lax.conv_general_dilated(
            xin, w, window_strides=(1, 1), padding="SAME",
            dimension_numbers=("NHWC", "HWIO", "NHWC"),
            preferred_element_type=jnp.float32)
        return y + b

    y1 = conv(x, P["w1"], P["b1"])
    y2 = conv(y1.astype(jnp.bfloat16), P["w2"], P["b2"])
    y2 = jnp.maximum(y2, 0.0)
    return jnp.transpose(y2, (0, 3, 1, 2))


# ----------------------------------------------------------------------------
if __name__ == "__main__":
    N, C, H, W = 2, 128, 16, 16          # conv3(in_ch=128, out_ch=128)
    x = jax.random.normal(jax.random.PRNGKey(0), (N, C, H, W), jnp.float32)
    P = make_params(jax.random.PRNGKey(42), C, C)

    out = jax.block_until_ready(jax.jit(conv3_forward)(P, x))
    assert out.shape == (N, C, H, W), out.shape
    assert bool(jnp.all(jnp.isfinite(out)))

    ref = jax.block_until_ready(_ref_forward(P, x))
    max_err = float(jnp.max(jnp.abs(out - ref)))
    assert max_err < 5e-2, f"mismatch vs XLA reference: {max_err}"
    print("KERNEL_OK")
</pallas_src>

<mosaic_0001>
module attributes {stable_mosaic.version = 11 : i64} {
  func.func @_conv3_fused_kernel(%arg0: i32, %arg1: memref<1x16x16x128xf32, #tpu.memory_space<vmem>>, %arg2: memref<1152x128xbf16, #tpu.memory_space<vmem>>, %arg3: memref<1x128xf32, #tpu.memory_space<vmem>>, %arg4: memref<1152x128xbf16, #tpu.memory_space<vmem>>, %arg5: memref<1x128xf32, #tpu.memory_space<vmem>>, %arg6: memref<1x16x16x128xf32, #tpu.memory_space<vmem>>, %arg7: memref<18x18x128xbf16, #tpu.memory_space<vmem>>, %arg8: memref<18x18x128xbf16, #tpu.memory_space<vmem>>, %arg9: memref<256x1152xbf16, #tpu.memory_space<vmem>>) attributes {dimension_semantics = [#tpu.dimension_semantics<parallel>], iteration_bounds = array<i64: 2>, scalar_prefetch = 0 : i64, scratch_operands = 3 : i64, tpu.core_type = #tpu.core_type<tc>, window_params = [{transform_indices = @transform_0, window_bounds = array<i64: 1, 16, 16, 128>}, {pipeline_mode = #tpu.pipeline_mode<synchronous>, transform_indices = @transform_1, window_bounds = array<i64: 1152, 128>}, {pipeline_mode = #tpu.pipeline_mode<synchronous>, transform_indices = @transform_2, window_bounds = array<i64: 1, 128>}, {pipeline_mode = #tpu.pipeline_mode<synchronous>, transform_indices = @transform_3, window_bounds = array<i64: 1152, 128>}, {pipeline_mode = #tpu.pipeline_mode<synchronous>, transform_indices = @transform_4, window_bounds = array<i64: 1, 128>}, {transform_indices = @transform_5, window_bounds = array<i64: 1, 16, 16, 128>}]} {
    %cst = arith.constant 0.000000e+00 : bf16
    %0 = vector.broadcast %cst : bf16 to vector<18x18x128xbf16>
    %c0 = arith.constant 0 : index
    %c0_0 = arith.constant 0 : index
    %c0_1 = arith.constant 0 : index
    %1 = vector.load %arg7[%c0, %c0_0, %c0_1] : memref<18x18x128xbf16, #tpu.memory_space<vmem>>, vector<18x18x128xbf16>
    tpu.vector_store %arg7[%c0, %c0_0, %c0_1], %0 {strides = array<i32>} : memref<18x18x128xbf16, #tpu.memory_space<vmem>>, vector<18x18x128xbf16>,
    %c0_2 = arith.constant 0 : index
    %c0_3 = arith.constant 0 : index
    %c0_4 = arith.constant 0 : index
    %c0_5 = arith.constant 0 : index
    %2 = vector.load %arg1[%c0_2, %c0_3, %c0_4, %c0_5] : memref<1x16x16x128xf32, #tpu.memory_space<vmem>>, vector<1x16x16x128xf32>
    %3 = vector.shape_cast %2 : vector<1x16x16x128xf32> to vector<16x16x128xf32>
    %4 = arith.truncf %3 : vector<16x16x128xf32> to vector<16x16x128xbf16>
    %c1 = arith.constant 1 : index
    %c1_6 = arith.constant 1 : index
    %c0_7 = arith.constant 0 : index
    %5 = vector.load %arg7[%c1, %c1_6, %c0_7] : memref<18x18x128xbf16, #tpu.memory_space<vmem>>, vector<16x16x128xbf16>
    tpu.vector_store %arg7[%c1, %c1_6, %c0_7], %4 {strides = array<i32>} : memref<18x18x128xbf16, #tpu.memory_space<vmem>>, vector<16x16x128xbf16>,
    %c0_8 = arith.constant 0 : index
    %c0_9 = arith.constant 0 : index
    %c0_10 = arith.constant 0 : index
    %6 = vector.load %arg7[%c0_8, %c0_9, %c0_10] : memref<18x18x128xbf16, #tpu.memory_space<vmem>>, vector<16x16x128xbf16>
    %7 = vector.shape_cast %6 : vector<16x16x128xbf16> to vector<256x128xbf16>
    %c0_11 = arith.constant 0 : index
    %c0_12 = arith.constant 0 : index
    %8 = vector.load %arg9[%c0_11, %c0_12] : memref<256x1152xbf16, #tpu.memory_space<vmem>>, vector<256x128xbf16>
    tpu.vector_store %arg9[%c0_11, %c0_12], %7 {strides = array<i32>} : memref<256x1152xbf16, #tpu.memory_space<vmem>>, vector<256x128xbf16>,
    %c0_13 = arith.constant 0 : index
    %c1_14 = arith.constant 1 : index
    %c0_15 = arith.constant 0 : index
    %9 = vector.load %arg7[%c0_13, %c1_14, %c0_15] : memref<18x18x128xbf16, #tpu.memory_space<vmem>>, vector<16x16x128xbf16>
    %10 = vector.shape_cast %9 : vector<16x16x128xbf16> to vector<256x128xbf16>
    %c0_16 = arith.constant 0 : index
    %c128 = arith.constant 128 : index
    %11 = vector.load %arg9[%c0_16, %c128] : memref<256x1152xbf16, #tpu.memory_space<vmem>>, vector<256x128xbf16>
    tpu.vector_store %arg9[%c0_16, %c128], %10 {strides = array<i32>} : memref<256x1152xbf16, #tpu.memory_space<vmem>>, vector<256x128xbf16>,
    %c0_17 = arith.constant 0 : index
    %c2 = arith.constant 2 : index
    %c0_18 = arith.constant 0 : index
    %12 = vector.load %arg7[%c0_17, %c2, %c0_18] : memref<18x18x128xbf16, #tpu.memory_space<vmem>>, vector<16x16x128xbf16>
    %13 = vector.shape_cast %12 : vector<16x16x128xbf16> to vector<256x128xbf16>
    %c0_19 = arith.constant 0 : index
    %c256 = arith.constant 256 : index
    %14 = vector.load %arg9[%c0_19, %c256] : memref<256x1152xbf16, #tpu.memory_space<vmem>>, vector<256x128xbf16>
    tpu.vector_store %arg9[%c0_19, %c256], %13 {strides = array<i32>} : memref<256x1152xbf16, #tpu.memory_space<vmem>>, vector<256x128xbf16>,
    %c1_20 = arith.constant 1 : index
    %c0_21 = arith.constant 0 : index
    %c0_22 = arith.constant 0 : index
    %15 = vector.load %arg7[%c1_20, %c0_21, %c0_22] : memref<18x18x128xbf16, #tpu.memory_space<vmem>>, vector<16x16x128xbf16>
    %16 = vector.shape_cast %15 : vector<16x16x128xbf16> to vector<256x128xbf16>
    %c0_23 = arith.constant 0 : index
    %c384 = arith.constant 384 : index
    %17 = vector.load %arg9[%c0_23, %c384] : memref<256x1152xbf16, #tpu.memory_space<vmem>>, vector<256x128xbf16>
    tpu.vector_store %arg9[%c0_23, %c384], %16 {strides = array<i32>} : memref<256x1152xbf16, #tpu.memory_space<vmem>>, vector<256x128xbf16>,
    %c1_24 = arith.constant 1 : index
    %c1_25 = arith.constant 1 : index
    %c0_26 = arith.constant 0 : index
    %18 = vector.load %arg7[%c1_24, %c1_25, %c0_26] : memref<18x18x128xbf16, #tpu.memory_space<vmem>>, vector<16x16x128xbf16>
    %19 = vector.shape_cast %18 : vector<16x16x128xbf16> to vector<256x128xbf16>
    %c0_27 = arith.constant 0 : index
    %c512 = arith.constant 512 : index
    %20 = vector.load %arg9[%c0_27, %c512] : memref<256x1152xbf16, #tpu.memory_space<vmem>>, vector<256x128xbf16>
    tpu.vector_store %arg9[%c0_27, %c512], %19 {strides = array<i32>} : memref<256x1152xbf16, #tpu.memory_space<vmem>>, vector<256x128xbf16>,
    %c1_28 = arith.constant 1 : index
    %c2_29 = arith.constant 2 : index
    %c0_30 = arith.constant 0 : index
    %21 = vector.load %arg7[%c1_28, %c2_29, %c0_30] : memref<18x18x128xbf16, #tpu.memory_space<vmem>>, vector<16x16x128xbf16>
    %22 = vector.shape_cast %21 : vector<16x16x128xbf16> to vector<256x128xbf16>
    %c0_31 = arith.constant 0 : index
    %c640 = arith.constant 640 : index
    %23 = vector.load %arg9[%c0_31, %c640] : memref<256x1152xbf16, #tpu.memory_space<vmem>>, vector<256x128xbf16>
    tpu.vector_store %arg9[%c0_31, %c640], %22 {strides = array<i32>} : memref<256x1152xbf16, #tpu.memory_space<vmem>>, vector<256x128xbf16>,
    %c2_32 = arith.constant 2 : index
    %c0_33 = arith.constant 0 : index
    %c0_34 = arith.constant 0 : index
    %24 = vector.load %arg7[%c2_32, %c0_33, %c0_34] : memref<18x18x128xbf16, #tpu.memory_space<vmem>>, vector<16x16x128xbf16>
    %25 = vector.shape_cast %24 : vector<16x16x128xbf16> to vector<256x128xbf16>
    %c0_35 = arith.constant 0 : index
    %c768 = arith.constant 768 : index
    %26 = vector.load %arg9[%c0_35, %c768] : memref<256x1152xbf16, #tpu.memory_space<vmem>>, vector<256x128xbf16>
    tpu.vector_store %arg9[%c0_35, %c768], %25 {strides = array<i32>} : memref<256x1152xbf16, #tpu.memory_space<vmem>>, vector<256x128xbf16>,
    %c2_36 = arith.constant 2 : index
    %c1_37 = arith.constant 1 : index
    %c0_38 = arith.constant 0 : index
    %27 = vector.load %arg7[%c2_36, %c1_37, %c0_38] : memref<18x18x128xbf16, #tpu.memory_space<vmem>>, vector<16x16x128xbf16>
    %28 = vector.shape_cast %27 : vector<16x16x128xbf16> to vector<256x128xbf16>
    %c0_39 = arith.constant 0 : index
    %c896 = arith.constant 896 : index
    %29 = vector.load %arg9[%c0_39, %c896] : memref<256x1152xbf16, #tpu.memory_space<vmem>>, vector<256x128xbf16>
    tpu.vector_store %arg9[%c0_39, %c896], %28 {strides = array<i32>} : memref<256x1152xbf16, #tpu.memory_space<vmem>>, vector<256x128xbf16>,
    %c2_40 = arith.constant 2 : index
    %c2_41 = arith.constant 2 : index
    %c0_42 = arith.constant 0 : index
    %30 = vector.load %arg7[%c2_40, %c2_41, %c0_42] : memref<18x18x128xbf16, #tpu.memory_space<vmem>>, vector<16x16x128xbf16>
    %31 = vector.shape_cast %30 : vector<16x16x128xbf16> to vector<256x128xbf16>
    %c0_43 = arith.constant 0 : index
    %c1024 = arith.constant 1024 : index
    %32 = vector.load %arg9[%c0_43, %c1024] : memref<256x1152xbf16, #tpu.memory_space<vmem>>, vector<256x128xbf16>
    tpu.vector_store %arg9[%c0_43, %c1024], %31 {strides = array<i32>} : memref<256x1152xbf16, #tpu.memory_space<vmem>>, vector<256x128xbf16>,
    %c0_44 = arith.constant 0 : index
    %c0_45 = arith.constant 0 : index
    %33 = vector.load %arg9[%c0_44, %c0_45] : memref<256x1152xbf16, #tpu.memory_space<vmem>>, vector<256x1152xbf16>
    %c0_46 = arith.constant 0 : index
    %c0_47 = arith.constant 0 : index
    %34 = vector.load %arg2[%c0_46, %c0_47] : memref<1152x128xbf16, #tpu.memory_space<vmem>>, vector<1152x128xbf16>
    %cst_48 = arith.constant dense<0.000000e+00> : vector<256x128xf32>
    %35 = tpu.matmul %33, %34, %cst_48 {dimension_numbers = #tpu.dot_dimension_numbers<[1], [0], [0], [1], [0, 0, 1, 1], [], []>} : vector<256x1152xbf16>, vector<1152x128xbf16>, vector<256x128xf32> -> vector<256x128xf32>
    %c0_49 = arith.constant 0 : index
    %c0_50 = arith.constant 0 : index
    %36 = vector.load %arg3[%c0_49, %c0_50] : memref<1x128xf32, #tpu.memory_space<vmem>>, vector<1x128xf32>
    %37 = vector.broadcast %36 : vector<1x128xf32> to vector<256x128xf32>
    %38 = arith.addf %35, %37 : vector<256x128xf32>
    %39 = vector.shape_cast %38 : vector<256x128xf32> to vector<16x16x128xf32>
    %cst_51 = arith.constant 0.000000e+00 : bf16
    %40 = vector.broadcast %cst_51 : bf16 to vector<18x18x128xbf16>
    %c0_52 = arith.constant 0 : index
    %c0_53 = arith.constant 0 : index
    %c0_54 = arith.constant 0 : index
    %41 = vector.load %arg8[%c0_52, %c0_53, %c0_54] : memref<18x18x128xbf16, #tpu.memory_space<vmem>>, vector<18x18x128xbf16>
    tpu.vector_store %arg8[%c0_52, %c0_53, %c0_54], %40 {strides = array<i32>} : memref<18x18x128xbf16, #tpu.memory_space<vmem>>, vector<18x18x128xbf16>,
    %42 = arith.truncf %39 : vector<16x16x128xf32> to vector<16x16x128xbf16>
    %c1_55 = arith.constant 1 : index
    %c1_56 = arith.constant 1 : index
    %c0_57 = arith.constant 0 : index
    %43 = vector.load %arg8[%c1_55, %c1_56, %c0_57] : memref<18x18x128xbf16, #tpu.memory_space<vmem>>, vector<16x16x128xbf16>
    tpu.vector_store %arg8[%c1_55, %c1_56, %c0_57], %42 {strides = array<i32>} : memref<18x18x128xbf16, #tpu.memory_space<vmem>>, vector<16x16x128xbf16>,
    %c0_58 = arith.constant 0 : index
    %c0_59 = arith.constant 0 : index
    %c0_60 = arith.constant 0 : index
    %44 = vector.load %arg8[%c0_58, %c0_59, %c0_60] : memref<18x18x128xbf16, #tpu.memory_space<vmem>>, vector<16x16x128xbf16>
    %45 = vector.shape_cast %44 : vector<16x16x128xbf16> to vector<256x128xbf16>
    %c0_61 = arith.constant 0 : index
    %c0_62 = arith.constant 0 : index
    %46 = vector.load %arg9[%c0_61, %c0_62] : memref<256x1152xbf16, #tpu.memory_space<vmem>>, vector<256x128xbf16>
    tpu.vector_store %arg9[%c0_61, %c0_62], %45 {strides = array<i32>} : memref<256x1152xbf16, #tpu.memory_space<vmem>>, vector<256x128xbf16>,
    %c0_63 = arith.constant 0 : index
    %c1_64 = arith.constant 1 : index
    %c0_65 = arith.constant 0 : index
    %47 = vector.load %arg8[%c0_63, %c1_64, %c0_65] : memref<18x18x128xbf16, #tpu.memory_space<vmem>>, vector<16x16x128xbf16>
    %48 = vector.shape_cast %47 : vector<16x16x128xbf16> to vector<256x128xbf16>
    %c0_66 = arith.constant 0 : index
    %c128_67 = arith.constant 128 : index
    %49 = vector.load %arg9[%c0_66, %c128_67] : memref<256x1152xbf16, #tpu.memory_space<vmem>>, vector<256x128xbf16>
    tpu.vector_store %arg9[%c0_66, %c128_67], %48 {strides = array<i32>} : memref<256x1152xbf16, #tpu.memory_space<vmem>>, vector<256x128xbf16>,
    %c0_68 = arith.constant 0 : index
    %c2_69 = arith.constant 2 : index
    %c0_70 = arith.constant 0 : index
    %50 = vector.load %arg8[%c0_68, %c2_69, %c0_70] : memref<18x18x128xbf16, #tpu.memory_space<vmem>>, vector<16x16x128xbf16>
    %51 = vector.shape_cast %50 : vector<16x16x128xbf16> to vector<256x128xbf16>
    %c0_71 = arith.constant 0 : index
    %c256_72 = arith.constant 256 : index
    %52 = vector.load %arg9[%c0_71, %c256_72] : memref<256x1152xbf16, #tpu.memory_space<vmem>>, vector<256x128xbf16>
    tpu.vector_store %arg9[%c0_71, %c256_72], %51 {strides = array<i32>} : memref<256x1152xbf16, #tpu.memory_space<vmem>>, vector<256x128xbf16>,
    %c1_73 = arith.constant 1 : index
    %c0_74 = arith.constant 0 : index
    %c0_75 = arith.constant 0 : index
    %53 = vector.load %arg8[%c1_73, %c0_74, %c0_75] : memref<18x18x128xbf16, #tpu.memory_space<vmem>>, vector<16x16x128xbf16>
    %54 = vector.shape_cast %53 : vector<16x16x128xbf16> to vector<256x128xbf16>
    %c0_76 = arith.constant 0 : index
    %c384_77 = arith.constant 384 : index
    %55 = vector.load %arg9[%c0_76, %c384_77] : memref<256x1152xbf16, #tpu.memory_space<vmem>>, vector<256x128xbf16>
    tpu.vector_store %arg9[%c0_76, %c384_77], %54 {strides = array<i32>} : memref<256x1152xbf16, #tpu.memory_space<vmem>>, vector<256x128xbf16>,
    %c1_78 = arith.constant 1 : index
    %c1_79 = arith.constant 1 : index
    %c0_80 = arith.constant 0 : index
    %56 = vector.load %arg8[%c1_78, %c1_79, %c0_80] : memref<18x18x128xbf16, #tpu.memory_space<vmem>>, vector<16x16x128xbf16>
    %57 = vector.shape_cast %56 : vector<16x16x128xbf16> to vector<256x128xbf16>
    %c0_81 = arith.constant 0 : index
    %c512_82 = arith.constant 512 : index
    %58 = vector.load %arg9[%c0_81, %c512_82] : memref<256x1152xbf16, #tpu.memory_space<vmem>>, vector<256x128xbf16>
    tpu.vector_store %arg9[%c0_81, %c512_82], %57 {strides = array<i32>} : memref<256x1152xbf16, #tpu.memory_space<vmem>>, vector<256x128xbf16>,
    %c1_83 = arith.constant 1 : index
    %c2_84 = arith.constant 2 : index
    %c0_85 = arith.constant 0 : index
    %59 = vector.load %arg8[%c1_83, %c2_84, %c0_85] : memref<18x18x128xbf16, #tpu.memory_space<vmem>>, vector<16x16x128xbf16>
    %60 = vector.shape_cast %59 : vector<16x16x128xbf16> to vector<256x128xbf16>
    %c0_86 = arith.constant 0 : index
    %c640_87 = arith.constant 640 : index
    %61 = vector.load %arg9[%c0_86, %c640_87] : memref<256x1152xbf16, #tpu.memory_space<vmem>>, vector<256x128xbf16>
    tpu.vector_store %arg9[%c0_86, %c640_87], %60 {strides = array<i32>} : memref<256x1152xbf16, #tpu.memory_space<vmem>>, vector<256x128xbf16>,
    %c2_88 = arith.constant 2 : index
    %c0_89 = arith.constant 0 : index
    %c0_90 = arith.constant 0 : index
    %62 = vector.load %arg8[%c2_88, %c0_89, %c0_90] : memref<18x18x128xbf16, #tpu.memory_space<vmem>>, vector<16x16x128xbf16>
    %63 = vector.shape_cast %62 : vector<16x16x128xbf16> to vector<256x128xbf16>
    %c0_91 = arith.constant 0 : index
    %c768_92 = arith.constant 768 : index
    %64 = vector.load %arg9[%c0_91, %c768_92] : memref<256x1152xbf16, #tpu.memory_space<vmem>>, vector<256x128xbf16>
    tpu.vector_store %arg9[%c0_91, %c768_92], %63 {strides = array<i32>} : memref<256x1152xbf16, #tpu.memory_space<vmem>>, vector<256x128xbf16>,
    %c2_93 = arith.constant 2 : index
    %c1_94 = arith.constant 1 : index
    %c0_95 = arith.constant 0 : index
    %65 = vector.load %arg8[%c2_93, %c1_94, %c0_95] : memref<18x18x128xbf16, #tpu.memory_space<vmem>>, vector<16x16x128xbf16>
    %66 = vector.shape_cast %65 : vector<16x16x128xbf16> to vector<256x128xbf16>
    %c0_96 = arith.constant 0 : index
    %c896_97 = arith.constant 896 : index
    %67 = vector.load %arg9[%c0_96, %c896_97] : memref<256x1152xbf16, #tpu.memory_space<vmem>>, vector<256x128xbf16>
    tpu.vector_store %arg9[%c0_96, %c896_97], %66 {strides = array<i32>} : memref<256x1152xbf16, #tpu.memory_space<vmem>>, vector<256x128xbf16>,
    %c2_98 = arith.constant 2 : index
    %c2_99 = arith.constant 2 : index
    %c0_100 = arith.constant 0 : index
    %68 = vector.load %arg8[%c2_98, %c2_99, %c0_100] : memref<18x18x128xbf16, #tpu.memory_space<vmem>>, vector<16x16x128xbf16>
    %69 = vector.shape_cast %68 : vector<16x16x128xbf16> to vector<256x128xbf16>
    %c0_101 = arith.constant 0 : index
    %c1024_102 = arith.constant 1024 : index
    %70 = vector.load %arg9[%c0_101, %c1024_102] : memref<256x1152xbf16, #tpu.memory_space<vmem>>, vector<256x128xbf16>
    tpu.vector_store %arg9[%c0_101, %c1024_102], %69 {strides = array<i32>} : memref<256x1152xbf16, #tpu.memory_space<vmem>>, vector<256x128xbf16>,
    %c0_103 = arith.constant 0 : index
    %c0_104 = arith.constant 0 : index
    %71 = vector.load %arg9[%c0_103, %c0_104] : memref<256x1152xbf16, #tpu.memory_space<vmem>>, vector<256x1152xbf16>
    %c0_105 = arith.constant 0 : index
    %c0_106 = arith.constant 0 : index
    %72 = vector.load %arg4[%c0_105, %c0_106] : memref<1152x128xbf16, #tpu.memory_space<vmem>>, vector<1152x128xbf16>
    %cst_107 = arith.constant dense<0.000000e+00> : vector<256x128xf32>
    %73 = tpu.matmul %71, %72, %cst_107 {dimension_numbers = #tpu.dot_dimension_numbers<[1], [0], [0], [1], [0, 0, 1, 1], [], []>} : vector<256x1152xbf16>, vector<1152x128xbf16>, vector<256x128xf32> -> vector<256x128xf32>
    %c0_108 = arith.constant 0 : index
    %c0_109 = arith.constant 0 : index
    %74 = vector.load %arg5[%c0_108, %c0_109] : memref<1x128xf32, #tpu.memory_space<vmem>>, vector<1x128xf32>
    %75 = vector.broadcast %74 : vector<1x128xf32> to vector<256x128xf32>
    %76 = arith.addf %73, %75 : vector<256x128xf32>
    %cst_110 = arith.constant 0.000000e+00 : f32
    %77 = vector.broadcast %cst_110 : f32 to vector<256x128xf32>
    %78 = arith.maximumf %76, %77 : vector<256x128xf32>
    %79 = vector.shape_cast %78 : vector<256x128xf32> to vector<1x16x16x128xf32>
    %c0_111 = arith.constant 0 : index
    %c0_112 = arith.constant 0 : index
    %c0_113 = arith.constant 0 : index
    %c0_114 = arith.constant 0 : index
    %80 = vector.load %arg6[%c0_111, %c0_112, %c0_113, %c0_114] : memref<1x16x16x128xf32, #tpu.memory_space<vmem>>, vector<1x16x16x128xf32>
    tpu.vector_store %arg6[%c0_111, %c0_112, %c0_113, %c0_114], %79 {strides = array<i32>} : memref<1x16x16x128xf32, #tpu.memory_space<vmem>>, vector<1x16x16x128xf32>,
    return
  }
  func.func @transform_0(%arg0: i32) -> (i32, i32, i32, i32) {
    %c0_i32 = arith.constant 0 : i32
    %c0_i32_0 = arith.constant 0 : i32
    %c0_i32_1 = arith.constant 0 : i32
    %c0_i32_2 = arith.constant 0 : i32
    return %arg0, %c0_i32, %c0_i32_0, %c0_i32_1 : i32, i32, i32, i32
  }
  func.func @transform_1(%arg0: i32) -> (i32, i32) {
    %c0_i32 = arith.constant 0 : i32
    %c0_i32_0 = arith.constant 0 : i32
    %c0_i32_1 = arith.constant 0 : i32
    return %c0_i32, %c0_i32_0 : i32, i32
  }
  func.func @transform_2(%arg0: i32) -> (i32, i32) {
    %c0_i32 = arith.constant 0 : i32
    %c0_i32_0 = arith.constant 0 : i32
    %c0_i32_1 = arith.constant 0 : i32
    return %c0_i32, %c0_i32_0 : i32, i32
  }
  func.func @transform_3(%arg0: i32) -> (i32, i32) {
    %c0_i32 = arith.constant 0 : i32
    %c0_i32_0 = arith.constant 0 : i32
    %c0_i32_1 = arith.constant 0 : i32
    return %c0_i32, %c0_i32_0 : i32, i32
  }
  func.func @transform_4(%arg0: i32) -> (i32, i32) {
    %c0_i32 = arith.constant 0 : i32
    %c0_i32_0 = arith.constant 0 : i32
    %c0_i32_1 = arith.constant 0 : i32
    return %c0_i32, %c0_i32_0 : i32, i32
  }
  func.func @transform_5(%arg0: i32) -> (i32, i32, i32, i32) {
    %c0_i32 = arith.constant 0 : i32
    %c0_i32_0 = arith.constant 0 : i32
    %c0_i32_1 = arith.constant 0 : i32
    %c0_i32_2 = arith.constant 0 : i32
    return %arg0, %c0_i32, %c0_i32_0, %c0_i32_1 : i32, i32, i32, i32
  }
}

</mosaic_0001>

<llo_original>
// kernel: conv3_forward.1
$region0: #{conv3_forward.1}
  #allocation0 [shape = 'u32[]', space=smem, size = 0x4, offset = 0x4, fixed_abs, tag = 'smem constant byte address 0x4 - core index']
  #allocation1 [shape = 'u32[144,128]{1,0:T(1,128)}', space=vmem, size = 0x12000, scoped, tag = 'internal scratch']
  #allocation2 [shape = 'bf16[18,18,128]{2,1,0:T(8,128)(2,1)}', space=vmem, size = 0x1b000, scoped, tag = 'scratch operand']
  #allocation3 [shape = 'bf16[18,18,128]{2,1,0:T(8,128)(2,1)}', space=vmem, size = 0x1b000, scoped, tag = 'scratch operand']
  #allocation4 [shape = 'bf16[256,1152]{1,0:T(16,128)(2,1)}', space=vmem, size = 0x90000, scoped, tag = 'scratch operand']
  %s0 = inlined_call_operand.hbm [shape: f32[2,16,16,128], index: 0, kind: input, shape index: {}]
  %s1 = inlined_call_operand.hbm [shape: bf16[1152,128], index: 1, kind: input, shape index: {}]
  %s2 = inlined_call_operand.vmem [shape: f32[1,128], index: 2, kind: input, shape index: {}]
  %s3 = inlined_call_operand.hbm [shape: bf16[1152,128], index: 3, kind: input, shape index: {}]
  %s4 = inlined_call_operand.vmem [shape: f32[1,128], index: 4, kind: input, shape index: {}]
  %s5 = inlined_call_operand.hbm [shape: f32[2,16,16,128], index: 5, kind: output, shape index: {}]
  %s6 = sld [smem:[#allocation0]]
  $region65: #{conv3_forward.1} parent=0
    _
  %s8 = ssub.s32 1, %s6
  %s9 = scalar_select 0, %s8, %s6
  $region1: #{conv3_forward.1} parent=0
    #allocation5 [shape = 'u8[262144]{0}', space=vmem, size = 0x40000, scoped, tag = 'input window, operand 0']
    #allocation6 [shape = 's32[2]{0}', space=sflag, size = 0x8, scoped, tag = 'scoped memory for conv3_forward.1']
    #allocation7 [shape = 's32[2]{0}', space=sflag, size = 0x8, scoped, tag = 'scoped memory for conv3_forward.1']
    #allocation8 [shape = 'u8[294912]{0}', space=vmem, size = 0x48000, scoped, tag = 'input window, operand 1, single buffered']
    #allocation9 [shape = 's32[1]{0}', space=sflag, size = 0x4, scoped, tag = 'scoped memory for conv3_forward.1']
    #allocation10 [shape = 'u8[294912]{0}', space=vmem, size = 0x48000, scoped, tag = 'input window, operand 3, single buffered']
    #allocation11 [shape = 'u8[262144]{0}', space=vmem, size = 0x40000, scoped, tag = 'output window, operand 0']
    %10 = vsyncpa [#allocation6], 0
    %s11 = scalar_lea.sflag [#allocation6], 1
    %12 = vsyncpa %s11, 0
    %13 = vsyncpa [#allocation9], 0
    %14 = vsyncpa [#allocation7], 0
    %s15 = scalar_lea.sflag [#allocation7], 1
    %16 = vsyncpa %s15, 0
    loop: start=0, step=1, limit=4
    $region2: #{conv3_forward.1} parent=1 // loop_pre_header
      _
    $region3: #{conv3_forward.1} parent=1 // loop_header
      %s18 = sphi 0, %s22
      %p19 = scmp.ge.s32.totalorder %s18, 4
      %s28 = sphi 0, %s30
      %s31 = sphi 0, %s28
      %s32 = sphi 0, %s31
      %s48 = sphi 0, %s32
      %s52 = sphi 0, %s52
      %s54 = sphi 0, %s52
      %s55 = sphi 0, %s54
      %s69 = sphi 0, %s55
      %s73 = sphi 0, %s73
      %s75 = sphi 0, %s73
      %s76 = sphi 0, %s75
      %s90 = sphi 0, %s76
      %s94 = sphi 0, %s94
      %s96 = sphi 0, %s94
      %s97 = sphi 0, %s96
      %s111 = sphi 0, %s97
      %s115 = sphi 0, %s115
      %s117 = sphi 0, %s115
      %s118 = sphi 0, %s117
      %s132 = sphi 0, %s118
      %s138 = sphi 0, %s140
      %s141 = sphi 0, %s138
      %s142 = sphi 0, %s141
      %s158 = sphi 0, %s142
    $region4: #{conv3_forward.1} parent=1 // loop_header_branch
      %21 = sbr.rel (%p19) target = $region8
    $region5: #{conv3_forward.1} parent=1 // loop_body
      %s23 = ssub.s32 %s18, 1
      %s24 = ssub.s32 %s18, 2
      %s25 = sadd.s32 %s18, 1
      %s26 = ssub.s32 %s18, %s25
      %p27 = scmp.eq.s32.totalorder %s26, 0
      %s29 = sadd.s32 %s28, 1
      %s30 = scalar_select %p27, %s28, %s29
      %p33 = pneg %p27
      %p34 = scmp.eq.s32.totalorder %s18, 1
      %p35 = por %p33, %p34
      %p36 = scmp.ne.s32.totalorder %s28, %s31
      %p37 = scmp.eq.s32.totalorder %s18, 0
      %p38 = por %p36, %p37
      %p39 = scmp.ne.s32.totalorder %s28, %s31
      %p40 = scmp.eq.s32.totalorder %s23, 1
      %p41 = por %p39, %p40
      %p42 = scmp.ne.s32.totalorder %s31, %s32
      %p43 = scmp.eq.s32.totalorder %s23, 0
      %p44 = por %p42, %p43
      %p45 = scmp.ne.s32.totalorder %s31, %s32
      %p46 = scmp.eq.s32.totalorder %s24, 1
      %p47 = por %p45, %p46
      %p49 = scmp.ne.s32.totalorder %s32, %s48
      %p50 = scmp.eq.s32.totalorder %s24, 0
      %p51 = por %p49, %p50
      %s53 = sadd.s32 %s52, 1
      %p56 = scmp.eq.s32.totalorder %s18, 1
      %p57 = scmp.ne.s32.totalorder %s52, %s54
      %p58 = scmp.eq.s32.totalorder %s18, 0
      %p59 = por %p57, %p58
      %p60 = scmp.ne.s32.totalorder %s52, %s54
      %p61 = scmp.eq.s32.totalorder %s23, 1
      %p62 = por %p60, %p61
      %p63 = scmp.ne.s32.totalorder %s54, %s55
      %p64 = scmp.eq.s32.totalorder %s23, 0
      %p65 = por %p63, %p64
      %p66 = scmp.ne.s32.totalorder %s54, %s55
      %p67 = scmp.eq.s32.totalorder %s24, 1
      %p68 = por %p66, %p67
      %p70 = scmp.ne.s32.totalorder %s55, %s69
      %p71 = scmp.eq.s32.totalorder %s24, 0
      %p72 = por %p70, %p71
      %s74 = sadd.s32 %s73, 1
      %p77 = scmp.eq.s32.totalorder %s18, 1
      %p78 = scmp.ne.s32.totalorder %s73, %s75
      %p79 = scmp.eq.s32.totalorder %s18, 0
      %p80 = por %p78, %p79
      %p81 = scmp.ne.s32.totalorder %s73, %s75
      %p82 = scmp.eq.s32.totalorder %s23, 1
      %p83 = por %p81, %p82
      %p84 = scmp.ne.s32.totalorder %s75, %s76
      %p85 = scmp.eq.s32.totalorder %s23, 0
      %p86 = por %p84, %p85
      %p87 = scmp.ne.s32.totalorder %s75, %s76
      %p88 = scmp.eq.s32.totalorder %s24, 1
      %p89 = por %p87, %p88
      %p91 = scmp.ne.s32.totalorder %s76, %s90
      %p92 = scmp.eq.s32.totalorder %s24, 0
      %p93 = por %p91, %p92
      %s95 = sadd.s32 %s94, 1
      %p98 = scmp.eq.s32.totalorder %s18, 1
      %p99 = scmp.ne.s32.totalorder %s94, %s96
      %p100 = scmp.eq.s32.totalorder %s18, 0
      %p101 = por %p99, %p100
      %p102 = scmp.ne.s32.totalorder %s94, %s96
      %p103 = scmp.eq.s32.totalorder %s23, 1
      %p104 = por %p102, %p103
      %p105 = scmp.ne.s32.totalorder %s96, %s97
      %p106 = scmp.eq.s32.totalorder %s23, 0
      %p107 = por %p105, %p106
      %p108 = scmp.ne.s32.totalorder %s96, %s97
      %p109 = scmp.eq.s32.totalorder %s24, 1
      %p110 = por %p108, %p109
      %p112 = scmp.ne.s32.totalorder %s97, %s111
      %p113 = scmp.eq.s32.totalorder %s24, 0
      %p114 = por %p112, %p113
      %s116 = sadd.s32 %s115, 1
      %p119 = scmp.eq.s32.totalorder %s18, 1
      %p120 = scmp.ne.s32.totalorder %s115, %s117
      %p121 = scmp.eq.s32.totalorder %s18, 0
      %p122 = por %p120, %p121
      %p123 = scmp.ne.s32.totalorder %s115, %s117
      %p124 = scmp.eq.s32.totalorder %s23, 1
      %p125 = por %p123, %p124
      %p126 = scmp.ne.s32.totalorder %s117, %s118
      %p127 = scmp.eq.s32.totalorder %s23, 0
      %p128 = por %p126, %p127
      %p129 = scmp.ne.s32.totalorder %s117, %s118
      %p130 = scmp.eq.s32.totalorder %s24, 1
      %p131 = por %p129, %p130
      %p133 = scmp.ne.s32.totalorder %s118, %s132
      %p134 = scmp.eq.s32.totalorder %s24, 0
      %p135 = por %p133, %p134
      %s136 = ssub.s32 %s18, %s25
      %p137 = scmp.eq.s32.totalorder %s136, 0
      %s139 = sadd.s32 %s138, 1
      %s140 = scalar_select %p137, %s138, %s139
      %p143 = pneg %p137
      %p144 = scmp.eq.s32.totalorder %s18, 1
      %p145 = por %p143, %p144
      %p146 = scmp.ne.s32.totalorder %s138, %s141
      %p147 = scmp.eq.s32.totalorder %s18, 0
      %p148 = por %p146, %p147
      %p149 = scmp.ne.s32.totalorder %s138, %s141
      %p150 = scmp.eq.s32.totalorder %s23, 1
      %p151 = por %p149, %p150
      %p152 = scmp.ne.s32.totalorder %s141, %s142
      %p153 = scmp.eq.s32.totalorder %s23, 0
      %p154 = por %p152, %p153
      %p155 = scmp.ne.s32.totalorder %s141, %s142
      %p156 = scmp.eq.s32.totalorder %s24, 1
      %p157 = por %p155, %p156
      %p159 = scmp.ne.s32.totalorder %s142, %s158
      %p160 = scmp.eq.s32.totalorder %s24, 0
      %p161 = por %p159, %p160
      %p162 = scmp.le.s32.totalorder 1, %s18
      %p163 = scmp.lt.s32.totalorder %s18, 3
      %p164 = pnand %p162, %p163
      %p165 = pneg %p164
      // Predicated region
      $region9: #{conv3_forward.1} parent=5 // pred_check
        _
      $region10: #{conv3_forward.1} parent=5 // pred_check_branch
        %167 = sbr.rel (%p164) target = $region12
      $region11: #{conv3_forward.1} parent=5 // pred_region
        %s168 = ssub.s32 %s18, 1
        // Predicated region
        $region13: #{conv3_forward.1} parent=11 // pred_check
          %p169 = pneg %p65
        $region14: #{conv3_forward.1} parent=11 // pred_check_branch
          %171 = sbr.rel (%p169) target = $region16
        $region15: #{conv3_forward.1} parent=11 // pred_region
          %s173 = ssub.s32 9216, 9216
          %174 = vsyncadd [#allocation9], %s173
          %s175 = sshll.u32 [#allocation8], 4
          %s176 = int_to_ptr.vmem [resolvable:$true] %s175
          %181 = dma.hbm_to_vmem [thread:$0]  %s1, 9216, %s176, [#allocation9], 64, 64, 4
        $region16: #{conv3_forward.1} parent=11 // pred_fallthru
          _
        // Predicated region
        $region17: #{conv3_forward.1} parent=11 // pred_check
          %p182 = pneg %p86
        $region18: #{conv3_forward.1} parent=11 // pred_check_branch
          %184 = sbr.rel (%p182) target = $region20
        $region19: #{conv3_forward.1} parent=11 // pred_region
          _
        $region20: #{conv3_forward.1} parent=11 // pred_fallthru
          _
        // Predicated region
        $region21: #{conv3_forward.1} parent=11 // pred_check
          %p185 = pneg %p107
        $region22: #{conv3_forward.1} parent=11 // pred_check_branch
          %187 = sbr.rel (%p185) target = $region24
        $region23: #{conv3_forward.1} parent=11 // pred_region
          %s189 = ssub.s32 9216, 9216
          %190 = vsyncadd [#allocation9], %s189
          %s191 = sshll.u32 [#allocation10], 4
          %s192 = int_to_ptr.vmem [resolvable:$true] %s191
          %197 = dma.hbm_to_vmem [thread:$0]  %s3, 9216, %s192, [#allocation9], 64, 64, 4
        $region24: #{conv3_forward.1} parent=11 // pred_fallthru
          _
        // Predicated region
        $region25: #{conv3_forward.1} parent=11 // pred_check
          %p198 = pneg %p128
        $region26: #{conv3_forward.1} parent=11 // pred_check_branch
          %200 = sbr.rel (%p198) target = $region28
        $region27: #{conv3_forward.1} parent=11 // pred_region
          _
        $region28: #{conv3_forward.1} parent=11 // pred_fallthru
          _
      $region12: #{conv3_forward.1} parent=5 // pred_fallthru
        _
      %p201 = scmp.lt.s32.totalorder %s18, 2
      // Predicated region
      $region29: #{conv3_forward.1} parent=5 // pred_check
        %p202 = pneg %p201
      $region30: #{conv3_forward.1} parent=5 // pred_check_branch
        %204 = sbr.rel (%p202) target = $region32
      $region31: #{conv3_forward.1} parent=5 // pred_region
        // Predicated region
        $region33: #{conv3_forward.1} parent=31 // pred_check
          %p205 = pneg %p38
        $region34: #{conv3_forward.1} parent=31 // pred_check_branch
          %207 = sbr.rel (%p205) target = $region36
        $region35: #{conv3_forward.1} parent=31 // pred_region
          %s208 = sand.u32 %s28, 1
          %s209 = scalar_lea.sflag [#allocation6], %s208
          %s210 = sand.u32 %s28, 1
          %s211 = smul.addr %s210, 256
          %s212 = scalar_lea.vmem [#allocation5], %s211
          %s214 = ssub.s32 4096, 4096
          %215 = vsyncadd %s209, %s214
          %s216 = smul.addr %s18, 32
          %s217 = smul.addr %s216, 128
          %s218 = scalar_lea.hbm %s0, %s217
          %s219 = sshll.u32 %s212, 4
          %s220 = int_to_ptr.vmem [resolvable:$true] %s219
          %225 = dma.hbm_to_vmem [thread:$0]  %s218, 4096, %s220, %s209, 128, 128, 8
        $region36: #{conv3_forward.1} parent=31 // pred_fallthru
          _
      $region32: #{conv3_forward.1} parent=5 // pred_fallthru
        _
      %p226 = scmp.le.s32.totalorder 1, %s18
      %p227 = scmp.lt.s32.totalorder %s18, 3
      %p228 = pnand %p226, %p227
      %p229 = pneg %p228
      // Predicated region
      $region37: #{conv3_forward.1} parent=5 // pred_check
        _
      $region38: #{conv3_forward.1} parent=5 // pred_check_branch
        %231 = sbr.rel (%p228) target = $region40
      $region39: #{conv3_forward.1} parent=5 // pred_region
        %s232 = ssub.s32 %s18, 1
        %s233 = sand.u32 %s31, 1
        %s234 = scalar_lea.sflag [#allocation6], %s233
        %s235 = sand.u32 %s31, 1
        %s236 = smul.addr %s235, 256
        %s237 = scalar_lea.vmem [#allocation5], %s236
        // Predicated region
        $region41: #{conv3_forward.1} parent=39 // pred_check
          %p238 = pneg %p44
        $region42: #{conv3_forward.1} parent=39 // pred_check_branch
          %240 = sbr.rel (%p238) target = $region44
        $region43: #{conv3_forward.1} parent=39 // pred_region
          %241 = dma.done %s234, 4096
        $region44: #{conv3_forward.1} parent=39 // pred_fallthru
          _
        // Predicated region
        $region45: #{conv3_forward.1} parent=39 // pred_check
          %p242 = pneg %p65
        $region46: #{conv3_forward.1} parent=39 // pred_check_branch
          %244 = sbr.rel (%p242) target = $region48
        $region47: #{conv3_forward.1} parent=39 // pred_region
          %245 = dma.done [#allocation9], 9216
        $region48: #{conv3_forward.1} parent=39 // pred_fallthru
          _
        // Predicated region
        $region49: #{conv3_forward.1} parent=39 // pred_check
          %p246 = pneg %p107
        $region50: #{conv3_forward.1} parent=39 // pred_check_branch
          %248 = sbr.rel (%p246) target = $region52
        $region51: #{conv3_forward.1} parent=39 // pred_region
          %249 = dma.done [#allocation9], 9216
        $region52: #{conv3_forward.1} parent=39 // pred_fallthru
          _
        %s250 = sand.u32 %s31, 1
        %s251 = scalar_lea.sflag [#allocation6], %s250
        %s252 = sand.u32 %s31, 1
        %s253 = smul.addr %s252, 256
        %s254 = scalar_lea.vmem [#allocation5], %s253
        %p255 = pneg %p44
        %p256 = pneg %p41
        %p257 = pneg %p65
        %p258 = pneg %p62
        %p259 = pneg %p86
        %p260 = pneg %p83
        %p261 = pneg %p107
        %p262 = pneg %p104
        %p263 = pneg %p128
        %p264 = pneg %p125
        %p265 = pneg %p154
        %p266 = pneg %p151
        %s267 = sand.u32 %s141, 1
        %s268 = scalar_lea.sflag [#allocation7], %s267
        %s269 = sand.u32 %s141, 1
        %s270 = smul.addr %s269, 256
        %s271 = scalar_lea.vmem [#allocation11], %s270
        %273 = vst [vmem:[#allocation2] sm:$0xf] 0
        %274 = vst [vmem:[#allocation2 + $0x4] sm:$0xf] 0
        %275 = vst [vmem:[#allocation2 + $0x8] sm:$0x1] 0
        %276 = vst [vmem:[#allocation2 + $0xc] sm:$0xf] 0
        %277 = vst [vmem:[#allocation2 + $0x10] sm:$0xf] 0
        %278 = vst [vmem:[#allocation2 + $0x14] sm:$0x1] 0
        %279 = vst [vmem:[#allocation2 + $0x18] sm:$0xf] 0
        %280 = vst [vmem:[#allocation2 + $0x1c] sm:$0xf] 0
        %281 = vst [vmem:[#allocation2 + $0x20] sm:$0x1] 0
        %282 = vst [vmem:[#allocation2 + $0x24] sm:$0xf] 0
        %283 = vst [vmem:[#allocation2 + $0x28] sm:$0xf] 0
        %284 = vst [vmem:[#allocation2 + $0x2c] sm:$0x1] 0
        %285 = vst [vmem:[#allocation2 + $0x30] sm:$0xf] 0
        %286 = vst [vmem:[#allocation2 + $0x34] sm:$0xf] 0
        %287 = vst [vmem:[#allocation2 + $0x38] sm:$0x1] 0
        %288 = vst [vmem:[#allocation2 + $0x3c] sm:$0xf] 0
        %289 = vst [vmem:[#allocation2 + $0x40] sm:$0xf] 0
        %290 = vst [vmem:[#allocation2 + $0x44] sm:$0x1] 0
        %291 = vst [vmem:[#allocation2 + $0x48] sm:$0xf] 0
        %292 = vst [vmem:[#allocation2 + $0x4c] sm:$0xf] 0
        %293 = vst [vmem:[#allocation2 + $0x50] sm:$0x1] 0
        %294 = vst [vmem:[#allocation2 + $0x54] sm:$0xf] 0
        %295 = vst [vmem:[#allocation2 + $0x58] sm:$0xf] 0
        %296 = vst [vmem:[#allocation2 + $0x5c] sm:$0x1] 0
        %297 = vst [vmem:[#allocation2 + $0x60] sm:$0xf] 0
        %298 = vst [vmem:[#allocation2 + $0x64] sm:$0xf] 0
        %299 = vst [vmem:[#allocation2 + $0x68] sm:$0x1] 0
        %300 = vst [vmem:[#allocation2 + $0x6c] sm:$0xf] 0
        %301 = vst [vmem:[#allocation2 + $0x70] sm:$0xf] 0
        %302 = vst [vmem:[#allocation2 + $0x74] sm:$0x1] 0
        %303 = vst [vmem:[#allocation2 + $0x78] sm:$0xf] 0
        %304 = vst [vmem:[#allocation2 + $0x7c] sm:$0xf] 0
        %305 = vst [vmem:[#allocation2 + $0x80] sm:$0x1] 0
        %306 = vst [vmem:[#allocation2 + $0x84] sm:$0xf] 0
        %307 = vst [vmem:[#allocation2 + $0x88] sm:$0xf] 0
        %308 = vst [vmem:[#allocation2 + $0x8c] sm:$0x1] 0
        %309 = vst [vmem:[#allocation2 + $0x90] sm:$0xf] 0
        %310 = vst [vmem:[#allocation2 + $0x94] sm:$0xf] 0
        %311 = vst [vmem:[#allocation2 + $0x98] sm:$0x1] 0
        %312 = vst [vmem:[#allocation2 + $0x9c] sm:$0xf] 0
        %313 = vst [vmem:[#allocation2 + $0xa0] sm:$0xf] 0
        %314 = vst [vmem:[#allocation2 + $0xa4] sm:$0x1] 0
        %315 = vst [vmem:[#allocation2 + $0xa8] sm:$0xf] 0
        %316 = vst [vmem:[#allocation2 + $0xac] sm:$0xf] 0
        %317 = vst [vmem:[#allocation2 + $0xb0] sm:$0x1] 0
        %318 = vst [vmem:[#allocation2 + $0xb4] sm:$0xf] 0
        %319 = vst [vmem:[#allocation2 + $0xb8] sm:$0xf] 0
        %320 = vst [vmem:[#allocation2 + $0xbc] sm:$0x1] 0
        %321 = vst [vmem:[#allocation2 + $0xc0] sm:$0xf] 0
        %322 = vst [vmem:[#allocation2 + $0xc4] sm:$0xf] 0
        %323 = vst [vmem:[#allocation2 + $0xc8] sm:$0x1] 0
        %324 = vst [vmem:[#allocation2 + $0xcc] sm:$0xf] 0
        %325 = vst [vmem:[#allocation2 + $0xd0] sm:$0xf] 0
        %326 = vst [vmem:[#allocation2 + $0xd4] sm:$0x1] 0
        %v327 = vld [vmem:[%s237] sm:$0xff]
        %v328 = vld [vmem:[%s237 + $0x8] sm:$0xff]
        %v329 = vld [vmem:[%s237 + $0x10] sm:$0xff]
        %v330 = vld [vmem:[%s237 + $0x18] sm:$0xff]
        %v331 = vld [vmem:[%s237 + $0x20] sm:$0xff]
        %v332 = vld [vmem:[%s237 + $0x28] sm:$0xff]
        %v333 = vld [vmem:[%s237 + $0x30] sm:$0xff]
        %v334 = vld [vmem:[%s237 + $0x38] sm:$0xff]
        %v335 = vld [vmem:[%s237 + $0x40] sm:$0xff]
        %v336 = vld [vmem:[%s237 + $0x48] sm:$0xff]
        %v337 = vld [vmem:[%s237 + $0x50] sm:$0xff]
        %v338 = vld [vmem:[%s237 + $0x58] sm:$0xff]
        %v339 = vld [vmem:[%s237 + $0x60] sm:$0xff]
        %v340 = vld [vmem:[%s237 + $0x68] sm:$0xff]
        %v341 = vld [vmem:[%s237 + $0x70] sm:$0xff]
        %v342 = vld [vmem:[%s237 + $0x78] sm:$0xff]
        %v343 = vld [vmem:[%s237 + $0x80] sm:$0xff]
        %v344 = vld [vmem:[%s237 + $0x88] sm:$0xff]
        %v345 = vld [vmem:[%s237 + $0x90] sm:$0xff]
        %v346 = vld [vmem:[%s237 + $0x98] sm:$0xff]
        %v347 = vld [vmem:[%s237 + $0xa0] sm:$0xff]
        %v348 = vld [vmem:[%s237 + $0xa8] sm:$0xff]
        %v349 = vld [vmem:[%s237 + $0xb0] sm:$0xff]
        %v350 = vld [vmem:[%s237 + $0xb8] sm:$0xff]
        %v351 = vld [vmem:[%s237 + $0xc0] sm:$0xff]
        %v352 = vld [vmem:[%s237 + $0xc8] sm:$0xff]
        %v353 = vld [vmem:[%s237 + $0xd0] sm:$0xff]
        %v354 = vld [vmem:[%s237 + $0xd8] sm:$0xff]
        %v355 = vld [vmem:[%s237 + $0xe0] sm:$0xff]
        %v356 = vld [vmem:[%s237 + $0xe8] sm:$0xff]
        %v357 = vld [vmem:[%s237 + $0xf0] sm:$0xff]
        %v358 = vld [vmem:[%s237 + $0xf8] sm:$0xff]
        %v359 = vpack.c.bf16 %v328, %v327
        %v360 = vpack.c.bf16 %v330, %v329
        %v361 = vpack.c.bf16 %v332, %v331
        %v362 = vpack.c.bf16 %v334, %v333
        %v363 = vpack.c.bf16 %v336, %v335
        %v364 = vpack.c.bf16 %v338, %v337
        %v365 = vpack.c.bf16 %v340, %v339
        %v366 = vpack.c.bf16 %v342, %v341
        %v367 = vpack.c.bf16 %v344, %v343
        %v368 = vpack.c.bf16 %v346, %v345
        %v369 = vpack.c.bf16 %v348, %v347
        %v370 = vpack.c.bf16 %v350, %v349
        %v371 = vpack.c.bf16 %v352, %v351
        %v372 = vpack.c.bf16 %v354, %v353
        %v373 = vpack.c.bf16 %v356, %v355
        %v374 = vpack.c.bf16 %v358, %v357
        %v391 = vunpack.c.l.b16 %v359
        %v392 = vunpack.c.h.b16 %v359
        %v393 = vunpack.c.l.b16 %v360
        %v394 = vunpack.c.h.b16 %v360
        %v395 = vunpack.c.l.b16 %v361
        %v396 = vunpack.c.h.b16 %v361
        %v397 = vunpack.c.l.b16 %v362
        %v398 = vunpack.c.h.b16 %v362
        %v399 = vunpack.c.l.b16 %v363
        %v400 = vunpack.c.h.b16 %v363
        %v401 = vunpack.c.l.b16 %v364
        %v402 = vunpack.c.h.b16 %v364
        %v403 = vunpack.c.l.b16 %v365
        %v404 = vunpack.c.h.b16 %v365
        %v405 = vunpack.c.l.b16 %v366
        %v406 = vunpack.c.h.b16 %v366
        %v407 = vunpack.c.l.b16 %v367
        %v408 = vunpack.c.h.b16 %v367
        %v409 = vunpack.c.l.b16 %v368
        %v410 = vunpack.c.h.b16 %v368
        %v411 = vunpack.c.l.b16 %v369
        %v412 = vunpack.c.h.b16 %v369
        %v413 = vunpack.c.l.b16 %v370
        %v414 = vunpack.c.h.b16 %v370
        %v415 = vunpack.c.l.b16 %v371
        %v416 = vunpack.c.h.b16 %v371
        %v417 = vunpack.c.l.b16 %v372
        %v418 = vunpack.c.h.b16 %v372
        %v419 = vunpack.c.l.b16 %v373
        %v420 = vunpack.c.h.b16 %v373
        %v421 = vunpack.c.l.b16 %v374
        %v422 = vunpack.c.h.b16 %v374
        %v423 = vpack.c.b16 %v391, %v391
        %v424 = vpack.c.b16 %v392, %v392
        %v425 = vpack.c.b16 %v393, %v393
        %v426 = vpack.c.b16 %v394, %v394
        %v427 = vpack.c.b16 %v395, %v395
        %v428 = vpack.c.b16 %v396, %v396
        %v429 = vpack.c.b16 %v397, %v397
        %v430 = vpack.c.b16 %v398, %v398
        %v431 = vpack.c.b16 %v399, %v399
        %v432 = vpack.c.b16 %v400, %v400
        %v433 = vpack.c.b16 %v401, %v401
        %v434 = vpack.c.b16 %v402, %v402
        %v435 = vpack.c.b16 %v403, %v403
        %v436 = vpack.c.b16 %v404, %v404
        %v437 = vpack.c.b16 %v405, %v405
        %v438 = vpack.c.b16 %v406, %v406
        %v439 = vpack.c.b16 %v407, %v407
        %v440 = vpack.c.b16 %v408, %v408
        %v441 = vpack.c.b16 %v409, %v409
        %v442 = vpack.c.b16 %v410, %v410
        %v443 = vpack.c.b16 %v411, %v411
        %v444 = vpack.c.b16 %v412, %v412
        %v445 = vpack.c.b16 %v413, %v413
        %v446 = vpack.c.b16 %v414, %v414
        %v447 = vpack.c.b16 %v415, %v415
        %v448 = vpack.c.b16 %v416, %v416
        %v449 = vpack.c.b16 %v417, %v417
        %v450 = vpack.c.b16 %v418, %v418
        %v451 = vpack.c.b16 %v419, %v419
        %v452 = vpack.c.b16 %v420, %v420
        %v453 = vpack.c.b16 %v421, %v421
        %v454 = vpack.c.b16 %v422, %v422
        %vm455 = vsmask.f32 256
        %vm456 = vsmask.f32 4368
        %vm457 = vmor %vm455, %vm456
        %v459 = vshrl.u32 %v423, 16
        %v461 = vrot.slane %v459, 7
        %v462 = vshll.u32 %v423, 16
        %v464 = vor.u32 %v461, %v462
        %v465 = vrot.slane %v461, 4
        %v467 = vshrl.u32 %v424, 16
        %v469 = vrot.slane %v467, 7
        %v470 = vshll.u32 %v424, 16
        %v472 = vor.u32 %v469, %v470
        %v473 = vsel %vm457, %v465, %v472
        %v474 = vrot.slane %v469, 4
        %v476 = vshrl.u32 %v425, 16
        %v478 = vrot.slane %v476, 7
        %v479 = vshll.u32 %v425, 16
        %v481 = vor.u32 %v478, %v479
        %v482 = vrot.slane %v478, 4
        %v484 = vshrl.u32 %v426, 16
        %v486 = vrot.slane %v484, 7
        %v487 = vshll.u32 %v426, 16
        %v489 = vor.u32 %v486, %v487
        %v490 = vsel %vm457, %v482, %v489
        %v491 = vrot.slane %v486, 4
        %v493 = vshrl.u32 %v427, 16
        %v495 = vrot.slane %v493, 7
        %v496 = vshll.u32 %v427, 16
        %v498 = vor.u32 %v495, %v496
        %v499 = vrot.slane %v495, 4
        %v501 = vshrl.u32 %v428, 16
        %v503 = vrot.slane %v501, 7
        %v504 = vshll.u32 %v428, 16
        %v506 = vor.u32 %v503, %v504
        %v507 = vsel %vm457, %v499, %v506
        %v508 = vrot.slane %v503, 4
        %v510 = vshrl.u32 %v429, 16
        %v512 = vrot.slane %v510, 7
        %v513 = vshll.u32 %v429, 16
        %v515 = vor.u32 %v512, %v513
        %v516 = vrot.slane %v512, 4
        %v518 = vshrl.u32 %v430, 16
        %v520 = vrot.slane %v518, 7
        %v521 = vshll.u32 %v430, 16
        %v523 = vor.u32 %v520, %v521
        %v524 = vsel %vm457, %v516, %v523
        %v525 = vrot.slane %v520, 4
        %v527 = vshrl.u32 %v431, 16
        %v529 = vrot.slane %v527, 7
        %v530 = vshll.u32 %v431, 16
        %v532 = vor.u32 %v529, %v530
        %v533 = vrot.slane %v529, 4
        %v535 = vshrl.u32 %v432, 16
        %v537 = vrot.slane %v535, 7
        %v538 = vshll.u32 %v432, 16
        %v540 = vor.u32 %v537, %v538
        %v541 = vsel %vm457, %v533, %v540
        %v542 = vrot.slane %v537, 4
        %v544 = vshrl.u32 %v433, 16
        %v546 = vrot.slane %v544, 7
        %v547 = vshll.u32 %v433, 16
        %v549 = vor.u32 %v546, %v547
        %v550 = vrot.slane %v546, 4
        %v552 = vshrl.u32 %v434, 16
        %v554 = vrot.slane %v552, 7
        %v555 = vshll.u32 %v434, 16
        %v557 = vor.u32 %v554, %v555
        %v558 = vsel %vm457, %v550, %v557
        %v559 = vrot.slane %v554, 4
        %v561 = vshrl.u32 %v435, 16
        %v563 = vrot.slane %v561, 7
        %v564 = vshll.u32 %v435, 16
        %v566 = vor.u32 %v563, %v564
        %v567 = vrot.slane %v563, 4
        %v569 = vshrl.u32 %v436, 16
        %v571 = vrot.slane %v569, 7
        %v572 = vshll.u32 %v436, 16
        %v574 = vor.u32 %v571, %v572
        %v575 = vsel %vm457, %v567, %v574
        %v576 = vrot.slane %v571, 4
        %v578 = vshrl.u32 %v437, 16
        %v580 = vrot.slane %v578, 7
        %v581 = vshll.u32 %v437, 16
        %v583 = vor.u32 %v580, %v581
        %v584 = vrot.slane %v580, 4
        %v586 = vshrl.u32 %v438, 16
        %v588 = vrot.slane %v586, 7
        %v589 = vshll.u32 %v438, 16
        %v591 = vor.u32 %v588, %v589
        %v592 = vsel %vm457, %v584, %v591
        %v593 = vrot.slane %v588, 4
        %v595 = vshrl.u32 %v439, 16
        %v597 = vrot.slane %v595, 7
        %v598 = vshll.u32 %v439, 16
        %v600 = vor.u32 %v597, %v598
        %v601 = vrot.slane %v597, 4
        %v603 = vshrl.u32 %v440, 16
        %v605 = vrot.slane %v603, 7
        %v606 = vshll.u32 %v440, 16
        %v608 = vor.u32 %v605, %v606
        %v609 = vsel %vm457, %v601, %v608
        %v610 = vrot.slane %v605, 4
        %v612 = vshrl.u32 %v441, 16
        %v614 = vrot.slane %v612, 7
        %v615 = vshll.u32 %v441, 16
        %v617 = vor.u32 %v614, %v615
        %v618 = vrot.slane %v614, 4
        %v620 = vshrl.u32 %v442, 16
        %v622 = vrot.slane %v620, 7
        %v623 = vshll.u32 %v442, 16
        %v625 = vor.u32 %v622, %v623
        %v626 = vsel %vm457, %v618, %v625
        %v627 = vrot.slane %v622, 4
        %v629 = vshrl.u32 %v443, 16
        %v631 = vrot.slane %v629, 7
        %v632 = vshll.u32 %v443, 16
        %v634 = vor.u32 %v631, %v632
        %v635 = vrot.slane %v631, 4
        %v637 = vshrl.u32 %v444, 16
        %v639 = vrot.slane %v637, 7
        %v640 = vshll.u32 %v444, 16
        %v642 = vor.u32 %v639, %v640
        %v643 = vsel %vm457, %v635, %v642
        %v644 = vrot.slane %v639, 4
        %v646 = vshrl.u32 %v445, 16
        %v648 = vrot.slane %v646, 7
        %v649 = vshll.u32 %v445, 16
        %v651 = vor.u32 %v648, %v649
        %v652 = vrot.slane %v648, 4
        %v654 = vshrl.u32 %v446, 16
        %v656 = vrot.slane %v654, 7
        %v657 = vshll.u32 %v446, 16
        %v659 = vor.u32 %v656, %v657
        %v660 = vsel %vm457, %v652, %v659
        %v661 = vrot.slane %v656, 4
        %v663 = vshrl.u32 %v447, 16
        %v665 = vrot.slane %v663, 7
        %v666 = vshll.u32 %v447, 16
        %v668 = vor.u32 %v665, %v666
        %v669 = vrot.slane %v665, 4
        %v671 = vshrl.u32 %v448, 16
        %v673 = vrot.slane %v671, 7
        %v674 = vshll.u32 %v448, 16
        %v676 = vor.u32 %v673, %v674
        %v677 = vsel %vm457, %v669, %v676
        %v678 = vrot.slane %v673, 4
        %v680 = vshrl.u32 %v449, 16
        %v682 = vrot.slane %v680, 7
        %v683 = vshll.u32 %v449, 16
        %v685 = vor.u32 %v682, %v683
        %v686 = vrot.slane %v682, 4
        %v688 = vshrl.u32 %v450, 16
        %v690 = vrot.slane %v688, 7
        %v691 = vshll.u32 %v450, 16
        %v693 = vor.u32 %v690, %v691
        %v694 = vsel %vm457, %v686, %v693
        %v695 = vrot.slane %v690, 4
        %v697 = vshrl.u32 %v451, 16
        %v699 = vrot.slane %v697, 7
        %v700 = vshll.u32 %v451, 16
        %v702 = vor.u32 %v699, %v700
        %v703 = vrot.slane %v699, 4
        %v705 = vshrl.u32 %v452, 16
        %v707 = vrot.slane %v705, 7
        %v708 = vshll.u32 %v452, 16
        %v710 = vor.u32 %v707, %v708
        %v711 = vsel %vm457, %v703, %v710
        %v712 = vrot.slane %v707, 4
        %v714 = vshrl.u32 %v453, 16
        %v716 = vrot.slane %v714, 7
        %v717 = vshll.u32 %v453, 16
        %v719 = vor.u32 %v716, %v717
        %v720 = vrot.slane %v716, 4
        %v722 = vshrl.u32 %v454, 16
        %v724 = vrot.slane %v722, 7
        %v725 = vshll.u32 %v454, 16
        %v727 = vor.u32 %v724, %v725
        %v728 = vsel %vm457, %v720, %v727
        %v729 = vrot.slane %v724, 4
        %s778 = scalar_lea.vmem [#allocation2], 12
        %vm779 = vcmask 1043456
        %vm780 = vsmask.f32 7938
        %vm781 = vmand %vm779, %vm780
        %v782 = vld [vmem:[%s778] sm:$0xf]
        %v783 = vsel %vm781, %v464, %v782
        %784 = vst [vmem:[%s778] sm:$0xf] %v783
        %785 = vst [vmem:[%s778 + $0x4] sm:$0xf] %v473
        %vm786 = vcmask 1040384
        %vm787 = vmand %vm786, %vm455
        %v788 = vld [vmem:[%s778 + $0x8] sm:$0x1]
        %v789 = vsel %vm787, %v474, %v788
        %790 = vst [vmem:[%s778 + $0x8] sm:$0x1] %v789
        %v791 = vld [vmem:[%s778 + $0xc] sm:$0xf]
        %v792 = vsel %vm781, %v481, %v791
        %793 = vst [vmem:[%s778 + $0xc] sm:$0xf] %v792
        %794 = vst [vmem:[%s778 + $0x10] sm:$0xf] %v490
        %v795 = vld [vmem:[%s778 + $0x14] sm:$0x1]
        %v796 = vsel %vm787, %v491, %v795
        %797 = vst [vmem:[%s778 + $0x14] sm:$0x1] %v796
        %v798 = vld [vmem:[%s778 + $0x18] sm:$0xf]
        %v799 = vsel %vm781, %v498, %v798
        %800 = vst [vmem:[%s778 + $0x18] sm:$0xf] %v799
        %801 = vst [vmem:[%s778 + $0x1c] sm:$0xf] %v507
        %v802 = vld [vmem:[%s778 + $0x20] sm:$0x1]
        %v803 = vsel %vm787, %v508, %v802
        %804 = vst [vmem:[%s778 + $0x20] sm:$0x1] %v803
        %v805 = vld [vmem:[%s778 + $0x24] sm:$0xf]
        %v806 = vsel %vm781, %v515, %v805
        %807 = vst [vmem:[%s778 + $0x24] sm:$0xf] %v806
        %808 = vst [vmem:[%s778 + $0x28] sm:$0xf] %v524
        %v809 = vld [vmem:[%s778 + $0x2c] sm:$0x1]
        %v810 = vsel %vm787, %v525, %v809
        %811 = vst [vmem:[%s778 + $0x2c] sm:$0x1] %v810
        %v812 = vld [vmem:[%s778 + $0x30] sm:$0xf]
        %v813 = vsel %vm781, %v532, %v812
        %814 = vst [vmem:[%s778 + $0x30] sm:$0xf] %v813
        %815 = vst [vmem:[%s778 + $0x34] sm:$0xf] %v541
        %v816 = vld [vmem:[%s778 + $0x38] sm:$0x1]
        %v817 = vsel %vm787, %v542, %v816
        %818 = vst [vmem:[%s778 + $0x38] sm:$0x1] %v817
        %v819 = vld [vmem:[%s778 + $0x3c] sm:$0xf]
        %v820 = vsel %vm781, %v549, %v819
        %821 = vst [vmem:[%s778 + $0x3c] sm:$0xf] %v820
        %822 = vst [vmem:[%s778 + $0x40] sm:$0xf] %v558
        %v823 = vld [vmem:[%s778 + $0x44] sm:$0x1]
        %v824 = vsel %vm787, %v559, %v823
        %825 = vst [vmem:[%s778 + $0x44] sm:$0x1] %v824
        %v826 = vld [vmem:[%s778 + $0x48] sm:$0xf]
        %v827 = vsel %vm781, %v566, %v826
        %828 = vst [vmem:[%s778 + $0x48] sm:$0xf] %v827
        %829 = vst [vmem:[%s778 + $0x4c] sm:$0xf] %v575
        %v830 = vld [vmem:[%s778 + $0x50] sm:$0x1]
        %v831 = vsel %vm787, %v576, %v830
        %832 = vst [vmem:[%s778 + $0x50] sm:$0x1] %v831
        %v833 = vld [vmem:[%s778 + $0x54] sm:$0xf]
        %v834 = vsel %vm781, %v583, %v833
        %835 = vst [vmem:[%s778 + $0x54] sm:$0xf] %v834
        %836 = vst [vmem:[%s778 + $0x58] sm:$0xf] %v592
        %v837 = vld [vmem:[%s778 + $0x5c] sm:$0x1]
        %v838 = vsel %vm787, %v593, %v837
        %839 = vst [vmem:[%s778 + $0x5c] sm:$0x1] %v838
        %v840 = vld [vmem:[%s778 + $0x60] sm:$0xf]
        %v841 = vsel %vm781, %v600, %v840
        %842 = vst [vmem:[%s778 + $0x60] sm:$0xf] %v841
        %843 = vst [vmem:[%s778 + $0x64] sm:$0xf] %v609
        %v844 = vld [vmem:[%s778 + $0x68] sm:$0x1]
        %v845 = vsel %vm787, %v610, %v844
        %846 = vst [vmem:[%s778 + $0x68] sm:$0x1] %v845
        %v847 = vld [vmem:[%s778 + $0x6c] sm:$0xf]
        %v848 = vsel %vm781, %v617, %v847
        %849 = vst [vmem:[%s778 + $0x6c] sm:$0xf] %v848
        %850 = vst [vmem:[%s778 + $0x70] sm:$0xf] %v626
        %v851 = vld [vmem:[%s778 + $0x74] sm:$0x1]
        %v852 = vsel %vm787, %v627, %v851
        %853 = vst [vmem:[%s778 + $0x74] sm:$0x1] %v852
        %v854 = vld [vmem:[%s778 + $0x78] sm:$0xf]
        %v855 = vsel %vm781, %v634, %v854
        %856 = vst [vmem:[%s778 + $0x78] sm:$0xf] %v855
        %857 = vst [vmem:[%s778 + $0x7c] sm:$0xf] %v643
        %v858 = vld [vmem:[%s778 + $0x80] sm:$0x1]
        %v859 = vsel %vm787, %v644, %v858
        %860 = vst [vmem:[%s778 + $0x80] sm:$0x1] %v859
        %v861 = vld [vmem:[%s778 + $0x84] sm:$0xf]
        %v862 = vsel %vm781, %v651, %v861
        %863 = vst [vmem:[%s778 + $0x84] sm:$0xf] %v862
        %864 = vst [vmem:[%s778 + $0x88] sm:$0xf] %v660
        %v865 = vld [vmem:[%s778 + $0x8c] sm:$0x1]
        %v866 = vsel %vm787, %v661, %v865
        %867 = vst [vmem:[%s778 + $0x8c] sm:$0x1] %v866
        %v868 = vld [vmem:[%s778 + $0x90] sm:$0xf]
        %v869 = vsel %vm781, %v668, %v868
        %870 = vst [vmem:[%s778 + $0x90] sm:$0xf] %v869
        %871 = vst [vmem:[%s778 + $0x94] sm:$0xf] %v677
        %v872 = vld [vmem:[%s778 + $0x98] sm:$0x1]
        %v873 = vsel %vm787, %v678, %v872
        %874 = vst [vmem:[%s778 + $0x98] sm:$0x1] %v873
        %v875 = vld [vmem:[%s778 + $0x9c] sm:$0xf]
        %v876 = vsel %vm781, %v685, %v875
        %877 = vst [vmem:[%s778 + $0x9c] sm:$0xf] %v876
        %878 = vst [vmem:[%s778 + $0xa0] sm:$0xf] %v694
        %v879 = vld [vmem:[%s778 + $0xa4] sm:$0x1]
        %v880 = vsel %vm787, %v695, %v879
        %881 = vst [vmem:[%s778 + $0xa4] sm:$0x1] %v880
        %v882 = vld [vmem:[%s778 + $0xa8] sm:$0xf]
        %v883 = vsel %vm781, %v702, %v882
        %884 = vst [vmem:[%s778 + $0xa8] sm:$0xf] %v883
        %885 = vst [vmem:[%s778 + $0xac] sm:$0xf] %v711
        %v886 = vld [vmem:[%s778 + $0xb0] sm:$0x1]
        %v887 = vsel %vm787, %v712, %v886
        %888 = vst [vmem:[%s778 + $0xb0] sm:$0x1] %v887
        %v889 = vld [vmem:[%s778 + $0xb4] sm:$0xf]
        %v890 = vsel %vm781, %v719, %v889
        %891 = vst [vmem:[%s778 + $0xb4] sm:$0xf] %v890
        %892 = vst [vmem:[%s778 + $0xb8] sm:$0xf] %v728
        %v893 = vld [vmem:[%s778 + $0xbc] sm:$0x1]
        %v894 = vsel %vm787, %v729, %v893
        %895 = vst [vmem:[%s778 + $0xbc] sm:$0x1] %v894
        %v896 = vld [vmem:[#allocation2] sm:$0xf]
        %v897 = vld [vmem:[#allocation2 + $0x4] sm:$0xf]
        %v898 = vld [vmem:[#allocation2 + $0xc] sm:$0xf]
        %v899 = vld [vmem:[#allocation2 + $0x10] sm:$0xf]
        %v900 = vld [vmem:[#allocation2 + $0x18] sm:$0xf]
        %v901 = vld [vmem:[#allocation2 + $0x1c] sm:$0xf]
        %v902 = vld [vmem:[#allocation2 + $0x24] sm:$0xf]
        %v903 = vld [vmem:[#allocation2 + $0x28] sm:$0xf]
        %v904 = vld [vmem:[#allocation2 + $0x30] sm:$0xf]
        %v905 = vld [vmem:[#allocation2 + $0x34] sm:$0xf]
        %v906 = vld [vmem:[#allocation2 + $0x3c] sm:$0xf]
        %v907 = vld [vmem:[#allocation2 + $0x40] sm:$0xf]
        %v908 = vld [vmem:[#allocation2 + $0x48] sm:$0xf]
        %v909 = vld [vmem:[#allocation2 + $0x4c] sm:$0xf]
        %v910 = vld [vmem:[#allocation2 + $0x54] sm:$0xf]
        %v911 = vld [vmem:[#allocation2 + $0x58] sm:$0xf]
        %v912 = vld [vmem:[#allocation2 + $0x60] sm:$0xf]
        %v913 = vld [vmem:[#allocation2 + $0x64] sm:$0xf]
        %v914 = vld [vmem:[#allocation2 + $0x6c] sm:$0xf]
        %v915 = vld [vmem:[#allocation2 + $0x70] sm:$0xf]
        %v916 = vld [vmem:[#allocation2 + $0x78] sm:$0xf]
        %v917 = vld [vmem:[#allocation2 + $0x7c] sm:$0xf]
        %v918 = vld [vmem:[#allocation2 + $0x84] sm:$0xf]
        %v919 = vld [vmem:[#allocation2 + $0x88] sm:$0xf]
        %v920 = vld [vmem:[#allocation2 + $0x90] sm:$0xf]
        %v921 = vld [vmem:[#allocation2 + $0x94] sm:$0xf]
        %v922 = vld [vmem:[#allocation2 + $0x9c] sm:$0xf]
        %v923 = vld [vmem:[#allocation2 + $0xa0] sm:$0xf]
        %v924 = vld [vmem:[#allocation2 + $0xa8] sm:$0xf]
        %v925 = vld [vmem:[#allocation2 + $0xac] sm:$0xf]
        %v926 = vld [vmem:[#allocation2 + $0xb4] sm:$0xf]
        %v927 = vld [vmem:[#allocation2 + $0xb8] sm:$0xf]
        %v960 = vunpack.c.l.b16 %v896
        %v961 = vunpack.c.l.b16 %v897
        %v962 = vunpack.c.l.b16 %v898
        %v963 = vunpack.c.l.b16 %v899
        %v964 = vunpack.c.l.b16 %v900
        %v965 = vunpack.c.l.b16 %v901
        %v966 = vunpack.c.l.b16 %v902
        %v967 = vunpack.c.l.b16 %v903
        %v968 = vunpack.c.l.b16 %v904
        %v969 = vunpack.c.l.b16 %v905
        %v970 = vunpack.c.l.b16 %v906
        %v971 = vunpack.c.l.b16 %v907
        %v972 = vunpack.c.l.b16 %v908
        %v973 = vunpack.c.l.b16 %v909
        %v974 = vunpack.c.l.b16 %v910
        %v975 = vunpack.c.l.b16 %v911
        %v976 = vunpack.c.l.b16 %v912
        %v977 = vunpack.c.l.b16 %v913
        %v978 = vunpack.c.l.b16 %v914
        %v979 = vunpack.c.l.b16 %v915
        %v980 = vunpack.c.l.b16 %v916
        %v981 = vunpack.c.l.b16 %v917
        %v982 = vunpack.c.l.b16 %v918
        %v983 = vunpack.c.l.b16 %v919
        %v984 = vunpack.c.l.b16 %v920
        %v985 = vunpack.c.l.b16 %v921
        %v986 = vunpack.c.l.b16 %v922
        %v987 = vunpack.c.l.b16 %v923
        %v988 = vunpack.c.l.b16 %v924
        %v989 = vunpack.c.l.b16 %v925
        %v990 = vunpack.c.l.b16 %v926
        %v991 = vunpack.c.l.b16 %v927
        %v992 = vpack.c.b16 %v961, %v960
        %v993 = vpack.c.b16 %v963, %v962
        %v994 = vpack.c.b16 %v965, %v964
        %v995 = vpack.c.b16 %v967, %v966
        %v996 = vpack.c.b16 %v969, %v968
        %v997 = vpack.c.b16 %v971, %v970
        %v998 = vpack.c.b16 %v973, %v972
        %v999 = vpack.c.b16 %v975, %v974
        %v1000 = vpack.c.b16 %v977, %v976
        %v1001 = vpack.c.b16 %v979, %v978
        %v1002 = vpack.c.b16 %v981, %v980
        %v1003 = vpack.c.b16 %v983, %v982
        %v1004 = vpack.c.b16 %v985, %v984
        %v1005 = vpack.c.b16 %v987, %v986
        %v1006 = vpack.c.b16 %v989, %v988
        %v1007 = vpack.c.b16 %v991, %v990
        %1024 = vst [vmem:[#allocation4] sm:$0xff] %v992
        %1025 = vst [vmem:[#allocation4 + $0x48] sm:$0xff] %v993
        %1026 = vst [vmem:[#allocation4 + $0x90] sm:$0xff] %v994
        %1027 = vst [vmem:[#allocation4 + $0xd8] sm:$0xff] %v995
        %1028 = vst [vmem:[#allocation4 + $0x120] sm:$0xff] %v996
        %1029 = vst [vmem:[#allocation4 + $0x168] sm:$0xff] %v997
        %1030 = vst [vmem:[#allocation4 + $0x1b0] sm:$0xff] %v998
        %1031 = vst [vmem:[#allocation4 + $0x1f8] sm:$0xff] %v999
        %1032 = vst [vmem:[#allocation4 + $0x240] sm:$0xff] %v1000
        %1033 = vst [vmem:[#allocation4 + $0x288] sm:$0xff] %v1001
        %1034 = vst [vmem:[#allocation4 + $0x2d0] sm:$0xff] %v1002
        %1035 = vst [vmem:[#allocation4 + $0x318] sm:$0xff] %v1003
        %1036 = vst [vmem:[#allocation4 + $0x360] sm:$0xff] %v1004
        %1037 = vst [vmem:[#allocation4 + $0x3a8] sm:$0xff] %v1005
        %1038 = vst [vmem:[#allocation4 + $0x3f0] sm:$0xff] %v1006
        %1039 = vst [vmem:[#allocation4 + $0x438] sm:$0xff] %v1007
        %v1040 = vld [vmem:[#allocation2] sm:$0xf]
        %v1041 = vld [vmem:[#allocation2 + $0x4] sm:$0xf]
        %v1042 = vld [vmem:[#allocation2 + $0x8] sm:$0x1]
        %v1043 = vld [vmem:[#allocation2 + $0xc] sm:$0xf]
        %v1044 = vld [vmem:[#allocation2 + $0x10] sm:$0xf]
        %v1045 = vld [vmem:[#allocation2 + $0x14] sm:$0x1]
        %v1046 = vld [vmem:[#allocation2 + $0x18] sm:$0xf]
        %v1047 = vld [vmem:[#allocation2 + $0x1c] sm:$0xf]
        %v1048 = vld [vmem:[#allocation2 + $0x20] sm:$0x1]
        %v1049 = vld [vmem:[#allocation2 + $0x24] sm:$0xf]
        %v1050 = vld [vmem:[#allocation2 + $0x28] sm:$0xf]
        %v1051 = vld [vmem:[#allocation2 + $0x2c] sm:$0x1]
        %v1052 = vld [vmem:[#allocation2 + $0x30] sm:$0xf]
        %v1053 = vld [vmem:[#allocation2 + $0x34] sm:$0xf]
        %v1054 = vld [vmem:[#allocation2 + $0x38] sm:$0x1]
        %v1055 = vld [vmem:[#allocation2 + $0x3c] sm:$0xf]
        %v1056 = vld [vmem:[#allocation2 + $0x40] sm:$0xf]
        %v1057 = vld [vmem:[#allocation2 + $0x44] sm:$0x1]
        %v1058 = vld [vmem:[#allocation2 + $0x48] sm:$0xf]
        %v1059 = vld [vmem:[#allocation2 + $0x4c] sm:$0xf]
        %v1060 = vld [vmem:[#allocation2 + $0x50] sm:$0x1]
        %v1061 = vld [vmem:[#allocation2 + $0x54] sm:$0xf]
        %v1062 = vld [vmem:[#allocation2 + $0x58] sm:$0xf]
        %v1063 = vld [vmem:[#allocation2 + $0x5c] sm:$0x1]
        %v1064 = vld [vmem:[#allocation2 + $0x60] sm:$0xf]
        %v1065 = vld [vmem:[#allocation2 + $0x64] sm:$0xf]
        %v1066 = vld [vmem:[#allocation2 + $0x68] sm:$0x1]
        %v1067 = vld [vmem:[#allocation2 + $0x6c] sm:$0xf]
        %v1068 = vld [vmem:[#allocation2 + $0x70] sm:$0xf]
        %v1069 = vld [vmem:[#allocation2 + $0x74] sm:$0x1]
        %v1070 = vld [vmem:[#allocation2 + $0x78] sm:$0xf]
        %v1071 = vld [vmem:[#allocation2 + $0x7c] sm:$0xf]
        %v1072 = vld [vmem:[#allocation2 + $0x80] sm:$0x1]
        %v1073 = vld [vmem:[#allocation2 + $0x84] sm:$0xf]
        %v1074 = vld [vmem:[#allocation2 + $0x88] sm:$0xf]
        %v1075 = vld [vmem:[#allocation2 + $0x8c] sm:$0x1]
        %v1076 = vld [vmem:[#allocation2 + $0x90] sm:$0xf]
        %v1077 = vld [vmem:[#allocation2 + $0x94] sm:$0xf]
        %v1078 = vld [vmem:[#allocation2 + $0x98] sm:$0x1]
        %v1079 = vld [vmem:[#allocation2 + $0x9c] sm:$0xf]
        %v1080 = vld [vmem:[#allocation2 + $0xa0] sm:$0xf]
        %v1081 = vld [vmem:[#allocation2 + $0xa4] sm:$0x1]
        %v1082 = vld [vmem:[#allocation2 + $0xa8] sm:$0xf]
        %v1083 = vld [vmem:[#allocation2 + $0xac] sm:$0xf]
        %v1084 = vld [vmem:[#allocation2 + $0xb0] sm:$0x1]
        %v1085 = vld [vmem:[#allocation2 + $0xb4] sm:$0xf]
        %v1086 = vld [vmem:[#allocation2 + $0xb8] sm:$0xf]
        %v1087 = vld [vmem:[#allocation2 + $0xbc] sm:$0x1]
        %vm1088 = vsmask.f32 3328
        %vm1089 = vsmask.f32 7440
        %vm1090 = vmor %vm1088, %vm1089
        %v1092 = vshrl.u32 %v1040, 16
        %v1094 = vrot.slane %v1092, 4
        %v1095 = vshll.u32 %v1040, 16
        %v1097 = vrot.slane %v1095, 5
        %v1098 = vor.u32 %v1094, %v1097
        %v1099 = vrot.slane %v1098, 4
        %v1101 = vshll.u32 %v1041, 16
        %v1103 = vrot.slane %v1101, 5
        %v1104 = vsel %vm1090, %v1099, %v1103
        %v1105 = vshrl.u32 %v1041, 16
        %v1107 = vrot.slane %v1105, 4
        %v1108 = vor.u32 %v1107, %v1103
        %v1109 = vrot.slane %v1108, 4
        %v1111 = vshll.u32 %v1042, 16
        %v1113 = vrot.slane %v1111, 5
        %v1114 = vsel %vm1090, %v1109, %v1113
        %v1116 = vshrl.u32 %v1043, 16
        %v1118 = vrot.slane %v1116, 4
        %v1119 = vshll.u32 %v1043, 16
        %v1121 = vrot.slane %v1119, 5
        %v1122 = vor.u32 %v1118, %v1121
        %v1123 = vrot.slane %v1122, 4
        %v1125 = vshll.u32 %v1044, 16
        %v1127 = vrot.slane %v1125, 5
        %v1128 = vsel %vm1090, %v1123, %v1127
        %v1129 = vshrl.u32 %v1044, 16
        %v1131 = vrot.slane %v1129, 4
        %v1132 = vor.u32 %v1131, %v1127
        %v1133 = vrot.slane %v1132, 4
        %v1135 = vshll.u32 %v1045, 16
        %v1137 = vrot.slane %v1135, 5
        %v1138 = vsel %vm1090, %v1133, %v1137
        %v1140 = vshrl.u32 %v1046, 16
        %v1142 = vrot.slane %v1140, 4
        %v1143 = vshll.u32 %v1046, 16
        %v1145 = vrot.slane %v1143, 5
        %v1146 = vor.u32 %v1142, %v1145
        %v1147 = vrot.slane %v1146, 4
        %v1149 = vshll.u32 %v1047, 16
        %v1151 = vrot.slane %v1149, 5
        %v1152 = vsel %vm1090, %v1147, %v1151
        %v1153 = vshrl.u32 %v1047, 16
        %v1155 = vrot.slane %v1153, 4
        %v1156 = vor.u32 %v1155, %v1151
        %v1157 = vrot.slane %v1156, 4
        %v1159 = vshll.u32 %v1048, 16
        %v1161 = vrot.slane %v1159, 5
        %v1162 = vsel %vm1090, %v1157, %v1161
        %v1164 = vshrl.u32 %v1049, 16
        %v1166 = vrot.slane %v1164, 4
        %v1167 = vshll.u32 %v1049, 16
        %v1169 = vrot.slane %v1167, 5
        %v1170 = vor.u32 %v1166, %v1169
        %v1171 = vrot.slane %v1170, 4
        %v1173 = vshll.u32 %v1050, 16
        %v1175 = vrot.slane %v1173, 5
        %v1176 = vsel %vm1090, %v1171, %v1175
        %v1177 = vshrl.u32 %v1050, 16
        %v1179 = vrot.slane %v1177, 4
        %v1180 = vor.u32 %v1179, %v1175
        %v1181 = vrot.slane %v1180, 4
        %v1183 = vshll.u32 %v1051, 16
        %v1185 = vrot.slane %v1183, 5
        %v1186 = vsel %vm1090, %v1181, %v1185
        %v1188 = vshrl.u32 %v1052, 16
        %v1190 = vrot.slane %v1188, 4
        %v1191 = vshll.u32 %v1052, 16
        %v1193 = vrot.slane %v1191, 5
        %v1194 = vor.u32 %v1190, %v1193
        %v1195 = vrot.slane %v1194, 4
        %v1197 = vshll.u32 %v1053, 16
        %v1199 = vrot.slane %v1197, 5
        %v1200 = vsel %vm1090, %v1195, %v1199
        %v1201 = vshrl.u32 %v1053, 16
        %v1203 = vrot.slane %v1201, 4
        %v1204 = vor.u32 %v1203, %v1199
        %v1205 = vrot.slane %v1204, 4
        %v1207 = vshll.u32 %v1054, 16
        %v1209 = vrot.slane %v1207, 5
        %v1210 = vsel %vm1090, %v1205, %v1209
        %v1212 = vshrl.u32 %v1055, 16
        %v1214 = vrot.slane %v1212, 4
        %v1215 = vshll.u32 %v1055, 16
        %v1217 = vrot.slane %v1215, 5
        %v1218 = vor.u32 %v1214, %v1217
        %v1219 = vrot.slane %v1218, 4
        %v1221 = vshll.u32 %v1056, 16
        %v1223 = vrot.slane %v1221, 5
        %v1224 = vsel %vm1090, %v1219, %v1223
        %v1225 = vshrl.u32 %v1056, 16
        %v1227 = vrot.slane %v1225, 4
        %v1228 = vor.u32 %v1227, %v1223
        %v1229 = vrot.slane %v1228, 4
        %v1231 = vshll.u32 %v1057, 16
        %v1233 = vrot.slane %v1231, 5
        %v1234 = vsel %vm1090, %v1229, %v1233
        %v1236 = vshrl.u32 %v1058, 16
        %v1238 = vrot.slane %v1236, 4
        %v1239 = vshll.u32 %v1058, 16
        %v1241 = vrot.slane %v1239, 5
        %v1242 = vor.u32 %v1238, %v1241
        %v1243 = vrot.slane %v1242, 4
        %v1245 = vshll.u32 %v1059, 16
        %v1247 = vrot.slane %v1245, 5
        %v1248 = vsel %vm1090, %v1243, %v1247
        %v1249 = vshrl.u32 %v1059, 16
        %v1251 = vrot.slane %v1249, 4
        %v1252 = vor.u32 %v1251, %v1247
        %v1253 = vrot.slane %v1252, 4
        %v1255 = vshll.u32 %v1060, 16
        %v1257 = vrot.slane %v1255, 5
        %v1258 = vsel %vm1090, %v1253, %v1257
        %v1260 = vshrl.u32 %v1061, 16
        %v1262 = vrot.slane %v1260, 4
        %v1263 = vshll.u32 %v1061, 16
        %v1265 = vrot.slane %v1263, 5
        %v1266 = vor.u32 %v1262, %v1265
        %v1267 = vrot.slane %v1266, 4
        %v1269 = vshll.u32 %v1062, 16
        %v1271 = vrot.slane %v1269, 5
        %v1272 = vsel %vm1090, %v1267, %v1271
        %v1273 = vshrl.u32 %v1062, 16
        %v1275 = vrot.slane %v1273, 4
        %v1276 = vor.u32 %v1275, %v1271
        %v1277 = vrot.slane %v1276, 4
        %v1279 = vshll.u32 %v1063, 16
        %v1281 = vrot.slane %v1279, 5
        %v1282 = vsel %vm1090, %v1277, %v1281
        %v1284 = vshrl.u32 %v1064, 16
        %v1286 = vrot.slane %v1284, 4
        %v1287 = vshll.u32 %v1064, 16
        %v1289 = vrot.slane %v1287, 5
        %v1290 = vor.u32 %v1286, %v1289
        %v1291 = vrot.slane %v1290, 4
        %v1293 = vshll.u32 %v1065, 16
        %v1295 = vrot.slane %v1293, 5
        %v1296 = vsel %vm1090, %v1291, %v1295
        %v1297 = vshrl.u32 %v1065, 16
        %v1299 = vrot.slane %v1297, 4
        %v1300 = vor.u32 %v1299, %v1295
        %v1301 = vrot.slane %v1300, 4
        %v1303 = vshll.u32 %v1066, 16
        %v1305 = vrot.slane %v1303, 5
        %v1306 = vsel %vm1090, %v1301, %v1305
        %v1308 = vshrl.u32 %v1067, 16
        %v1310 = vrot.slane %v1308, 4
        %v1311 = vshll.u32 %v1067, 16
        %v1313 = vrot.slane %v1311, 5
        %v1314 = vor.u32 %v1310, %v1313
        %v1315 = vrot.slane %v1314, 4
        %v1317 = vshll.u32 %v1068, 16
        %v1319 = vrot.slane %v1317, 5
        %v1320 = vsel %vm1090, %v1315, %v1319
        %v1321 = vshrl.u32 %v1068, 16
        %v1323 = vrot.slane %v1321, 4
        %v1324 = vor.u32 %v1323, %v1319
        %v1325 = vrot.slane %v1324, 4
        %v1327 = vshll.u32 %v1069, 16
        %v1329 = vrot.slane %v1327, 5
        %v1330 = vsel %vm1090, %v1325, %v1329
        %v1332 = vshrl.u32 %v1070, 16
        %v1334 = vrot.slane %v1332, 4
        %v1335 = vshll.u32 %v1070, 16
        %v1337 = vrot.slane %v1335, 5
        %v1338 = vor.u32 %v1334, %v1337
        %v1339 = vrot.slane %v1338, 4
        %v1341 = vshll.u32 %v1071, 16
        %v1343 = vrot.slane %v1341, 5
        %v1344 = vsel %vm1090, %v1339, %v1343
        %v1345 = vshrl.u32 %v1071, 16
        %v1347 = vrot.slane %v1345, 4
        %v1348 = vor.u32 %v1347, %v1343
        %v1349 = vrot.slane %v1348, 4
        %v1351 = vshll.u32 %v1072, 16
        %v1353 = vrot.slane %v1351, 5
        %v1354 = vsel %vm1090, %v1349, %v1353
        %v1356 = vshrl.u32 %v1073, 16
        %v1358 = vrot.slane %v1356, 4
        %v1359 = vshll.u32 %v1073, 16
        %v1361 = vrot.slane %v1359, 5
        %v1362 = vor.u32 %v1358, %v1361
        %v1363 = vrot.slane %v1362, 4
        %v1365 = vshll.u32 %v1074, 16
        %v1367 = vrot.slane %v1365, 5
        %v1368 = vsel %vm1090, %v1363, %v1367
        %v1369 = vshrl.u32 %v1074, 16
        %v1371 = vrot.slane %v1369, 4
        %v1372 = vor.u32 %v1371, %v1367
        %v1373 = vrot.slane %v1372, 4
        %v1375 = vshll.u32 %v1075, 16
        %v1377 = vrot.slane %v1375, 5
        %v1378 = vsel %vm1090, %v1373, %v1377
        %v1380 = vshrl.u32 %v1076, 16
        %v1382 = vrot.slane %v1380, 4
        %v1383 = vshll.u32 %v1076, 16
        %v1385 = vrot.slane %v1383, 5
        %v1386 = vor.u32 %v1382, %v1385
        %v1387 = vrot.slane %v1386, 4
        %v1389 = vshll.u32 %v1077, 16
        %v1391 = vrot.slane %v1389, 5
        %v1392 = vsel %vm1090, %v1387, %v1391
        %v1393 = vshrl.u32 %v1077, 16
        %v1395 = vrot.slane %v1393, 4
        %v1396 = vor.u32 %v1395, %v1391
        %v1397 = vrot.slane %v1396, 4
        %v1399 = vshll.u32 %v1078, 16
        %v1401 = vrot.slane %v1399, 5
        %v1402 = vsel %vm1090, %v1397, %v1401
        %v1404 = vshrl.u32 %v1079, 16
        %v1406 = vrot.slane %v1404, 4
        %v1407 = vshll.u32 %v1079, 16
        %v1409 = vrot.slane %v1407, 5
        %v1410 = vor.u32 %v1406, %v1409
        %v1411 = vrot.slane %v1410, 4
        %v1413 = vshll.u32 %v1080, 16
        %v1415 = vrot.slane %v1413, 5
        %v1416 = vsel %vm1090, %v1411, %v1415
        %v1417 = vshrl.u32 %v1080, 16
        %v1419 = vrot.slane %v1417, 4
        %v1420 = vor.u32 %v1419, %v1415
        %v1421 = vrot.slane %v1420, 4
        %v1423 = vshll.u32 %v1081, 16
        %v1425 = vrot.slane %v1423, 5
        %v1426 = vsel %vm1090, %v1421, %v1425
        %v1428 = vshrl.u32 %v1082, 16
        %v1430 = vrot.slane %v1428, 4
        %v1431 = vshll.u32 %v1082, 16
        %v1433 = vrot.slane %v1431, 5
        %v1434 = vor.u32 %v1430, %v1433
        %v1435 = vrot.slane %v1434, 4
        %v1437 = vshll.u32 %v1083, 16
        %v1439 = vrot.slane %v1437, 5
        %v1440 = vsel %vm1090, %v1435, %v1439
        %v1441 = vshrl.u32 %v1083, 16
        %v1443 = vrot.slane %v1441, 4
        %v1444 = vor.u32 %v1443, %v1439
        %v1445 = vrot.slane %v1444, 4
        %v1447 = vshll.u32 %v1084, 16
        %v1449 = vrot.slane %v1447, 5
        %v1450 = vsel %vm1090, %v1445, %v1449
        %v1452 = vshrl.u32 %v1085, 16
        %v1454 = vrot.slane %v1452, 4
        %v1455 = vshll.u32 %v1085, 16
        %v1457 = vrot.slane %v1455, 5
        %v1458 = vor.u32 %v1454, %v1457
        %v1459 = vrot.slane %v1458, 4
        %v1461 = vshll.u32 %v1086, 16
        %v1463 = vrot.slane %v1461, 5
        %v1464 = vsel %vm1090, %v1459, %v1463
        %v1465 = vshrl.u32 %v1086, 16
        %v1467 = vrot.slane %v1465, 4
        %v1468 = vor.u32 %v1467, %v1463
        %v1469 = vrot.slane %v1468, 4
        %v1471 = vshll.u32 %v1087, 16
        %v1473 = vrot.slane %v1471, 5
        %v1474 = vsel %vm1090, %v1469, %v1473
        %v1475 = vunpack.c.l.b16 %v1104
        %v1476 = vunpack.c.l.b16 %v1114
        %v1477 = vunpack.c.l.b16 %v1128
        %v1478 = vunpack.c.l.b16 %v1138
        %v1479 = vunpack.c.l.b16 %v1152
        %v1480 = vunpack.c.l.b16 %v1162
        %v1481 = vunpack.c.l.b16 %v1176
        %v1482 = vunpack.c.l.b16 %v1186
        %v1483 = vunpack.c.l.b16 %v1200
        %v1484 = vunpack.c.l.b16 %v1210
        %v1485 = vunpack.c.l.b16 %v1224
        %v1486 = vunpack.c.l.b16 %v1234
        %v1487 = vunpack.c.l.b16 %v1248
        %v1488 = vunpack.c.l.b16 %v1258
        %v1489 = vunpack.c.l.b16 %v1272
        %v1490 = vunpack.c.l.b16 %v1282
        %v1491 = vunpack.c.l.b16 %v1296
        %v1492 = vunpack.c.l.b16 %v1306
        %v1493 = vunpack.c.l.b16 %v1320
        %v1494 = vunpack.c.l.b16 %v1330
        %v1495 = vunpack.c.l.b16 %v1344
        %v1496 = vunpack.c.l.b16 %v1354
        %v1497 = vunpack.c.l.b16 %v1368
        %v1498 = vunpack.c.l.b16 %v1378
        %v1499 = vunpack.c.l.b16 %v1392
        %v1500 = vunpack.c.l.b16 %v1402
        %v1501 = vunpack.c.l.b16 %v1416
        %v1502 = vunpack.c.l.b16 %v1426
        %v1503 = vunpack.c.l.b16 %v1440
        %v1504 = vunpack.c.l.b16 %v1450
        %v1505 = vunpack.c.l.b16 %v1464
        %v1506 = vunpack.c.l.b16 %v1474
        %v1507 = vpack.c.b16 %v1476, %v1475
        %v1508 = vpack.c.b16 %v1478, %v1477
        %v1509 = vpack.c.b16 %v1480, %v1479
        %v1510 = vpack.c.b16 %v1482, %v1481
        %v1511 = vpack.c.b16 %v1484, %v1483
        %v1512 = vpack.c.b16 %v1486, %v1485
        %v1513 = vpack.c.b16 %v1488, %v1487
        %v1514 = vpack.c.b16 %v1490, %v1489
        %v1515 = vpack.c.b16 %v1492, %v1491
        %v1516 = vpack.c.b16 %v1494, %v1493
        %v1517 = vpack.c.b16 %v1496, %v1495
        %v1518 = vpack.c.b16 %v1498, %v1497
        %v1519 = vpack.c.b16 %v1500, %v1499
        %v1520 = vpack.c.b16 %v1502, %v1501
        %v1521 = vpack.c.b16 %v1504, %v1503
        %v1522 = vpack.c.b16 %v1506, %v1505
        %1539 = vst [vmem:[#allocation4 + $0x8] sm:$0xff] %v1507
        %1540 = vst [vmem:[#allocation4 + $0x50] sm:$0xff] %v1508
        %1541 = vst [vmem:[#allocation4 + $0x98] sm:$0xff] %v1509
        %1542 = vst [vmem:[#allocation4 + $0xe0] sm:$0xff] %v1510
        %1543 = vst [vmem:[#allocation4 + $0x128] sm:$0xff] %v1511
        %1544 = vst [vmem:[#allocation4 + $0x170] sm:$0xff] %v1512
        %1545 = vst [vmem:[#allocation4 + $0x1b8] sm:$0xff] %v1513
        %1546 = vst [vmem:[#allocation4 + $0x200] sm:$0xff] %v1514
        %1547 = vst [vmem:[#allocation4 + $0x248] sm:$0xff] %v1515
        %1548 = vst [vmem:[#allocation4 + $0x290] sm:$0xff] %v1516
        %1549 = vst [vmem:[#allocation4 + $0x2d8] sm:$0xff] %v1517
        %1550 = vst [vmem:[#allocation4 + $0x320] sm:$0xff] %v1518
        %1551 = vst [vmem:[#allocation4 + $0x368] sm:$0xff] %v1519
        %1552 = vst [vmem:[#allocation4 + $0x3b0] sm:$0xff] %v1520
        %1553 = vst [vmem:[#allocation4 + $0x3f8] sm:$0xff] %v1521
        %1554 = vst [vmem:[#allocation4 + $0x440] sm:$0xff] %v1522
        %v1555 = vld [vmem:[#allocation2] sm:$0xe]
        %v1556 = vld [vmem:[#allocation2 + $0x4] sm:$0xf]
        %v1557 = vld [vmem:[#allocation2 + $0x8] sm:$0x1]
        %v1558 = vld [vmem:[#allocation2 + $0xc] sm:$0xe]
        %v1559 = vld [vmem:[#allocation2 + $0x10] sm:$0xf]
        %v1560 = vld [vmem:[#allocation2 + $0x14] sm:$0x1]
        %v1561 = vld [vmem:[#allocation2 + $0x18] sm:$0xe]
        %v1562 = vld [vmem:[#allocation2 + $0x1c] sm:$0xf]
        %v1563 = vld [vmem:[#allocation2 + $0x20] sm:$0x1]
        %v1564 = vld [vmem:[#allocation2 + $0x24] sm:$0xe]
        %v1565 = vld [vmem:[#allocation2 + $0x28] sm:$0xf]
        %v1566 = vld [vmem:[#allocation2 + $0x2c] sm:$0x1]
        %v1567 = vld [vmem:[#allocation2 + $0x30] sm:$0xe]
        %v1568 = vld [vmem:[#allocation2 + $0x34] sm:$0xf]
        %v1569 = vld [vmem:[#allocation2 + $0x38] sm:$0x1]
        %v1570 = vld [vmem:[#allocation2 + $0x3c] sm:$0xe]
        %v1571 = vld [vmem:[#allocation2 + $0x40] sm:$0xf]
        %v1572 = vld [vmem:[#allocation2 + $0x44] sm:$0x1]
        %v1573 = vld [vmem:[#allocation2 + $0x48] sm:$0xe]
        %v1574 = vld [vmem:[#allocation2 + $0x4c] sm:$0xf]
        %v1575 = vld [vmem:[#allocation2 + $0x50] sm:$0x1]
        %v1576 = vld [vmem:[#allocation2 + $0x54] sm:$0xe]
        %v1577 = vld [vmem:[#allocation2 + $0x58] sm:$0xf]
        %v1578 = vld [vmem:[#allocation2 + $0x5c] sm:$0x1]
        %v1579 = vld [vmem:[#allocation2 + $0x60] sm:$0xe]
        %v1580 = vld [vmem:[#allocation2 + $0x64] sm:$0xf]
        %v1581 = vld [vmem:[#allocation2 + $0x68] sm:$0x1]
        %v1582 = vld [vmem:[#allocation2 + $0x6c] sm:$0xe]
        %v1583 = vld [vmem:[#allocation2 + $0x70] sm:$0xf]
        %v1584 = vld [vmem:[#allocation2 + $0x74] sm:$0x1]
        %v1585 = vld [vmem:[#allocation2 + $0x78] sm:$0xe]
        %v1586 = vld [vmem:[#allocation2 + $0x7c] sm:$0xf]
        %v1587 = vld [vmem:[#allocation2 + $0x80] sm:$0x1]
        %v1588 = vld [vmem:[#allocation2 + $0x84] sm:$0xe]
        %v1589 = vld [vmem:[#allocation2 + $0x88] sm:$0xf]
        %v1590 = vld [vmem:[#allocation2 + $0x8c] sm:$0x1]
        %v1591 = vld [vmem:[#allocation2 + $0x90] sm:$0xe]
        %v1592 = vld [vmem:[#allocation2 + $0x94] sm:$0xf]
        %v1593 = vld [vmem:[#allocation2 + $0x98] sm:$0x1]
        %v1594 = vld [vmem:[#allocation2 + $0x9c] sm:$0xe]
        %v1595 = vld [vmem:[#allocation2 + $0xa0] sm:$0xf]
        %v1596 = vld [vmem:[#allocation2 + $0xa4] sm:$0x1]
        %v1597 = vld [vmem:[#allocation2 + $0xa8] sm:$0xe]
        %v1598 = vld [vmem:[#allocation2 + $0xac] sm:$0xf]
        %v1599 = vld [vmem:[#allocation2 + $0xb0] sm:$0x1]
        %v1600 = vld [vmem:[#allocation2 + $0xb4] sm:$0xe]
        %v1601 = vld [vmem:[#allocation2 + $0xb8] sm:$0xf]
        %v1602 = vld [vmem:[#allocation2 + $0xbc] sm:$0x1]
        %vm1651 = vcmask 1042432
        %vm1652 = vcmask 1046532
        %vm1653 = vmor %vm1651, %vm1652
        %v1654 = vrot.slane %v1555, 5
        %v1655 = vrot.slane %v1654, 4
        %v1656 = vrot.slane %v1556, 5
        %v1657 = vsel %vm1653, %v1655, %v1656
        %v1658 = vrot.slane %v1656, 4
        %v1659 = vrot.slane %v1557, 5
        %v1660 = vsel %vm1653, %v1658, %v1659
        %v1661 = vrot.slane %v1558, 5
        %v1662 = vrot.slane %v1661, 4
        %v1663 = vrot.slane %v1559, 5
        %v1664 = vsel %vm1653, %v1662, %v1663
        %v1665 = vrot.slane %v1663, 4
        %v1666 = vrot.slane %v1560, 5
        %v1667 = vsel %vm1653, %v1665, %v1666
        %v1668 = vrot.slane %v1561, 5
        %v1669 = vrot.slane %v1668, 4
        %v1670 = vrot.slane %v1562, 5
        %v1671 = vsel %vm1653, %v1669, %v1670
        %v1672 = vrot.slane %v1670, 4
        %v1673 = vrot.slane %v1563, 5
        %v1674 = vsel %vm1653, %v1672, %v1673
        %v1675 = vrot.slane %v1564, 5
        %v1676 = vrot.slane %v1675, 4
        %v1677 = vrot.slane %v1565, 5
        %v1678 = vsel %vm1653, %v1676, %v1677
        %v1679 = vrot.slane %v1677, 4
        %v1680 = vrot.slane %v1566, 5
        %v1681 = vsel %vm1653, %v1679, %v1680
        %v1682 = vrot.slane %v1567, 5
        %v1683 = vrot.slane %v1682, 4
        %v1684 = vrot.slane %v1568, 5
        %v1685 = vsel %vm1653, %v1683, %v1684
        %v1686 = vrot.slane %v1684, 4
        %v1687 = vrot.slane %v1569, 5
        %v1688 = vsel %vm1653, %v1686, %v1687
        %v1689 = vrot.slane %v1570, 5
        %v1690 = vrot.slane %v1689, 4
        %v1691 = vrot.slane %v1571, 5
        %v1692 = vsel %vm1653, %v1690, %v1691
        %v1693 = vrot.slane %v1691, 4
        %v1694 = vrot.slane %v1572, 5
        %v1695 = vsel %vm1653, %v1693, %v1694
        %v1696 = vrot.slane %v1573, 5
        %v1697 = vrot.slane %v1696, 4
        %v1698 = vrot.slane %v1574, 5
        %v1699 = vsel %vm1653, %v1697, %v1698
        %v1700 = vrot.slane %v1698, 4
        %v1701 = vrot.slane %v1575, 5
        %v1702 = vsel %vm1653, %v1700, %v1701
        %v1703 = vrot.slane %v1576, 5
        %v1704 = vrot.slane %v1703, 4
        %v1705 = vrot.slane %v1577, 5
        %v1706 = vsel %vm1653, %v1704, %v1705
        %v1707 = vrot.slane %v1705, 4
        %v1708 = vrot.slane %v1578, 5
        %v1709 = vsel %vm1653, %v1707, %v1708
        %v1710 = vrot.slane %v1579, 5
        %v1711 = vrot.slane %v1710, 4
        %v1712 = vrot.slane %v1580, 5
        %v1713 = vsel %vm1653, %v1711, %v1712
        %v1714 = vrot.slane %v1712, 4
        %v1715 = vrot.slane %v1581, 5
        %v1716 = vsel %vm1653, %v1714, %v1715
        %v1717 = vrot.slane %v1582, 5
        %v1718 = vrot.slane %v1717, 4
        %v1719 = vrot.slane %v1583, 5
        %v1720 = vsel %vm1653, %v1718, %v1719
        %v1721 = vrot.slane %v1719, 4
        %v1722 = vrot.slane %v1584, 5
        %v1723 = vsel %vm1653, %v1721, %v1722
        %v1724 = vrot.slane %v1585, 5
        %v1725 = vrot.slane %v1724, 4
        %v1726 = vrot.slane %v1586, 5
        %v1727 = vsel %vm1653, %v1725, %v1726
        %v1728 = vrot.slane %v1726, 4
        %v1729 = vrot.slane %v1587, 5
        %v1730 = vsel %vm1653, %v1728, %v1729
        %v1731 = vrot.slane %v1588, 5
        %v1732 = vrot.slane %v1731, 4
        %v1733 = vrot.slane %v1589, 5
        %v1734 = vsel %vm1653, %v1732, %v1733
        %v1735 = vrot.slane %v1733, 4
        %v1736 = vrot.slane %v1590, 5
        %v1737 = vsel %vm1653, %v1735, %v1736
        %v1738 = vrot.slane %v1591, 5
        %v1739 = vrot.slane %v1738, 4
        %v1740 = vrot.slane %v1592, 5
        %v1741 = vsel %vm1653, %v1739, %v1740
        %v1742 = vrot.slane %v1740, 4
        %v1743 = vrot.slane %v1593, 5
        %v1744 = vsel %vm1653, %v1742, %v1743
        %v1745 = vrot.slane %v1594, 5
        %v1746 = vrot.slane %v1745, 4
        %v1747 = vrot.slane %v1595, 5
        %v1748 = vsel %vm1653, %v1746, %v1747
        %v1749 = vrot.slane %v1747, 4
        %v1750 = vrot.slane %v1596, 5
        %v1751 = vsel %vm1653, %v1749, %v1750
        %v1752 = vrot.slane %v1597, 5
        %v1753 = vrot.slane %v1752, 4
        %v1754 = vrot.slane %v1598, 5
        %v1755 = vsel %vm1653, %v1753, %v1754
        %v1756 = vrot.slane %v1754, 4
        %v1757 = vrot.slane %v1599, 5
        %v1758 = vsel %vm1653, %v1756, %v1757
        %v1759 = vrot.slane %v1600, 5
        %v1760 = vrot.slane %v1759, 4
        %v1761 = vrot.slane %v1601, 5
        %v1762 = vsel %vm1653, %v1760, %v1761
        %v1763 = vrot.slane %v1761, 4
        %v1764 = vrot.slane %v1602, 5
        %v1765 = vsel %vm1653, %v1763, %v1764
        %v1766 = vunpack.c.l.b16 %v1657
        %v1767 = vunpack.c.l.b16 %v1660
        %v1768 = vunpack.c.l.b16 %v1664
        %v1769 = vunpack.c.l.b16 %v1667
        %v1770 = vunpack.c.l.b16 %v1671
        %v1771 = vunpack.c.l.b16 %v1674
        %v1772 = vunpack.c.l.b16 %v1678
        %v1773 = vunpack.c.l.b16 %v1681
        %v1774 = vunpack.c.l.b16 %v1685
        %v1775 = vunpack.c.l.b16 %v1688
        %v1776 = vunpack.c.l.b16 %v1692
        %v1777 = vunpack.c.l.b16 %v1695
        %v1778 = vunpack.c.l.b16 %v1699
        %v1779 = vunpack.c.l.b16 %v1702
        %v1780 = vunpack.c.l.b16 %v1706
        %v1781 = vunpack.c.l.b16 %v1709
        %v1782 = vunpack.c.l.b16 %v1713
        %v1783 = vunpack.c.l.b16 %v1716
        %v1784 = vunpack.c.l.b16 %v1720
        %v1785 = vunpack.c.l.b16 %v1723
        %v1786 = vunpack.c.l.b16 %v1727
        %v1787 = vunpack.c.l.b16 %v1730
        %v1788 = vunpack.c.l.b16 %v1734
        %v1789 = vunpack.c.l.b16 %v1737
        %v1790 = vunpack.c.l.b16 %v1741
        %v1791 = vunpack.c.l.b16 %v1744
        %v1792 = vunpack.c.l.b16 %v1748
        %v1793 = vunpack.c.l.b16 %v1751
        %v1794 = vunpack.c.l.b16 %v1755
        %v1795 = vunpack.c.l.b16 %v1758
        %v1796 = vunpack.c.l.b16 %v1762
        %v1797 = vunpack.c.l.b16 %v1765
        %v1798 = vpack.c.b16 %v1767, %v1766
        %v1799 = vpack.c.b16 %v1769, %v1768
        %v1800 = vpack.c.b16 %v1771, %v1770
        %v1801 = vpack.c.b16 %v1773, %v1772
        %v1802 = vpack.c.b16 %v1775, %v1774
        %v1803 = vpack.c.b16 %v1777, %v1776
        %v1804 = vpack.c.b16 %v1779, %v1778
        %v1805 = vpack.c.b16 %v1781, %v1780
        %v1806 = vpack.c.b16 %v1783, %v1782
        %v1807 = vpack.c.b16 %v1785, %v1784
        %v1808 = vpack.c.b16 %v1787, %v1786
        %v1809 = vpack.c.b16 %v1789, %v1788
        %v1810 = vpack.c.b16 %v1791, %v1790
        %v1811 = vpack.c.b16 %v1793, %v1792
        %v1812 = vpack.c.b16 %v1795, %v1794
        %v1813 = vpack.c.b16 %v1797, %v1796
        %1830 = vst [vmem:[#allocation4 + $0x10] sm:$0xff] %v1798
        %1831 = vst [vmem:[#allocation4 + $0x58] sm:$0xff] %v1799
        %1832 = vst [vmem:[#allocation4 + $0xa0] sm:$0xff] %v1800
        %1833 = vst [vmem:[#allocation4 + $0xe8] sm:$0xff] %v1801
        %1834 = vst [vmem:[#allocation4 + $0x130] sm:$0xff] %v1802
        %1835 = vst [vmem:[#allocation4 + $0x178] sm:$0xff] %v1803
        %1836 = vst [vmem:[#allocation4 + $0x1c0] sm:$0xff] %v1804
        %1837 = vst [vmem:[#allocation4 + $0x208] sm:$0xff] %v1805
        %1838 = vst [vmem:[#allocation4 + $0x250] sm:$0xff] %v1806
        %1839 = vst [vmem:[#allocation4 + $0x298] sm:$0xff] %v1807
        %1840 = vst [vmem:[#allocation4 + $0x2e0] sm:$0xff] %v1808
        %1841 = vst [vmem:[#allocation4 + $0x328] sm:$0xff] %v1809
        %1842 = vst [vmem:[#allocation4 + $0x370] sm:$0xff] %v1810
        %1843 = vst [vmem:[#allocation4 + $0x3b8] sm:$0xff] %v1811
        %1844 = vst [vmem:[#allocation4 + $0x400] sm:$0xff] %v1812
        %1845 = vst [vmem:[#allocation4 + $0x448] sm:$0xff] %v1813
        %v1846 = vld [vmem:[%s778] sm:$0xf]
        %v1847 = vld [vmem:[%s778 + $0x4] sm:$0xf]
        %v1848 = vld [vmem:[%s778 + $0xc] sm:$0xf]
        %v1849 = vld [vmem:[%s778 + $0x10] sm:$0xf]
        %v1850 = vld [vmem:[%s778 + $0x18] sm:$0xf]
        %v1851 = vld [vmem:[%s778 + $0x1c] sm:$0xf]
        %v1852 = vld [vmem:[%s778 + $0x24] sm:$0xf]
        %v1853 = vld [vmem:[%s778 + $0x28] sm:$0xf]
        %v1854 = vld [vmem:[%s778 + $0x30] sm:$0xf]
        %v1855 = vld [vmem:[%s778 + $0x34] sm:$0xf]
        %v1856 = vld [vmem:[%s778 + $0x3c] sm:$0xf]
        %v1857 = vld [vmem:[%s778 + $0x40] sm:$0xf]
        %v1858 = vld [vmem:[%s778 + $0x48] sm:$0xf]
        %v1859 = vld [vmem:[%s778 + $0x4c] sm:$0xf]
        %v1860 = vld [vmem:[%s778 + $0x54] sm:$0xf]
        %v1861 = vld [vmem:[%s778 + $0x58] sm:$0xf]
        %v1862 = vld [vmem:[%s778 + $0x60] sm:$0xf]
        %v1863 = vld [vmem:[%s778 + $0x64] sm:$0xf]
        %v1864 = vld [vmem:[%s778 + $0x6c] sm:$0xf]
        %v1865 = vld [vmem:[%s778 + $0x70] sm:$0xf]
        %v1866 = vld [vmem:[%s778 + $0x78] sm:$0xf]
        %v1867 = vld [vmem:[%s778 + $0x7c] sm:$0xf]
        %v1868 = vld [vmem:[%s778 + $0x84] sm:$0xf]
        %v1869 = vld [vmem:[%s778 + $0x88] sm:$0xf]
        %v1870 = vld [vmem:[%s778 + $0x90] sm:$0xf]
        %v1871 = vld [vmem:[%s778 + $0x94] sm:$0xf]
        %v1872 = vld [vmem:[%s778 + $0x9c] sm:$0xf]
        %v1873 = vld [vmem:[%s778 + $0xa0] sm:$0xf]
        %v1874 = vld [vmem:[%s778 + $0xa8] sm:$0xf]
        %v1875 = vld [vmem:[%s778 + $0xac] sm:$0xf]
        %v1876 = vld [vmem:[%s778 + $0xb4] sm:$0xf]
        %v1877 = vld [vmem:[%s778 + $0xb8] sm:$0xf]
        %v1910 = vunpack.c.l.b16 %v1846
        %v1911 = vunpack.c.l.b16 %v1847
        %v1912 = vunpack.c.l.b16 %v1848
        %v1913 = vunpack.c.l.b16 %v1849
        %v1914 = vunpack.c.l.b16 %v1850
        %v1915 = vunpack.c.l.b16 %v1851
        %v1916 = vunpack.c.l.b16 %v1852
        %v1917 = vunpack.c.l.b16 %v1853
        %v1918 = vunpack.c.l.b16 %v1854
        %v1919 = vunpack.c.l.b16 %v1855
        %v1920 = vunpack.c.l.b16 %v1856
        %v1921 = vunpack.c.l.b16 %v1857
        %v1922 = vunpack.c.l.b16 %v1858
        %v1923 = vunpack.c.l.b16 %v1859
        %v1924 = vunpack.c.l.b16 %v1860
        %v1925 = vunpack.c.l.b16 %v1861
        %v1926 = vunpack.c.l.b16 %v1862
        %v1927 = vunpack.c.l.b16 %v1863
        %v1928 = vunpack.c.l.b16 %v1864
        %v1929 = vunpack.c.l.b16 %v1865
        %v1930 = vunpack.c.l.b16 %v1866
        %v1931 = vunpack.c.l.b16 %v1867
        %v1932 = vunpack.c.l.b16 %v1868
        %v1933 = vunpack.c.l.b16 %v1869
        %v1934 = vunpack.c.l.b16 %v1870
        %v1935 = vunpack.c.l.b16 %v1871
        %v1936 = vunpack.c.l.b16 %v1872
        %v1937 = vunpack.c.l.b16 %v1873
        %v1938 = vunpack.c.l.b16 %v1874
        %v1939 = vunpack.c.l.b16 %v1875
        %v1940 = vunpack.c.l.b16 %v1876
        %v1941 = vunpack.c.l.b16 %v1877
        %v1942 = vpack.c.b16 %v1911, %v1910
        %v1943 = vpack.c.b16 %v1913, %v1912
        %v1944 = vpack.c.b16 %v1915, %v1914
        %v1945 = vpack.c.b16 %v1917, %v1916
        %v1946 = vpack.c.b16 %v1919, %v1918
        %v1947 = vpack.c.b16 %v1921, %v1920
        %v1948 = vpack.c.b16 %v1923, %v1922
        %v1949 = vpack.c.b16 %v1925, %v1924
        %v1950 = vpack.c.b16 %v1927, %v1926
        %v1951 = vpack.c.b16 %v1929, %v1928
        %v1952 = vpack.c.b16 %v1931, %v1930
        %v1953 = vpack.c.b16 %v1933, %v1932
        %v1954 = vpack.c.b16 %v1935, %v1934
        %v1955 = vpack.c.b16 %v1937, %v1936
        %v1956 = vpack.c.b16 %v1939, %v1938
        %v1957 = vpack.c.b16 %v1941, %v1940
        %1974 = vst [vmem:[#allocation4 + $0x18] sm:$0xff] %v1942
        %1975 = vst [vmem:[#allocation4 + $0x60] sm:$0xff] %v1943
        %1976 = vst [vmem:[#allocation4 + $0xa8] sm:$0xff] %v1944
        %1977 = vst [vmem:[#allocation4 + $0xf0] sm:$0xff] %v1945
        %1978 = vst [vmem:[#allocation4 + $0x138] sm:$0xff] %v1946
        %1979 = vst [vmem:[#allocation4 + $0x180] sm:$0xff] %v1947
        %1980 = vst [vmem:[#allocation4 + $0x1c8] sm:$0xff] %v1948
        %1981 = vst [vmem:[#allocation4 + $0x210] sm:$0xff] %v1949
        %1982 = vst [vmem:[#allocation4 + $0x258] sm:$0xff] %v1950
        %1983 = vst [vmem:[#allocation4 + $0x2a0] sm:$0xff] %v1951
        %1984 = vst [vmem:[#allocation4 + $0x2e8] sm:$0xff] %v1952
        %1985 = vst [vmem:[#allocation4 + $0x330] sm:$0xff] %v1953
        %1986 = vst [vmem:[#allocation4 + $0x378] sm:$0xff] %v1954
        %1987 = vst [vmem:[#allocation4 + $0x3c0] sm:$0xff] %v1955
        %1988 = vst [vmem:[#allocation4 + $0x408] sm:$0xff] %v1956
        %1989 = vst [vmem:[#allocation4 + $0x450] sm:$0xff] %v1957
        %v1990 = vld [vmem:[%s778] sm:$0xf]
        %v1991 = vld [vmem:[%s778 + $0x4] sm:$0xf]
        %v1992 = vld [vmem:[%s778 + $0x8] sm:$0x1]
        %v1993 = vld [vmem:[%s778 + $0xc] sm:$0xf]
        %v1994 = vld [vmem:[%s778 + $0x10] sm:$0xf]
        %v1995 = vld [vmem:[%s778 + $0x14] sm:$0x1]
        %v1996 = vld [vmem:[%s778 + $0x18] sm:$0xf]
        %v1997 = vld [vmem:[%s778 + $0x1c] sm:$0xf]
        %v1998 = vld [vmem:[%s778 + $0x20] sm:$0x1]
        %v1999 = vld [vmem:[%s778 + $0x24] sm:$0xf]
        %v2000 = vld [vmem:[%s778 + $0x28] sm:$0xf]
        %v2001 = vld [vmem:[%s778 + $0x2c] sm:$0x1]
        %v2002 = vld [vmem:[%s778 + $0x30] sm:$0xf]
        %v2003 = vld [vmem:[%s778 + $0x34] sm:$0xf]
        %v2004 = vld [vmem:[%s778 + $0x38] sm:$0x1]
        %v2005 = vld [vmem:[%s778 + $0x3c] sm:$0xf]
        %v2006 = vld [vmem:[%s778 + $0x40] sm:$0xf]
        %v2007 = vld [vmem:[%s778 + $0x44] sm:$0x1]
        %v2008 = vld [vmem:[%s778 + $0x48] sm:$0xf]
        %v2009 = vld [vmem:[%s778 + $0x4c] sm:$0xf]
        %v2010 = vld [vmem:[%s778 + $0x50] sm:$0x1]
        %v2011 = vld [vmem:[%s778 + $0x54] sm:$0xf]
        %v2012 = vld [vmem:[%s778 + $0x58] sm:$0xf]
        %v2013 = vld [vmem:[%s778 + $0x5c] sm:$0x1]
        %v2014 = vld [vmem:[%s778 + $0x60] sm:$0xf]
        %v2015 = vld [vmem:[%s778 + $0x64] sm:$0xf]
        %v2016 = vld [vmem:[%s778 + $0x68] sm:$0x1]
        %v2017 = vld [vmem:[%s778 + $0x6c] sm:$0xf]
        %v2018 = vld [vmem:[%s778 + $0x70] sm:$0xf]
        %v2019 = vld [vmem:[%s778 + $0x74] sm:$0x1]
        %v2020 = vld [vmem:[%s778 + $0x78] sm:$0xf]
        %v2021 = vld [vmem:[%s778 + $0x7c] sm:$0xf]
        %v2022 = vld [vmem:[%s778 + $0x80] sm:$0x1]
        %v2023 = vld [vmem:[%s778 + $0x84] sm:$0xf]
        %v2024 = vld [vmem:[%s778 + $0x88] sm:$0xf]
        %v2025 = vld [vmem:[%s778 + $0x8c] sm:$0x1]
        %v2026 = vld [vmem:[%s778 + $0x90] sm:$0xf]
        %v2027 = vld [vmem:[%s778 + $0x94] sm:$0xf]
        %v2028 = vld [vmem:[%s778 + $0x98] sm:$0x1]
        %v2029 = vld [vmem:[%s778 + $0x9c] sm:$0xf]
        %v2030 = vld [vmem:[%s778 + $0xa0] sm:$0xf]
        %v2031 = vld [vmem:[%s778 + $0xa4] sm:$0x1]
        %v2032 = vld [vmem:[%s778 + $0xa8] sm:$0xf]
        %v2033 = vld [vmem:[%s778 + $0xac] sm:$0xf]
        %v2034 = vld [vmem:[%s778 + $0xb0] sm:$0x1]
        %v2035 = vld [vmem:[%s778 + $0xb4] sm:$0xf]
        %v2036 = vld [vmem:[%s778 + $0xb8] sm:$0xf]
        %v2037 = vld [vmem:[%s778 + $0xbc] sm:$0x1]
        %v2039 = vshrl.u32 %v1990, 16
        %v2041 = vrot.slane %v2039, 4
        %v2042 = vshll.u32 %v1990, 16
        %v2044 = vrot.slane %v2042, 5
        %v2045 = vor.u32 %v2041, %v2044
        %v2046 = vrot.slane %v2045, 4
        %v2048 = vshll.u32 %v1991, 16
        %v2050 = vrot.slane %v2048, 5
        %v2051 = vsel %vm1090, %v2046, %v2050
        %v2052 = vshrl.u32 %v1991, 16
        %v2054 = vrot.slane %v2052, 4
        %v2055 = vor.u32 %v2054, %v2050
        %v2056 = vrot.slane %v2055, 4
        %v2058 = vshll.u32 %v1992, 16
        %v2060 = vrot.slane %v2058, 5
        %v2061 = vsel %vm1090, %v2056, %v2060
        %v2063 = vshrl.u32 %v1993, 16
        %v2065 = vrot.slane %v2063, 4
        %v2066 = vshll.u32 %v1993, 16
        %v2068 = vrot.slane %v2066, 5
        %v2069 = vor.u32 %v2065, %v2068
        %v2070 = vrot.slane %v2069, 4
        %v2072 = vshll.u32 %v1994, 16
        %v2074 = vrot.slane %v2072, 5
        %v2075 = vsel %vm1090, %v2070, %v2074
        %v2076 = vshrl.u32 %v1994, 16
        %v2078 = vrot.slane %v2076, 4
        %v2079 = vor.u32 %v2078, %v2074
        %v2080 = vrot.slane %v2079, 4
        %v2082 = vshll.u32 %v1995, 16
        %v2084 = vrot.slane %v2082, 5
        %v2085 = vsel %vm1090, %v2080, %v2084
        %v2087 = vshrl.u32 %v1996, 16
        %v2089 = vrot.slane %v2087, 4
        %v2090 = vshll.u32 %v1996, 16
        %v2092 = vrot.slane %v2090, 5
        %v2093 = vor.u32 %v2089, %v2092
        %v2094 = vrot.slane %v2093, 4
        %v2096 = vshll.u32 %v1997, 16
        %v2098 = vrot.slane %v2096, 5
        %v2099 = vsel %vm1090, %v2094, %v2098
        %v2100 = vshrl.u32 %v1997, 16
        %v2102 = vrot.slane %v2100, 4
        %v2103 = vor.u32 %v2102, %v2098
        %v2104 = vrot.slane %v2103, 4
        %v2106 = vshll.u32 %v1998, 16
        %v2108 = vrot.slane %v2106, 5
        %v2109 = vsel %vm1090, %v2104, %v2108
        %v2111 = vshrl.u32 %v1999, 16
        %v2113 = vrot.slane %v2111, 4
        %v2114 = vshll.u32 %v1999, 16
        %v2116 = vrot.slane %v2114, 5
        %v2117 = vor.u32 %v2113, %v2116
        %v2118 = vrot.slane %v2117, 4
        %v2120 = vshll.u32 %v2000, 16
        %v2122 = vrot.slane %v2120, 5
        %v2123 = vsel %vm1090, %v2118, %v2122
        %v2124 = vshrl.u32 %v2000, 16
        %v2126 = vrot.slane %v2124, 4
        %v2127 = vor.u32 %v2126, %v2122
        %v2128 = vrot.slane %v2127, 4
        %v2130 = vshll.u32 %v2001, 16
        %v2132 = vrot.slane %v2130, 5
        %v2133 = vsel %vm1090, %v2128, %v2132
        %v2135 = vshrl.u32 %v2002, 16
        %v2137 = vrot.slane %v2135, 4
        %v2138 = vshll.u32 %v2002, 16
        %v2140 = vrot.slane %v2138, 5
        %v2141 = vor.u32 %v2137, %v2140
        %v2142 = vrot.slane %v2141, 4
        %v2144 = vshll.u32 %v2003, 16
        %v2146 = vrot.slane %v2144, 5
        %v2147 = vsel %vm1090, %v2142, %v2146
        %v2148 = vshrl.u32 %v2003, 16
        %v2150 = vrot.slane %v2148, 4
        %v2151 = vor.u32 %v2150, %v2146
        %v2152 = vrot.slane %v2151, 4
        %v2154 = vshll.u32 %v2004, 16
        %v2156 = vrot.slane %v2154, 5
        %v2157 = vsel %vm1090, %v2152, %v2156
        %v2159 = vshrl.u32 %v2005, 16
        %v2161 = vrot.slane %v2159, 4
        %v2162 = vshll.u32 %v2005, 16
        %v2164 = vrot.slane %v2162, 5
        %v2165 = vor.u32 %v2161, %v2164
        %v2166 = vrot.slane %v2165, 4
        %v2168 = vshll.u32 %v2006, 16
        %v2170 = vrot.slane %v2168, 5
        %v2171 = vsel %vm1090, %v2166, %v2170
        %v2172 = vshrl.u32 %v2006, 16
        %v2174 = vrot.slane %v2172, 4
        %v2175 = vor.u32 %v2174, %v2170
        %v2176 = vrot.slane %v2175, 4
        %v2178 = vshll.u32 %v2007, 16
        %v2180 = vrot.slane %v2178, 5
        %v2181 = vsel %vm1090, %v2176, %v2180
        %v2183 = vshrl.u32 %v2008, 16
        %v2185 = vrot.slane %v2183, 4
        %v2186 = vshll.u32 %v2008, 16
        %v2188 = vrot.slane %v2186, 5
        %v2189 = vor.u32 %v2185, %v2188
        %v2190 = vrot.slane %v2189, 4
        %v2192 = vshll.u32 %v2009, 16
        %v2194 = vrot.slane %v2192, 5
        %v2195 = vsel %vm1090, %v2190, %v2194
        %v2196 = vshrl.u32 %v2009, 16
        %v2198 = vrot.slane %v2196, 4
        %v2199 = vor.u32 %v2198, %v2194
        %v2200 = vrot.slane %v2199, 4
        %v2202 = vshll.u32 %v2010, 16
        %v2204 = vrot.slane %v2202, 5
        %v2205 = vsel %vm1090, %v2200, %v2204
        %v2207 = vshrl.u32 %v2011, 16
        %v2209 = vrot.slane %v2207, 4
        %v2210 = vshll.u32 %v2011, 16
        %v2212 = vrot.slane %v2210, 5
        %v2213 = vor.u32 %v2209, %v2212
        %v2214 = vrot.slane %v2213, 4
        %v2216 = vshll.u32 %v2012, 16
        %v2218 = vrot.slane %v2216, 5
        %v2219 = vsel %vm1090, %v2214, %v2218
        %v2220 = vshrl.u32 %v2012, 16
        %v2222 = vrot.slane %v2220, 4
        %v2223 = vor.u32 %v2222, %v2218
        %v2224 = vrot.slane %v2223, 4
        %v2226 = vshll.u32 %v2013, 16
        %v2228 = vrot.slane %v2226, 5
        %v2229 = vsel %vm1090, %v2224, %v2228
        %v2231 = vshrl.u32 %v2014, 16
        %v2233 = vrot.slane %v2231, 4
        %v2234 = vshll.u32 %v2014, 16
        %v2236 = vrot.slane %v2234, 5
        %v2237 = vor.u32 %v2233, %v2236
        %v2238 = vrot.slane %v2237, 4
        %v2240 = vshll.u32 %v2015, 16
        %v2242 = vrot.slane %v2240, 5
        %v2243 = vsel %vm1090, %v2238, %v2242
        %v2244 = vshrl.u32 %v2015, 16
        %v2246 = vrot.slane %v2244, 4
        %v2247 = vor.u32 %v2246, %v2242
        %v2248 = vrot.slane %v2247, 4
        %v2250 = vshll.u32 %v2016, 16
        %v2252 = vrot.slane %v2250, 5
        %v2253 = vsel %vm1090, %v2248, %v2252
        %v2255 = vshrl.u32 %v2017, 16
        %v2257 = vrot.slane %v2255, 4
        %v2258 = vshll.u32 %v2017, 16
        %v2260 = vrot.slane %v2258, 5
        %v2261 = vor.u32 %v2257, %v2260
        %v2262 = vrot.slane %v2261, 4
        %v2264 = vshll.u32 %v2018, 16
        %v2266 = vrot.slane %v2264, 5
        %v2267 = vsel %vm1090, %v2262, %v2266
        %v2268 = vshrl.u32 %v2018, 16
        %v2270 = vrot.slane %v2268, 4
        %v2271 = vor.u32 %v2270, %v2266
        %v2272 = vrot.slane %v2271, 4
        %v2274 = vshll.u32 %v2019, 16
        %v2276 = vrot.slane %v2274, 5
        %v2277 = vsel %vm1090, %v2272, %v2276
        %v2279 = vshrl.u32 %v2020, 16
        %v2281 = vrot.slane %v2279, 4
        %v2282 = vshll.u32 %v2020, 16
        %v2284 = vrot.slane %v2282, 5
        %v2285 = vor.u32 %v2281, %v2284
        %v2286 = vrot.slane %v2285, 4
        %v2288 = vshll.u32 %v2021, 16
        %v2290 = vrot.slane %v2288, 5
        %v2291 = vsel %vm1090, %v2286, %v2290
        %v2292 = vshrl.u32 %v2021, 16
        %v2294 = vrot.slane %v2292, 4
        %v2295 = vor.u32 %v2294, %v2290
        %v2296 = vrot.slane %v2295, 4
        %v2298 = vshll.u32 %v2022, 16
        %v2300 = vrot.slane %v2298, 5
        %v2301 = vsel %vm1090, %v2296, %v2300
        %v2303 = vshrl.u32 %v2023, 16
        %v2305 = vrot.slane %v2303, 4
        %v2306 = vshll.u32 %v2023, 16
        %v2308 = vrot.slane %v2306, 5
        %v2309 = vor.u32 %v2305, %v2308
        %v2310 = vrot.slane %v2309, 4
        %v2312 = vshll.u32 %v2024, 16
        %v2314 = vrot.slane %v2312, 5
        %v2315 = vsel %vm1090, %v2310, %v2314
        %v2316 = vshrl.u32 %v2024, 16
        %v2318 = vrot.slane %v2316, 4
        %v2319 = vor.u32 %v2318, %v2314
        %v2320 = vrot.slane %v2319, 4
        %v2322 = vshll.u32 %v2025, 16
        %v2324 = vrot.slane %v2322, 5
        %v2325 = vsel %vm1090, %v2320, %v2324
        %v2327 = vshrl.u32 %v2026, 16
        %v2329 = vrot.slane %v2327, 4
        %v2330 = vshll.u32 %v2026, 16
        %v2332 = vrot.slane %v2330, 5
        %v2333 = vor.u32 %v2329, %v2332
        %v2334 = vrot.slane %v2333, 4
        %v2336 = vshll.u32 %v2027, 16
        %v2338 = vrot.slane %v2336, 5
        %v2339 = vsel %vm1090, %v2334, %v2338
        %v2340 = vshrl.u32 %v2027, 16
        %v2342 = vrot.slane %v2340, 4
        %v2343 = vor.u32 %v2342, %v2338
        %v2344 = vrot.slane %v2343, 4
        %v2346 = vshll.u32 %v2028, 16
        %v2348 = vrot.slane %v2346, 5
        %v2349 = vsel %vm1090, %v2344, %v2348
        %v2351 = vshrl.u32 %v2029, 16
        %v2353 = vrot.slane %v2351, 4
        %v2354 = vshll.u32 %v2029, 16
        %v2356 = vrot.slane %v2354, 5
        %v2357 = vor.u32 %v2353, %v2356
        %v2358 = vrot.slane %v2357, 4
        %v2360 = vshll.u32 %v2030, 16
        %v2362 = vrot.slane %v2360, 5
        %v2363 = vsel %vm1090, %v2358, %v2362
        %v2364 = vshrl.u32 %v2030, 16
        %v2366 = vrot.slane %v2364, 4
        %v2367 = vor.u32 %v2366, %v2362
        %v2368 = vrot.slane %v2367, 4
        %v2370 = vshll.u32 %v2031, 16
        %v2372 = vrot.slane %v2370, 5
        %v2373 = vsel %vm1090, %v2368, %v2372
        %v2375 = vshrl.u32 %v2032, 16
        %v2377 = vrot.slane %v2375, 4
        %v2378 = vshll.u32 %v2032, 16
        %v2380 = vrot.slane %v2378, 5
        %v2381 = vor.u32 %v2377, %v2380
        %v2382 = vrot.slane %v2381, 4
        %v2384 = vshll.u32 %v2033, 16
        %v2386 = vrot.slane %v2384, 5
        %v2387 = vsel %vm1090, %v2382, %v2386
        %v2388 = vshrl.u32 %v2033, 16
        %v2390 = vrot.slane %v2388, 4
        %v2391 = vor.u32 %v2390, %v2386
        %v2392 = vrot.slane %v2391, 4
        %v2394 = vshll.u32 %v2034, 16
        %v2396 = vrot.slane %v2394, 5
        %v2397 = vsel %vm1090, %v2392, %v2396
        %v2399 = vshrl.u32 %v2035, 16
        %v2401 = vrot.slane %v2399, 4
        %v2402 = vshll.u32 %v2035, 16
        %v2404 = vrot.slane %v2402, 5
        %v2405 = vor.u32 %v2401, %v2404
        %v2406 = vrot.slane %v2405, 4
        %v2408 = vshll.u32 %v2036, 16
        %v2410 = vrot.slane %v2408, 5
        %v2411 = vsel %vm1090, %v2406, %v2410
        %v2412 = vshrl.u32 %v2036, 16
        %v2414 = vrot.slane %v2412, 4
        %v2415 = vor.u32 %v2414, %v2410
        %v2416 = vrot.slane %v2415, 4
        %v2418 = vshll.u32 %v2037, 16
        %v2420 = vrot.slane %v2418, 5
        %v2421 = vsel %vm1090, %v2416, %v2420
        %v2422 = vunpack.c.l.b16 %v2051
        %v2423 = vunpack.c.l.b16 %v2061
        %v2424 = vunpack.c.l.b16 %v2075
        %v2425 = vunpack.c.l.b16 %v2085
        %v2426 = vunpack.c.l.b16 %v2099
        %v2427 = vunpack.c.l.b16 %v2109
        %v2428 = vunpack.c.l.b16 %v2123
        %v2429 = vunpack.c.l.b16 %v2133
        %v2430 = vunpack.c.l.b16 %v2147
        %v2431 = vunpack.c.l.b16 %v2157
        %v2432 = vunpack.c.l.b16 %v2171
        %v2433 = vunpack.c.l.b16 %v2181
        %v2434 = vunpack.c.l.b16 %v2195
        %v2435 = vunpack.c.l.b16 %v2205
        %v2436 = vunpack.c.l.b16 %v2219
        %v2437 = vunpack.c.l.b16 %v2229
        %v2438 = vunpack.c.l.b16 %v2243
        %v2439 = vunpack.c.l.b16 %v2253
        %v2440 = vunpack.c.l.b16 %v2267
        %v2441 = vunpack.c.l.b16 %v2277
        %v2442 = vunpack.c.l.b16 %v2291
        %v2443 = vunpack.c.l.b16 %v2301
        %v2444 = vunpack.c.l.b16 %v2315
        %v2445 = vunpack.c.l.b16 %v2325
        %v2446 = vunpack.c.l.b16 %v2339
        %v2447 = vunpack.c.l.b16 %v2349
        %v2448 = vunpack.c.l.b16 %v2363
        %v2449 = vunpack.c.l.b16 %v2373
        %v2450 = vunpack.c.l.b16 %v2387
        %v2451 = vunpack.c.l.b16 %v2397
        %v2452 = vunpack.c.l.b16 %v2411
        %v2453 = vunpack.c.l.b16 %v2421
        %v2454 = vpack.c.b16 %v2423, %v2422
        %v2455 = vpack.c.b16 %v2425, %v2424
        %v2456 = vpack.c.b16 %v2427, %v2426
        %v2457 = vpack.c.b16 %v2429, %v2428
        %v2458 = vpack.c.b16 %v2431, %v2430
        %v2459 = vpack.c.b16 %v2433, %v2432
        %v2460 = vpack.c.b16 %v2435, %v2434
        %v2461 = vpack.c.b16 %v2437, %v2436
        %v2462 = vpack.c.b16 %v2439, %v2438
        %v2463 = vpack.c.b16 %v2441, %v2440
        %v2464 = vpack.c.b16 %v2443, %v2442
        %v2465 = vpack.c.b16 %v2445, %v2444
        %v2466 = vpack.c.b16 %v2447, %v2446
        %v2467 = vpack.c.b16 %v2449, %v2448
        %v2468 = vpack.c.b16 %v2451, %v2450
        %v2469 = vpack.c.b16 %v2453, %v2452
        %2486 = vst [vmem:[#allocation4 + $0x20] sm:$0xff] %v2454
        %2487 = vst [vmem:[#allocation4 + $0x68] sm:$0xff] %v2455
        %2488 = vst [vmem:[#allocation4 + $0xb0] sm:$0xff] %v2456
        %2489 = vst [vmem:[#allocation4 + $0xf8] sm:$0xff] %v2457
        %2490 = vst [vmem:[#allocation4 + $0x140] sm:$0xff] %v2458
        %2491 = vst [vmem:[#allocation4 + $0x188] sm:$0xff] %v2459
        %2492 = vst [vmem:[#allocation4 + $0x1d0] sm:$0xff] %v2460
        %2493 = vst [vmem:[#allocation4 + $0x218] sm:$0xff] %v2461
        %2494 = vst [vmem:[#allocation4 + $0x260] sm:$0xff] %v2462
        %2495 = vst [vmem:[#allocation4 + $0x2a8] sm:$0xff] %v2463
        %2496 = vst [vmem:[#allocation4 + $0x2f0] sm:$0xff] %v2464
        %2497 = vst [vmem:[#allocation4 + $0x338] sm:$0xff] %v2465
        %2498 = vst [vmem:[#allocation4 + $0x380] sm:$0xff] %v2466
        %2499 = vst [vmem:[#allocation4 + $0x3c8] sm:$0xff] %v2467
        %2500 = vst [vmem:[#allocation4 + $0x410] sm:$0xff] %v2468
        %2501 = vst [vmem:[#allocation4 + $0x458] sm:$0xff] %v2469
        %v2502 = vld [vmem:[%s778] sm:$0xe]
        %v2503 = vld [vmem:[%s778 + $0x4] sm:$0xf]
        %v2504 = vld [vmem:[%s778 + $0x8] sm:$0x1]
        %v2505 = vld [vmem:[%s778 + $0xc] sm:$0xe]
        %v2506 = vld [vmem:[%s778 + $0x10] sm:$0xf]
        %v2507 = vld [vmem:[%s778 + $0x14] sm:$0x1]
        %v2508 = vld [vmem:[%s778 + $0x18] sm:$0xe]
        %v2509 = vld [vmem:[%s778 + $0x1c] sm:$0xf]
        %v2510 = vld [vmem:[%s778 + $0x20] sm:$0x1]
        %v2511 = vld [vmem:[%s778 + $0x24] sm:$0xe]
        %v2512 = vld [vmem:[%s778 + $0x28] sm:$0xf]
        %v2513 = vld [vmem:[%s778 + $0x2c] sm:$0x1]
        %v2514 = vld [vmem:[%s778 + $0x30] sm:$0xe]
        %v2515 = vld [vmem:[%s778 + $0x34] sm:$0xf]
        %v2516 = vld [vmem:[%s778 + $0x38] sm:$0x1]
        %v2517 = vld [vmem:[%s778 + $0x3c] sm:$0xe]
        %v2518 = vld [vmem:[%s778 + $0x40] sm:$0xf]
        %v2519 = vld [vmem:[%s778 + $0x44] sm:$0x1]
        %v2520 = vld [vmem:[%s778 + $0x48] sm:$0xe]
        %v2521 = vld [vmem:[%s778 + $0x4c] sm:$0xf]
        %v2522 = vld [vmem:[%s778 + $0x50] sm:$0x1]
        %v2523 = vld [vmem:[%s778 + $0x54] sm:$0xe]
        %v2524 = vld [vmem:[%s778 + $0x58] sm:$0xf]
        %v2525 = vld [vmem:[%s778 + $0x5c] sm:$0x1]
        %v2526 = vld [vmem:[%s778 + $0x60] sm:$0xe]
        %v2527 = vld [vmem:[%s778 + $0x64] sm:$0xf]
        %v2528 = vld [vmem:[%s778 + $0x68] sm:$0x1]
        %v2529 = vld [vmem:[%s778 + $0x6c] sm:$0xe]
        %v2530 = vld [vmem:[%s778 + $0x70] sm:$0xf]
        %v2531 = vld [vmem:[%s778 + $0x74] sm:$0x1]
        %v2532 = vld [vmem:[%s778 + $0x78] sm:$0xe]
        %v2533 = vld [vmem:[%s778 + $0x7c] sm:$0xf]
        %v2534 = vld [vmem:[%s778 + $0x80] sm:$0x1]
        %v2535 = vld [vmem:[%s778 + $0x84] sm:$0xe]
        %v2536 = vld [vmem:[%s778 + $0x88] sm:$0xf]
        %v2537 = vld [vmem:[%s778 + $0x8c] sm:$0x1]
        %v2538 = vld [vmem:[%s778 + $0x90] sm:$0xe]
        %v2539 = vld [vmem:[%s778 + $0x94] sm:$0xf]
        %v2540 = vld [vmem:[%s778 + $0x98] sm:$0x1]
        %v2541 = vld [vmem:[%s778 + $0x9c] sm:$0xe]
        %v2542 = vld [vmem:[%s778 + $0xa0] sm:$0xf]
        %v2543 = vld [vmem:[%s778 + $0xa4] sm:$0x1]
        %v2544 = vld [vmem:[%s778 + $0xa8] sm:$0xe]
        %v2545 = vld [vmem:[%s778 + $0xac] sm:$0xf]
        %v2546 = vld [vmem:[%s778 + $0xb0] sm:$0x1]
        %v2547 = vld [vmem:[%s778 + $0xb4] sm:$0xe]
        %v2548 = vld [vmem:[%s778 + $0xb8] sm:$0xf]
        %v2549 = vld [vmem:[%s778 + $0xbc] sm:$0x1]
        %v2598 = vrot.slane %v2502, 5
        %v2599 = vrot.slane %v2598, 4
        %v2600 = vrot.slane %v2503, 5
        %v2601 = vsel %vm1653, %v2599, %v2600
        %v2602 = vrot.slane %v2600, 4
        %v2603 = vrot.slane %v2504, 5
        %v2604 = vsel %vm1653, %v2602, %v2603
        %v2605 = vrot.slane %v2505, 5
        %v2606 = vrot.slane %v2605, 4
        %v2607 = vrot.slane %v2506, 5
        %v2608 = vsel %vm1653, %v2606, %v2607
        %v2609 = vrot.slane %v2607, 4
        %v2610 = vrot.slane %v2507, 5
        %v2611 = vsel %vm1653, %v2609, %v2610
        %v2612 = vrot.slane %v2508, 5
        %v2613 = vrot.slane %v2612, 4
        %v2614 = vrot.slane %v2509, 5
        %v2615 = vsel %vm1653, %v2613, %v2614
        %v2616 = vrot.slane %v2614, 4
        %v2617 = vrot.slane %v2510, 5
        %v2618 = vsel %vm1653, %v2616, %v2617
        %v2619 = vrot.slane %v2511, 5
        %v2620 = vrot.slane %v2619, 4
        %v2621 = vrot.slane %v2512, 5
        %v2622 = vsel %vm1653, %v2620, %v2621
        %v2623 = vrot.slane %v2621, 4
        %v2624 = vrot.slane %v2513, 5
        %v2625 = vsel %vm1653, %v2623, %v2624
        %v2626 = vrot.slane %v2514, 5
        %v2627 = vrot.slane %v2626, 4
        %v2628 = vrot.slane %v2515, 5
        %v2629 = vsel %vm1653, %v2627, %v2628
        %v2630 = vrot.slane %v2628, 4
        %v2631 = vrot.slane %v2516, 5
        %v2632 = vsel %vm1653, %v2630, %v2631
        %v2633 = vrot.slane %v2517, 5
        %v2634 = vrot.slane %v2633, 4
        %v2635 = vrot.slane %v2518, 5
        %v2636 = vsel %vm1653, %v2634, %v2635
        %v2637 = vrot.slane %v2635, 4
        %v2638 = vrot.slane %v2519, 5
        %v2639 = vsel %vm1653, %v2637, %v2638
        %v2640 = vrot.slane %v2520, 5
        %v2641 = vrot.slane %v2640, 4
        %v2642 = vrot.slane %v2521, 5
        %v2643 = vsel %vm1653, %v2641, %v2642
        %v2644 = vrot.slane %v2642, 4
        %v2645 = vrot.slane %v2522, 5
        %v2646 = vsel %vm1653, %v2644, %v2645
        %v2647 = vrot.slane %v2523, 5
        %v2648 = vrot.slane %v2647, 4
        %v2649 = vrot.slane %v2524, 5
        %v2650 = vsel %vm1653, %v2648, %v2649
        %v2651 = vrot.slane %v2649, 4
        %v2652 = vrot.slane %v2525, 5
        %v2653 = vsel %vm1653, %v2651, %v2652
        %v2654 = vrot.slane %v2526, 5
        %v2655 = vrot.slane %v2654, 4
        %v2656 = vrot.slane %v2527, 5
        %v2657 = vsel %vm1653, %v2655, %v2656
        %v2658 = vrot.slane %v2656, 4
        %v2659 = vrot.slane %v2528, 5
        %v2660 = vsel %vm1653, %v2658, %v2659
        %v2661 = vrot.slane %v2529, 5
        %v2662 = vrot.slane %v2661, 4
        %v2663 = vrot.slane %v2530, 5
        %v2664 = vsel %vm1653, %v2662, %v2663
        %v2665 = vrot.slane %v2663, 4
        %v2666 = vrot.slane %v2531, 5
        %v2667 = vsel %vm1653, %v2665, %v2666
        %v2668 = vrot.slane %v2532, 5
        %v2669 = vrot.slane %v2668, 4
        %v2670 = vrot.slane %v2533, 5
        %v2671 = vsel %vm1653, %v2669, %v2670
        %v2672 = vrot.slane %v2670, 4
        %v2673 = vrot.slane %v2534, 5
        %v2674 = vsel %vm1653, %v2672, %v2673
        %v2675 = vrot.slane %v2535, 5
        %v2676 = vrot.slane %v2675, 4
        %v2677 = vrot.slane %v2536, 5
        %v2678 = vsel %vm1653, %v2676, %v2677
        %v2679 = vrot.slane %v2677, 4
        %v2680 = vrot.slane %v2537, 5
        %v2681 = vsel %vm1653, %v2679, %v2680
        %v2682 = vrot.slane %v2538, 5
        %v2683 = vrot.slane %v2682, 4
        %v2684 = vrot.slane %v2539, 5
        %v2685 = vsel %vm1653, %v2683, %v2684
        %v2686 = vrot.slane %v2684, 4
        %v2687 = vrot.slane %v2540, 5
        %v2688 = vsel %vm1653, %v2686, %v2687
        %v2689 = vrot.slane %v2541, 5
        %v2690 = vrot.slane %v2689, 4
        %v2691 = vrot.slane %v2542, 5
        %v2692 = vsel %vm1653, %v2690, %v2691
        %v2693 = vrot.slane %v2691, 4
        %v2694 = vrot.slane %v2543, 5
        %v2695 = vsel %vm1653, %v2693, %v2694
        %v2696 = vrot.slane %v2544, 5
        %v2697 = vrot.slane %v2696, 4
        %v2698 = vrot.slane %v2545, 5
        %v2699 = vsel %vm1653, %v2697, %v2698
        %v2700 = vrot.slane %v2698, 4
        %v2701 = vrot.slane %v2546, 5
        %v2702 = vsel %vm1653, %v2700, %v2701
        %v2703 = vrot.slane %v2547, 5
        %v2704 = vrot.slane %v2703, 4
        %v2705 = vrot.slane %v2548, 5
        %v2706 = vsel %vm1653, %v2704, %v2705
        %v2707 = vrot.slane %v2705, 4
        %v2708 = vrot.slane %v2549, 5
        %v2709 = vsel %vm1653, %v2707, %v2708
        %v2710 = vunpack.c.l.b16 %v2601
        %v2711 = vunpack.c.l.b16 %v2604
        %v2712 = vunpack.c.l.b16 %v2608
        %v2713 = vunpack.c.l.b16 %v2611
        %v2714 = vunpack.c.l.b16 %v2615
        %v2715 = vunpack.c.l.b16 %v2618
        %v2716 = vunpack.c.l.b16 %v2622
        %v2717 = vunpack.c.l.b16 %v2625
        %v2718 = vunpack.c.l.b16 %v2629
        %v2719 = vunpack.c.l.b16 %v2632
        %v2720 = vunpack.c.l.b16 %v2636
        %v2721 = vunpack.c.l.b16 %v2639
        %v2722 = vunpack.c.l.b16 %v2643
        %v2723 = vunpack.c.l.b16 %v2646
        %v2724 = vunpack.c.l.b16 %v2650
        %v2725 = vunpack.c.l.b16 %v2653
        %v2726 = vunpack.c.l.b16 %v2657
        %v2727 = vunpack.c.l.b16 %v2660
        %v2728 = vunpack.c.l.b16 %v2664
        %v2729 = vunpack.c.l.b16 %v2667
        %v2730 = vunpack.c.l.b16 %v2671
        %v2731 = vunpack.c.l.b16 %v2674
        %v2732 = vunpack.c.l.b16 %v2678
        %v2733 = vunpack.c.l.b16 %v2681
        %v2734 = vunpack.c.l.b16 %v2685
        %v2735 = vunpack.c.l.b16 %v2688
        %v2736 = vunpack.c.l.b16 %v2692
        %v2737 = vunpack.c.l.b16 %v2695
        %v2738 = vunpack.c.l.b16 %v2699
        %v2739 = vunpack.c.l.b16 %v2702
        %v2740 = vunpack.c.l.b16 %v2706
        %v2741 = vunpack.c.l.b16 %v2709
        %v2742 = vpack.c.b16 %v2711, %v2710
        %v2743 = vpack.c.b16 %v2713, %v2712
        %v2744 = vpack.c.b16 %v2715, %v2714
        %v2745 = vpack.c.b16 %v2717, %v2716
        %v2746 = vpack.c.b16 %v2719, %v2718
        %v2747 = vpack.c.b16 %v2721, %v2720
        %v2748 = vpack.c.b16 %v2723, %v2722
        %v2749 = vpack.c.b16 %v2725, %v2724
        %v2750 = vpack.c.b16 %v2727, %v2726
        %v2751 = vpack.c.b16 %v2729, %v2728
        %v2752 = vpack.c.b16 %v2731, %v2730
        %v2753 = vpack.c.b16 %v2733, %v2732
        %v2754 = vpack.c.b16 %v2735, %v2734
        %v2755 = vpack.c.b16 %v2737, %v2736
        %v2756 = vpack.c.b16 %v2739, %v2738
        %v2757 = vpack.c.b16 %v2741, %v2740
        %2774 = vst [vmem:[#allocation4 + $0x28] sm:$0xff] %v2742
        %2775 = vst [vmem:[#allocation4 + $0x70] sm:$0xff] %v2743
        %2776 = vst [vmem:[#allocation4 + $0xb8] sm:$0xff] %v2744
        %2777 = vst [vmem:[#allocation4 + $0x100] sm:$0xff] %v2745
        %2778 = vst [vmem:[#allocation4 + $0x148] sm:$0xff] %v2746
        %2779 = vst [vmem:[#allocation4 + $0x190] sm:$0xff] %v2747
        %2780 = vst [vmem:[#allocation4 + $0x1d8] sm:$0xff] %v2748
        %2781 = vst [vmem:[#allocation4 + $0x220] sm:$0xff] %v2749
        %2782 = vst [vmem:[#allocation4 + $0x268] sm:$0xff] %v2750
        %2783 = vst [vmem:[#allocation4 + $0x2b0] sm:$0xff] %v2751
        %2784 = vst [vmem:[#allocation4 + $0x2f8] sm:$0xff] %v2752
        %2785 = vst [vmem:[#allocation4 + $0x340] sm:$0xff] %v2753
        %2786 = vst [vmem:[#allocation4 + $0x388] sm:$0xff] %v2754
        %2787 = vst [vmem:[#allocation4 + $0x3d0] sm:$0xff] %v2755
        %2788 = vst [vmem:[#allocation4 + $0x418] sm:$0xff] %v2756
        %2789 = vst [vmem:[#allocation4 + $0x460] sm:$0xff] %v2757
        %s2790 = scalar_lea.vmem [#allocation2], 24
        %v2791 = vld [vmem:[%s2790] sm:$0xf]
        %v2792 = vld [vmem:[%s2790 + $0x4] sm:$0xf]
        %v2793 = vld [vmem:[%s2790 + $0xc] sm:$0xf]
        %v2794 = vld [vmem:[%s2790 + $0x10] sm:$0xf]
        %v2795 = vld [vmem:[%s2790 + $0x18] sm:$0xf]
        %v2796 = vld [vmem:[%s2790 + $0x1c] sm:$0xf]
        %v2797 = vld [vmem:[%s2790 + $0x24] sm:$0xf]
        %v2798 = vld [vmem:[%s2790 + $0x28] sm:$0xf]
        %v2799 = vld [vmem:[%s2790 + $0x30] sm:$0xf]
        %v2800 = vld [vmem:[%s2790 + $0x34] sm:$0xf]
        %v2801 = vld [vmem:[%s2790 + $0x3c] sm:$0xf]
        %v2802 = vld [vmem:[%s2790 + $0x40] sm:$0xf]
        %v2803 = vld [vmem:[%s2790 + $0x48] sm:$0xf]
        %v2804 = vld [vmem:[%s2790 + $0x4c] sm:$0xf]
        %v2805 = vld [vmem:[%s2790 + $0x54] sm:$0xf]
        %v2806 = vld [vmem:[%s2790 + $0x58] sm:$0xf]
        %v2807 = vld [vmem:[%s2790 + $0x60] sm:$0xf]
        %v2808 = vld [vmem:[%s2790 + $0x64] sm:$0xf]
        %v2809 = vld [vmem:[%s2790 + $0x6c] sm:$0xf]
        %v2810 = vld [vmem:[%s2790 + $0x70] sm:$0xf]
        %v2811 = vld [vmem:[%s2790 + $0x78] sm:$0xf]
        %v2812 = vld [vmem:[%s2790 + $0x7c] sm:$0xf]
        %v2813 = vld [vmem:[%s2790 + $0x84] sm:$0xf]
        %v2814 = vld [vmem:[%s2790 + $0x88] sm:$0xf]
        %v2815 = vld [vmem:[%s2790 + $0x90] sm:$0xf]
        %v2816 = vld [vmem:[%s2790 + $0x94] sm:$0xf]
        %v2817 = vld [vmem:[%s2790 + $0x9c] sm:$0xf]
        %v2818 = vld [vmem:[%s2790 + $0xa0] sm:$0xf]
        %v2819 = vld [vmem:[%s2790 + $0xa8] sm:$0xf]
        %v2820 = vld [vmem:[%s2790 + $0xac] sm:$0xf]
        %v2821 = vld [vmem:[%s2790 + $0xb4] sm:$0xf]
        %v2822 = vld [vmem:[%s2790 + $0xb8] sm:$0xf]
        %v2855 = vunpack.c.l.b16 %v2791
        %v2856 = vunpack.c.l.b16 %v2792
        %v2857 = vunpack.c.l.b16 %v2793
        %v2858 = vunpack.c.l.b16 %v2794
        %v2859 = vunpack.c.l.b16 %v2795
        %v2860 = vunpack.c.l.b16 %v2796
        %v2861 = vunpack.c.l.b16 %v2797
        %v2862 = vunpack.c.l.b16 %v2798
        %v2863 = vunpack.c.l.b16 %v2799
        %v2864 = vunpack.c.l.b16 %v2800
        %v2865 = vunpack.c.l.b16 %v2801
        %v2866 = vunpack.c.l.b16 %v2802
        %v2867 = vunpack.c.l.b16 %v2803
        %v2868 = vunpack.c.l.b16 %v2804
        %v2869 = vunpack.c.l.b16 %v2805
        %v2870 = vunpack.c.l.b16 %v2806
        %v2871 = vunpack.c.l.b16 %v2807
        %v2872 = vunpack.c.l.b16 %v2808
        %v2873 = vunpack.c.l.b16 %v2809
        %v2874 = vunpack.c.l.b16 %v2810
        %v2875 = vunpack.c.l.b16 %v2811
        %v2876 = vunpack.c.l.b16 %v2812
        %v2877 = vunpack.c.l.b16 %v2813
        %v2878 = vunpack.c.l.b16 %v2814
        %v2879 = vunpack.c.l.b16 %v2815
        %v2880 = vunpack.c.l.b16 %v2816
        %v2881 = vunpack.c.l.b16 %v2817
        %v2882 = vunpack.c.l.b16 %v2818
        %v2883 = vunpack.c.l.b16 %v2819
        %v2884 = vunpack.c.l.b16 %v2820
        %v2885 = vunpack.c.l.b16 %v2821
        %v2886 = vunpack.c.l.b16 %v2822
        %v2887 = vpack.c.b16 %v2856, %v2855
        %v2888 = vpack.c.b16 %v2858, %v2857
        %v2889 = vpack.c.b16 %v2860, %v2859
        %v2890 = vpack.c.b16 %v2862, %v2861
        %v2891 = vpack.c.b16 %v2864, %v2863
        %v2892 = vpack.c.b16 %v2866, %v2865
        %v2893 = vpack.c.b16 %v2868, %v2867
        %v2894 = vpack.c.b16 %v2870, %v2869
        %v2895 = vpack.c.b16 %v2872, %v2871
        %v2896 = vpack.c.b16 %v2874, %v2873
        %v2897 = vpack.c.b16 %v2876, %v2875
        %v2898 = vpack.c.b16 %v2878, %v2877
        %v2899 = vpack.c.b16 %v2880, %v2879
        %v2900 = vpack.c.b16 %v2882, %v2881
        %v2901 = vpack.c.b16 %v2884, %v2883
        %v2902 = vpack.c.b16 %v2886, %v2885
        %2919 = vst [vmem:[#allocation4 + $0x30] sm:$0xff] %v2887
        %2920 = vst [vmem:[#allocation4 + $0x78] sm:$0xff] %v2888
        %2921 = vst [vmem:[#allocation4 + $0xc0] sm:$0xff] %v2889
        %2922 = vst [vmem:[#allocation4 + $0x108] sm:$0xff] %v2890
        %2923 = vst [vmem:[#allocation4 + $0x150] sm:$0xff] %v2891
        %2924 = vst [vmem:[#allocation4 + $0x198] sm:$0xff] %v2892
        %2925 = vst [vmem:[#allocation4 + $0x1e0] sm:$0xff] %v2893
        %2926 = vst [vmem:[#allocation4 + $0x228] sm:$0xff] %v2894
        %2927 = vst [vmem:[#allocation4 + $0x270] sm:$0xff] %v2895
        %2928 = vst [vmem:[#allocation4 + $0x2b8] sm:$0xff] %v2896
        %2929 = vst [vmem:[#allocation4 + $0x300] sm:$0xff] %v2897
        %2930 = vst [vmem:[#allocation4 + $0x348] sm:$0xff] %v2898
        %2931 = vst [vmem:[#allocation4 + $0x390] sm:$0xff] %v2899
        %2932 = vst [vmem:[#allocation4 + $0x3d8] sm:$0xff] %v2900
        %2933 = vst [vmem:[#allocation4 + $0x420] sm:$0xff] %v2901
        %2934 = vst [vmem:[#allocation4 + $0x468] sm:$0xff] %v2902
        %v2935 = vld [vmem:[%s2790] sm:$0xf]
        %v2936 = vld [vmem:[%s2790 + $0x4] sm:$0xf]
        %v2937 = vld [vmem:[%s2790 + $0x8] sm:$0x1]
        %v2938 = vld [vmem:[%s2790 + $0xc] sm:$0xf]
        %v2939 = vld [vmem:[%s2790 + $0x10] sm:$0xf]
        %v2940 = vld [vmem:[%s2790 + $0x14] sm:$0x1]
        %v2941 = vld [vmem:[%s2790 + $0x18] sm:$0xf]
        %v2942 = vld [vmem:[%s2790 + $0x1c] sm:$0xf]
        %v2943 = vld [vmem:[%s2790 + $0x20] sm:$0x1]
        %v2944 = vld [vmem:[%s2790 + $0x24] sm:$0xf]
        %v2945 = vld [vmem:[%s2790 + $0x28] sm:$0xf]
        %v2946 = vld [vmem:[%s2790 + $0x2c] sm:$0x1]
        %v2947 = vld [vmem:[%s2790 + $0x30] sm:$0xf]
        %v2948 = vld [vmem:[%s2790 + $0x34] sm:$0xf]
        %v2949 = vld [vmem:[%s2790 + $0x38] sm:$0x1]
        %v2950 = vld [vmem:[%s2790 + $0x3c] sm:$0xf]
        %v2951 = vld [vmem:[%s2790 + $0x40] sm:$0xf]
        %v2952 = vld [vmem:[%s2790 + $0x44] sm:$0x1]
        %v2953 = vld [vmem:[%s2790 + $0x48] sm:$0xf]
        %v2954 = vld [vmem:[%s2790 + $0x4c] sm:$0xf]
        %v2955 = vld [vmem:[%s2790 + $0x50] sm:$0x1]
        %v2956 = vld [vmem:[%s2790 + $0x54] sm:$0xf]
        %v2957 = vld [vmem:[%s2790 + $0x58] sm:$0xf]
        %v2958 = vld [vmem:[%s2790 + $0x5c] sm:$0x1]
        %v2959 = vld [vmem:[%s2790 + $0x60] sm:$0xf]
        %v2960 = vld [vmem:[%s2790 + $0x64] sm:$0xf]
        %v2961 = vld [vmem:[%s2790 + $0x68] sm:$0x1]
        %v2962 = vld [vmem:[%s2790 + $0x6c] sm:$0xf]
        %v2963 = vld [vmem:[%s2790 + $0x70] sm:$0xf]
        %v2964 = vld [vmem:[%s2790 + $0x74] sm:$0x1]
        %v2965 = vld [vmem:[%s2790 + $0x78] sm:$0xf]
        %v2966 = vld [vmem:[%s2790 + $0x7c] sm:$0xf]
        %v2967 = vld [vmem:[%s2790 + $0x80] sm:$0x1]
        %v2968 = vld [vmem:[%s2790 + $0x84] sm:$0xf]
        %v2969 = vld [vmem:[%s2790 + $0x88] sm:$0xf]
        %v2970 = vld [vmem:[%s2790 + $0x8c] sm:$0x1]
        %v2971 = vld [vmem:[%s2790 + $0x90] sm:$0xf]
        %v2972 = vld [vmem:[%s2790 + $0x94] sm:$0xf]
        %v2973 = vld [vmem:[%s2790 + $0x98] sm:$0x1]
        %v2974 = vld [vmem:[%s2790 + $0x9c] sm:$0xf]
        %v2975 = vld [vmem:[%s2790 + $0xa0] sm:$0xf]
        %v2976 = vld [vmem:[%s2790 + $0xa4] sm:$0x1]
        %v2977 = vld [vmem:[%s2790 + $0xa8] sm:$0xf]
        %v2978 = vld [vmem:[%s2790 + $0xac] sm:$0xf]
        %v2979 = vld [vmem:[%s2790 + $0xb0] sm:$0x1]
        %v2980 = vld [vmem:[%s2790 + $0xb4] sm:$0xf]
        %v2981 = vld [vmem:[%s2790 + $0xb8] sm:$0xf]
        %v2982 = vld [vmem:[%s2790 + $0xbc] sm:$0x1]
        %v2984 = vshrl.u32 %v2935, 16
        %v2986 = vrot.slane %v2984, 4
        %v2987 = vshll.u32 %v2935, 16
        %v2989 = vrot.slane %v2987, 5
        %v2990 = vor.u32 %v2986, %v2989
        %v2991 = vrot.slane %v2990, 4
        %v2993 = vshll.u32 %v2936, 16
        %v2995 = vrot.slane %v2993, 5
        %v2996 = vsel %vm1090, %v2991, %v2995
        %v2997 = vshrl.u32 %v2936, 16
        %v2999 = vrot.slane %v2997, 4
        %v3000 = vor.u32 %v2999, %v2995
        %v3001 = vrot.slane %v3000, 4
        %v3003 = vshll.u32 %v2937, 16
        %v3005 = vrot.slane %v3003, 5
        %v3006 = vsel %vm1090, %v3001, %v3005
        %v3008 = vshrl.u32 %v2938, 16
        %v3010 = vrot.slane %v3008, 4
        %v3011 = vshll.u32 %v2938, 16
        %v3013 = vrot.slane %v3011, 5
        %v3014 = vor.u32 %v3010, %v3013
        %v3015 = vrot.slane %v3014, 4
        %v3017 = vshll.u32 %v2939, 16
        %v3019 = vrot.slane %v3017, 5
        %v3020 = vsel %vm1090, %v3015, %v3019
        %v3021 = vshrl.u32 %v2939, 16
        %v3023 = vrot.slane %v3021, 4
        %v3024 = vor.u32 %v3023, %v3019
        %v3025 = vrot.slane %v3024, 4
        %v3027 = vshll.u32 %v2940, 16
        %v3029 = vrot.slane %v3027, 5
        %v3030 = vsel %vm1090, %v3025, %v3029
        %v3032 = vshrl.u32 %v2941, 16
        %v3034 = vrot.slane %v3032, 4
        %v3035 = vshll.u32 %v2941, 16
        %v3037 = vrot.slane %v3035, 5
        %v3038 = vor.u32 %v3034, %v3037
        %v3039 = vrot.slane %v3038, 4
        %v3041 = vshll.u32 %v2942, 16
        %v3043 = vrot.slane %v3041, 5
        %v3044 = vsel %vm1090, %v3039, %v3043
        %v3045 = vshrl.u32 %v2942, 16
        %v3047 = vrot.slane %v3045, 4
        %v3048 = vor.u32 %v3047, %v3043
        %v3049 = vrot.slane %v3048, 4
        %v3051 = vshll.u32 %v2943, 16
        %v3053 = vrot.slane %v3051, 5
        %v3054 = vsel %vm1090, %v3049, %v3053
        %v3056 = vshrl.u32 %v2944, 16
        %v3058 = vrot.slane %v3056, 4
        %v3059 = vshll.u32 %v2944, 16
        %v3061 = vrot.slane %v3059, 5
        %v3062 = vor.u32 %v3058, %v3061
        %v3063 = vrot.slane %v3062, 4
        %v3065 = vshll.u32 %v2945, 16
        %v3067 = vrot.slane %v3065, 5
        %v3068 = vsel %vm1090, %v3063, %v3067
        %v3069 = vshrl.u32 %v2945, 16
        %v3071 = vrot.slane %v3069, 4
        %v3072 = vor.u32 %v3071, %v3067
        %v3073 = vrot.slane %v3072, 4
        %v3075 = vshll.u32 %v2946, 16
        %v3077 = vrot.slane %v3075, 5
        %v3078 = vsel %vm1090, %v3073, %v3077
        %v3080 = vshrl.u32 %v2947, 16
        %v3082 = vrot.slane %v3080, 4
        %v3083 = vshll.u32 %v2947, 16
        %v3085 = vrot.slane %v3083, 5
        %v3086 = vor.u32 %v3082, %v3085
        %v3087 = vrot.slane %v3086, 4
        %v3089 = vshll.u32 %v2948, 16
        %v3091 = vrot.slane %v3089, 5
        %v3092 = vsel %vm1090, %v3087, %v3091
        %v3093 = vshrl.u32 %v2948, 16
        %v3095 = vrot.slane %v3093, 4
        %v3096 = vor.u32 %v3095, %v3091
        %v3097 = vrot.slane %v3096, 4
        %v3099 = vshll.u32 %v2949, 16
        %v3101 = vrot.slane %v3099, 5
        %v3102 = vsel %vm1090, %v3097, %v3101
        %v3104 = vshrl.u32 %v2950, 16
        %v3106 = vrot.slane %v3104, 4
        %v3107 = vshll.u32 %v2950, 16
        %v3109 = vrot.slane %v3107, 5
        %v3110 = vor.u32 %v3106, %v3109
        %v3111 = vrot.slane %v3110, 4
        %v3113 = vshll.u32 %v2951, 16
        %v3115 = vrot.slane %v3113, 5
        %v3116 = vsel %vm1090, %v3111, %v3115
        %v3117 = vshrl.u32 %v2951, 16
        %v3119 = vrot.slane %v3117, 4
        %v3120 = vor.u32 %v3119, %v3115
        %v3121 = vrot.slane %v3120, 4
        %v3123 = vshll.u32 %v2952, 16
        %v3125 = vrot.slane %v3123, 5
        %v3126 = vsel %vm1090, %v3121, %v3125
        %v3128 = vshrl.u32 %v2953, 16
        %v3130 = vrot.slane %v3128, 4
        %v3131 = vshll.u32 %v2953, 16
        %v3133 = vrot.slane %v3131, 5
        %v3134 = vor.u32 %v3130, %v3133
        %v3135 = vrot.slane %v3134, 4
        %v3137 = vshll.u32 %v2954, 16
        %v3139 = vrot.slane %v3137, 5
        %v3140 = vsel %vm1090, %v3135, %v3139
        %v3141 = vshrl.u32 %v2954, 16
        %v3143 = vrot.slane %v3141, 4
        %v3144 = vor.u32 %v3143, %v3139
        %v3145 = vrot.slane %v3144, 4
        %v3147 = vshll.u32 %v2955, 16
        %v3149 = vrot.slane %v3147, 5
        %v3150 = vsel %vm1090, %v3145, %v3149
        %v3152 = vshrl.u32 %v2956, 16
        %v3154 = vrot.slane %v3152, 4
        %v3155 = vshll.u32 %v2956, 16
        %v3157 = vrot.slane %v3155, 5
        %v3158 = vor.u32 %v3154, %v3157
        %v3159 = vrot.slane %v3158, 4
        %v3161 = vshll.u32 %v2957, 16
        %v3163 = vrot.slane %v3161, 5
        %v3164 = vsel %vm1090, %v3159, %v3163
        %v3165 = vshrl.u32 %v2957, 16
        %v3167 = vrot.slane %v3165, 4
        %v3168 = vor.u32 %v3167, %v3163
        %v3169 = vrot.slane %v3168, 4
        %v3171 = vshll.u32 %v2958, 16
        %v3173 = vrot.slane %v3171, 5
        %v3174 = vsel %vm1090, %v3169, %v3173
        %v3176 = vshrl.u32 %v2959, 16
        %v3178 = vrot.slane %v3176, 4
        %v3179 = vshll.u32 %v2959, 16
        %v3181 = vrot.slane %v3179, 5
        %v3182 = vor.u32 %v3178, %v3181
        %v3183 = vrot.slane %v3182, 4
        %v3185 = vshll.u32 %v2960, 16
        %v3187 = vrot.slane %v3185, 5
        %v3188 = vsel %vm1090, %v3183, %v3187
        %v3189 = vshrl.u32 %v2960, 16
        %v3191 = vrot.slane %v3189, 4
        %v3192 = vor.u32 %v3191, %v3187
        %v3193 = vrot.slane %v3192, 4
        %v3195 = vshll.u32 %v2961, 16
        %v3197 = vrot.slane %v3195, 5
        %v3198 = vsel %vm1090, %v3193, %v3197
        %v3200 = vshrl.u32 %v2962, 16
        %v3202 = vrot.slane %v3200, 4
        %v3203 = vshll.u32 %v2962, 16
        %v3205 = vrot.slane %v3203, 5
        %v3206 = vor.u32 %v3202, %v3205
        %v3207 = vrot.slane %v3206, 4
        %v3209 = vshll.u32 %v2963, 16
        %v3211 = vrot.slane %v3209, 5
        %v3212 = vsel %vm1090, %v3207, %v3211
        %v3213 = vshrl.u32 %v2963, 16
        %v3215 = vrot.slane %v3213, 4
        %v3216 = vor.u32 %v3215, %v3211
        %v3217 = vrot.slane %v3216, 4
        %v3219 = vshll.u32 %v2964, 16
        %v3221 = vrot.slane %v3219, 5
        %v3222 = vsel %vm1090, %v3217, %v3221
        %v3224 = vshrl.u32 %v2965, 16
        %v3226 = vrot.slane %v3224, 4
        %v3227 = vshll.u32 %v2965, 16
        %v3229 = vrot.slane %v3227, 5
        %v3230 = vor.u32 %v3226, %v3229
        %v3231 = vrot.slane %v3230, 4
        %v3233 = vshll.u32 %v2966, 16
        %v3235 = vrot.slane %v3233, 5
        %v3236 = vsel %vm1090, %v3231, %v3235
        %v3237 = vshrl.u32 %v2966, 16
        %v3239 = vrot.slane %v3237, 4
        %v3240 = vor.u32 %v3239, %v3235
        %v3241 = vrot.slane %v3240, 4
        %v3243 = vshll.u32 %v2967, 16
        %v3245 = vrot.slane %v3243, 5
        %v3246 = vsel %vm1090, %v3241, %v3245
        %v3248 = vshrl.u32 %v2968, 16
        %v3250 = vrot.slane %v3248, 4
        %v3251 = vshll.u32 %v2968, 16
        %v3253 = vrot.slane %v3251, 5
        %v3254 = vor.u32 %v3250, %v3253
        %v3255 = vrot.slane %v3254, 4
        %v3257 = vshll.u32 %v2969, 16
        %v3259 = vrot.slane %v3257, 5
        %v3260 = vsel %vm1090, %v3255, %v3259
        %v3261 = vshrl.u32 %v2969, 16
        %v3263 = vrot.slane %v3261, 4
        %v3264 = vor.u32 %v3263, %v3259
        %v3265 = vrot.slane %v3264, 4
        %v3267 = vshll.u32 %v2970, 16
        %v3269 = vrot.slane %v3267, 5
        %v3270 = vsel %vm1090, %v3265, %v3269
        %v3272 = vshrl.u32 %v2971, 16
        %v3274 = vrot.slane %v3272, 4
        %v3275 = vshll.u32 %v2971, 16
        %v3277 = vrot.slane %v3275, 5
        %v3278 = vor.u32 %v3274, %v3277
        %v3279 = vrot.slane %v3278, 4
        %v3281 = vshll.u32 %v2972, 16
        %v3283 = vrot.slane %v3281, 5
        %v3284 = vsel %vm1090, %v3279, %v3283
        %v3285 = vshrl.u32 %v2972, 16
        %v3287 = vrot.slane %v3285, 4
        %v3288 = vor.u32 %v3287, %v3283
        %v3289 = vrot.slane %v3288, 4
        %v3291 = vshll.u32 %v2973, 16
        %v3293 = vrot.slane %v3291, 5
        %v3294 = vsel %vm1090, %v3289, %v3293
        %v3296 = vshrl.u32 %v2974, 16
        %v3298 = vrot.slane %v3296, 4
        %v3299 = vshll.u32 %v2974, 16
        %v3301 = vrot.slane %v3299, 5
        %v3302 = vor.u32 %v3298, %v3301
        %v3303 = vrot.slane %v3302, 4
        %v3305 = vshll.u32 %v2975, 16
        %v3307 = vrot.slane %v3305, 5
        %v3308 = vsel %vm1090, %v3303, %v3307
        %v3309 = vshrl.u32 %v2975, 16
        %v3311 = vrot.slane %v3309, 4
        %v3312 = vor.u32 %v3311, %v3307
        %v3313 = vrot.slane %v3312, 4
        %v3315 = vshll.u32 %v2976, 16
        %v3317 = vrot.slane %v3315, 5
        %v3318 = vsel %vm1090, %v3313, %v3317
        %v3320 = vshrl.u32 %v2977, 16
        %v3322 = vrot.slane %v3320, 4
        %v3323 = vshll.u32 %v2977, 16
        %v3325 = vrot.slane %v3323, 5
        %v3326 = vor.u32 %v3322, %v3325
        %v3327 = vrot.slane %v3326, 4
        %v3329 = vshll.u32 %v2978, 16
        %v3331 = vrot.slane %v3329, 5
        %v3332 = vsel %vm1090, %v3327, %v3331
        %v3333 = vshrl.u32 %v2978, 16
        %v3335 = vrot.slane %v3333, 4
        %v3336 = vor.u32 %v3335, %v3331
        %v3337 = vrot.slane %v3336, 4
        %v3339 = vshll.u32 %v2979, 16
        %v3341 = vrot.slane %v3339, 5
        %v3342 = vsel %vm1090, %v3337, %v3341
        %v3344 = vshrl.u32 %v2980, 16
        %v3346 = vrot.slane %v3344, 4
        %v3347 = vshll.u32 %v2980, 16
        %v3349 = vrot.slane %v3347, 5
        %v3350 = vor.u32 %v3346, %v3349
        %v3351 = vrot.slane %v3350, 4
        %v3353 = vshll.u32 %v2981, 16
        %v3355 = vrot.slane %v3353, 5
        %v3356 = vsel %vm1090, %v3351, %v3355
        %v3357 = vshrl.u32 %v2981, 16
        %v3359 = vrot.slane %v3357, 4
        %v3360 = vor.u32 %v3359, %v3355
        %v3361 = vrot.slane %v3360, 4
        %v3363 = vshll.u32 %v2982, 16
        %v3365 = vrot.slane %v3363, 5
        %v3366 = vsel %vm1090, %v3361, %v3365
        %v3367 = vunpack.c.l.b16 %v2996
        %v3368 = vunpack.c.l.b16 %v3006
        %v3369 = vunpack.c.l.b16 %v3020
        %v3370 = vunpack.c.l.b16 %v3030
        %v3371 = vunpack.c.l.b16 %v3044
        %v3372 = vunpack.c.l.b16 %v3054
        %v3373 = vunpack.c.l.b16 %v3068
        %v3374 = vunpack.c.l.b16 %v3078
        %v3375 = vunpack.c.l.b16 %v3092
        %v3376 = vunpack.c.l.b16 %v3102
        %v3377 = vunpack.c.l.b16 %v3116
        %v3378 = vunpack.c.l.b16 %v3126
        %v3379 = vunpack.c.l.b16 %v3140
        %v3380 = vunpack.c.l.b16 %v3150
        %v3381 = vunpack.c.l.b16 %v3164
        %v3382 = vunpack.c.l.b16 %v3174
        %v3383 = vunpack.c.l.b16 %v3188
        %v3384 = vunpack.c.l.b16 %v3198
        %v3385 = vunpack.c.l.b16 %v3212
        %v3386 = vunpack.c.l.b16 %v3222
        %v3387 = vunpack.c.l.b16 %v3236
        %v3388 = vunpack.c.l.b16 %v3246
        %v3389 = vunpack.c.l.b16 %v3260
        %v3390 = vunpack.c.l.b16 %v3270
        %v3391 = vunpack.c.l.b16 %v3284
        %v3392 = vunpack.c.l.b16 %v3294
        %v3393 = vunpack.c.l.b16 %v3308
        %v3394 = vunpack.c.l.b16 %v3318
        %v3395 = vunpack.c.l.b16 %v3332
        %v3396 = vunpack.c.l.b16 %v3342
        %v3397 = vunpack.c.l.b16 %v3356
        %v3398 = vunpack.c.l.b16 %v3366
        %v3399 = vpack.c.b16 %v3368, %v3367
        %v3400 = vpack.c.b16 %v3370, %v3369
        %v3401 = vpack.c.b16 %v3372, %v3371
        %v3402 = vpack.c.b16 %v3374, %v3373
        %v3403 = vpack.c.b16 %v3376, %v3375
        %v3404 = vpack.c.b16 %v3378, %v3377
        %v3405 = vpack.c.b16 %v3380, %v3379
        %v3406 = vpack.c.b16 %v3382, %v3381
        %v3407 = vpack.c.b16 %v3384, %v3383
        %v3408 = vpack.c.b16 %v3386, %v3385
        %v3409 = vpack.c.b16 %v3388, %v3387
        %v3410 = vpack.c.b16 %v3390, %v3389
        %v3411 = vpack.c.b16 %v3392, %v3391
        %v3412 = vpack.c.b16 %v3394, %v3393
        %v3413 = vpack.c.b16 %v3396, %v3395
        %v3414 = vpack.c.b16 %v3398, %v3397
        %3431 = vst [vmem:[#allocation4 + $0x38] sm:$0xff] %v3399
        %3432 = vst [vmem:[#allocation4 + $0x80] sm:$0xff] %v3400
        %3433 = vst [vmem:[#allocation4 + $0xc8] sm:$0xff] %v3401
        %3434 = vst [vmem:[#allocation4 + $0x110] sm:$0xff] %v3402
        %3435 = vst [vmem:[#allocation4 + $0x158] sm:$0xff] %v3403
        %3436 = vst [vmem:[#allocation4 + $0x1a0] sm:$0xff] %v3404
        %3437 = vst [vmem:[#allocation4 + $0x1e8] sm:$0xff] %v3405
        %3438 = vst [vmem:[#allocation4 + $0x230] sm:$0xff] %v3406
        %3439 = vst [vmem:[#allocation4 + $0x278] sm:$0xff] %v3407
        %3440 = vst [vmem:[#allocation4 + $0x2c0] sm:$0xff] %v3408
        %3441 = vst [vmem:[#allocation4 + $0x308] sm:$0xff] %v3409
        %3442 = vst [vmem:[#allocation4 + $0x350] sm:$0xff] %v3410
        %3443 = vst [vmem:[#allocation4 + $0x398] sm:$0xff] %v3411
        %3444 = vst [vmem:[#allocation4 + $0x3e0] sm:$0xff] %v3412
        %3445 = vst [vmem:[#allocation4 + $0x428] sm:$0xff] %v3413
        %3446 = vst [vmem:[#allocation4 + $0x470] sm:$0xff] %v3414
        %v3447 = vld [vmem:[%s2790] sm:$0xe]
        %v3448 = vld [vmem:[%s2790 + $0x4] sm:$0xf]
        %v3449 = vld [vmem:[%s2790 + $0x8] sm:$0x1]
        %v3450 = vld [vmem:[%s2790 + $0xc] sm:$0xe]
        %v3451 = vld [vmem:[%s2790 + $0x10] sm:$0xf]
        %v3452 = vld [vmem:[%s2790 + $0x14] sm:$0x1]
        %v3453 = vld [vmem:[%s2790 + $0x18] sm:$0xe]
        %v3454 = vld [vmem:[%s2790 + $0x1c] sm:$0xf]
        %v3455 = vld [vmem:[%s2790 + $0x20] sm:$0x1]
        %v3456 = vld [vmem:[%s2790 + $0x24] sm:$0xe]
        %v3457 = vld [vmem:[%s2790 + $0x28] sm:$0xf]
        %v3458 = vld [vmem:[%s2790 + $0x2c] sm:$0x1]
        %v3459 = vld [vmem:[%s2790 + $0x30] sm:$0xe]
        %v3460 = vld [vmem:[%s2790 + $0x34] sm:$0xf]
        %v3461 = vld [vmem:[%s2790 + $0x38] sm:$0x1]
        %v3462 = vld [vmem:[%s2790 + $0x3c] sm:$0xe]
        %v3463 = vld [vmem:[%s2790 + $0x40] sm:$0xf]
        %v3464 = vld [vmem:[%s2790 + $0x44] sm:$0x1]
        %v3465 = vld [vmem:[%s2790 + $0x48] sm:$0xe]
        %v3466 = vld [vmem:[%s2790 + $0x4c] sm:$0xf]
        %v3467 = vld [vmem:[%s2790 + $0x50] sm:$0x1]
        %v3468 = vld [vmem:[%s2790 + $0x54] sm:$0xe]
        %v3469 = vld [vmem:[%s2790 + $0x58] sm:$0xf]
        %v3470 = vld [vmem:[%s2790 + $0x5c] sm:$0x1]
        %v3471 = vld [vmem:[%s2790 + $0x60] sm:$0xe]
        %v3472 = vld [vmem:[%s2790 + $0x64] sm:$0xf]
        %v3473 = vld [vmem:[%s2790 + $0x68] sm:$0x1]
        %v3474 = vld [vmem:[%s2790 + $0x6c] sm:$0xe]
        %v3475 = vld [vmem:[%s2790 + $0x70] sm:$0xf]
        %v3476 = vld [vmem:[%s2790 + $0x74] sm:$0x1]
        %v3477 = vld [vmem:[%s2790 + $0x78] sm:$0xe]
        %v3478 = vld [vmem:[%s2790 + $0x7c] sm:$0xf]
        %v3479 = vld [vmem:[%s2790 + $0x80] sm:$0x1]
        %v3480 = vld [vmem:[%s2790 + $0x84] sm:$0xe]
        %v3481 = vld [vmem:[%s2790 + $0x88] sm:$0xf]
        %v3482 = vld [vmem:[%s2790 + $0x8c] sm:$0x1]
        %v3483 = vld [vmem:[%s2790 + $0x90] sm:$0xe]
        %v3484 = vld [vmem:[%s2790 + $0x94] sm:$0xf]
        %v3485 = vld [vmem:[%s2790 + $0x98] sm:$0x1]
        %v3486 = vld [vmem:[%s2790 + $0x9c] sm:$0xe]
        %v3487 = vld [vmem:[%s2790 + $0xa0] sm:$0xf]
        %v3488 = vld [vmem:[%s2790 + $0xa4] sm:$0x1]
        %v3489 = vld [vmem:[%s2790 + $0xa8] sm:$0xe]
        %v3490 = vld [vmem:[%s2790 + $0xac] sm:$0xf]
        %v3491 = vld [vmem:[%s2790 + $0xb0] sm:$0x1]
        %v3492 = vld [vmem:[%s2790 + $0xb4] sm:$0xe]
        %v3493 = vld [vmem:[%s2790 + $0xb8] sm:$0xf]
        %v3494 = vld [vmem:[%s2790 + $0xbc] sm:$0x1]
        %v3543 = vrot.slane %v3447, 5
        %v3544 = vrot.slane %v3543, 4
        %v3545 = vrot.slane %v3448, 5
        %v3546 = vsel %vm1653, %v3544, %v3545
        %v3547 = vrot.slane %v3545, 4
        %v3548 = vrot.slane %v3449, 5
        %v3549 = vsel %vm1653, %v3547, %v3548
        %v3550 = vrot.slane %v3450, 5
        %v3551 = vrot.slane %v3550, 4
        %v3552 = vrot.slane %v3451, 5
        %v3553 = vsel %vm1653, %v3551, %v3552
        %v3554 = vrot.slane %v3552, 4
        %v3555 = vrot.slane %v3452, 5
        %v3556 = vsel %vm1653, %v3554, %v3555
        %v3557 = vrot.slane %v3453, 5
        %v3558 = vrot.slane %v3557, 4
        %v3559 = vrot.slane %v3454, 5
        %v3560 = vsel %vm1653, %v3558, %v3559
        %v3561 = vrot.slane %v3559, 4
        %v3562 = vrot.slane %v3455, 5
        %v3563 = vsel %vm1653, %v3561, %v3562
        %v3564 = vrot.slane %v3456, 5
        %v3565 = vrot.slane %v3564, 4
        %v3566 = vrot.slane %v3457, 5
        %v3567 = vsel %vm1653, %v3565, %v3566
        %v3568 = vrot.slane %v3566, 4
        %v3569 = vrot.slane %v3458, 5
        %v3570 = vsel %vm1653, %v3568, %v3569
        %v3571 = vrot.slane %v3459, 5
        %v3572 = vrot.slane %v3571, 4
        %v3573 = vrot.slane %v3460, 5
        %v3574 = vsel %vm1653, %v3572, %v3573
        %v3575 = vrot.slane %v3573, 4
        %v3576 = vrot.slane %v3461, 5
        %v3577 = vsel %vm1653, %v3575, %v3576
        %v3578 = vrot.slane %v3462, 5
        %v3579 = vrot.slane %v3578, 4
        %v3580 = vrot.slane %v3463, 5
        %v3581 = vsel %vm1653, %v3579, %v3580
        %v3582 = vrot.slane %v3580, 4
        %v3583 = vrot.slane %v3464, 5
        %v3584 = vsel %vm1653, %v3582, %v3583
        %v3585 = vrot.slane %v3465, 5
        %v3586 = vrot.slane %v3585, 4
        %v3587 = vrot.slane %v3466, 5
        %v3588 = vsel %vm1653, %v3586, %v3587
        %v3589 = vrot.slane %v3587, 4
        %v3590 = vrot.slane %v3467, 5
        %v3591 = vsel %vm1653, %v3589, %v3590
        %v3592 = vrot.slane %v3468, 5
        %v3593 = vrot.slane %v3592, 4
        %v3594 = vrot.slane %v3469, 5
        %v3595 = vsel %vm1653, %v3593, %v3594
        %v3596 = vrot.slane %v3594, 4
        %v3597 = vrot.slane %v3470, 5
        %v3598 = vsel %vm1653, %v3596, %v3597
        %v3599 = vrot.slane %v3471, 5
        %v3600 = vrot.slane %v3599, 4
        %v3601 = vrot.slane %v3472, 5
        %v3602 = vsel %vm1653, %v3600, %v3601
        %v3603 = vrot.slane %v3601, 4
        %v3604 = vrot.slane %v3473, 5
        %v3605 = vsel %vm1653, %v3603, %v3604
        %v3606 = vrot.slane %v3474, 5
        %v3607 = vrot.slane %v3606, 4
        %v3608 = vrot.slane %v3475, 5
        %v3609 = vsel %vm1653, %v3607, %v3608
        %v3610 = vrot.slane %v3608, 4
        %v3611 = vrot.slane %v3476, 5
        %v3612 = vsel %vm1653, %v3610, %v3611
        %v3613 = vrot.slane %v3477, 5
        %v3614 = vrot.slane %v3613, 4
        %v3615 = vrot.slane %v3478, 5
        %v3616 = vsel %vm1653, %v3614, %v3615
        %v3617 = vrot.slane %v3615, 4
        %v3618 = vrot.slane %v3479, 5
        %v3619 = vsel %vm1653, %v3617, %v3618
        %v3620 = vrot.slane %v3480, 5
        %v3621 = vrot.slane %v3620, 4
        %v3622 = vrot.slane %v3481, 5
        %v3623 = vsel %vm1653, %v3621, %v3622
        %v3624 = vrot.slane %v3622, 4
        %v3625 = vrot.slane %v3482, 5
        %v3626 = vsel %vm1653, %v3624, %v3625
        %v3627 = vrot.slane %v3483, 5
        %v3628 = vrot.slane %v3627, 4
        %v3629 = vrot.slane %v3484, 5
        %v3630 = vsel %vm1653, %v3628, %v3629
        %v3631 = vrot.slane %v3629, 4
        %v3632 = vrot.slane %v3485, 5
        %v3633 = vsel %vm1653, %v3631, %v3632
        %v3634 = vrot.slane %v3486, 5
        %v3635 = vrot.slane %v3634, 4
        %v3636 = vrot.slane %v3487, 5
        %v3637 = vsel %vm1653, %v3635, %v3636
        %v3638 = vrot.slane %v3636, 4
        %v3639 = vrot.slane %v3488, 5
        %v3640 = vsel %vm1653, %v3638, %v3639
        %v3641 = vrot.slane %v3489, 5
        %v3642 = vrot.slane %v3641, 4
        %v3643 = vrot.slane %v3490, 5
        %v3644 = vsel %vm1653, %v3642, %v3643
        %v3645 = vrot.slane %v3643, 4
        %v3646 = vrot.slane %v3491, 5
        %v3647 = vsel %vm1653, %v3645, %v3646
        %v3648 = vrot.slane %v3492, 5
        %v3649 = vrot.slane %v3648, 4
        %v3650 = vrot.slane %v3493, 5
        %v3651 = vsel %vm1653, %v3649, %v3650
        %v3652 = vrot.slane %v3650, 4
        %v3653 = vrot.slane %v3494, 5
        %v3654 = vsel %vm1653, %v3652, %v3653
        %v3655 = vunpack.c.l.b16 %v3546
        %v3656 = vunpack.c.l.b16 %v3549
        %v3657 = vunpack.c.l.b16 %v3553
        %v3658 = vunpack.c.l.b16 %v3556
        %v3659 = vunpack.c.l.b16 %v3560
        %v3660 = vunpack.c.l.b16 %v3563
        %v3661 = vunpack.c.l.b16 %v3567
        %v3662 = vunpack.c.l.b16 %v3570
        %v3663 = vunpack.c.l.b16 %v3574
        %v3664 = vunpack.c.l.b16 %v3577
        %v3665 = vunpack.c.l.b16 %v3581
        %v3666 = vunpack.c.l.b16 %v3584
        %v3667 = vunpack.c.l.b16 %v3588
        %v3668 = vunpack.c.l.b16 %v3591
        %v3669 = vunpack.c.l.b16 %v3595
        %v3670 = vunpack.c.l.b16 %v3598
        %v3671 = vunpack.c.l.b16 %v3602
        %v3672 = vunpack.c.l.b16 %v3605
        %v3673 = vunpack.c.l.b16 %v3609
        %v3674 = vunpack.c.l.b16 %v3612
        %v3675 = vunpack.c.l.b16 %v3616
        %v3676 = vunpack.c.l.b16 %v3619
        %v3677 = vunpack.c.l.b16 %v3623
        %v3678 = vunpack.c.l.b16 %v3626
        %v3679 = vunpack.c.l.b16 %v3630
        %v3680 = vunpack.c.l.b16 %v3633
        %v3681 = vunpack.c.l.b16 %v3637
        %v3682 = vunpack.c.l.b16 %v3640
        %v3683 = vunpack.c.l.b16 %v3644
        %v3684 = vunpack.c.l.b16 %v3647
        %v3685 = vunpack.c.l.b16 %v3651
        %v3686 = vunpack.c.l.b16 %v3654
        %v3687 = vpack.c.b16 %v3656, %v3655
        %v3688 = vpack.c.b16 %v3658, %v3657
        %v3689 = vpack.c.b16 %v3660, %v3659
        %v3690 = vpack.c.b16 %v3662, %v3661
        %v3691 = vpack.c.b16 %v3664, %v3663
        %v3692 = vpack.c.b16 %v3666, %v3665
        %v3693 = vpack.c.b16 %v3668, %v3667
        %v3694 = vpack.c.b16 %v3670, %v3669
        %v3695 = vpack.c.b16 %v3672, %v3671
        %v3696 = vpack.c.b16 %v3674, %v3673
        %v3697 = vpack.c.b16 %v3676, %v3675
        %v3698 = vpack.c.b16 %v3678, %v3677
        %v3699 = vpack.c.b16 %v3680, %v3679
        %v3700 = vpack.c.b16 %v3682, %v3681
        %v3701 = vpack.c.b16 %v3684, %v3683
        %v3702 = vpack.c.b16 %v3686, %v3685
        %3719 = vst [vmem:[#allocation4 + $0x40] sm:$0xff] %v3687
        %3720 = vst [vmem:[#allocation4 + $0x88] sm:$0xff] %v3688
        %3721 = vst [vmem:[#allocation4 + $0xd0] sm:$0xff] %v3689
        %3722 = vst [vmem:[#allocation4 + $0x118] sm:$0xff] %v3690
        %3723 = vst [vmem:[#allocation4 + $0x160] sm:$0xff] %v3691
        %3724 = vst [vmem:[#allocation4 + $0x1a8] sm:$0xff] %v3692
        %3725 = vst [vmem:[#allocation4 + $0x1f0] sm:$0xff] %v3693
        %3726 = vst [vmem:[#allocation4 + $0x238] sm:$0xff] %v3694
        %3727 = vst [vmem:[#allocation4 + $0x280] sm:$0xff] %v3695
        %3728 = vst [vmem:[#allocation4 + $0x2c8] sm:$0xff] %v3696
        %3729 = vst [vmem:[#allocation4 + $0x310] sm:$0xff] %v3697
        %3730 = vst [vmem:[#allocation4 + $0x358] sm:$0xff] %v3698
        %3731 = vst [vmem:[#allocation4 + $0x3a0] sm:$0xff] %v3699
        %3732 = vst [vmem:[#allocation4 + $0x3e8] sm:$0xff] %v3700
        %3733 = vst [vmem:[#allocation4 + $0x430] sm:$0xff] %v3701
        %3734 = vst [vmem:[#allocation4 + $0x478] sm:$0xff] %v3702
        %v3735 = vld [vmem:[#allocation4] sm:$0xff]
        %v3736 = vld [vmem:[#allocation4 + $0x8] sm:$0xff]
        %v3737 = vld [vmem:[#allocation4 + $0x10] sm:$0xff]
        %v3738 = vld [vmem:[#allocation4 + $0x18] sm:$0xff]
        %v3739 = vld [vmem:[#allocation4 + $0x20] sm:$0xff]
        %v3740 = vld [vmem:[#allocation4 + $0x28] sm:$0xff]
        %v3741 = vld [vmem:[#allocation4 + $0x30] sm:$0xff]
        %v3742 = vld [vmem:[#allocation4 + $0x38] sm:$0xff]
        %v3743 = vld [vmem:[#allocation4 + $0x40] sm:$0xff]
        %v3744 = vld [vmem:[#allocation4 + $0x48] sm:$0xff]
        %v3745 = vld [vmem:[#allocation4 + $0x50] sm:$0xff]
        %v3746 = vld [vmem:[#allocation4 + $0x58] sm:$0xff]
        %v3747 = vld [vmem:[#allocation4 + $0x60] sm:$0xff]
        %v3748 = vld [vmem:[#allocation4 + $0x68] sm:$0xff]
        %v3749 = vld [vmem:[#allocation4 + $0x70] sm:$0xff]
        %v3750 = vld [vmem:[#allocation4 + $0x78] sm:$0xff]
        %v3751 = vld [vmem:[#allocation4 + $0x80] sm:$0xff]
        %v3752 = vld [vmem:[#allocation4 + $0x88] sm:$0xff]
        %v3753 = vld [vmem:[#allocation4 + $0x90] sm:$0xff]
        %v3754 = vld [vmem:[#allocation4 + $0x98] sm:$0xff]
        %v3755 = vld [vmem:[#allocation4 + $0xa0] sm:$0xff]
        %v3756 = vld [vmem:[#allocation4 + $0xa8] sm:$0xff]
        %v3757 = vld [vmem:[#allocation4 + $0xb0] sm:$0xff]
        %v3758 = vld [vmem:[#allocation4 + $0xb8] sm:$0xff]
        %v3759 = vld [vmem:[#allocation4 + $0xc0] sm:$0xff]
        %v3760 = vld [vmem:[#allocation4 + $0xc8] sm:$0xff]
        %v3761 = vld [vmem:[#allocation4 + $0xd0] sm:$0xff]
        %v3762 = vld [vmem:[#allocation4 + $0xd8] sm:$0xff]
        %v3763 = vld [vmem:[#allocation4 + $0xe0] sm:$0xff]
        %v3764 = vld [vmem:[#allocation4 + $0xe8] sm:$0xff]
        %v3765 = vld [vmem:[#allocation4 + $0xf0] sm:$0xff]
        %v3766 = vld [vmem:[#allocation4 + $0xf8] sm:$0xff]
        %v3767 = vld [vmem:[#allocation4 + $0x100] sm:$0xff]
        %v3768 = vld [vmem:[#allocation4 + $0x108] sm:$0xff]
        %v3769 = vld [vmem:[#allocation4 + $0x110] sm:$0xff]
        %v3770 = vld [vmem:[#allocation4 + $0x118] sm:$0xff]
        %v3771 = vld [vmem:[#allocation4 + $0x120] sm:$0xff]
        %v3772 = vld [vmem:[#allocation4 + $0x128] sm:$0xff]
        %v3773 = vld [vmem:[#allocation4 + $0x130] sm:$0xff]
        %v3774 = vld [vmem:[#allocation4 + $0x138] sm:$0xff]
        %v3775 = vld [vmem:[#allocation4 + $0x140] sm:$0xff]
        %v3776 = vld [vmem:[#allocation4 + $0x148] sm:$0xff]
        %v3777 = vld [vmem:[#allocation4 + $0x150] sm:$0xff]
        %v3778 = vld [vmem:[#allocation4 + $0x158] sm:$0xff]
        %v3779 = vld [vmem:[#allocation4 + $0x160] sm:$0xff]
        %v3780 = vld [vmem:[#allocation4 + $0x168] sm:$0xff]
        %v3781 = vld [vmem:[#allocation4 + $0x170] sm:$0xff]
        %v3782 = vld [vmem:[#allocation4 + $0x178] sm:$0xff]
        %v3783 = vld [vmem:[#allocation4 + $0x180] sm:$0xff]
        %v3784 = vld [vmem:[#allocation4 + $0x188] sm:$0xff]
        %v3785 = vld [vmem:[#allocation4 + $0x190] sm:$0xff]
        %v3786 = vld [vmem:[#allocation4 + $0x198] sm:$0xff]
        %v3787 = vld [vmem:[#allocation4 + $0x1a0] sm:$0xff]
        %v3788 = vld [vmem:[#allocation4 + $0x1a8] sm:$0xff]
        %v3789 = vld [vmem:[#allocation4 + $0x1b0] sm:$0xff]
        %v3790 = vld [vmem:[#allocation4 + $0x1b8] sm:$0xff]
        %v3791 = vld [vmem:[#allocation4 + $0x1c0] sm:$0xff]
        %v3792 = vld [vmem:[#allocation4 + $0x1c8] sm:$0xff]
        %v3793 = vld [vmem:[#allocation4 + $0x1d0] sm:$0xff]
        %v3794 = vld [vmem:[#allocation4 + $0x1d8] sm:$0xff]
        %v3795 = vld [vmem:[#allocation4 + $0x1e0] sm:$0xff]
        %v3796 = vld [vmem:[#allocation4 + $0x1e8] sm:$0xff]
        %v3797 = vld [vmem:[#allocation4 + $0x1f0] sm:$0xff]
        %v3798 = vld [vmem:[#allocation4 + $0x1f8] sm:$0xff]
        %v3799 = vld [vmem:[#allocation4 + $0x200] sm:$0xff]
        %v3800 = vld [vmem:[#allocation4 + $0x208] sm:$0xff]
        %v3801 = vld [vmem:[#allocation4 + $0x210] sm:$0xff]
        %v3802 = vld [vmem:[#allocation4 + $0x218] sm:$0xff]
        %v3803 = vld [vmem:[#allocation4 + $0x220] sm:$0xff]
        %v3804 = vld [vmem:[#allocation4 + $0x228] sm:$0xff]
        %v3805 = vld [vmem:[#allocation4 + $0x230] sm:$0xff]
        %v3806 = vld [vmem:[#allocation4 + $0x238] sm:$0xff]
        %v3807 = vld [vmem:[#allocation4 + $0x240] sm:$0xff]
        %v3808 = vld [vmem:[#allocation4 + $0x248] sm:$0xff]
        %v3809 = vld [vmem:[#allocation4 + $0x250] sm:$0xff]
        %v3810 = vld [vmem:[#allocation4 + $0x258] sm:$0xff]
        %v3811 = vld [vmem:[#allocation4 + $0x260] sm:$0xff]
        %v3812 = vld [vmem:[#allocation4 + $0x268] sm:$0xff]
        %v3813 = vld [vmem:[#allocation4 + $0x270] sm:$0xff]
        %v3814 = vld [vmem:[#allocation4 + $0x278] sm:$0xff]
        %v3815 = vld [vmem:[#allocation4 + $0x280] sm:$0xff]
        %v3816 = vld [vmem:[#allocation4 + $0x288] sm:$0xff]
        %v3817 = vld [vmem:[#allocation4 + $0x290] sm:$0xff]
        %v3818 = vld [vmem:[#allocation4 + $0x298] sm:$0xff]
        %v3819 = vld [vmem:[#allocation4 + $0x2a0] sm:$0xff]
        %v3820 = vld [vmem:[#allocation4 + $0x2a8] sm:$0xff]
        %v3821 = vld [vmem:[#allocation4 + $0x2b0] sm:$0xff]
        %v3822 = vld [vmem:[#allocation4 + $0x2b8] sm:$0xff]
        %v3823 = vld [vmem:[#allocation4 + $0x2c0] sm:$0xff]
        %v3824 = vld [vmem:[#allocation4 + $0x2c8] sm:$0xff]
        %v3825 = vld [vmem:[#allocation4 + $0x2d0] sm:$0xff]
        %v3826 = vld [vmem:[#allocation4 + $0x2d8] sm:$0xff]
        %v3827 = vld [vmem:[#allocation4 + $0x2e0] sm:$0xff]
        %v3828 = vld [vmem:[#allocation4 + $0x2e8] sm:$0xff]
        %v3829 = vld [vmem:[#allocation4 + $0x2f0] sm:$0xff]
        %v3830 = vld [vmem:[#allocation4 + $0x2f8] sm:$0xff]
        %v3831 = vld [vmem:[#allocation4 + $0x300] sm:$0xff]
        %v3832 = vld [vmem:[#allocation4 + $0x308] sm:$0xff]
        %v3833 = vld [vmem:[#allocation4 + $0x310] sm:$0xff]
        %v3834 = vld [vmem:[#allocation4 + $0x318] sm:$0xff]
        %v3835 = vld [vmem:[#allocation4 + $0x320] sm:$0xff]
        %v3836 = vld [vmem:[#allocation4 + $0x328] sm:$0xff]
        %v3837 = vld [vmem:[#allocation4 + $0x330] sm:$0xff]
        %v3838 = vld [vmem:[#allocation4 + $0x338] sm:$0xff]
        %v3839 = vld [vmem:[#allocation4 + $0x340] sm:$0xff]
        %v3840 = vld [vmem:[#allocation4 + $0x348] sm:$0xff]
        %v3841 = vld [vmem:[#allocation4 + $0x350] sm:$0xff]
        %v3842 = vld [vmem:[#allocation4 + $0x358] sm:$0xff]
        %v3843 = vld [vmem:[#allocation4 + $0x360] sm:$0xff]
        %v3844 = vld [vmem:[#allocation4 + $0x368] sm:$0xff]
        %v3845 = vld [vmem:[#allocation4 + $0x370] sm:$0xff]
        %v3846 = vld [vmem:[#allocation4 + $0x378] sm:$0xff]
        %v3847 = vld [vmem:[#allocation4 + $0x380] sm:$0xff]
        %v3848 = vld [vmem:[#allocation4 + $0x388] sm:$0xff]
        %v3849 = vld [vmem:[#allocation4 + $0x390] sm:$0xff]
        %v3850 = vld [vmem:[#allocation4 + $0x398] sm:$0xff]
        %v3851 = vld [vmem:[#allocation4 + $0x3a0] sm:$0xff]
        %v3852 = vld [vmem:[#allocation4 + $0x3a8] sm:$0xff]
        %v3853 = vld [vmem:[#allocation4 + $0x3b0] sm:$0xff]
        %v3854 = vld [vmem:[#allocation4 + $0x3b8] sm:$0xff]
        %v3855 = vld [vmem:[#allocation4 + $0x3c0] sm:$0xff]
        %v3856 = vld [vmem:[#allocation4 + $0x3c8] sm:$0xff]
        %v3857 = vld [vmem:[#allocation4 + $0x3d0] sm:$0xff]
        %v3858 = vld [vmem:[#allocation4 + $0x3d8] sm:$0xff]
        %v3859 = vld [vmem:[#allocation4 + $0x3e0] sm:$0xff]
        %v3860 = vld [vmem:[#allocation4 + $0x3e8] sm:$0xff]
        %v3861 = vld [vmem:[#allocation4 + $0x3f0] sm:$0xff]
        %v3862 = vld [vmem:[#allocation4 + $0x3f8] sm:$0xff]
        %v3863 = vld [vmem:[#allocation4 + $0x400] sm:$0xff]
        %v3864 = vld [vmem:[#allocation4 + $0x408] sm:$0xff]
        %v3865 = vld [vmem:[#allocation4 + $0x410] sm:$0xff]
        %v3866 = vld [vmem:[#allocation4 + $0x418] sm:$0xff]
        %v3867 = vld [vmem:[#allocation4 + $0x420] sm:$0xff]
        %v3868 = vld [vmem:[#allocation4 + $0x428] sm:$0xff]
        %v3869 = vld [vmem:[#allocation4 + $0x430] sm:$0xff]
        %v3870 = vld [vmem:[#allocation4 + $0x438] sm:$0xff]
        %v3871 = vld [vmem:[#allocation4 + $0x440] sm:$0xff]
        %v3872 = vld [vmem:[#allocation4 + $0x448] sm:$0xff]
        %v3873 = vld [vmem:[#allocation4 + $0x450] sm:$0xff]
        %v3874 = vld [vmem:[#allocation4 + $0x458] sm:$0xff]
        %v3875 = vld [vmem:[#allocation4 + $0x460] sm:$0xff]
        %v3876 = vld [vmem:[#allocation4 + $0x468] sm:$0xff]
        %v3877 = vld [vmem:[#allocation4 + $0x470] sm:$0xff]
        %v3878 = vld [vmem:[#allocation4 + $0x478] sm:$0xff]
        %v3879 = vld [vmem:[#allocation8] sm:$0xf]
        %v3880 = vld [vmem:[#allocation8 + $0x4] sm:$0xf]
        %v3881 = vld [vmem:[#allocation8 + $0x8] sm:$0xf]
        %v3882 = vld [vmem:[#allocation8 + $0xc] sm:$0xf]
        %v3883 = vld [vmem:[#allocation8 + $0x10] sm:$0xf]
        %v3884 = vld [vmem:[#allocation8 + $0x14] sm:$0xf]
        %v3885 = vld [vmem:[#allocation8 + $0x18] sm:$0xf]
        %v3886 = vld [vmem:[#allocation8 + $0x1c] sm:$0xf]
        %v3887 = vld [vmem:[#allocation8 + $0x20] sm:$0xf]
        %v3888 = vld [vmem:[#allocation8 + $0x24] sm:$0xf]
        %v3889 = vld [vmem:[#allocation8 + $0x28] sm:$0xf]
        %v3890 = vld [vmem:[#allocation8 + $0x2c] sm:$0xf]
        %v3891 = vld [vmem:[#allocation8 + $0x30] sm:$0xf]
        %v3892 = vld [vmem:[#allocation8 + $0x34] sm:$0xf]
        %v3893 = vld [vmem:[#allocation8 + $0x38] sm:$0xf]
        %v3894 = vld [vmem:[#allocation8 + $0x3c] sm:$0xf]
        %v3895 = vld [vmem:[#allocation8 + $0x40] sm:$0xf]
        %v3896 = vld [vmem:[#allocation8 + $0x44] sm:$0xf]
        %v3897 = vld [vmem:[#allocation8 + $0x48] sm:$0xf]
        %v3898 = vld [vmem:[#allocation8 + $0x4c] sm:$0xf]
        %v3899 = vld [vmem:[#allocation8 + $0x50] sm:$0xf]
        %v3900 = vld [vmem:[#allocation8 + $0x54] sm:$0xf]
        %v3901 = vld [vmem:[#allocation8 + $0x58] sm:$0xf]
        %v3902 = vld [vmem:[#allocation8 + $0x5c] sm:$0xf]
        %v3903 = vld [vmem:[#allocation8 + $0x60] sm:$0xf]
        %v3904 = vld [vmem:[#allocation8 + $0x64] sm:$0xf]
        %v3905 = vld [vmem:[#allocation8 + $0x68] sm:$0xf]
        %v3906 = vld [vmem:[#allocation8 + $0x6c] sm:$0xf]
        %v3907 = vld [vmem:[#allocation8 + $0x70] sm:$0xf]
        %v3908 = vld [vmem:[#allocation8 + $0x74] sm:$0xf]
        %v3909 = vld [vmem:[#allocation8 + $0x78] sm:$0xf]
        %v3910 = vld [vmem:[#allocation8 + $0x7c] sm:$0xf]
        %v3911 = vld [vmem:[#allocation8 + $0x80] sm:$0xf]
        %v3912 = vld [vmem:[#allocation8 + $0x84] sm:$0xf]
        %v3913 = vld [vmem:[#allocation8 + $0x88] sm:$0xf]
        %v3914 = vld [vmem:[#allocation8 + $0x8c] sm:$0xf]
        %v3915 = vld [vmem:[#allocation8 + $0x90] sm:$0xf]
        %v3916 = vld [vmem:[#allocation8 + $0x94] sm:$0xf]
        %v3917 = vld [vmem:[#allocation8 + $0x98] sm:$0xf]
        %v3918 = vld [vmem:[#allocation8 + $0x9c] sm:$0xf]
        %v3919 = vld [vmem:[#allocation8 + $0xa0] sm:$0xf]
        %v3920 = vld [vmem:[#allocation8 + $0xa4] sm:$0xf]
        %v3921 = vld [vmem:[#allocation8 + $0xa8] sm:$0xf]
        %v3922 = vld [vmem:[#allocation8 + $0xac] sm:$0xf]
        %v3923 = vld [vmem:[#allocation8 + $0xb0] sm:$0xf]
        %v3924 = vld [vmem:[#allocation8 + $0xb4] sm:$0xf]
        %v3925 = vld [vmem:[#allocation8 + $0xb8] sm:$0xf]
        %v3926 = vld [vmem:[#allocation8 + $0xbc] sm:$0xf]
        %v3927 = vld [vmem:[#allocation8 + $0xc0] sm:$0xf]
        %v3928 = vld [vmem:[#allocation8 + $0xc4] sm:$0xf]
        %v3929 = vld [vmem:[#allocation8 + $0xc8] sm:$0xf]
        %v3930 = vld [vmem:[#allocation8 + $0xcc] sm:$0xf]
        %v3931 = vld [vmem:[#allocation8 + $0xd0] sm:$0xf]
        %v3932 = vld [vmem:[#allocation8 + $0xd4] sm:$0xf]
        %v3933 = vld [vmem:[#allocation8 + $0xd8] sm:$0xf]
        %v3934 = vld [vmem:[#allocation8 + $0xdc] sm:$0xf]
        %v3935 = vld [vmem:[#allocation8 + $0xe0] sm:$0xf]
        %v3936 = vld [vmem:[#allocation8 + $0xe4] sm:$0xf]
        %v3937 = vld [vmem:[#allocation8 + $0xe8] sm:$0xf]
        %v3938 = vld [vmem:[#allocation8 + $0xec] sm:$0xf]
        %v3939 = vld [vmem:[#allocation8 + $0xf0] sm:$0xf]
        %v3940 = vld [vmem:[#allocation8 + $0xf4] sm:$0xf]
        %v3941 = vld [vmem:[#allocation8 + $0xf8] sm:$0xf]
        %v3942 = vld [vmem:[#allocation8 + $0xfc] sm:$0xf]
        %v3943 = vld [vmem:[#allocation8 + $0x100] sm:$0xf]
        %v3944 = vld [vmem:[#allocation8 + $0x104] sm:$0xf]
        %v3945 = vld [vmem:[#allocation8 + $0x108] sm:$0xf]
        %v3946 = vld [vmem:[#allocation8 + $0x10c] sm:$0xf]
        %v3947 = vld [vmem:[#allocation8 + $0x110] sm:$0xf]
        %v3948 = vld [vmem:[#allocation8 + $0x114] sm:$0xf]
        %v3949 = vld [vmem:[#allocation8 + $0x118] sm:$0xf]
        %v3950 = vld [vmem:[#allocation8 + $0x11c] sm:$0xf]
        %v3951 = vld [vmem:[#allocation8 + $0x120] sm:$0xf]
        %v3952 = vld [vmem:[#allocation8 + $0x124] sm:$0xf]
        %v3953 = vld [vmem:[#allocation8 + $0x128] sm:$0xf]
        %v3954 = vld [vmem:[#allocation8 + $0x12c] sm:$0xf]
        %v3955 = vld [vmem:[#allocation8 + $0x130] sm:$0xf]
        %v3956 = vld [vmem:[#allocation8 + $0x134] sm:$0xf]
        %v3957 = vld [vmem:[#allocation8 + $0x138] sm:$0xf]
        %v3958 = vld [vmem:[#allocation8 + $0x13c] sm:$0xf]
        %v3959 = vld [vmem:[#allocation8 + $0x140] sm:$0xf]
        %v3960 = vld [vmem:[#allocation8 + $0x144] sm:$0xf]
        %v3961 = vld [vmem:[#allocation8 + $0x148] sm:$0xf]
        %v3962 = vld [vmem:[#allocation8 + $0x14c] sm:$0xf]
        %v3963 = vld [vmem:[#allocation8 + $0x150] sm:$0xf]
        %v3964 = vld [vmem:[#allocation8 + $0x154] sm:$0xf]
        %v3965 = vld [vmem:[#allocation8 + $0x158] sm:$0xf]
        %v3966 = vld [vmem:[#allocation8 + $0x15c] sm:$0xf]
        %v3967 = vld [vmem:[#allocation8 + $0x160] sm:$0xf]
        %v3968 = vld [vmem:[#allocation8 + $0x164] sm:$0xf]
        %v3969 = vld [vmem:[#allocation8 + $0x168] sm:$0xf]
        %v3970 = vld [vmem:[#allocation8 + $0x16c] sm:$0xf]
        %v3971 = vld [vmem:[#allocation8 + $0x170] sm:$0xf]
        %v3972 = vld [vmem:[#allocation8 + $0x174] sm:$0xf]
        %v3973 = vld [vmem:[#allocation8 + $0x178] sm:$0xf]
        %v3974 = vld [vmem:[#allocation8 + $0x17c] sm:$0xf]
        %v3975 = vld [vmem:[#allocation8 + $0x180] sm:$0xf]
        %v3976 = vld [vmem:[#allocation8 + $0x184] sm:$0xf]
        %v3977 = vld [vmem:[#allocation8 + $0x188] sm:$0xf]
        %v3978 = vld [vmem:[#allocation8 + $0x18c] sm:$0xf]
        %v3979 = vld [vmem:[#allocation8 + $0x190] sm:$0xf]
        %v3980 = vld [vmem:[#allocation8 + $0x194] sm:$0xf]
        %v3981 = vld [vmem:[#allocation8 + $0x198] sm:$0xf]
        %v3982 = vld [vmem:[#allocation8 + $0x19c] sm:$0xf]
        %v3983 = vld [vmem:[#allocation8 + $0x1a0] sm:$0xf]
        %v3984 = vld [vmem:[#allocation8 + $0x1a4] sm:$0xf]
        %v3985 = vld [vmem:[#allocation8 + $0x1a8] sm:$0xf]
        %v3986 = vld [vmem:[#allocation8 + $0x1ac] sm:$0xf]
        %v3987 = vld [vmem:[#allocation8 + $0x1b0] sm:$0xf]
        %v3988 = vld [vmem:[#allocation8 + $0x1b4] sm:$0xf]
        %v3989 = vld [vmem:[#allocation8 + $0x1b8] sm:$0xf]
        %v3990 = vld [vmem:[#allocation8 + $0x1bc] sm:$0xf]
        %v3991 = vld [vmem:[#allocation8 + $0x1c0] sm:$0xf]
        %v3992 = vld [vmem:[#allocation8 + $0x1c4] sm:$0xf]
        %v3993 = vld [vmem:[#allocation8 + $0x1c8] sm:$0xf]
        %v3994 = vld [vmem:[#allocation8 + $0x1cc] sm:$0xf]
        %v3995 = vld [vmem:[#allocation8 + $0x1d0] sm:$0xf]
        %v3996 = vld [vmem:[#allocation8 + $0x1d4] sm:$0xf]
        %v3997 = vld [vmem:[#allocation8 + $0x1d8] sm:$0xf]
        %v3998 = vld [vmem:[#allocation8 + $0x1dc] sm:$0xf]
        %v3999 = vld [vmem:[#allocation8 + $0x1e0] sm:$0xf]
        %v4000 = vld [vmem:[#allocation8 + $0x1e4] sm:$0xf]
        %v4001 = vld [vmem:[#allocation8 + $0x1e8] sm:$0xf]
        %v4002 = vld [vmem:[#allocation8 + $0x1ec] sm:$0xf]
        %v4003 = vld [vmem:[#allocation8 + $0x1f0] sm:$0xf]
        %v4004 = vld [vmem:[#allocation8 + $0x1f4] sm:$0xf]
        %v4005 = vld [vmem:[#allocation8 + $0x1f8] sm:$0xf]
        %v4006 = vld [vmem:[#allocation8 + $0x1fc] sm:$0xf]
        %v4007 = vld [vmem:[#allocation8 + $0x200] sm:$0xf]
        %v4008 = vld [vmem:[#allocation8 + $0x204] sm:$0xf]
        %v4009 = vld [vmem:[#allocation8 + $0x208] sm:$0xf]
        %v4010 = vld [vmem:[#allocation8 + $0x20c] sm:$0xf]
        %v4011 = vld [vmem:[#allocation8 + $0x210] sm:$0xf]
        %v4012 = vld [vmem:[#allocation8 + $0x214] sm:$0xf]
        %v4013 = vld [vmem:[#allocation8 + $0x218] sm:$0xf]
        %v4014 = vld [vmem:[#allocation8 + $0x21c] sm:$0xf]
        %v4015 = vld [vmem:[#allocation8 + $0x220] sm:$0xf]
        %v4016 = vld [vmem:[#allocation8 + $0x224] sm:$0xf]
        %v4017 = vld [vmem:[#allocation8 + $0x228] sm:$0xf]
        %v4018 = vld [vmem:[#allocation8 + $0x22c] sm:$0xf]
        %v4019 = vld [vmem:[#allocation8 + $0x230] sm:$0xf]
        %v4020 = vld [vmem:[#allocation8 + $0x234] sm:$0xf]
        %v4021 = vld [vmem:[#allocation8 + $0x238] sm:$0xf]
        %v4022 = vld [vmem:[#allocation8 + $0x23c] sm:$0xf]
        %v4023 = vld [vmem:[%s2] sm:$0x1]
        %v4025 = vlaneseq
        %v4026 = vshrl.u32 %v4025, 7
        %v4027 = vsub.s32 0, %v4026
        %v4028 = vrot.slane %v4023, %v4027
        %v4174 = vunpack.c.l.b16 %v3879
        %v4175 = vunpack.c.l.b16 %v3880
        %v4176 = vunpack.c.l.b16 %v3881
        %v4177 = vunpack.c.l.b16 %v3882
        %v4178 = vunpack.c.l.b16 %v3883
        %v4179 = vunpack.c.l.b16 %v3884
        %v4180 = vunpack.c.l.b16 %v3885
        %v4181 = vunpack.c.l.b16 %v3886
        %v4182 = vunpack.c.l.b16 %v3887
        %v4183 = vunpack.c.l.b16 %v3888
        %v4184 = vunpack.c.l.b16 %v3889
        %v4185 = vunpack.c.l.b16 %v3890
        %v4186 = vunpack.c.l.b16 %v3891
        %v4187 = vunpack.c.l.b16 %v3892
        %v4188 = vunpack.c.l.b16 %v3893
        %v4189 = vunpack.c.l.b16 %v3894
        %v4190 = vunpack.c.l.b16 %v3895
        %v4191 = vunpack.c.l.b16 %v3896
        %v4192 = vunpack.c.l.b16 %v3897
        %v4193 = vunpack.c.l.b16 %v3898
        %v4194 = vunpack.c.l.b16 %v3899
        %v4195 = vunpack.c.l.b16 %v3900
        %v4196 = vunpack.c.l.b16 %v3901
        %v4197 = vunpack.c.l.b16 %v3902
        %v4198 = vunpack.c.l.b16 %v3903
        %v4199 = vunpack.c.l.b16 %v3904
        %v4200 = vunpack.c.l.b16 %v3905
        %v4201 = vunpack.c.l.b16 %v3906
        %v4202 = vunpack.c.l.b16 %v3907
        %v4203 = vunpack.c.l.b16 %v3908
        %v4204 = vunpack.c.l.b16 %v3909
        %v4205 = vunpack.c.l.b16 %v3910
        %v4206 = vunpack.c.l.b16 %v3911
        %v4207 = vunpack.c.l.b16 %v3912
        %v4208 = vunpack.c.l.b16 %v3913
        %v4209 = vunpack.c.l.b16 %v3914
        %v4210 = vunpack.c.l.b16 %v3915
        %v4211 = vunpack.c.l.b16 %v3916
        %v4212 = vunpack.c.l.b16 %v3917
        %v4213 = vunpack.c.l.b16 %v3918
        %v4214 = vunpack.c.l.b16 %v3919
        %v4215 = vunpack.c.l.b16 %v3920
        %v4216 = vunpack.c.l.b16 %v3921
        %v4217 = vunpack.c.l.b16 %v3922
        %v4218 = vunpack.c.l.b16 %v3923
        %v4219 = vunpack.c.l.b16 %v3924
        %v4220 = vunpack.c.l.b16 %v3925
        %v4221 = vunpack.c.l.b16 %v3926
        %v4222 = vunpack.c.l.b16 %v3927
        %v4223 = vunpack.c.l.b16 %v3928
        %v4224 = vunpack.c.l.b16 %v3929
        %v4225 = vunpack.c.l.b16 %v3930
        %v4226 = vunpack.c.l.b16 %v3931
        %v4227 = vunpack.c.l.b16 %v3932
        %v4228 = vunpack.c.l.b16 %v3933
        %v4229 = vunpack.c.l.b16 %v3934
        %v4230 = vunpack.c.l.b16 %v3935
        %v4231 = vunpack.c.l.b16 %v3936
        %v4232 = vunpack.c.l.b16 %v3937
        %v4233 = vunpack.c.l.b16 %v3938
        %v4234 = vunpack.c.l.b16 %v3939
        %v4235 = vunpack.c.l.b16 %v3940
        %v4236 = vunpack.c.l.b16 %v3941
        %v4237 = vunpack.c.l.b16 %v3942
        %v4238 = vunpack.c.l.b16 %v3943
        %v4239 = vunpack.c.l.b16 %v3944
        %v4240 = vunpack.c.l.b16 %v3945
        %v4241 = vunpack.c.l.b16 %v3946
        %v4242 = vunpack.c.l.b16 %v3947
        %v4243 = vunpack.c.l.b16 %v3948
        %v4244 = vunpack.c.l.b16 %v3949
        %v4245 = vunpack.c.l.b16 %v3950
        %v4246 = vunpack.c.l.b16 %v3951
        %v4247 = vunpack.c.l.b16 %v3952
        %v4248 = vunpack.c.l.b16 %v3953
        %v4249 = vunpack.c.l.b16 %v3954
        %v4250 = vunpack.c.l.b16 %v3955
        %v4251 = vunpack.c.l.b16 %v3956
        %v4252 = vunpack.c.l.b16 %v3957
        %v4253 = vunpack.c.l.b16 %v3958
        %v4254 = vunpack.c.l.b16 %v3959
        %v4255 = vunpack.c.l.b16 %v3960
        %v4256 = vunpack.c.l.b16 %v3961
        %v4257 = vunpack.c.l.b16 %v3962
        %v4258 = vunpack.c.l.b16 %v3963
        %v4259 = vunpack.c.l.b16 %v3964
        %v4260 = vunpack.c.l.b16 %v3965
        %v4261 = vunpack.c.l.b16 %v3966
        %v4262 = vunpack.c.l.b16 %v3967
        %v4263 = vunpack.c.l.b16 %v3968
        %v4264 = vunpack.c.l.b16 %v3969
        %v4265 = vunpack.c.l.b16 %v3970
        %v4266 = vunpack.c.l.b16 %v3971
        %v4267 = vunpack.c.l.b16 %v3972
        %v4268 = vunpack.c.l.b16 %v3973
        %v4269 = vunpack.c.l.b16 %v3974
        %v4270 = vunpack.c.l.b16 %v3975
        %v4271 = vunpack.c.l.b16 %v3976
        %v4272 = vunpack.c.l.b16 %v3977
        %v4273 = vunpack.c.l.b16 %v3978
        %v4274 = vunpack.c.l.b16 %v3979
        %v4275 = vunpack.c.l.b16 %v3980
        %v4276 = vunpack.c.l.b16 %v3981
        %v4277 = vunpack.c.l.b16 %v3982
        %v4278 = vunpack.c.l.b16 %v3983
        %v4279 = vunpack.c.l.b16 %v3984
        %v4280 = vunpack.c.l.b16 %v3985
        %v4281 = vunpack.c.l.b16 %v3986
        %v4282 = vunpack.c.l.b16 %v3987
        %v4283 = vunpack.c.l.b16 %v3988
        %v4284 = vunpack.c.l.b16 %v3989
        %v4285 = vunpack.c.l.b16 %v3990
        %v4286 = vunpack.c.l.b16 %v3991
        %v4287 = vunpack.c.l.b16 %v3992
        %v4288 = vunpack.c.l.b16 %v3993
        %v4289 = vunpack.c.l.b16 %v3994
        %v4290 = vunpack.c.l.b16 %v3995
        %v4291 = vunpack.c.l.b16 %v3996
        %v4292 = vunpack.c.l.b16 %v3997
        %v4293 = vunpack.c.l.b16 %v3998
        %v4294 = vunpack.c.l.b16 %v3999
        %v4295 = vunpack.c.l.b16 %v4000
        %v4296 = vunpack.c.l.b16 %v4001
        %v4297 = vunpack.c.l.b16 %v4002
        %v4298 = vunpack.c.l.b16 %v4003
        %v4299 = vunpack.c.l.b16 %v4004
        %v4300 = vunpack.c.l.b16 %v4005
        %v4301 = vunpack.c.l.b16 %v4006
        %v4302 = vunpack.c.l.b16 %v4007
        %v4303 = vunpack.c.l.b16 %v4008
        %v4304 = vunpack.c.l.b16 %v4009
        %v4305 = vunpack.c.l.b16 %v4010
        %v4306 = vunpack.c.l.b16 %v4011
        %v4307 = vunpack.c.l.b16 %v4012
        %v4308 = vunpack.c.l.b16 %v4013
        %v4309 = vunpack.c.l.b16 %v4014
        %v4310 = vunpack.c.l.b16 %v4015
        %v4311 = vunpack.c.l.b16 %v4016
        %v4312 = vunpack.c.l.b16 %v4017
        %v4313 = vunpack.c.l.b16 %v4018
        %v4314 = vunpack.c.l.b16 %v4019
        %v4315 = vunpack.c.l.b16 %v4020
        %v4316 = vunpack.c.l.b16 %v4021
        %v4317 = vunpack.c.l.b16 %v4022
        %v4318 = vpack.c.b16 %v4175, %v4174
        %v4319 = vpack.c.b16 %v4177, %v4176
        %v4320 = vpack.c.b16 %v4179, %v4178
        %v4321 = vpack.c.b16 %v4181, %v4180
        %v4322 = vpack.c.b16 %v4183, %v4182
        %v4323 = vpack.c.b16 %v4185, %v4184
        %v4324 = vpack.c.b16 %v4187, %v4186
        %v4325 = vpack.c.b16 %v4189, %v4188
        %v4326 = vpack.c.b16 %v4191, %v4190
        %v4327 = vpack.c.b16 %v4193, %v4192
        %v4328 = vpack.c.b16 %v4195, %v4194
        %v4329 = vpack.c.b16 %v4197, %v4196
        %v4330 = vpack.c.b16 %v4199, %v4198
        %v4331 = vpack.c.b16 %v4201, %v4200
        %v4332 = vpack.c.b16 %v4203, %v4202
        %v4333 = vpack.c.b16 %v4205, %v4204
        %v4334 = vpack.c.b16 %v4207, %v4206
        %v4335 = vpack.c.b16 %v4209, %v4208
        %v4336 = vpack.c.b16 %v4211, %v4210
        %v4337 = vpack.c.b16 %v4213, %v4212
        %v4338 = vpack.c.b16 %v4215, %v4214
        %v4339 = vpack.c.b16 %v4217, %v4216
        %v4340 = vpack.c.b16 %v4219, %v4218
        %v4341 = vpack.c.b16 %v4221, %v4220
        %v4342 = vpack.c.b16 %v4223, %v4222
        %v4343 = vpack.c.b16 %v4225, %v4224
        %v4344 = vpack.c.b16 %v4227, %v4226
        %v4345 = vpack.c.b16 %v4229, %v4228
        %v4346 = vpack.c.b16 %v4231, %v4230
        %v4347 = vpack.c.b16 %v4233, %v4232
        %v4348 = vpack.c.b16 %v4235, %v4234
        %v4349 = vpack.c.b16 %v4237, %v4236
        %v4350 = vpack.c.b16 %v4239, %v4238
        %v4351 = vpack.c.b16 %v4241, %v4240
        %v4352 = vpack.c.b16 %v4243, %v4242
        %v4353 = vpack.c.b16 %v4245, %v4244
        %v4354 = vpack.c.b16 %v4247, %v4246
        %v4355 = vpack.c.b16 %v4249, %v4248
        %v4356 = vpack.c.b16 %v4251, %v4250
        %v4357 = vpack.c.b16 %v4253, %v4252
        %v4358 = vpack.c.b16 %v4255, %v4254
        %v4359 = vpack.c.b16 %v4257, %v4256
        %v4360 = vpack.c.b16 %v4259, %v4258
        %v4361 = vpack.c.b16 %v4261, %v4260
        %v4362 = vpack.c.b16 %v4263, %v4262
        %v4363 = vpack.c.b16 %v4265, %v4264
        %v4364 = vpack.c.b16 %v4267, %v4266
        %v4365 = vpack.c.b16 %v4269, %v4268
        %v4366 = vpack.c.b16 %v4271, %v4270
        %v4367 = vpack.c.b16 %v4273, %v4272
        %v4368 = vpack.c.b16 %v4275, %v4274
        %v4369 = vpack.c.b16 %v4277, %v4276
        %v4370 = vpack.c.b16 %v4279, %v4278
        %v4371 = vpack.c.b16 %v4281, %v4280
        %v4372 = vpack.c.b16 %v4283, %v4282
        %v4373 = vpack.c.b16 %v4285, %v4284
        %v4374 = vpack.c.b16 %v4287, %v4286
        %v4375 = vpack.c.b16 %v4289, %v4288
        %v4376 = vpack.c.b16 %v4291, %v4290
        %v4377 = vpack.c.b16 %v4293, %v4292
        %v4378 = vpack.c.b16 %v4295, %v4294
        %v4379 = vpack.c.b16 %v4297, %v4296
        %v4380 = vpack.c.b16 %v4299, %v4298
        %v4381 = vpack.c.b16 %v4301, %v4300
        %v4382 = vpack.c.b16 %v4303, %v4302
        %v4383 = vpack.c.b16 %v4305, %v4304
        %v4384 = vpack.c.b16 %v4307, %v4306
        %v4385 = vpack.c.b16 %v4309, %v4308
        %v4386 = vpack.c.b16 %v4311, %v4310
        %v4387 = vpack.c.b16 %v4313, %v4312
        %v4388 = vpack.c.b16 %v4315, %v4314
        %v4389 = vpack.c.b16 %v4317, %v4316
        %4462 = vmatprep.subr.bf16.mxu0 0
        %4463 = vmatpush1.bf16.msra.mxu0 %v4318
        %4464 = vmatprep.subr.bf16.mxu0 0
        %4465 = vmatpush1.bf16.msra.mxu0 %v4319
        %4466 = vmatprep.subr.bf16.mxu0 0
        %4467 = vmatpush1.bf16.msra.mxu0 %v4320
        %4468 = vmatprep.subr.bf16.mxu0 0
        %4469 = vmatpush1.bf16.msra.mxu0 %v4321
        %4470 = vmatprep.subr.bf16.mxu0 0
        %4471 = vmatpush1.bf16.msra.mxu0 %v4322
        %4472 = vmatprep.subr.bf16.mxu0 0
        %4473 = vmatpush1.bf16.msra.mxu0 %v4323
        %4474 = vmatprep.subr.bf16.mxu0 0
        %4475 = vmatpush1.bf16.msra.mxu0 %v4324
        %4476 = vmatprep.subr.bf16.mxu0 0
        %4477 = vmatpush1.bf16.msra.mxu0 %v4325
        %4478 = vmatprep.subr.bf16.mxu0 0
        %4479 = vmatpush1.bf16.msra.mxu0 %v4326
        %4480 = vmatprep.subr.bf16.mxu0 0
        %4481 = vmatpush1.bf16.msra.mxu0 %v4327
        %4482 = vmatprep.subr.bf16.mxu0 0
        %4483 = vmatpush1.bf16.msra.mxu0 %v4328
        %4484 = vmatprep.subr.bf16.mxu0 0
        %4485 = vmatpush1.bf16.msra.mxu0 %v4329
        %4486 = vmatprep.subr.bf16.mxu0 0
        %4487 = vmatpush1.bf16.msra.mxu0 %v4330
        %4488 = vmatprep.subr.bf16.mxu0 0
        %4489 = vmatpush1.bf16.msra.mxu0 %v4331
        %4490 = vmatprep.subr.bf16.mxu0 0
        %4491 = vmatpush1.bf16.msra.mxu0 %v4332
        %4492 = vmatprep.subr.bf16.mxu0 0
        %4493 = vmatpush1.bf16.msra.mxu0 %v4333
        %4494 = vmatprep.mubr.bf16.mxu0 %v3736
        %4495 = vmatmul.mubr.bf16.gmra.mrb[0].mxu0 %v3735
        %v4496 = vpop.f32.mrb[0].mxu0
        %v4497 = vadd.f32 %v4028, %v4496
        %v4498 = vpop.f32.mrb[0].mxu0
        %v4499 = vpop.f32.mrb[0].mxu0
        %v4500 = vadd.f32 %v4028, %v4499
        %v4501 = vpop.f32.mrb[0].mxu0
        %4502 = vmatprep.mubr.bf16.mxu0 %v3745
        %4503 = vmatmul.mubr.bf16.gmra.mrb[0].mxu0 %v3744
        %v4504 = vpop.f32.mrb[0].mxu0
        %v4505 = vadd.f32 %v4028, %v4504
        %v4506 = vpop.f32.mrb[0].mxu0
        %v4507 = vpop.f32.mrb[0].mxu0
        %v4508 = vadd.f32 %v4028, %v4507
        %v4509 = vpop.f32.mrb[0].mxu0
        %4510 = vmatprep.mubr.bf16.mxu0 %v3754
        %4511 = vmatmul.mubr.bf16.gmra.mrb[0].mxu0 %v3753
        %v4512 = vpop.f32.mrb[0].mxu0
        %v4513 = vadd.f32 %v4028, %v4512
        %v4514 = vpop.f32.mrb[0].mxu0
        %v4515 = vpop.f32.mrb[0].mxu0
        %v4516 = vadd.f32 %v4028, %v4515
        %v4517 = vpop.f32.mrb[0].mxu0
        %4518 = vmatprep.mubr.bf16.mxu0 %v3763
        %4519 = vmatmul.mubr.bf16.gmra.mrb[0].mxu0 %v3762
        %v4520 = vpop.f32.mrb[0].mxu0
        %v4521 = vadd.f32 %v4028, %v4520
        %v4522 = vpop.f32.mrb[0].mxu0
        %v4523 = vpop.f32.mrb[0].mxu0
        %v4524 = vadd.f32 %v4028, %v4523
        %v4525 = vpop.f32.mrb[0].mxu0
        %4526 = vmatprep.mubr.bf16.mxu0 %v3772
        %4527 = vmatmul.mubr.bf16.gmra.mrb[0].mxu0 %v3771
        %v4528 = vpop.f32.mrb[0].mxu0
        %v4529 = vadd.f32 %v4028, %v4528
        %v4530 = vpop.f32.mrb[0].mxu0
        %v4531 = vpop.f32.mrb[0].mxu0
        %v4532 = vadd.f32 %v4028, %v4531
        %v4533 = vpop.f32.mrb[0].mxu0
        %4534 = vmatprep.mubr.bf16.mxu0 %v3781
        %4535 = vmatmul.mubr.bf16.gmra.mrb[0].mxu0 %v3780
        %v4536 = vpop.f32.mrb[0].mxu0
        %v4537 = vadd.f32 %v4028, %v4536
        %v4538 = vpop.f32.mrb[0].mxu0
        %v4539 = vpop.f32.mrb[0].mxu0
        %v4540 = vadd.f32 %v4028, %v4539
        %v4541 = vpop.f32.mrb[0].mxu0
        %4542 = vmatprep.mubr.bf16.mxu0 %v3790
        %4543 = vmatmul.mubr.bf16.gmra.mrb[0].mxu0 %v3789
        %v4544 = vpop.f32.mrb[0].mxu0
        %v4545 = vadd.f32 %v4028, %v4544
        %v4546 = vpop.f32.mrb[0].mxu0
        %v4547 = vpop.f32.mrb[0].mxu0
        %v4548 = vadd.f32 %v4028, %v4547
        %v4549 = vpop.f32.mrb[0].mxu0
        %4550 = vmatprep.mubr.bf16.mxu0 %v3799
        %4551 = vmatmul.mubr.bf16.gmra.mrb[0].mxu0 %v3798
        %v4552 = vpop.f32.mrb[0].mxu0
        %v4553 = vadd.f32 %v4028, %v4552
        %v4554 = vpop.f32.mrb[0].mxu0
        %v4555 = vpop.f32.mrb[0].mxu0
        %v4556 = vadd.f32 %v4028, %v4555
        %v4557 = vpop.f32.mrb[0].mxu0
        %4558 = vmatprep.mubr.bf16.mxu0 %v3808
        %4559 = vmatmul.mubr.bf16.gmra.mrb[0].mxu0 %v3807
        %v4560 = vpop.f32.mrb[0].mxu0
        %v4561 = vadd.f32 %v4028, %v4560
        %v4562 = vpop.f32.mrb[0].mxu0
        %v4563 = vpop.f32.mrb[0].mxu0
        %v4564 = vadd.f32 %v4028, %v4563
        %v4565 = vpop.f32.mrb[0].mxu0
        %4566 = vmatprep.mubr.bf16.mxu0 %v3817
        %4567 = vmatmul.mubr.bf16.gmra.mrb[0].mxu0 %v3816
        %v4568 = vpop.f32.mrb[0].mxu0
        %v4569 = vadd.f32 %v4028, %v4568
        %v4570 = vpop.f32.mrb[0].mxu0
        %v4571 = vpop.f32.mrb[0].mxu0
        %v4572 = vadd.f32 %v4028, %v4571
        %v4573 = vpop.f32.mrb[0].mxu0
        %4574 = vmatprep.mubr.bf16.mxu0 %v3826
        %4575 = vmatmul.mubr.bf16.gmra.mrb[0].mxu0 %v3825
        %v4576 = vpop.f32.mrb[0].mxu0
        %v4577 = vadd.f32 %v4028, %v4576
        %v4578 = vpop.f32.mrb[0].mxu0
        %v4579 = vpop.f32.mrb[0].mxu0
        %v4580 = vadd.f32 %v4028, %v4579
        %v4581 = vpop.f32.mrb[0].mxu0
        %4582 = vmatprep.mubr.bf16.mxu0 %v3835
        %4583 = vmatmul.mubr.bf16.gmra.mrb[0].mxu0 %v3834
        %v4584 = vpop.f32.mrb[0].mxu0
        %v4585 = vadd.f32 %v4028, %v4584
        %v4586 = vpop.f32.mrb[0].mxu0
        %v4587 = vpop.f32.mrb[0].mxu0
        %v4588 = vadd.f32 %v4028, %v4587
        %v4589 = vpop.f32.mrb[0].mxu0
        %4590 = vmatprep.mubr.bf16.mxu0 %v3844
        %4591 = vmatmul.mubr.bf16.gmra.mrb[0].mxu0 %v3843
        %v4592 = vpop.f32.mrb[0].mxu0
        %v4593 = vadd.f32 %v4028, %v4592
        %v4594 = vpop.f32.mrb[0].mxu0
        %v4595 = vpop.f32.mrb[0].mxu0
        %v4596 = vadd.f32 %v4028, %v4595
        %v4597 = vpop.f32.mrb[0].mxu0
        %4598 = vmatprep.mubr.bf16.mxu0 %v3853
        %4599 = vmatmul.mubr.bf16.gmra.mrb[0].mxu0 %v3852
        %v4600 = vpop.f32.mrb[0].mxu0
        %v4601 = vadd.f32 %v4028, %v4600
        %v4602 = vpop.f32.mrb[0].mxu0
        %v4603 = vpop.f32.mrb[0].mxu0
        %v4604 = vadd.f32 %v4028, %v4603
        %v4605 = vpop.f32.mrb[0].mxu0
        %4606 = vmatprep.mubr.bf16.mxu0 %v3862
        %4607 = vmatmul.mubr.bf16.gmra.mrb[0].mxu0 %v3861
        %v4608 = vpop.f32.mrb[0].mxu0
        %v4609 = vadd.f32 %v4028, %v4608
        %v4610 = vpop.f32.mrb[0].mxu0
        %v4611 = vpop.f32.mrb[0].mxu0
        %v4612 = vadd.f32 %v4028, %v4611
        %v4613 = vpop.f32.mrb[0].mxu0
        %4614 = vmatprep.mubr.bf16.mxu0 %v3871
        %4615 = vmatmul.mubr.bf16.gmra.mrb[0].mxu0 %v3870
        %v4616 = vpop.f32.mrb[0].mxu0
        %v4617 = vadd.f32 %v4028, %v4616
        %v4618 = vpop.f32.mrb[0].mxu0
        %v4619 = vpop.f32.mrb[0].mxu0
        %v4620 = vadd.f32 %v4028, %v4619
        %v4621 = vpop.f32.mrb[0].mxu0
        %4622 = vdwg.mxu0
        %4623 = vmatprep.subr.bf16.mxu0 0
        %4624 = vmatpush1.bf16.msra.mxu0 %v4334
        %4625 = vmatprep.subr.bf16.mxu0 0
        %4626 = vmatpush1.bf16.msra.mxu0 %v4335
        %4627 = vmatprep.subr.bf16.mxu0 0
        %4628 = vmatpush1.bf16.msra.mxu0 %v4336
        %4629 = vmatprep.subr.bf16.mxu0 0
        %4630 = vmatpush1.bf16.msra.mxu0 %v4337
        %4631 = vmatprep.subr.bf16.mxu0 0
        %4632 = vmatpush1.bf16.msra.mxu0 %v4338
        %4633 = vmatprep.subr.bf16.mxu0 0
        %4634 = vmatpush1.bf16.msra.mxu0 %v4339
        %4635 = vmatprep.subr.bf16.mxu0 0
        %4636 = vmatpush1.bf16.msra.mxu0 %v4340
        %4637 = vmatprep.subr.bf16.mxu0 0
        %4638 = vmatpush1.bf16.msra.mxu0 %v4341
        %4639 = vmatprep.subr.bf16.mxu0 0
        %4640 = vmatpush1.bf16.msra.mxu0 %v4342
        %4641 = vmatprep.subr.bf16.mxu0 0
        %4642 = vmatpush1.bf16.msra.mxu0 %v4343
        %4643 = vmatprep.subr.bf16.mxu0 0
        %4644 = vmatpush1.bf16.msra.mxu0 %v4344
        %4645 = vmatprep.subr.bf16.mxu0 0
        %4646 = vmatpush1.bf16.msra.mxu0 %v4345
        %4647 = vmatprep.subr.bf16.mxu0 0
        %4648 = vmatpush1.bf16.msra.mxu0 %v4346
        %4649 = vmatprep.subr.bf16.mxu0 0
        %4650 = vmatpush1.bf16.msra.mxu0 %v4347
        %4651 = vmatprep.subr.bf16.mxu0 0
        %4652 = vmatpush1.bf16.msra.mxu0 %v4348
        %4653 = vmatprep.subr.bf16.mxu0 0
        %4654 = vmatpush1.bf16.msra.mxu0 %v4349
        %4655 = vmatprep.mubr.bf16.mxu0 %v3738
        %4656 = vmatmul.mubr.bf16.gmra.mrb[0].mxu0 %v3737
        %v4657 = vpop.f32.mrb[0].mxu0
        %v4658 = vadd.f32 %v4497, %v4657
        %v4659 = vpop.f32.mrb[0].mxu0
        %v4660 = vpop.f32.mrb[0].mxu0
        %v4661 = vadd.f32 %v4500, %v4660
        %v4662 = vpop.f32.mrb[0].mxu0
        %4663 = vmatprep.mubr.bf16.mxu0 %v3747
        %4664 = vmatmul.mubr.bf16.gmra.mrb[0].mxu0 %v3746
        %v4665 = vpop.f32.mrb[0].mxu0
        %v4666 = vadd.f32 %v4505, %v4665
        %v4667 = vpop.f32.mrb[0].mxu0
        %v4668 = vpop.f32.mrb[0].mxu0
        %v4669 = vadd.f32 %v4508, %v4668
        %v4670 = vpop.f32.mrb[0].mxu0
        %4671 = vmatprep.mubr.bf16.mxu0 %v3756
        %4672 = vmatmul.mubr.bf16.gmra.mrb[0].mxu0 %v3755
        %v4673 = vpop.f32.mrb[0].mxu0
        %v4674 = vadd.f32 %v4513, %v4673
        %v4675 = vpop.f32.mrb[0].mxu0
        %v4676 = vpop.f32.mrb[0].mxu0
        %v4677 = vadd.f32 %v4516, %v4676
        %v4678 = vpop.f32.mrb[0].mxu0
        %4679 = vmatprep.mubr.bf16.mxu0 %v3765
        %4680 = vmatmul.mubr.bf16.gmra.mrb[0].mxu0 %v3764
        %v4681 = vpop.f32.mrb[0].mxu0
        %v4682 = vadd.f32 %v4521, %v4681
        %v4683 = vpop.f32.mrb[0].mxu0
        %v4684 = vpop.f32.mrb[0].mxu0
        %v4685 = vadd.f32 %v4524, %v4684
        %v4686 = vpop.f32.mrb[0].mxu0
        %4687 = vmatprep.mubr.bf16.mxu0 %v3774
        %4688 = vmatmul.mubr.bf16.gmra.mrb[0].mxu0 %v3773
        %v4689 = vpop.f32.mrb[0].mxu0
        %v4690 = vadd.f32 %v4529, %v4689
        %v4691 = vpop.f32.mrb[0].mxu0
        %v4692 = vpop.f32.mrb[0].mxu0
        %v4693 = vadd.f32 %v4532, %v4692
        %v4694 = vpop.f32.mrb[0].mxu0
        %4695 = vmatprep.mubr.bf16.mxu0 %v3783
        %4696 = vmatmul.mubr.bf16.gmra.mrb[0].mxu0 %v3782
        %v4697 = vpop.f32.mrb[0].mxu0
        %v4698 = vadd.f32 %v4537, %v4697
        %v4699 = vpop.f32.mrb[0].mxu0
        %v4700 = vpop.f32.mrb[0].mxu0
        %v4701 = vadd.f32 %v4540, %v4700
        %v4702 = vpop.f32.mrb[0].mxu0
        %4703 = vmatprep.mubr.bf16.mxu0 %v3792
        %4704 = vmatmul.mubr.bf16.gmra.mrb[0].mxu0 %v3791
        %v4705 = vpop.f32.mrb[0].mxu0
        %v4706 = vadd.f32 %v4545, %v4705
        %v4707 = vpop.f32.mrb[0].mxu0
        %v4708 = vpop.f32.mrb[0].mxu0
        %v4709 = vadd.f32 %v4548, %v4708
        %v4710 = vpop.f32.mrb[0].mxu0
        %4711 = vmatprep.mubr.bf16.mxu0 %v3801
        %4712 = vmatmul.mubr.bf16.gmra.mrb[0].mxu0 %v3800
        %v4713 = vpop.f32.mrb[0].mxu0
        %v4714 = vadd.f32 %v4553, %v4713
        %v4715 = vpop.f32.mrb[0].mxu0
        %v4716 = vpop.f32.mrb[0].mxu0
        %v4717 = vadd.f32 %v4556, %v4716
        %v4718 = vpop.f32.mrb[0].mxu0
        %4719 = vmatprep.mubr.bf16.mxu0 %v3810
        %4720 = vmatmul.mubr.bf16.gmra.mrb[0].mxu0 %v3809
        %v4721 = vpop.f32.mrb[0].mxu0
        %v4722 = vadd.f32 %v4561, %v4721
        %v4723 = vpop.f32.mrb[0].mxu0
        %v4724 = vpop.f32.mrb[0].mxu0
        %v4725 = vadd.f32 %v4564, %v4724
        %v4726 = vpop.f32.mrb[0].mxu0
        %4727 = vmatprep.mubr.bf16.mxu0 %v3819
        %4728 = vmatmul.mubr.bf16.gmra.mrb[0].mxu0 %v3818
        %v4729 = vpop.f32.mrb[0].mxu0
        %v4730 = vadd.f32 %v4569, %v4729
        %v4731 = vpop.f32.mrb[0].mxu0
        %v4732 = vpop.f32.mrb[0].mxu0
        %v4733 = vadd.f32 %v4572, %v4732
        %v4734 = vpop.f32.mrb[0].mxu0
        %4735 = vmatprep.mubr.bf16.mxu0 %v3828
        %4736 = vmatmul.mubr.bf16.gmra.mrb[0].mxu0 %v3827
        %v4737 = vpop.f32.mrb[0].mxu0
        %v4738 = vadd.f32 %v4577, %v4737
        %v4739 = vpop.f32.mrb[0].mxu0
        %v4740 = vpop.f32.mrb[0].mxu0
        %v4741 = vadd.f32 %v4580, %v4740
        %v4742 = vpop.f32.mrb[0].mxu0
        %4743 = vmatprep.mubr.bf16.mxu0 %v3837
        %4744 = vmatmul.mubr.bf16.gmra.mrb[0].mxu0 %v3836
        %v4745 = vpop.f32.mrb[0].mxu0
        %v4746 = vadd.f32 %v4585, %v4745
        %v4747 = vpop.f32.mrb[0].mxu0
        %v4748 = vpop.f32.mrb[0].mxu0
        %v4749 = vadd.f32 %v4588, %v4748
        %v4750 = vpop.f32.mrb[0].mxu0
        %4751 = vmatprep.mubr.bf16.mxu0 %v3846
        %4752 = vmatmul.mubr.bf16.gmra.mrb[0].mxu0 %v3845
        %v4753 = vpop.f32.mrb[0].mxu0
        %v4754 = vadd.f32 %v4593, %v4753
        %v4755 = vpop.f32.mrb[0].mxu0
        %v4756 = vpop.f32.mrb[0].mxu0
        %v4757 = vadd.f32 %v4596, %v4756
        %v4758 = vpop.f32.mrb[0].mxu0
        %4759 = vmatprep.mubr.bf16.mxu0 %v3855
        %4760 = vmatmul.mubr.bf16.gmra.mrb[0].mxu0 %v3854
        %v4761 = vpop.f32.mrb[0].mxu0
        %v4762 = vadd.f32 %v4601, %v4761
        %v4763 = vpop.f32.mrb[0].mxu0
        %v4764 = vpop.f32.mrb[0].mxu0
        %v4765 = vadd.f32 %v4604, %v4764
        %v4766 = vpop.f32.mrb[0].mxu0
        %4767 = vmatprep.mubr.bf16.mxu0 %v3864
        %4768 = vmatmul.mubr.bf16.gmra.mrb[0].mxu0 %v3863
        %v4769 = vpop.f32.mrb[0].mxu0
        %v4770 = vadd.f32 %v4609, %v4769
        %v4771 = vpop.f32.mrb[0].mxu0
        %v4772 = vpop.f32.mrb[0].mxu0
        %v4773 = vadd.f32 %v4612, %v4772
        %v4774 = vpop.f32.mrb[0].mxu0
        %4775 = vmatprep.mubr.bf16.mxu0 %v3873
        %4776 = vmatmul.mubr.bf16.gmra.mrb[0].mxu0 %v3872
        %v4777 = vpop.f32.mrb[0].mxu0
        %v4778 = vadd.f32 %v4617, %v4777
        %v4779 = vpop.f32.mrb[0].mxu0
        %v4780 = vpop.f32.mrb[0].mxu0
        %v4781 = vadd.f32 %v4620, %v4780
        %v4782 = vpop.f32.mrb[0].mxu0
        %4783 = vdwg.mxu0
        %4784 = vmatprep.subr.bf16.mxu0 0
        %4785 = vmatpush1.bf16.msra.mxu0 %v4350
        %4786 = vmatprep.subr.bf16.mxu0 0
        %4787 = vmatpush1.bf16.msra.mxu0 %v4351
        %4788 = vmatprep.subr.bf16.mxu0 0
        %4789 = vmatpush1.bf16.msra.mxu0 %v4352
        %4790 = vmatprep.subr.bf16.mxu0 0
        %4791 = vmatpush1.bf16.msra.mxu0 %v4353
        %4792 = vmatprep.subr.bf16.mxu0 0
        %4793 = vmatpush1.bf16.msra.mxu0 %v4354
        %4794 = vmatprep.subr.bf16.mxu0 0
        %4795 = vmatpush1.bf16.msra.mxu0 %v4355
        %4796 = vmatprep.subr.bf16.mxu0 0
        %4797 = vmatpush1.bf16.msra.mxu0 %v4356
        %4798 = vmatprep.subr.bf16.mxu0 0
        %4799 = vmatpush1.bf16.msra.mxu0 %v4357
        %4800 = vmatprep.subr.bf16.mxu0 0
        %4801 = vmatpush1.bf16.msra.mxu0 %v4358
        %4802 = vmatprep.subr.bf16.mxu0 0
        %4803 = vmatpush1.bf16.msra.mxu0 %v4359
        %4804 = vmatprep.subr.bf16.mxu0 0
        %4805 = vmatpush1.bf16.msra.mxu0 %v4360
        %4806 = vmatprep.subr.bf16.mxu0 0
        %4807 = vmatpush1.bf16.msra.mxu0 %v4361
        %4808 = vmatprep.subr.bf16.mxu0 0
        %4809 = vmatpush1.bf16.msra.mxu0 %v4362
        %4810 = vmatprep.subr.bf16.mxu0 0
        %4811 = vmatpush1.bf16.msra.mxu0 %v4363
        %4812 = vmatprep.subr.bf16.mxu0 0
        %4813 = vmatpush1.bf16.msra.mxu0 %v4364
        %4814 = vmatprep.subr.bf16.mxu0 0
        %4815 = vmatpush1.bf16.msra.mxu0 %v4365
        %4816 = vmatprep.mubr.bf16.mxu0 %v3740
        %4817 = vmatmul.mubr.bf16.gmra.mrb[0].mxu0 %v3739
        %v4818 = vpop.f32.mrb[0].mxu0
        %v4819 = vadd.f32 %v4658, %v4818
        %v4820 = vpop.f32.mrb[0].mxu0
        %v4821 = vpop.f32.mrb[0].mxu0
        %v4822 = vadd.f32 %v4661, %v4821
        %v4823 = vpop.f32.mrb[0].mxu0
        %4824 = vmatprep.mubr.bf16.mxu0 %v3749
        %4825 = vmatmul.mubr.bf16.gmra.mrb[0].mxu0 %v3748
        %v4826 = vpop.f32.mrb[0].mxu0
        %v4827 = vadd.f32 %v4666, %v4826
        %v4828 = vpop.f32.mrb[0].mxu0
        %v4829 = vpop.f32.mrb[0].mxu0
        %v4830 = vadd.f32 %v4669, %v4829
        %v4831 = vpop.f32.mrb[0].mxu0
        %4832 = vmatprep.mubr.bf16.mxu0 %v3758
        %4833 = vmatmul.mubr.bf16.gmra.mrb[0].mxu0 %v3757
        %v4834 = vpop.f32.mrb[0].mxu0
        %v4835 = vadd.f32 %v4674, %v4834
        %v4836 = vpop.f32.mrb[0].mxu0
        %v4837 = vpop.f32.mrb[0].mxu0
        %v4838 = vadd.f32 %v4677, %v4837
        %v4839 = vpop.f32.mrb[0].mxu0
        %4840 = vmatprep.mubr.bf16.mxu0 %v3767
        %4841 = vmatmul.mubr.bf16.gmra.mrb[0].mxu0 %v3766
        %v4842 = vpop.f32.mrb[0].mxu0
        %v4843 = vadd.f32 %v4682, %v4842
        %v4844 = vpop.f32.mrb[0].mxu0
        %v4845 = vpop.f32.mrb[0].mxu0
        %v4846 = vadd.f32 %v4685, %v4845
        %v4847 = vpop.f32.mrb[0].mxu0
        %4848 = vmatprep.mubr.bf16.mxu0 %v3776
        %4849 = vmatmul.mubr.bf16.gmra.mrb[0].mxu0 %v3775
        %v4850 = vpop.f32.mrb[0].mxu0
        %v4851 = vadd.f32 %v4690, %v4850
        %v4852 = vpop.f32.mrb[0].mxu0
        %v4853 = vpop.f32.mrb[0].mxu0
        %v4854 = vadd.f32 %v4693, %v4853
        %v4855 = vpop.f32.mrb[0].mxu0
        %4856 = vmatprep.mubr.bf16.mxu0 %v3785
        %4857 = vmatmul.mubr.bf16.gmra.mrb[0].mxu0 %v3784
        %v4858 = vpop.f32.mrb[0].mxu0
        %v4859 = vadd.f32 %v4698, %v4858
        %v4860 = vpop.f32.mrb[0].mxu0
        %v4861 = vpop.f32.mrb[0].mxu0
        %v4862 = vadd.f32 %v4701, %v4861
        %v4863 = vpop.f32.mrb[0].mxu0
        %4864 = vmatprep.mubr.bf16.mxu0 %v3794
        %4865 = vmatmul.mubr.bf16.gmra.mrb[0].mxu0 %v3793
        %v4866 = vpop.f32.mrb[0].mxu0
        %v4867 = vadd.f32 %v4706, %v4866
        %v4868 = vpop.f32.mrb[0].mxu0
        %v4869 = vpop.f32.mrb[0].mxu0
        %v4870 = vadd.f32 %v4709, %v4869
        %v4871 = vpop.f32.mrb[0].mxu0
        %4872 = vmatprep.mubr.bf16.mxu0 %v3803
        %4873 = vmatmul.mubr.bf16.gmra.mrb[0].mxu0 %v3802
        %v4874 = vpop.f32.mrb[0].mxu0
        %v4875 = vadd.f32 %v4714, %v4874
        %v4876 = vpop.f32.mrb[0].mxu0
        %v4877 = vpop.f32.mrb[0].mxu0
        %v4878 = vadd.f32 %v4717, %v4877
        %v4879 = vpop.f32.mrb[0].mxu0
        %4880 = vmatprep.mubr.bf16.mxu0 %v3812
        %4881 = vmatmul.mubr.bf16.gmra.mrb[0].mxu0 %v3811
        %v4882 = vpop.f32.mrb[0].mxu0
        %v4883 = vadd.f32 %v4722, %v4882
        %v4884 = vpop.f32.mrb[0].mxu0
        %v4885 = vpop.f32.mrb[0].mxu0
        %v4886 = vadd.f32 %v4725, %v4885
        %v4887 = vpop.f32.mrb[0].mxu0
        %4888 = vmatprep.mubr.bf16.mxu0 %v3821
        %4889 = vmatmul.mubr.bf16.gmra.mrb[0].mxu0 %v3820
        %v4890 = vpop.f32.mrb[0].mxu0
        %v4891 = vadd.f32 %v4730, %v4890
        %v4892 = vpop.f32.mrb[0].mxu0
        %v4893 = vpop.f32.mrb[0].mxu0
        %v4894 = vadd.f32 %v4733, %v4893
        %v4895 = vpop.f32.mrb[0].mxu0
        %4896 = vmatprep.mubr.bf16.mxu0 %v3830
        %4897 = vmatmul.mubr.bf16.gmra.mrb[0].mxu0 %v3829
        %v4898 = vpop.f32.mrb[0].mxu0
        %v4899 = vadd.f32 %v4738, %v4898
        %v4900 = vpop.f32.mrb[0].mxu0
        %v4901 = vpop.f32.mrb[0].mxu0
        %v4902 = vadd.f32 %v4741, %v4901
        %v4903 = vpop.f32.mrb[0].mxu0
        %4904 = vmatprep.mubr.bf16.mxu0 %v3839
        %4905 = vmatmul.mubr.bf16.gmra.mrb[0].mxu0 %v3838
        %v4906 = vpop.f32.mrb[0].mxu0
        %v4907 = vadd.f32 %v4746, %v4906
        %v4908 = vpop.f32.mrb[0].mxu0
        %v4909 = vpop.f32.mrb[0].mxu0
        %v4910 = vadd.f32 %v4749, %v4909
        %v4911 = vpop.f32.mrb[0].mxu0
        %4912 = vmatprep.mubr.bf16.mxu0 %v3848
        %4913 = vmatmul.mubr.bf16.gmra.mrb[0].mxu0 %v3847
        %v4914 = vpop.f32.mrb[0].mxu0
        %v4915 = vadd.f32 %v4754, %v4914
        %v4916 = vpop.f32.mrb[0].mxu0
        %v4917 = vpop.f32.mrb[0].mxu0
        %v4918 = vadd.f32 %v4757, %v4917
        %v4919 = vpop.f32.mrb[0].mxu0
        %4920 = vmatprep.mubr.bf16.mxu0 %v3857
        %4921 = vmatmul.mubr.bf16.gmra.mrb[0].mxu0 %v3856
        %v4922 = vpop.f32.mrb[0].mxu0
        %v4923 = vadd.f32 %v4762, %v4922
        %v4924 = vpop.f32.mrb[0].mxu0
        %v4925 = vpop.f32.mrb[0].mxu0
        %v4926 = vadd.f32 %v4765, %v4925
        %v4927 = vpop.f32.mrb[0].mxu0
        %4928 = vmatprep.mubr.bf16.mxu0 %v3866
        %4929 = vmatmul.mubr.bf16.gmra.mrb[0].mxu0 %v3865
        %v4930 = vpop.f32.mrb[0].mxu0
        %v4931 = vadd.f32 %v4770, %v4930
        %v4932 = vpop.f32.mrb[0].mxu0
        %v4933 = vpop.f32.mrb[0].mxu0
        %v4934 = vadd.f32 %v4773, %v4933
        %v4935 = vpop.f32.mrb[0].mxu0
        %4936 = vmatprep.mubr.bf16.mxu0 %v3875
        %4937 = vmatmul.mubr.bf16.gmra.mrb[0].mxu0 %v3874
        %v4938 = vpop.f32.mrb[0].mxu0
        %v4939 = vadd.f32 %v4778, %v4938
        %v4940 = vpop.f32.mrb[0].mxu0
        %v4941 = vpop.f32.mrb[0].mxu0
        %v4942 = vadd.f32 %v4781, %v4941
        %v4943 = vpop.f32.mrb[0].mxu0
        %4944 = vdwg.mxu0
        %4945 = vmatprep.subr.bf16.mxu0 0
        %4946 = vmatpush1.bf16.msra.mxu0 %v4366
        %4947 = vmatprep.subr.bf16.mxu0 0
        %4948 = vmatpush1.bf16.msra.mxu0 %v4367
        %4949 = vmatprep.subr.bf16.mxu0 0
        %4950 = vmatpush1.bf16.msra.mxu0 %v4368
        %4951 = vmatprep.subr.bf16.mxu0 0
        %4952 = vmatpush1.bf16.msra.mxu0 %v4369
        %4953 = vmatprep.subr.bf16.mxu0 0
        %4954 = vmatpush1.bf16.msra.mxu0 %v4370
        %4955 = vmatprep.subr.bf16.mxu0 0
        %4956 = vmatpush1.bf16.msra.mxu0 %v4371
        %4957 = vmatprep.subr.bf16.mxu0 0
        %4958 = vmatpush1.bf16.msra.mxu0 %v4372
        %4959 = vmatprep.subr.bf16.mxu0 0
        %4960 = vmatpush1.bf16.msra.mxu0 %v4373
        %4961 = vmatprep.subr.bf16.mxu0 0
        %4962 = vmatpush1.bf16.msra.mxu0 %v4374
        %4963 = vmatprep.subr.bf16.mxu0 0
        %4964 = vmatpush1.bf16.msra.mxu0 %v4375
        %4965 = vmatprep.subr.bf16.mxu0 0
        %4966 = vmatpush1.bf16.msra.mxu0 %v4376
        %4967 = vmatprep.subr.bf16.mxu0 0
        %4968 = vmatpush1.bf16.msra.mxu0 %v4377
        %4969 = vmatprep.subr.bf16.mxu0 0
        %4970 = vmatpush1.bf16.msra.mxu0 %v4378
        %4971 = vmatprep.subr.bf16.mxu0 0
        %4972 = vmatpush1.bf16.msra.mxu0 %v4379
        %4973 = vmatprep.subr.bf16.mxu0 0
        %4974 = vmatpush1.bf16.msra.mxu0 %v4380
        %4975 = vmatprep.subr.bf16.mxu0 0
        %4976 = vmatpush1.bf16.msra.mxu0 %v4381
        %4977 = vmatprep.mubr.bf16.mxu0 %v3742
        %4978 = vmatmul.mubr.bf16.gmra.mrb[0].mxu0 %v3741
        %v4979 = vpop.f32.mrb[0].mxu0
        %v4980 = vadd.f32 %v4819, %v4979
        %v4981 = vpop.f32.mrb[0].mxu0
        %v4982 = vpop.f32.mrb[0].mxu0
        %v4983 = vadd.f32 %v4822, %v4982
        %v4984 = vpop.f32.mrb[0].mxu0
        %4985 = vmatprep.mubr.bf16.mxu0 %v3751
        %4986 = vmatmul.mubr.bf16.gmra.mrb[0].mxu0 %v3750
        %v4987 = vpop.f32.mrb[0].mxu0
        %v4988 = vadd.f32 %v4827, %v4987
        %v4989 = vpop.f32.mrb[0].mxu0
        %v4990 = vpop.f32.mrb[0].mxu0
        %v4991 = vadd.f32 %v4830, %v4990
        %v4992 = vpop.f32.mrb[0].mxu0
        %4993 = vmatprep.mubr.bf16.mxu0 %v3760
        %4994 = vmatmul.mubr.bf16.gmra.mrb[0].mxu0 %v3759
        %v4995 = vpop.f32.mrb[0].mxu0
        %v4996 = vadd.f32 %v4835, %v4995
        %v4997 = vpop.f32.mrb[0].mxu0
        %v4998 = vpop.f32.mrb[0].mxu0
        %v4999 = vadd.f32 %v4838, %v4998
        %v5000 = vpop.f32.mrb[0].mxu0
        %5001 = vmatprep.mubr.bf16.mxu0 %v3769
        %5002 = vmatmul.mubr.bf16.gmra.mrb[0].mxu0 %v3768
        %v5003 = vpop.f32.mrb[0].mxu0
        %v5004 = vadd.f32 %v4843, %v5003
        %v5005 = vpop.f32.mrb[0].mxu0
        %v5006 = vpop.f32.mrb[0].mxu0
        %v5007 = vadd.f32 %v4846, %v5006
        %v5008 = vpop.f32.mrb[0].mxu0
        %5009 = vmatprep.mubr.bf16.mxu0 %v3778
        %5010 = vmatmul.mubr.bf16.gmra.mrb[0].mxu0 %v3777
        %v5011 = vpop.f32.mrb[0].mxu0
        %v5012 = vadd.f32 %v4851, %v5011
        %v5013 = vpop.f32.mrb[0].mxu0
        %v5014 = vpop.f32.mrb[0].mxu0
        %v5015 = vadd.f32 %v4854, %v5014
        %v5016 = vpop.f32.mrb[0].mxu0
        %5017 = vmatprep.mubr.bf16.mxu0 %v3787
        %5018 = vmatmul.mubr.bf16.gmra.mrb[0].mxu0 %v3786
        %v5019 = vpop.f32.mrb[0].mxu0
        %v5020 = vadd.f32 %v4859, %v5019
        %v5021 = vpop.f32.mrb[0].mxu0
        %v5022 = vpop.f32.mrb[0].mxu0
        %v5023 = vadd.f32 %v4862, %v5022
        %v5024 = vpop.f32.mrb[0].mxu0
        %5025 = vmatprep.mubr.bf16.mxu0 %v3796
        %5026 = vmatmul.mubr.bf16.gmra.mrb[0].mxu0 %v3795
        %v5027 = vpop.f32.mrb[0].mxu0
        %v5028 = vadd.f32 %v4867, %v5027
        %v5029 = vpop.f32.mrb[0].mxu0
        %v5030 = vpop.f32.mrb[0].mxu0
        %v5031 = vadd.f32 %v4870, %v5030
        %v5032 = vpop.f32.mrb[0].mxu0
        %5033 = vmatprep.mubr.bf16.mxu0 %v3805
        %5034 = vmatmul.mubr.bf16.gmra.mrb[0].mxu0 %v3804
        %v5035 = vpop.f32.mrb[0].mxu0
        %v5036 = vadd.f32 %v4875, %v5035
        %v5037 = vpop.f32.mrb[0].mxu0
        %v5038 = vpop.f32.mrb[0].mxu0
        %v5039 = vadd.f32 %v4878, %v5038
        %v5040 = vpop.f32.mrb[0].mxu0
        %5041 = vmatprep.mubr.bf16.mxu0 %v3814
        %5042 = vmatmul.mubr.bf16.gmra.mrb[0].mxu0 %v3813
        %v5043 = vpop.f32.mrb[0].mxu0
        %v5044 = vadd.f32 %v4883, %v5043
        %v5045 = vpop.f32.mrb[0].mxu0
        %v5046 = vpop.f32.mrb[0].mxu0
        %v5047 = vadd.f32 %v4886, %v5046
        %v5048 = vpop.f32.mrb[0].mxu0
        %5049 = vmatprep.mubr.bf16.mxu0 %v3823
        %5050 = vmatmul.mubr.bf16.gmra.mrb[0].mxu0 %v3822
        %v5051 = vpop.f32.mrb[0].mxu0
        %v5052 = vadd.f32 %v4891, %v5051
        %v5053 = vpop.f32.mrb[0].mxu0
        %v5054 = vpop.f32.mrb[0].mxu0
        %v5055 = vadd.f32 %v4894, %v5054
        %v5056 = vpop.f32.mrb[0].mxu0
        %5057 = vmatprep.mubr.bf16.mxu0 %v3832
        %5058 = vmatmul.mubr.bf16.gmra.mrb[0].mxu0 %v3831
        %v5059 = vpop.f32.mrb[0].mxu0
        %v5060 = vadd.f32 %v4899, %v5059
        %v5061 = vpop.f32.mrb[0].mxu0
        %v5062 = vpop.f32.mrb[0].mxu0
        %v5063 = vadd.f32 %v4902, %v5062
        %v5064 = vpop.f32.mrb[0].mxu0
        %5065 = vmatprep.mubr.bf16.mxu0 %v3841
        %5066 = vmatmul.mubr.bf16.gmra.mrb[0].mxu0 %v3840
        %v5067 = vpop.f32.mrb[0].mxu0
        %v5068 = vadd.f32 %v4907, %v5067
        %v5069 = vpop.f32.mrb[0].mxu0
        %v5070 = vpop.f32.mrb[0].mxu0
        %v5071 = vadd.f32 %v4910, %v5070
        %v5072 = vpop.f32.mrb[0].mxu0
        %5073 = vmatprep.mubr.bf16.mxu0 %v3850
        %5074 = vmatmul.mubr.bf16.gmra.mrb[0].mxu0 %v3849
        %v5075 = vpop.f32.mrb[0].mxu0
        %v5076 = vadd.f32 %v4915, %v5075
        %v5077 = vpop.f32.mrb[0].mxu0
        %v5078 = vpop.f32.mrb[0].mxu0
        %v5079 = vadd.f32 %v4918, %v5078
        %v5080 = vpop.f32.mrb[0].mxu0
        %5081 = vmatprep.mubr.bf16.mxu0 %v3859
        %5082 = vmatmul.mubr.bf16.gmra.mrb[0].mxu0 %v3858
        %v5083 = vpop.f32.mrb[0].mxu0
        %v5084 = vadd.f32 %v4923, %v5083
        %v5085 = vpop.f32.mrb[0].mxu0
        %v5086 = vpop.f32.mrb[0].mxu0
        %v5087 = vadd.f32 %v4926, %v5086
        %v5088 = vpop.f32.mrb[0].mxu0
        %5089 = vmatprep.mubr.bf16.mxu0 %v3868
        %5090 = vmatmul.mubr.bf16.gmra.mrb[0].mxu0 %v3867
        %v5091 = vpop.f32.mrb[0].mxu0
        %v5092 = vadd.f32 %v4931, %v5091
        %v5093 = vpop.f32.mrb[0].mxu0
        %v5094 = vpop.f32.mrb[0].mxu0
        %v5095 = vadd.f32 %v4934, %v5094
        %v5096 = vpop.f32.mrb[0].mxu0
        %5097 = vmatprep.mubr.bf16.mxu0 %v3877
        %5098 = vmatmul.mubr.bf16.gmra.mrb[0].mxu0 %v3876
        %v5099 = vpop.f32.mrb[0].mxu0
        %v5100 = vadd.f32 %v4939, %v5099
        %v5101 = vpop.f32.mrb[0].mxu0
        %v5102 = vpop.f32.mrb[0].mxu0
        %v5103 = vadd.f32 %v4942, %v5102
        %v5104 = vpop.f32.mrb[0].mxu0
        %5105 = vdwg.mxu0
        %5106 = vmatprep.subr.bf16.mxu0 0
        %5107 = vmatpush1.bf16.msra.mxu0 %v4382
        %5108 = vmatprep.subr.bf16.mxu0 0
        %5109 = vmatpush1.bf16.msra.mxu0 %v4383
        %5110 = vmatprep.subr.bf16.mxu0 0
        %5111 = vmatpush1.bf16.msra.mxu0 %v4384
        %5112 = vmatprep.subr.bf16.mxu0 0
        %5113 = vmatpush1.bf16.msra.mxu0 %v4385
        %5114 = vmatprep.subr.bf16.mxu0 0
        %5115 = vmatpush1.bf16.msra.mxu0 %v4386
        %5116 = vmatprep.subr.bf16.mxu0 0
        %5117 = vmatpush1.bf16.msra.mxu0 %v4387
        %5118 = vmatprep.subr.bf16.mxu0 0
        %5119 = vmatpush1.bf16.msra.mxu0 %v4388
        %5120 = vmatprep.subr.bf16.mxu0 0
        %5121 = vmatpush1.bf16.msra.mxu0 %v4389
        %5122 = vmatprep.subr.bf16.mxu0 0
        %5123 = vmatpush1.bf16.msra.mxu0 0
        %5124 = vmatprep.subr.bf16.mxu0 0
        %5125 = vmatpush1.bf16.msra.mxu0 0
        %5126 = vmatprep.subr.bf16.mxu0 0
        %5127 = vmatpush1.bf16.msra.mxu0 0
        %5128 = vmatprep.subr.bf16.mxu0 0
        %5129 = vmatpush1.bf16.msra.mxu0 0
        %5130 = vmatprep.subr.bf16.mxu0 0
        %5131 = vmatpush1.bf16.msra.mxu0 0
        %5132 = vmatprep.subr.bf16.mxu0 0
        %5133 = vmatpush1.bf16.msra.mxu0 0
        %5134 = vmatprep.subr.bf16.mxu0 0
        %5135 = vmatpush1.bf16.msra.mxu0 0
        %5136 = vmatprep.subr.bf16.mxu0 0
        %5137 = vmatpush1.bf16.msra.mxu0 0
        %5138 = vmatprep.mubr.bf16.mxu0 0
        %5139 = vmatmul.mubr.bf16.gmra.mrb[0].mxu0 %v3743
        %v5140 = vpop.f32.mrb[0].mxu0
        %v5141 = vadd.f32 %v4980, %v5140
        %v5142 = vpop.f32.mrb[0].mxu0
        %v5143 = vpop.f32.mrb[0].mxu0
        %v5144 = vadd.f32 %v4983, %v5143
        %v5145 = vpop.f32.mrb[0].mxu0
        %5146 = vmatprep.mubr.bf16.mxu0 0
        %5147 = vmatmul.mubr.bf16.gmra.mrb[0].mxu0 %v3752
        %v5148 = vpop.f32.mrb[0].mxu0
        %v5149 = vadd.f32 %v4988, %v5148
        %v5150 = vpop.f32.mrb[0].mxu0
        %v5151 = vpop.f32.mrb[0].mxu0
        %v5152 = vadd.f32 %v4991, %v5151
        %v5153 = vpop.f32.mrb[0].mxu0
        %5154 = vmatprep.mubr.bf16.mxu0 0
        %5155 = vmatmul.mubr.bf16.gmra.mrb[0].mxu0 %v3761
        %v5156 = vpop.f32.mrb[0].mxu0
        %v5157 = vadd.f32 %v4996, %v5156
        %v5158 = vpop.f32.mrb[0].mxu0
        %v5159 = vpop.f32.mrb[0].mxu0
        %v5160 = vadd.f32 %v4999, %v5159
        %v5161 = vpop.f32.mrb[0].mxu0
        %5162 = vmatprep.mubr.bf16.mxu0 0
        %5163 = vmatmul.mubr.bf16.gmra.mrb[0].mxu0 %v3770
        %v5164 = vpop.f32.mrb[0].mxu0
        %v5165 = vadd.f32 %v5004, %v5164
        %v5166 = vpop.f32.mrb[0].mxu0
        %v5167 = vpop.f32.mrb[0].mxu0
        %v5168 = vadd.f32 %v5007, %v5167
        %v5169 = vpop.f32.mrb[0].mxu0
        %5170 = vmatprep.mubr.bf16.mxu0 0
        %5171 = vmatmul.mubr.bf16.gmra.mrb[0].mxu0 %v3779
        %v5172 = vpop.f32.mrb[0].mxu0
        %v5173 = vadd.f32 %v5012, %v5172
        %v5174 = vpop.f32.mrb[0].mxu0
        %v5175 = vpop.f32.mrb[0].mxu0
        %v5176 = vadd.f32 %v5015, %v5175
        %v5177 = vpop.f32.mrb[0].mxu0
        %5178 = vmatprep.mubr.bf16.mxu0 0
        %5179 = vmatmul.mubr.bf16.gmra.mrb[0].mxu0 %v3788
        %v5180 = vpop.f32.mrb[0].mxu0
        %v5181 = vadd.f32 %v5020, %v5180
        %v5182 = vpop.f32.mrb[0].mxu0
        %v5183 = vpop.f32.mrb[0].mxu0
        %v5184 = vadd.f32 %v5023, %v5183
        %v5185 = vpop.f32.mrb[0].mxu0
        %5186 = vmatprep.mubr.bf16.mxu0 0
        %5187 = vmatmul.mubr.bf16.gmra.mrb[0].mxu0 %v3797
        %v5188 = vpop.f32.mrb[0].mxu0
        %v5189 = vadd.f32 %v5028, %v5188
        %v5190 = vpop.f32.mrb[0].mxu0
        %v5191 = vpop.f32.mrb[0].mxu0
        %v5192 = vadd.f32 %v5031, %v5191
        %v5193 = vpop.f32.mrb[0].mxu0
        %5194 = vmatprep.mubr.bf16.mxu0 0
        %5195 = vmatmul.mubr.bf16.gmra.mrb[0].mxu0 %v3806
        %v5196 = vpop.f32.mrb[0].mxu0
        %v5197 = vadd.f32 %v5036, %v5196
        %v5198 = vpop.f32.mrb[0].mxu0
        %v5199 = vpop.f32.mrb[0].mxu0
        %v5200 = vadd.f32 %v5039, %v5199
        %v5201 = vpop.f32.mrb[0].mxu0
        %5202 = vmatprep.mubr.bf16.mxu0 0
        %5203 = vmatmul.mubr.bf16.gmra.mrb[0].mxu0 %v3815
        %v5204 = vpop.f32.mrb[0].mxu0
        %v5205 = vadd.f32 %v5044, %v5204
        %v5206 = vpop.f32.mrb[0].mxu0
        %v5207 = vpop.f32.mrb[0].mxu0
        %v5208 = vadd.f32 %v5047, %v5207
        %v5209 = vpop.f32.mrb[0].mxu0
        %5210 = vmatprep.mubr.bf16.mxu0 0
        %5211 = vmatmul.mubr.bf16.gmra.mrb[0].mxu0 %v3824
        %v5212 = vpop.f32.mrb[0].mxu0
        %v5213 = vadd.f32 %v5052, %v5212
        %v5214 = vpop.f32.mrb[0].mxu0
        %v5215 = vpop.f32.mrb[0].mxu0
        %v5216 = vadd.f32 %v5055, %v5215
        %v5217 = vpop.f32.mrb[0].mxu0
        %5218 = vmatprep.mubr.bf16.mxu0 0
        %5219 = vmatmul.mubr.bf16.gmra.mrb[0].mxu0 %v3833
        %v5220 = vpop.f32.mrb[0].mxu0
        %v5221 = vadd.f32 %v5060, %v5220
        %v5222 = vpop.f32.mrb[0].mxu0
        %v5223 = vpop.f32.mrb[0].mxu0
        %v5224 = vadd.f32 %v5063, %v5223
        %v5225 = vpop.f32.mrb[0].mxu0
        %5226 = vmatprep.mubr.bf16.mxu0 0
        %5227 = vmatmul.mubr.bf16.gmra.mrb[0].mxu0 %v3842
        %v5228 = vpop.f32.mrb[0].mxu0
        %v5229 = vadd.f32 %v5068, %v5228
        %v5230 = vpop.f32.mrb[0].mxu0
        %v5231 = vpop.f32.mrb[0].mxu0
        %v5232 = vadd.f32 %v5071, %v5231
        %v5233 = vpop.f32.mrb[0].mxu0
        %5234 = vmatprep.mubr.bf16.mxu0 0
        %5235 = vmatmul.mubr.bf16.gmra.mrb[0].mxu0 %v3851
        %v5236 = vpop.f32.mrb[0].mxu0
        %v5237 = vadd.f32 %v5076, %v5236
        %v5238 = vpop.f32.mrb[0].mxu0
        %v5239 = vpop.f32.mrb[0].mxu0
        %v5240 = vadd.f32 %v5079, %v5239
        %v5241 = vpop.f32.mrb[0].mxu0
        %5242 = vmatprep.mubr.bf16.mxu0 0
        %5243 = vmatmul.mubr.bf16.gmra.mrb[0].mxu0 %v3860
        %v5244 = vpop.f32.mrb[0].mxu0
        %v5245 = vadd.f32 %v5084, %v5244
        %v5246 = vpop.f32.mrb[0].mxu0
        %v5247 = vpop.f32.mrb[0].mxu0
        %v5248 = vadd.f32 %v5087, %v5247
        %v5249 = vpop.f32.mrb[0].mxu0
        %5250 = vmatprep.mubr.bf16.mxu0 0
        %5251 = vmatmul.mubr.bf16.gmra.mrb[0].mxu0 %v3869
        %v5252 = vpop.f32.mrb[0].mxu0
        %v5253 = vadd.f32 %v5092, %v5252
        %v5254 = vpop.f32.mrb[0].mxu0
        %v5255 = vpop.f32.mrb[0].mxu0
        %v5256 = vadd.f32 %v5095, %v5255
        %v5257 = vpop.f32.mrb[0].mxu0
        %5258 = vmatprep.mubr.bf16.mxu0 0
        %5259 = vmatmul.mubr.bf16.gmra.mrb[0].mxu0 %v3878
        %v5260 = vpop.f32.mrb[0].mxu0
        %v5261 = vadd.f32 %v5100, %v5260
        %v5262 = vpop.f32.mrb[0].mxu0
        %v5263 = vpop.f32.mrb[0].mxu0
        %v5264 = vadd.f32 %v5103, %v5263
        %v5265 = vpop.f32.mrb[0].mxu0
        %5266 = vdwg.mxu0
        %5267 = vst [vmem:[#allocation3] sm:$0xf] 0
        %5268 = vst [vmem:[#allocation3 + $0x4] sm:$0xf] 0
        %5269 = vst [vmem:[#allocation3 + $0x8] sm:$0x1] 0
        %5270 = vst [vmem:[#allocation3 + $0xc] sm:$0xf] 0
        %5271 = vst [vmem:[#allocation3 + $0x10] sm:$0xf] 0
        %5272 = vst [vmem:[#allocation3 + $0x14] sm:$0x1] 0
        %5273 = vst [vmem:[#allocation3 + $0x18] sm:$0xf] 0
        %5274 = vst [vmem:[#allocation3 + $0x1c] sm:$0xf] 0
        %5275 = vst [vmem:[#allocation3 + $0x20] sm:$0x1] 0
        %5276 = vst [vmem:[#allocation3 + $0x24] sm:$0xf] 0
        %5277 = vst [vmem:[#allocation3 + $0x28] sm:$0xf] 0
        %5278 = vst [vmem:[#allocation3 + $0x2c] sm:$0x1] 0
        %5279 = vst [vmem:[#allocation3 + $0x30] sm:$0xf] 0
        %5280 = vst [vmem:[#allocation3 + $0x34] sm:$0xf] 0
        %5281 = vst [vmem:[#allocation3 + $0x38] sm:$0x1] 0
        %5282 = vst [vmem:[#allocation3 + $0x3c] sm:$0xf] 0
        %5283 = vst [vmem:[#allocation3 + $0x40] sm:$0xf] 0
        %5284 = vst [vmem:[#allocation3 + $0x44] sm:$0x1] 0
        %5285 = vst [vmem:[#allocation3 + $0x48] sm:$0xf] 0
        %5286 = vst [vmem:[#allocation3 + $0x4c] sm:$0xf] 0
        %5287 = vst [vmem:[#allocation3 + $0x50] sm:$0x1] 0
        %5288 = vst [vmem:[#allocation3 + $0x54] sm:$0xf] 0
        %5289 = vst [vmem:[#allocation3 + $0x58] sm:$0xf] 0
        %5290 = vst [vmem:[#allocation3 + $0x5c] sm:$0x1] 0
        %5291 = vst [vmem:[#allocation3 + $0x60] sm:$0xf] 0
        %5292 = vst [vmem:[#allocation3 + $0x64] sm:$0xf] 0
        %5293 = vst [vmem:[#allocation3 + $0x68] sm:$0x1] 0
        %5294 = vst [vmem:[#allocation3 + $0x6c] sm:$0xf] 0
        %5295 = vst [vmem:[#allocation3 + $0x70] sm:$0xf] 0
        %5296 = vst [vmem:[#allocation3 + $0x74] sm:$0x1] 0
        %5297 = vst [vmem:[#allocation3 + $0x78] sm:$0xf] 0
        %5298 = vst [vmem:[#allocation3 + $0x7c] sm:$0xf] 0
        %5299 = vst [vmem:[#allocation3 + $0x80] sm:$0x1] 0
        %5300 = vst [vmem:[#allocation3 + $0x84] sm:$0xf] 0
        %5301 = vst [vmem:[#allocation3 + $0x88] sm:$0xf] 0
        %5302 = vst [vmem:[#allocation3 + $0x8c] sm:$0x1] 0
        %5303 = vst [vmem:[#allocation3 + $0x90] sm:$0xf] 0
        %5304 = vst [vmem:[#allocation3 + $0x94] sm:$0xf] 0
        %5305 = vst [vmem:[#allocation3 + $0x98] sm:$0x1] 0
        %5306 = vst [vmem:[#allocation3 + $0x9c] sm:$0xf] 0
        %5307 = vst [vmem:[#allocation3 + $0xa0] sm:$0xf] 0
        %5308 = vst [vmem:[#allocation3 + $0xa4] sm:$0x1] 0
        %5309 = vst [vmem:[#allocation3 + $0xa8] sm:$0xf] 0
        %5310 = vst [vmem:[#allocation3 + $0xac] sm:$0xf] 0
        %5311 = vst [vmem:[#allocation3 + $0xb0] sm:$0x1] 0
        %5312 = vst [vmem:[#allocation3 + $0xb4] sm:$0xf] 0
        %5313 = vst [vmem:[#allocation3 + $0xb8] sm:$0xf] 0
        %5314 = vst [vmem:[#allocation3 + $0xbc] sm:$0x1] 0
        %5315 = vst [vmem:[#allocation3 + $0xc0] sm:$0xf] 0
        %5316 = vst [vmem:[#allocation3 + $0xc4] sm:$0xf] 0
        %5317 = vst [vmem:[#allocation3 + $0xc8] sm:$0x1] 0
        %5318 = vst [vmem:[#allocation3 + $0xcc] sm:$0xf] 0
        %5319 = vst [vmem:[#allocation3 + $0xd0] sm:$0xf] 0
        %5320 = vst [vmem:[#allocation3 + $0xd4] sm:$0x1] 0
        %v5321 = vpack.c.bf16 %v5144, %v5141
        %v5322 = vpack.c.bf16 %v5152, %v5149
        %v5323 = vpack.c.bf16 %v5160, %v5157
        %v5324 = vpack.c.bf16 %v5168, %v5165
        %v5325 = vpack.c.bf16 %v5176, %v5173
        %v5326 = vpack.c.bf16 %v5184, %v5181
        %v5327 = vpack.c.bf16 %v5192, %v5189
        %v5328 = vpack.c.bf16 %v5200, %v5197
        %v5329 = vpack.c.bf16 %v5208, %v5205
        %v5330 = vpack.c.bf16 %v5216, %v5213
        %v5331 = vpack.c.bf16 %v5224, %v5221
        %v5332 = vpack.c.bf16 %v5232, %v5229
        %v5333 = vpack.c.bf16 %v5240, %v5237
        %v5334 = vpack.c.bf16 %v5248, %v5245
        %v5335 = vpack.c.bf16 %v5256, %v5253
        %v5336 = vpack.c.bf16 %v5264, %v5261
        %v5353 = vunpack.c.l.b16 %v5321
        %v5354 = vunpack.c.h.b16 %v5321
        %v5355 = vunpack.c.l.b16 %v5322
        %v5356 = vunpack.c.h.b16 %v5322
        %v5357 = vunpack.c.l.b16 %v5323
        %v5358 = vunpack.c.h.b16 %v5323
        %v5359 = vunpack.c.l.b16 %v5324
        %v5360 = vunpack.c.h.b16 %v5324
        %v5361 = vunpack.c.l.b16 %v5325
        %v5362 = vunpack.c.h.b16 %v5325
        %v5363 = vunpack.c.l.b16 %v5326
        %v5364 = vunpack.c.h.b16 %v5326
        %v5365 = vunpack.c.l.b16 %v5327
        %v5366 = vunpack.c.h.b16 %v5327
        %v5367 = vunpack.c.l.b16 %v5328
        %v5368 = vunpack.c.h.b16 %v5328
        %v5369 = vunpack.c.l.b16 %v5329
        %v5370 = vunpack.c.h.b16 %v5329
        %v5371 = vunpack.c.l.b16 %v5330
        %v5372 = vunpack.c.h.b16 %v5330
        %v5373 = vunpack.c.l.b16 %v5331
        %v5374 = vunpack.c.h.b16 %v5331
        %v5375 = vunpack.c.l.b16 %v5332
        %v5376 = vunpack.c.h.b16 %v5332
        %v5377 = vunpack.c.l.b16 %v5333
        %v5378 = vunpack.c.h.b16 %v5333
        %v5379 = vunpack.c.l.b16 %v5334
        %v5380 = vunpack.c.h.b16 %v5334
        %v5381 = vunpack.c.l.b16 %v5335
        %v5382 = vunpack.c.h.b16 %v5335
        %v5383 = vunpack.c.l.b16 %v5336
        %v5384 = vunpack.c.h.b16 %v5336
        %v5385 = vpack.c.b16 %v5353, %v5353
        %v5386 = vpack.c.b16 %v5354, %v5354
        %v5387 = vpack.c.b16 %v5355, %v5355
        %v5388 = vpack.c.b16 %v5356, %v5356
        %v5389 = vpack.c.b16 %v5357, %v5357
        %v5390 = vpack.c.b16 %v5358, %v5358
        %v5391 = vpack.c.b16 %v5359, %v5359
        %v5392 = vpack.c.b16 %v5360, %v5360
        %v5393 = vpack.c.b16 %v5361, %v5361
        %v5394 = vpack.c.b16 %v5362, %v5362
        %v5395 = vpack.c.b16 %v5363, %v5363
        %v5396 = vpack.c.b16 %v5364, %v5364
        %v5397 = vpack.c.b16 %v5365, %v5365
        %v5398 = vpack.c.b16 %v5366, %v5366
        %v5399 = vpack.c.b16 %v5367, %v5367
        %v5400 = vpack.c.b16 %v5368, %v5368
        %v5401 = vpack.c.b16 %v5369, %v5369
        %v5402 = vpack.c.b16 %v5370, %v5370
        %v5403 = vpack.c.b16 %v5371, %v5371
        %v5404 = vpack.c.b16 %v5372, %v5372
        %v5405 = vpack.c.b16 %v5373, %v5373
        %v5406 = vpack.c.b16 %v5374, %v5374
        %v5407 = vpack.c.b16 %v5375, %v5375
        %v5408 = vpack.c.b16 %v5376, %v5376
        %v5409 = vpack.c.b16 %v5377, %v5377
        %v5410 = vpack.c.b16 %v5378, %v5378
        %v5411 = vpack.c.b16 %v5379, %v5379
        %v5412 = vpack.c.b16 %v5380, %v5380
        %v5413 = vpack.c.b16 %v5381, %v5381
        %v5414 = vpack.c.b16 %v5382, %v5382
        %v5415 = vpack.c.b16 %v5383, %v5383
        %v5416 = vpack.c.b16 %v5384, %v5384
        %v5418 = vshrl.u32 %v5385, 16
        %v5420 = vrot.slane %v5418, 7
        %v5421 = vshll.u32 %v5385, 16
        %v5423 = vor.u32 %v5420, %v5421
        %v5424 = vrot.slane %v5420, 4
        %v5426 = vshrl.u32 %v5386, 16
        %v5428 = vrot.slane %v5426, 7
        %v5429 = vshll.u32 %v5386, 16
        %v5431 = vor.u32 %v5428, %v5429
        %v5432 = vsel %vm457, %v5424, %v5431
        %v5433 = vrot.slane %v5428, 4
        %v5435 = vshrl.u32 %v5387, 16
        %v5437 = vrot.slane %v5435, 7
        %v5438 = vshll.u32 %v5387, 16
        %v5440 = vor.u32 %v5437, %v5438
        %v5441 = vrot.slane %v5437, 4
        %v5443 = vshrl.u32 %v5388, 16
        %v5445 = vrot.slane %v5443, 7
        %v5446 = vshll.u32 %v5388, 16
        %v5448 = vor.u32 %v5445, %v5446
        %v5449 = vsel %vm457, %v5441, %v5448
        %v5450 = vrot.slane %v5445, 4
        %v5452 = vshrl.u32 %v5389, 16
        %v5454 = vrot.slane %v5452, 7
        %v5455 = vshll.u32 %v5389, 16
        %v5457 = vor.u32 %v5454, %v5455
        %v5458 = vrot.slane %v5454, 4
        %v5460 = vshrl.u32 %v5390, 16
        %v5462 = vrot.slane %v5460, 7
        %v5463 = vshll.u32 %v5390, 16
        %v5465 = vor.u32 %v5462, %v5463
        %v5466 = vsel %vm457, %v5458, %v5465
        %v5467 = vrot.slane %v5462, 4
        %v5469 = vshrl.u32 %v5391, 16
        %v5471 = vrot.slane %v5469, 7
        %v5472 = vshll.u32 %v5391, 16
        %v5474 = vor.u32 %v5471, %v5472
        %v5475 = vrot.slane %v5471, 4
        %v5477 = vshrl.u32 %v5392, 16
        %v5479 = vrot.slane %v5477, 7
        %v5480 = vshll.u32 %v5392, 16
        %v5482 = vor.u32 %v5479, %v5480
        %v5483 = vsel %vm457, %v5475, %v5482
        %v5484 = vrot.slane %v5479, 4
        %v5486 = vshrl.u32 %v5393, 16
        %v5488 = vrot.slane %v5486, 7
        %v5489 = vshll.u32 %v5393, 16
        %v5491 = vor.u32 %v5488, %v5489
        %v5492 = vrot.slane %v5488, 4
        %v5494 = vshrl.u32 %v5394, 16
        %v5496 = vrot.slane %v5494, 7
        %v5497 = vshll.u32 %v5394, 16
        %v5499 = vor.u32 %v5496, %v5497
        %v5500 = vsel %vm457, %v5492, %v5499
        %v5501 = vrot.slane %v5496, 4
        %v5503 = vshrl.u32 %v5395, 16
        %v5505 = vrot.slane %v5503, 7
        %v5506 = vshll.u32 %v5395, 16
        %v5508 = vor.u32 %v5505, %v5506
        %v5509 = vrot.slane %v5505, 4
        %v5511 = vshrl.u32 %v5396, 16
        %v5513 = vrot.slane %v5511, 7
        %v5514 = vshll.u32 %v5396, 16
        %v5516 = vor.u32 %v5513, %v5514
        %v5517 = vsel %vm457, %v5509, %v5516
        %v5518 = vrot.slane %v5513, 4
        %v5520 = vshrl.u32 %v5397, 16
        %v5522 = vrot.slane %v5520, 7
        %v5523 = vshll.u32 %v5397, 16
        %v5525 = vor.u32 %v5522, %v5523
        %v5526 = vrot.slane %v5522, 4
        %v5528 = vshrl.u32 %v5398, 16
        %v5530 = vrot.slane %v5528, 7
        %v5531 = vshll.u32 %v5398, 16
        %v5533 = vor.u32 %v5530, %v5531
        %v5534 = vsel %vm457, %v5526, %v5533
        %v5535 = vrot.slane %v5530, 4
        %v5537 = vshrl.u32 %v5399, 16
        %v5539 = vrot.slane %v5537, 7
        %v5540 = vshll.u32 %v5399, 16
        %v5542 = vor.u32 %v5539, %v5540
        %v5543 = vrot.slane %v5539, 4
        %v5545 = vshrl.u32 %v5400, 16
        %v5547 = vrot.slane %v5545, 7
        %v5548 = vshll.u32 %v5400, 16
        %v5550 = vor.u32 %v5547, %v5548
        %v5551 = vsel %vm457, %v5543, %v5550
        %v5552 = vrot.slane %v5547, 4
        %v5554 = vshrl.u32 %v5401, 16
        %v5556 = vrot.slane %v5554, 7
        %v5557 = vshll.u32 %v5401, 16
        %v5559 = vor.u32 %v5556, %v5557
        %v5560 = vrot.slane %v5556, 4
        %v5562 = vshrl.u32 %v5402, 16
        %v5564 = vrot.slane %v5562, 7
        %v5565 = vshll.u32 %v5402, 16
        %v5567 = vor.u32 %v5564, %v5565
        %v5568 = vsel %vm457, %v5560, %v5567
        %v5569 = vrot.slane %v5564, 4
        %v5571 = vshrl.u32 %v5403, 16
        %v5573 = vrot.slane %v5571, 7
        %v5574 = vshll.u32 %v5403, 16
        %v5576 = vor.u32 %v5573, %v5574
        %v5577 = vrot.slane %v5573, 4
        %v5579 = vshrl.u32 %v5404, 16
        %v5581 = vrot.slane %v5579, 7
        %v5582 = vshll.u32 %v5404, 16
        %v5584 = vor.u32 %v5581, %v5582
        %v5585 = vsel %vm457, %v5577, %v5584
        %v5586 = vrot.slane %v5581, 4
        %v5588 = vshrl.u32 %v5405, 16
        %v5590 = vrot.slane %v5588, 7
        %v5591 = vshll.u32 %v5405, 16
        %v5593 = vor.u32 %v5590, %v5591
        %v5594 = vrot.slane %v5590, 4
        %v5596 = vshrl.u32 %v5406, 16
        %v5598 = vrot.slane %v5596, 7
        %v5599 = vshll.u32 %v5406, 16
        %v5601 = vor.u32 %v5598, %v5599
        %v5602 = vsel %vm457, %v5594, %v5601
        %v5603 = vrot.slane %v5598, 4
        %v5605 = vshrl.u32 %v5407, 16
        %v5607 = vrot.slane %v5605, 7
        %v5608 = vshll.u32 %v5407, 16
        %v5610 = vor.u32 %v5607, %v5608
        %v5611 = vrot.slane %v5607, 4
        %v5613 = vshrl.u32 %v5408, 16
        %v5615 = vrot.slane %v5613, 7
        %v5616 = vshll.u32 %v5408, 16
        %v5618 = vor.u32 %v5615, %v5616
        %v5619 = vsel %vm457, %v5611, %v5618
        %v5620 = vrot.slane %v5615, 4
        %v5622 = vshrl.u32 %v5409, 16
        %v5624 = vrot.slane %v5622, 7
        %v5625 = vshll.u32 %v5409, 16
        %v5627 = vor.u32 %v5624, %v5625
        %v5628 = vrot.slane %v5624, 4
        %v5630 = vshrl.u32 %v5410, 16
        %v5632 = vrot.slane %v5630, 7
        %v5633 = vshll.u32 %v5410, 16
        %v5635 = vor.u32 %v5632, %v5633
        %v5636 = vsel %vm457, %v5628, %v5635
        %v5637 = vrot.slane %v5632, 4
        %v5639 = vshrl.u32 %v5411, 16
        %v5641 = vrot.slane %v5639, 7
        %v5642 = vshll.u32 %v5411, 16
        %v5644 = vor.u32 %v5641, %v5642
        %v5645 = vrot.slane %v5641, 4
        %v5647 = vshrl.u32 %v5412, 16
        %v5649 = vrot.slane %v5647, 7
        %v5650 = vshll.u32 %v5412, 16
        %v5652 = vor.u32 %v5649, %v5650
        %v5653 = vsel %vm457, %v5645, %v5652
        %v5654 = vrot.slane %v5649, 4
        %v5656 = vshrl.u32 %v5413, 16
        %v5658 = vrot.slane %v5656, 7
        %v5659 = vshll.u32 %v5413, 16
        %v5661 = vor.u32 %v5658, %v5659
        %v5662 = vrot.slane %v5658, 4
        %v5664 = vshrl.u32 %v5414, 16
        %v5666 = vrot.slane %v5664, 7
        %v5667 = vshll.u32 %v5414, 16
        %v5669 = vor.u32 %v5666, %v5667
        %v5670 = vsel %vm457, %v5662, %v5669
        %v5671 = vrot.slane %v5666, 4
        %v5673 = vshrl.u32 %v5415, 16
        %v5675 = vrot.slane %v5673, 7
        %v5676 = vshll.u32 %v5415, 16
        %v5678 = vor.u32 %v5675, %v5676
        %v5679 = vrot.slane %v5675, 4
        %v5681 = vshrl.u32 %v5416, 16
        %v5683 = vrot.slane %v5681, 7
        %v5684 = vshll.u32 %v5416, 16
        %v5686 = vor.u32 %v5683, %v5684
        %v5687 = vsel %vm457, %v5679, %v5686
        %v5688 = vrot.slane %v5683, 4
        %s5737 = scalar_lea.vmem [#allocation3], 12
        %v5738 = vld [vmem:[%s5737] sm:$0xf]
        %v5739 = vsel %vm781, %v5423, %v5738
        %5740 = vst [vmem:[%s5737] sm:$0xf] %v5739
        %5741 = vst [vmem:[%s5737 + $0x4] sm:$0xf] %v5432
        %v5742 = vld [vmem:[%s5737 + $0x8] sm:$0x1]
        %v5743 = vsel %vm787, %v5433, %v5742
        %5744 = vst [vmem:[%s5737 + $0x8] sm:$0x1] %v5743
        %v5745 = vld [vmem:[%s5737 + $0xc] sm:$0xf]
        %v5746 = vsel %vm781, %v5440, %v5745
        %5747 = vst [vmem:[%s5737 + $0xc] sm:$0xf] %v5746
        %5748 = vst [vmem:[%s5737 + $0x10] sm:$0xf] %v5449
        %v5749 = vld [vmem:[%s5737 + $0x14] sm:$0x1]
        %v5750 = vsel %vm787, %v5450, %v5749
        %5751 = vst [vmem:[%s5737 + $0x14] sm:$0x1] %v5750
        %v5752 = vld [vmem:[%s5737 + $0x18] sm:$0xf]
        %v5753 = vsel %vm781, %v5457, %v5752
        %5754 = vst [vmem:[%s5737 + $0x18] sm:$0xf] %v5753
        %5755 = vst [vmem:[%s5737 + $0x1c] sm:$0xf] %v5466
        %v5756 = vld [vmem:[%s5737 + $0x20] sm:$0x1]
        %v5757 = vsel %vm787, %v5467, %v5756
        %5758 = vst [vmem:[%s5737 + $0x20] sm:$0x1] %v5757
        %v5759 = vld [vmem:[%s5737 + $0x24] sm:$0xf]
        %v5760 = vsel %vm781, %v5474, %v5759
        %5761 = vst [vmem:[%s5737 + $0x24] sm:$0xf] %v5760
        %5762 = vst [vmem:[%s5737 + $0x28] sm:$0xf] %v5483
        %v5763 = vld [vmem:[%s5737 + $0x2c] sm:$0x1]
        %v5764 = vsel %vm787, %v5484, %v5763
        %5765 = vst [vmem:[%s5737 + $0x2c] sm:$0x1] %v5764
        %v5766 = vld [vmem:[%s5737 + $0x30] sm:$0xf]
        %v5767 = vsel %vm781, %v5491, %v5766
        %5768 = vst [vmem:[%s5737 + $0x30] sm:$0xf] %v5767
        %5769 = vst [vmem:[%s5737 + $0x34] sm:$0xf] %v5500
        %v5770 = vld [vmem:[%s5737 + $0x38] sm:$0x1]
        %v5771 = vsel %vm787, %v5501, %v5770
        %5772 = vst [vmem:[%s5737 + $0x38] sm:$0x1] %v5771
        %v5773 = vld [vmem:[%s5737 + $0x3c] sm:$0xf]
        %v5774 = vsel %vm781, %v5508, %v5773
        %5775 = vst [vmem:[%s5737 + $0x3c] sm:$0xf] %v5774
        %5776 = vst [vmem:[%s5737 + $0x40] sm:$0xf] %v5517
        %v5777 = vld [vmem:[%s5737 + $0x44] sm:$0x1]
        %v5778 = vsel %vm787, %v5518, %v5777
        %5779 = vst [vmem:[%s5737 + $0x44] sm:$0x1] %v5778
        %v5780 = vld [vmem:[%s5737 + $0x48] sm:$0xf]
        %v5781 = vsel %vm781, %v5525, %v5780
        %5782 = vst [vmem:[%s5737 + $0x48] sm:$0xf] %v5781
        %5783 = vst [vmem:[%s5737 + $0x4c] sm:$0xf] %v5534
        %v5784 = vld [vmem:[%s5737 + $0x50] sm:$0x1]
        %v5785 = vsel %vm787, %v5535, %v5784
        %5786 = vst [vmem:[%s5737 + $0x50] sm:$0x1] %v5785
        %v5787 = vld [vmem:[%s5737 + $0x54] sm:$0xf]
        %v5788 = vsel %vm781, %v5542, %v5787
        %5789 = vst [vmem:[%s5737 + $0x54] sm:$0xf] %v5788
        %5790 = vst [vmem:[%s5737 + $0x58] sm:$0xf] %v5551
        %v5791 = vld [vmem:[%s5737 + $0x5c] sm:$0x1]
        %v5792 = vsel %vm787, %v5552, %v5791
        %5793 = vst [vmem:[%s5737 + $0x5c] sm:$0x1] %v5792
        %v5794 = vld [vmem:[%s5737 + $0x60] sm:$0xf]
        %v5795 = vsel %vm781, %v5559, %v5794
        %5796 = vst [vmem:[%s5737 + $0x60] sm:$0xf] %v5795
        %5797 = vst [vmem:[%s5737 + $0x64] sm:$0xf] %v5568
        %v5798 = vld [vmem:[%s5737 + $0x68] sm:$0x1]
        %v5799 = vsel %vm787, %v5569, %v5798
        %5800 = vst [vmem:[%s5737 + $0x68] sm:$0x1] %v5799
        %v5801 = vld [vmem:[%s5737 + $0x6c] sm:$0xf]
        %v5802 = vsel %vm781, %v5576, %v5801
        %5803 = vst [vmem:[%s5737 + $0x6c] sm:$0xf] %v5802
        %5804 = vst [vmem:[%s5737 + $0x70] sm:$0xf] %v5585
        %v5805 = vld [vmem:[%s5737 + $0x74] sm:$0x1]
        %v5806 = vsel %vm787, %v5586, %v5805
        %5807 = vst [vmem:[%s5737 + $0x74] sm:$0x1] %v5806
        %v5808 = vld [vmem:[%s5737 + $0x78] sm:$0xf]
        %v5809 = vsel %vm781, %v5593, %v5808
        %5810 = vst [vmem:[%s5737 + $0x78] sm:$0xf] %v5809
        %5811 = vst [vmem:[%s5737 + $0x7c] sm:$0xf] %v5602
        %v5812 = vld [vmem:[%s5737 + $0x80] sm:$0x1]
        %v5813 = vsel %vm787, %v5603, %v5812
        %5814 = vst [vmem:[%s5737 + $0x80] sm:$0x1] %v5813
        %v5815 = vld [vmem:[%s5737 + $0x84] sm:$0xf]
        %v5816 = vsel %vm781, %v5610, %v5815
        %5817 = vst [vmem:[%s5737 + $0x84] sm:$0xf] %v5816
        %5818 = vst [vmem:[%s5737 + $0x88] sm:$0xf] %v5619
        %v5819 = vld [vmem:[%s5737 + $0x8c] sm:$0x1]
        %v5820 = vsel %vm787, %v5620, %v5819
        %5821 = vst [vmem:[%s5737 + $0x8c] sm:$0x1] %v5820
        %v5822 = vld [vmem:[%s5737 + $0x90] sm:$0xf]
        %v5823 = vsel %vm781, %v5627, %v5822
        %5824 = vst [vmem:[%s5737 + $0x90] sm:$0xf] %v5823
        %5825 = vst [vmem:[%s5737 + $0x94] sm:$0xf] %v5636
        %v5826 = vld [vmem:[%s5737 + $0x98] sm:$0x1]
        %v5827 = vsel %vm787, %v5637, %v5826
        %5828 = vst [vmem:[%s5737 + $0x98] sm:$0x1] %v5827
        %v5829 = vld [vmem:[%s5737 + $0x9c] sm:$0xf]
        %v5830 = vsel %vm781, %v5644, %v5829
        %5831 = vst [vmem:[%s5737 + $0x9c] sm:$0xf] %v5830
        %5832 = vst [vmem:[%s5737 + $0xa0] sm:$0xf] %v5653
        %v5833 = vld [vmem:[%s5737 + $0xa4] sm:$0x1]
        %v5834 = vsel %vm787, %v5654, %v5833
        %5835 = vst [vmem:[%s5737 + $0xa4] sm:$0x1] %v5834
        %v5836 = vld [vmem:[%s5737 + $0xa8] sm:$0xf]
        %v5837 = vsel %vm781, %v5661, %v5836
        %5838 = vst [vmem:[%s5737 + $0xa8] sm:$0xf] %v5837
        %5839 = vst [vmem:[%s5737 + $0xac] sm:$0xf] %v5670
        %v5840 = vld [vmem:[%s5737 + $0xb0] sm:$0x1]
        %v5841 = vsel %vm787, %v5671, %v5840
        %5842 = vst [vmem:[%s5737 + $0xb0] sm:$0x1] %v5841
        %v5843 = vld [vmem:[%s5737 + $0xb4] sm:$0xf]
        %v5844 = vsel %vm781, %v5678, %v5843
        %5845 = vst [vmem:[%s5737 + $0xb4] sm:$0xf] %v5844
        %5846 = vst [vmem:[%s5737 + $0xb8] sm:$0xf] %v5687
        %v5847 = vld [vmem:[%s5737 + $0xbc] sm:$0x1]
        %v5848 = vsel %vm787, %v5688, %v5847
        %5849 = vst [vmem:[%s5737 + $0xbc] sm:$0x1] %v5848
        %v5850 = vld [vmem:[#allocation3] sm:$0xf]
        %v5851 = vld [vmem:[#allocation3 + $0x4] sm:$0xf]
        %v5852 = vld [vmem:[#allocation3 + $0xc] sm:$0xf]
        %v5853 = vld [vmem:[#allocation3 + $0x10] sm:$0xf]
        %v5854 = vld [vmem:[#allocation3 + $0x18] sm:$0xf]
        %v5855 = vld [vmem:[#allocation3 + $0x1c] sm:$0xf]
        %v5856 = vld [vmem:[#allocation3 + $0x24] sm:$0xf]
        %v5857 = vld [vmem:[#allocation3 + $0x28] sm:$0xf]
        %v5858 = vld [vmem:[#allocation3 + $0x30] sm:$0xf]
        %v5859 = vld [vmem:[#allocation3 + $0x34] sm:$0xf]
        %v5860 = vld [vmem:[#allocation3 + $0x3c] sm:$0xf]
        %v5861 = vld [vmem:[#allocation3 + $0x40] sm:$0xf]
        %v5862 = vld [vmem:[#allocation3 + $0x48] sm:$0xf]
        %v5863 = vld [vmem:[#allocation3 + $0x4c] sm:$0xf]
        %v5864 = vld [vmem:[#allocation3 + $0x54] sm:$0xf]
        %v5865 = vld [vmem:[#allocation3 + $0x58] sm:$0xf]
        %v5866 = vld [vmem:[#allocation3 + $0x60] sm:$0xf]
        %v5867 = vld [vmem:[#allocation3 + $0x64] sm:$0xf]
        %v5868 = vld [vmem:[#allocation3 + $0x6c] sm:$0xf]
        %v5869 = vld [vmem:[#allocation3 + $0x70] sm:$0xf]
        %v5870 = vld [vmem:[#allocation3 + $0x78] sm:$0xf]
        %v5871 = vld [vmem:[#allocation3 + $0x7c] sm:$0xf]
        %v5872 = vld [vmem:[#allocation3 + $0x84] sm:$0xf]
        %v5873 = vld [vmem:[#allocation3 + $0x88] sm:$0xf]
        %v5874 = vld [vmem:[#allocation3 + $0x90] sm:$0xf]
        %v5875 = vld [vmem:[#allocation3 + $0x94] sm:$0xf]
        %v5876 = vld [vmem:[#allocation3 + $0x9c] sm:$0xf]
        %v5877 = vld [vmem:[#allocation3 + $0xa0] sm:$0xf]
        %v5878 = vld [vmem:[#allocation3 + $0xa8] sm:$0xf]
        %v5879 = vld [vmem:[#allocation3 + $0xac] sm:$0xf]
        %v5880 = vld [vmem:[#allocation3 + $0xb4] sm:$0xf]
        %v5881 = vld [vmem:[#allocation3 + $0xb8] sm:$0xf]
        %v5914 = vunpack.c.l.b16 %v5850
        %v5915 = vunpack.c.l.b16 %v5851
        %v5916 = vunpack.c.l.b16 %v5852
        %v5917 = vunpack.c.l.b16 %v5853
        %v5918 = vunpack.c.l.b16 %v5854
        %v5919 = vunpack.c.l.b16 %v5855
        %v5920 = vunpack.c.l.b16 %v5856
        %v5921 = vunpack.c.l.b16 %v5857
        %v5922 = vunpack.c.l.b16 %v5858
        %v5923 = vunpack.c.l.b16 %v5859
        %v5924 = vunpack.c.l.b16 %v5860
        %v5925 = vunpack.c.l.b16 %v5861
        %v5926 = vunpack.c.l.b16 %v5862
        %v5927 = vunpack.c.l.b16 %v5863
        %v5928 = vunpack.c.l.b16 %v5864
        %v5929 = vunpack.c.l.b16 %v5865
        %v5930 = vunpack.c.l.b16 %v5866
        %v5931 = vunpack.c.l.b16 %v5867
        %v5932 = vunpack.c.l.b16 %v5868
        %v5933 = vunpack.c.l.b16 %v5869
        %v5934 = vunpack.c.l.b16 %v5870
        %v5935 = vunpack.c.l.b16 %v5871
        %v5936 = vunpack.c.l.b16 %v5872
        %v5937 = vunpack.c.l.b16 %v5873
        %v5938 = vunpack.c.l.b16 %v5874
        %v5939 = vunpack.c.l.b16 %v5875
        %v5940 = vunpack.c.l.b16 %v5876
        %v5941 = vunpack.c.l.b16 %v5877
        %v5942 = vunpack.c.l.b16 %v5878
        %v5943 = vunpack.c.l.b16 %v5879
        %v5944 = vunpack.c.l.b16 %v5880
        %v5945 = vunpack.c.l.b16 %v5881
        %v5946 = vpack.c.b16 %v5915, %v5914
        %v5947 = vpack.c.b16 %v5917, %v5916
        %v5948 = vpack.c.b16 %v5919, %v5918
        %v5949 = vpack.c.b16 %v5921, %v5920
        %v5950 = vpack.c.b16 %v5923, %v5922
        %v5951 = vpack.c.b16 %v5925, %v5924
        %v5952 = vpack.c.b16 %v5927, %v5926
        %v5953 = vpack.c.b16 %v5929, %v5928
        %v5954 = vpack.c.b16 %v5931, %v5930
        %v5955 = vpack.c.b16 %v5933, %v5932
        %v5956 = vpack.c.b16 %v5935, %v5934
        %v5957 = vpack.c.b16 %v5937, %v5936
        %v5958 = vpack.c.b16 %v5939, %v5938
        %v5959 = vpack.c.b16 %v5941, %v5940
        %v5960 = vpack.c.b16 %v5943, %v5942
        %v5961 = vpack.c.b16 %v5945, %v5944
        %5978 = vst [vmem:[#allocation4] sm:$0xff] %v5946
        %5979 = vst [vmem:[#allocation4 + $0x48] sm:$0xff] %v5947
        %5980 = vst [vmem:[#allocation4 + $0x90] sm:$0xff] %v5948
        %5981 = vst [vmem:[#allocation4 + $0xd8] sm:$0xff] %v5949
        %5982 = vst [vmem:[#allocation4 + $0x120] sm:$0xff] %v5950
        %5983 = vst [vmem:[#allocation4 + $0x168] sm:$0xff] %v5951
        %5984 = vst [vmem:[#allocation4 + $0x1b0] sm:$0xff] %v5952
        %5985 = vst [vmem:[#allocation4 + $0x1f8] sm:$0xff] %v5953
        %5986 = vst [vmem:[#allocation4 + $0x240] sm:$0xff] %v5954
        %5987 = vst [vmem:[#allocation4 + $0x288] sm:$0xff] %v5955
        %5988 = vst [vmem:[#allocation4 + $0x2d0] sm:$0xff] %v5956
        %5989 = vst [vmem:[#allocation4 + $0x318] sm:$0xff] %v5957
        %5990 = vst [vmem:[#allocation4 + $0x360] sm:$0xff] %v5958
        %5991 = vst [vmem:[#allocation4 + $0x3a8] sm:$0xff] %v5959
        %5992 = vst [vmem:[#allocation4 + $0x3f0] sm:$0xff] %v5960
        %5993 = vst [vmem:[#allocation4 + $0x438] sm:$0xff] %v5961
        %v5994 = vld [vmem:[#allocation3] sm:$0xf]
        %v5995 = vld [vmem:[#allocation3 + $0x4] sm:$0xf]
        %v5996 = vld [vmem:[#allocation3 + $0x8] sm:$0x1]
        %v5997 = vld [vmem:[#allocation3 + $0xc] sm:$0xf]
        %v5998 = vld [vmem:[#allocation3 + $0x10] sm:$0xf]
        %v5999 = vld [vmem:[#allocation3 + $0x14] sm:$0x1]
        %v6000 = vld [vmem:[#allocation3 + $0x18] sm:$0xf]
        %v6001 = vld [vmem:[#allocation3 + $0x1c] sm:$0xf]
        %v6002 = vld [vmem:[#allocation3 + $0x20] sm:$0x1]
        %v6003 = vld [vmem:[#allocation3 + $0x24] sm:$0xf]
        %v6004 = vld [vmem:[#allocation3 + $0x28] sm:$0xf]
        %v6005 = vld [vmem:[#allocation3 + $0x2c] sm:$0x1]
        %v6006 = vld [vmem:[#allocation3 + $0x30] sm:$0xf]
        %v6007 = vld [vmem:[#allocation3 + $0x34] sm:$0xf]
        %v6008 = vld [vmem:[#allocation3 + $0x38] sm:$0x1]
        %v6009 = vld [vmem:[#allocation3 + $0x3c] sm:$0xf]
        %v6010 = vld [vmem:[#allocation3 + $0x40] sm:$0xf]
        %v6011 = vld [vmem:[#allocation3 + $0x44] sm:$0x1]
        %v6012 = vld [vmem:[#allocation3 + $0x48] sm:$0xf]
        %v6013 = vld [vmem:[#allocation3 + $0x4c] sm:$0xf]
        %v6014 = vld [vmem:[#allocation3 + $0x50] sm:$0x1]
        %v6015 = vld [vmem:[#allocation3 + $0x54] sm:$0xf]
        %v6016 = vld [vmem:[#allocation3 + $0x58] sm:$0xf]
        %v6017 = vld [vmem:[#allocation3 + $0x5c] sm:$0x1]
        %v6018 = vld [vmem:[#allocation3 + $0x60] sm:$0xf]
        %v6019 = vld [vmem:[#allocation3 + $0x64] sm:$0xf]
        %v6020 = vld [vmem:[#allocation3 + $0x68] sm:$0x1]
        %v6021 = vld [vmem:[#allocation3 + $0x6c] sm:$0xf]
        %v6022 = vld [vmem:[#allocation3 + $0x70] sm:$0xf]
        %v6023 = vld [vmem:[#allocation3 + $0x74] sm:$0x1]
        %v6024 = vld [vmem:[#allocation3 + $0x78] sm:$0xf]
        %v6025 = vld [vmem:[#allocation3 + $0x7c] sm:$0xf]
        %v6026 = vld [vmem:[#allocation3 + $0x80] sm:$0x1]
        %v6027 = vld [vmem:[#allocation3 + $0x84] sm:$0xf]
        %v6028 = vld [vmem:[#allocation3 + $0x88] sm:$0xf]
        %v6029 = vld [vmem:[#allocation3 + $0x8c] sm:$0x1]
        %v6030 = vld [vmem:[#allocation3 + $0x90] sm:$0xf]
        %v6031 = vld [vmem:[#allocation3 + $0x94] sm:$0xf]
        %v6032 = vld [vmem:[#allocation3 + $0x98] sm:$0x1]
        %v6033 = vld [vmem:[#allocation3 + $0x9c] sm:$0xf]
        %v6034 = vld [vmem:[#allocation3 + $0xa0] sm:$0xf]
        %v6035 = vld [vmem:[#allocation3 + $0xa4] sm:$0x1]
        %v6036 = vld [vmem:[#allocation3 + $0xa8] sm:$0xf]
        %v6037 = vld [vmem:[#allocation3 + $0xac] sm:$0xf]
        %v6038 = vld [vmem:[#allocation3 + $0xb0] sm:$0x1]
        %v6039 = vld [vmem:[#allocation3 + $0xb4] sm:$0xf]
        %v6040 = vld [vmem:[#allocation3 + $0xb8] sm:$0xf]
        %v6041 = vld [vmem:[#allocation3 + $0xbc] sm:$0x1]
        %v6043 = vshrl.u32 %v5994, 16
        %v6045 = vrot.slane %v6043, 4
        %v6046 = vshll.u32 %v5994, 16
        %v6048 = vrot.slane %v6046, 5
        %v6049 = vor.u32 %v6045, %v6048
        %v6050 = vrot.slane %v6049, 4
        %v6052 = vshll.u32 %v5995, 16
        %v6054 = vrot.slane %v6052, 5
        %v6055 = vsel %vm1090, %v6050, %v6054
        %v6056 = vshrl.u32 %v5995, 16
        %v6058 = vrot.slane %v6056, 4
        %v6059 = vor.u32 %v6058, %v6054
        %v6060 = vrot.slane %v6059, 4
        %v6062 = vshll.u32 %v5996, 16
        %v6064 = vrot.slane %v6062, 5
        %v6065 = vsel %vm1090, %v6060, %v6064
        %v6067 = vshrl.u32 %v5997, 16
        %v6069 = vrot.slane %v6067, 4
        %v6070 = vshll.u32 %v5997, 16
        %v6072 = vrot.slane %v6070, 5
        %v6073 = vor.u32 %v6069, %v6072
        %v6074 = vrot.slane %v6073, 4
        %v6076 = vshll.u32 %v5998, 16
        %v6078 = vrot.slane %v6076, 5
        %v6079 = vsel %vm1090, %v6074, %v6078
        %v6080 = vshrl.u32 %v5998, 16
        %v6082 = vrot.slane %v6080, 4
        %v6083 = vor.u32 %v6082, %v6078
        %v6084 = vrot.slane %v6083, 4
        %v6086 = vshll.u32 %v5999, 16
        %v6088 = vrot.slane %v6086, 5
        %v6089 = vsel %vm1090, %v6084, %v6088
        %v6091 = vshrl.u32 %v6000, 16
        %v6093 = vrot.slane %v6091, 4
        %v6094 = vshll.u32 %v6000, 16
        %v6096 = vrot.slane %v6094, 5
        %v6097 = vor.u32 %v6093, %v6096
        %v6098 = vrot.slane %v6097, 4
        %v6100 = vshll.u32 %v6001, 16
        %v6102 = vrot.slane %v6100, 5
        %v6103 = vsel %vm1090, %v6098, %v6102
        %v6104 = vshrl.u32 %v6001, 16
        %v6106 = vrot.slane %v6104, 4
        %v6107 = vor.u32 %v6106, %v6102
        %v6108 = vrot.slane %v6107, 4
        %v6110 = vshll.u32 %v6002, 16
        %v6112 = vrot.slane %v6110, 5
        %v6113 = vsel %vm1090, %v6108, %v6112
        %v6115 = vshrl.u32 %v6003, 16
        %v6117 = vrot.slane %v6115, 4
        %v6118 = vshll.u32 %v6003, 16
        %v6120 = vrot.slane %v6118, 5
        %v6121 = vor.u32 %v6117, %v6120
        %v6122 = vrot.slane %v6121, 4
        %v6124 = vshll.u32 %v6004, 16
        %v6126 = vrot.slane %v6124, 5
        %v6127 = vsel %vm1090, %v6122, %v6126
        %v6128 = vshrl.u32 %v6004, 16
        %v6130 = vrot.slane %v6128, 4
        %v6131 = vor.u32 %v6130, %v6126
        %v6132 = vrot.slane %v6131, 4
        %v6134 = vshll.u32 %v6005, 16
        %v6136 = vrot.slane %v6134, 5
        %v6137 = vsel %vm1090, %v6132, %v6136
        %v6139 = vshrl.u32 %v6006, 16
        %v6141 = vrot.slane %v6139, 4
        %v6142 = vshll.u32 %v6006, 16
        %v6144 = vrot.slane %v6142, 5
        %v6145 = vor.u32 %v6141, %v6144
        %v6146 = vrot.slane %v6145, 4
        %v6148 = vshll.u32 %v6007, 16
        %v6150 = vrot.slane %v6148, 5
        %v6151 = vsel %vm1090, %v6146, %v6150
        %v6152 = vshrl.u32 %v6007, 16
        %v6154 = vrot.slane %v6152, 4
        %v6155 = vor.u32 %v6154, %v6150
        %v6156 = vrot.slane %v6155, 4
        %v6158 = vshll.u32 %v6008, 16
        %v6160 = vrot.slane %v6158, 5
        %v6161 = vsel %vm1090, %v6156, %v6160
        %v6163 = vshrl.u32 %v6009, 16
        %v6165 = vrot.slane %v6163, 4
        %v6166 = vshll.u32 %v6009, 16
        %v6168 = vrot.slane %v6166, 5
        %v6169 = vor.u32 %v6165, %v6168
        %v6170 = vrot.slane %v6169, 4
        %v6172 = vshll.u32 %v6010, 16
        %v6174 = vrot.slane %v6172, 5
        %v6175 = vsel %vm1090, %v6170, %v6174
        %v6176 = vshrl.u32 %v6010, 16
        %v6178 = vrot.slane %v6176, 4
        %v6179 = vor.u32 %v6178, %v6174
        %v6180 = vrot.slane %v6179, 4
        %v6182 = vshll.u32 %v6011, 16
        %v6184 = vrot.slane %v6182, 5
        %v6185 = vsel %vm1090, %v6180, %v6184
        %v6187 = vshrl.u32 %v6012, 16
        %v6189 = vrot.slane %v6187, 4
        %v6190 = vshll.u32 %v6012, 16
        %v6192 = vrot.slane %v6190, 5
        %v6193 = vor.u32 %v6189, %v6192
        %v6194 = vrot.slane %v6193, 4
        %v6196 = vshll.u32 %v6013, 16
        %v6198 = vrot.slane %v6196, 5
        %v6199 = vsel %vm1090, %v6194, %v6198
        %v6200 = vshrl.u32 %v6013, 16
        %v6202 = vrot.slane %v6200, 4
        %v6203 = vor.u32 %v6202, %v6198
        %v6204 = vrot.slane %v6203, 4
        %v6206 = vshll.u32 %v6014, 16
        %v6208 = vrot.slane %v6206, 5
        %v6209 = vsel %vm1090, %v6204, %v6208
        %v6211 = vshrl.u32 %v6015, 16
        %v6213 = vrot.slane %v6211, 4
        %v6214 = vshll.u32 %v6015, 16
        %v6216 = vrot.slane %v6214, 5
        %v6217 = vor.u32 %v6213, %v6216
        %v6218 = vrot.slane %v6217, 4
        %v6220 = vshll.u32 %v6016, 16
        %v6222 = vrot.slane %v6220, 5
        %v6223 = vsel %vm1090, %v6218, %v6222
        %v6224 = vshrl.u32 %v6016, 16
        %v6226 = vrot.slane %v6224, 4
        %v6227 = vor.u32 %v6226, %v6222
        %v6228 = vrot.slane %v6227, 4
        %v6230 = vshll.u32 %v6017, 16
        %v6232 = vrot.slane %v6230, 5
        %v6233 = vsel %vm1090, %v6228, %v6232
        %v6235 = vshrl.u32 %v6018, 16
        %v6237 = vrot.slane %v6235, 4
        %v6238 = vshll.u32 %v6018, 16
        %v6240 = vrot.slane %v6238, 5
        %v6241 = vor.u32 %v6237, %v6240
        %v6242 = vrot.slane %v6241, 4
        %v6244 = vshll.u32 %v6019, 16
        %v6246 = vrot.slane %v6244, 5
        %v6247 = vsel %vm1090, %v6242, %v6246
        %v6248 = vshrl.u32 %v6019, 16
        %v6250 = vrot.slane %v6248, 4
        %v6251 = vor.u32 %v6250, %v6246
        %v6252 = vrot.slane %v6251, 4
        %v6254 = vshll.u32 %v6020, 16
        %v6256 = vrot.slane %v6254, 5
        %v6257 = vsel %vm1090, %v6252, %v6256
        %v6259 = vshrl.u32 %v6021, 16
        %v6261 = vrot.slane %v6259, 4
        %v6262 = vshll.u32 %v6021, 16
        %v6264 = vrot.slane %v6262, 5
        %v6265 = vor.u32 %v6261, %v6264
        %v6266 = vrot.slane %v6265, 4
        %v6268 = vshll.u32 %v6022, 16
        %v6270 = vrot.slane %v6268, 5
        %v6271 = vsel %vm1090, %v6266, %v6270
        %v6272 = vshrl.u32 %v6022, 16
        %v6274 = vrot.slane %v6272, 4
        %v6275 = vor.u32 %v6274, %v6270
        %v6276 = vrot.slane %v6275, 4
        %v6278 = vshll.u32 %v6023, 16
        %v6280 = vrot.slane %v6278, 5
        %v6281 = vsel %vm1090, %v6276, %v6280
        %v6283 = vshrl.u32 %v6024, 16
        %v6285 = vrot.slane %v6283, 4
        %v6286 = vshll.u32 %v6024, 16
        %v6288 = vrot.slane %v6286, 5
        %v6289 = vor.u32 %v6285, %v6288
        %v6290 = vrot.slane %v6289, 4
        %v6292 = vshll.u32 %v6025, 16
        %v6294 = vrot.slane %v6292, 5
        %v6295 = vsel %vm1090, %v6290, %v6294
        %v6296 = vshrl.u32 %v6025, 16
        %v6298 = vrot.slane %v6296, 4
        %v6299 = vor.u32 %v6298, %v6294
        %v6300 = vrot.slane %v6299, 4
        %v6302 = vshll.u32 %v6026, 16
        %v6304 = vrot.slane %v6302, 5
        %v6305 = vsel %vm1090, %v6300, %v6304
        %v6307 = vshrl.u32 %v6027, 16
        %v6309 = vrot.slane %v6307, 4
        %v6310 = vshll.u32 %v6027, 16
        %v6312 = vrot.slane %v6310, 5
        %v6313 = vor.u32 %v6309, %v6312
        %v6314 = vrot.slane %v6313, 4
        %v6316 = vshll.u32 %v6028, 16
        %v6318 = vrot.slane %v6316, 5
        %v6319 = vsel %vm1090, %v6314, %v6318
        %v6320 = vshrl.u32 %v6028, 16
        %v6322 = vrot.slane %v6320, 4
        %v6323 = vor.u32 %v6322, %v6318
        %v6324 = vrot.slane %v6323, 4
        %v6326 = vshll.u32 %v6029, 16
        %v6328 = vrot.slane %v6326, 5
        %v6329 = vsel %vm1090, %v6324, %v6328
        %v6331 = vshrl.u32 %v6030, 16
        %v6333 = vrot.slane %v6331, 4
        %v6334 = vshll.u32 %v6030, 16
        %v6336 = vrot.slane %v6334, 5
        %v6337 = vor.u32 %v6333, %v6336
        %v6338 = vrot.slane %v6337, 4
        %v6340 = vshll.u32 %v6031, 16
        %v6342 = vrot.slane %v6340, 5
        %v6343 = vsel %vm1090, %v6338, %v6342
        %v6344 = vshrl.u32 %v6031, 16
        %v6346 = vrot.slane %v6344, 4
        %v6347 = vor.u32 %v6346, %v6342
        %v6348 = vrot.slane %v6347, 4
        %v6350 = vshll.u32 %v6032, 16
        %v6352 = vrot.slane %v6350, 5
        %v6353 = vsel %vm1090, %v6348, %v6352
        %v6355 = vshrl.u32 %v6033, 16
        %v6357 = vrot.slane %v6355, 4
        %v6358 = vshll.u32 %v6033, 16
        %v6360 = vrot.slane %v6358, 5
        %v6361 = vor.u32 %v6357, %v6360
        %v6362 = vrot.slane %v6361, 4
        %v6364 = vshll.u32 %v6034, 16
        %v6366 = vrot.slane %v6364, 5
        %v6367 = vsel %vm1090, %v6362, %v6366
        %v6368 = vshrl.u32 %v6034, 16
        %v6370 = vrot.slane %v6368, 4
        %v6371 = vor.u32 %v6370, %v6366
        %v6372 = vrot.slane %v6371, 4
        %v6374 = vshll.u32 %v6035, 16
        %v6376 = vrot.slane %v6374, 5
        %v6377 = vsel %vm1090, %v6372, %v6376
        %v6379 = vshrl.u32 %v6036, 16
        %v6381 = vrot.slane %v6379, 4
        %v6382 = vshll.u32 %v6036, 16
        %v6384 = vrot.slane %v6382, 5
        %v6385 = vor.u32 %v6381, %v6384
        %v6386 = vrot.slane %v6385, 4
        %v6388 = vshll.u32 %v6037, 16
        %v6390 = vrot.slane %v6388, 5
        %v6391 = vsel %vm1090, %v6386, %v6390
        %v6392 = vshrl.u32 %v6037, 16
        %v6394 = vrot.slane %v6392, 4
        %v6395 = vor.u32 %v6394, %v6390
        %v6396 = vrot.slane %v6395, 4
        %v6398 = vshll.u32 %v6038, 16
        %v6400 = vrot.slane %v6398, 5
        %v6401 = vsel %vm1090, %v6396, %v6400
        %v6403 = vshrl.u32 %v6039, 16
        %v6405 = vrot.slane %v6403, 4
        %v6406 = vshll.u32 %v6039, 16
        %v6408 = vrot.slane %v6406, 5
        %v6409 = vor.u32 %v6405, %v6408
        %v6410 = vrot.slane %v6409, 4
        %v6412 = vshll.u32 %v6040, 16
        %v6414 = vrot.slane %v6412, 5
        %v6415 = vsel %vm1090, %v6410, %v6414
        %v6416 = vshrl.u32 %v6040, 16
        %v6418 = vrot.slane %v6416, 4
        %v6419 = vor.u32 %v6418, %v6414
        %v6420 = vrot.slane %v6419, 4
        %v6422 = vshll.u32 %v6041, 16
        %v6424 = vrot.slane %v6422, 5
        %v6425 = vsel %vm1090, %v6420, %v6424
        %v6426 = vunpack.c.l.b16 %v6055
        %v6427 = vunpack.c.l.b16 %v6065
        %v6428 = vunpack.c.l.b16 %v6079
        %v6429 = vunpack.c.l.b16 %v6089
        %v6430 = vunpack.c.l.b16 %v6103
        %v6431 = vunpack.c.l.b16 %v6113
        %v6432 = vunpack.c.l.b16 %v6127
        %v6433 = vunpack.c.l.b16 %v6137
        %v6434 = vunpack.c.l.b16 %v6151
        %v6435 = vunpack.c.l.b16 %v6161
        %v6436 = vunpack.c.l.b16 %v6175
        %v6437 = vunpack.c.l.b16 %v6185
        %v6438 = vunpack.c.l.b16 %v6199
        %v6439 = vunpack.c.l.b16 %v6209
        %v6440 = vunpack.c.l.b16 %v6223
        %v6441 = vunpack.c.l.b16 %v6233
        %v6442 = vunpack.c.l.b16 %v6247
        %v6443 = vunpack.c.l.b16 %v6257
        %v6444 = vunpack.c.l.b16 %v6271
        %v6445 = vunpack.c.l.b16 %v6281
        %v6446 = vunpack.c.l.b16 %v6295
        %v6447 = vunpack.c.l.b16 %v6305
        %v6448 = vunpack.c.l.b16 %v6319
        %v6449 = vunpack.c.l.b16 %v6329
        %v6450 = vunpack.c.l.b16 %v6343
        %v6451 = vunpack.c.l.b16 %v6353
        %v6452 = vunpack.c.l.b16 %v6367
        %v6453 = vunpack.c.l.b16 %v6377
        %v6454 = vunpack.c.l.b16 %v6391
        %v6455 = vunpack.c.l.b16 %v6401
        %v6456 = vunpack.c.l.b16 %v6415
        %v6457 = vunpack.c.l.b16 %v6425
        %v6458 = vpack.c.b16 %v6427, %v6426
        %v6459 = vpack.c.b16 %v6429, %v6428
        %v6460 = vpack.c.b16 %v6431, %v6430
        %v6461 = vpack.c.b16 %v6433, %v6432
        %v6462 = vpack.c.b16 %v6435, %v6434
        %v6463 = vpack.c.b16 %v6437, %v6436
        %v6464 = vpack.c.b16 %v6439, %v6438
        %v6465 = vpack.c.b16 %v6441, %v6440
        %v6466 = vpack.c.b16 %v6443, %v6442
        %v6467 = vpack.c.b16 %v6445, %v6444
        %v6468 = vpack.c.b16 %v6447, %v6446
        %v6469 = vpack.c.b16 %v6449, %v6448
        %v6470 = vpack.c.b16 %v6451, %v6450
        %v6471 = vpack.c.b16 %v6453, %v6452
        %v6472 = vpack.c.b16 %v6455, %v6454
        %v6473 = vpack.c.b16 %v6457, %v6456
        %6490 = vst [vmem:[#allocation4 + $0x8] sm:$0xff] %v6458
        %6491 = vst [vmem:[#allocation4 + $0x50] sm:$0xff] %v6459
        %6492 = vst [vmem:[#allocation4 + $0x98] sm:$0xff] %v6460
        %6493 = vst [vmem:[#allocation4 + $0xe0] sm:$0xff] %v6461
        %6494 = vst [vmem:[#allocation4 + $0x128] sm:$0xff] %v6462
        %6495 = vst [vmem:[#allocation4 + $0x170] sm:$0xff] %v6463
        %6496 = vst [vmem:[#allocation4 + $0x1b8] sm:$0xff] %v6464
        %6497 = vst [vmem:[#allocation4 + $0x200] sm:$0xff] %v6465
        %6498 = vst [vmem:[#allocation4 + $0x248] sm:$0xff] %v6466
        %6499 = vst [vmem:[#allocation4 + $0x290] sm:$0xff] %v6467
        %6500 = vst [vmem:[#allocation4 + $0x2d8] sm:$0xff] %v6468
        %6501 = vst [vmem:[#allocation4 + $0x320] sm:$0xff] %v6469
        %6502 = vst [vmem:[#allocation4 + $0x368] sm:$0xff] %v6470
        %6503 = vst [vmem:[#allocation4 + $0x3b0] sm:$0xff] %v6471
        %6504 = vst [vmem:[#allocation4 + $0x3f8] sm:$0xff] %v6472
        %6505 = vst [vmem:[#allocation4 + $0x440] sm:$0xff] %v6473
        %v6506 = vld [vmem:[#allocation3] sm:$0xe]
        %v6507 = vld [vmem:[#allocation3 + $0x4] sm:$0xf]
        %v6508 = vld [vmem:[#allocation3 + $0x8] sm:$0x1]
        %v6509 = vld [vmem:[#allocation3 + $0xc] sm:$0xe]
        %v6510 = vld [vmem:[#allocation3 + $0x10] sm:$0xf]
        %v6511 = vld [vmem:[#allocation3 + $0x14] sm:$0x1]
        %v6512 = vld [vmem:[#allocation3 + $0x18] sm:$0xe]
        %v6513 = vld [vmem:[#allocation3 + $0x1c] sm:$0xf]
        %v6514 = vld [vmem:[#allocation3 + $0x20] sm:$0x1]
        %v6515 = vld [vmem:[#allocation3 + $0x24] sm:$0xe]
        %v6516 = vld [vmem:[#allocation3 + $0x28] sm:$0xf]
        %v6517 = vld [vmem:[#allocation3 + $0x2c] sm:$0x1]
        %v6518 = vld [vmem:[#allocation3 + $0x30] sm:$0xe]
        %v6519 = vld [vmem:[#allocation3 + $0x34] sm:$0xf]
        %v6520 = vld [vmem:[#allocation3 + $0x38] sm:$0x1]
        %v6521 = vld [vmem:[#allocation3 + $0x3c] sm:$0xe]
        %v6522 = vld [vmem:[#allocation3 + $0x40] sm:$0xf]
        %v6523 = vld [vmem:[#allocation3 + $0x44] sm:$0x1]
        %v6524 = vld [vmem:[#allocation3 + $0x48] sm:$0xe]
        %v6525 = vld [vmem:[#allocation3 + $0x4c] sm:$0xf]
        %v6526 = vld [vmem:[#allocation3 + $0x50] sm:$0x1]
        %v6527 = vld [vmem:[#allocation3 + $0x54] sm:$0xe]
        %v6528 = vld [vmem:[#allocation3 + $0x58] sm:$0xf]
        %v6529 = vld [vmem:[#allocation3 + $0x5c] sm:$0x1]
        %v6530 = vld [vmem:[#allocation3 + $0x60] sm:$0xe]
        %v6531 = vld [vmem:[#allocation3 + $0x64] sm:$0xf]
        %v6532 = vld [vmem:[#allocation3 + $0x68] sm:$0x1]
        %v6533 = vld [vmem:[#allocation3 + $0x6c] sm:$0xe]
        %v6534 = vld [vmem:[#allocation3 + $0x70] sm:$0xf]
        %v6535 = vld [vmem:[#allocation3 + $0x74] sm:$0x1]
        %v6536 = vld [vmem:[#allocation3 + $0x78] sm:$0xe]
        %v6537 = vld [vmem:[#allocation3 + $0x7c] sm:$0xf]
        %v6538 = vld [vmem:[#allocation3 + $0x80] sm:$0x1]
        %v6539 = vld [vmem:[#allocation3 + $0x84] sm:$0xe]
        %v6540 = vld [vmem:[#allocation3 + $0x88] sm:$0xf]
        %v6541 = vld [vmem:[#allocation3 + $0x8c] sm:$0x1]
        %v6542 = vld [vmem:[#allocation3 + $0x90] sm:$0xe]
        %v6543 = vld [vmem:[#allocation3 + $0x94] sm:$0xf]
        %v6544 = vld [vmem:[#allocation3 + $0x98] sm:$0x1]
        %v6545 = vld [vmem:[#allocation3 + $0x9c] sm:$0xe]
        %v6546 = vld [vmem:[#allocation3 + $0xa0] sm:$0xf]
        %v6547 = vld [vmem:[#allocation3 + $0xa4] sm:$0x1]
        %v6548 = vld [vmem:[#allocation3 + $0xa8] sm:$0xe]
        %v6549 = vld [vmem:[#allocation3 + $0xac] sm:$0xf]
        %v6550 = vld [vmem:[#allocation3 + $0xb0] sm:$0x1]
        %v6551 = vld [vmem:[#allocation3 + $0xb4] sm:$0xe]
        %v6552 = vld [vmem:[#allocation3 + $0xb8] sm:$0xf]
        %v6553 = vld [vmem:[#allocation3 + $0xbc] sm:$0x1]
        %v6602 = vrot.slane %v6506, 5
        %v6603 = vrot.slane %v6602, 4
        %v6604 = vrot.slane %v6507, 5
        %v6605 = vsel %vm1653, %v6603, %v6604
        %v6606 = vrot.slane %v6604, 4
        %v6607 = vrot.slane %v6508, 5
        %v6608 = vsel %vm1653, %v6606, %v6607
        %v6609 = vrot.slane %v6509, 5
        %v6610 = vrot.slane %v6609, 4
        %v6611 = vrot.slane %v6510, 5
        %v6612 = vsel %vm1653, %v6610, %v6611
        %v6613 = vrot.slane %v6611, 4
        %v6614 = vrot.slane %v6511, 5
        %v6615 = vsel %vm1653, %v6613, %v6614
        %v6616 = vrot.slane %v6512, 5
        %v6617 = vrot.slane %v6616, 4
        %v6618 = vrot.slane %v6513, 5
        %v6619 = vsel %vm1653, %v6617, %v6618
        %v6620 = vrot.slane %v6618, 4
        %v6621 = vrot.slane %v6514, 5
        %v6622 = vsel %vm1653, %v6620, %v6621
        %v6623 = vrot.slane %v6515, 5
        %v6624 = vrot.slane %v6623, 4
        %v6625 = vrot.slane %v6516, 5
        %v6626 = vsel %vm1653, %v6624, %v6625
        %v6627 = vrot.slane %v6625, 4
        %v6628 = vrot.slane %v6517, 5
        %v6629 = vsel %vm1653, %v6627, %v6628
        %v6630 = vrot.slane %v6518, 5
        %v6631 = vrot.slane %v6630, 4
        %v6632 = vrot.slane %v6519, 5
        %v6633 = vsel %vm1653, %v6631, %v6632
        %v6634 = vrot.slane %v6632, 4
        %v6635 = vrot.slane %v6520, 5
        %v6636 = vsel %vm1653, %v6634, %v6635
        %v6637 = vrot.slane %v6521, 5
        %v6638 = vrot.slane %v6637, 4
        %v6639 = vrot.slane %v6522, 5
        %v6640 = vsel %vm1653, %v6638, %v6639
        %v6641 = vrot.slane %v6639, 4
        %v6642 = vrot.slane %v6523, 5
        %v6643 = vsel %vm1653, %v6641, %v6642
        %v6644 = vrot.slane %v6524, 5
        %v6645 = vrot.slane %v6644, 4
        %v6646 = vrot.slane %v6525, 5
        %v6647 = vsel %vm1653, %v6645, %v6646
        %v6648 = vrot.slane %v6646, 4
        %v6649 = vrot.slane %v6526, 5
        %v6650 = vsel %vm1653, %v6648, %v6649
        %v6651 = vrot.slane %v6527, 5
        %v6652 = vrot.slane %v6651, 4
        %v6653 = vrot.slane %v6528, 5
        %v6654 = vsel %vm1653, %v6652, %v6653
        %v6655 = vrot.slane %v6653, 4
        %v6656 = vrot.slane %v6529, 5
        %v6657 = vsel %vm1653, %v6655, %v6656
        %v6658 = vrot.slane %v6530, 5
        %v6659 = vrot.slane %v6658, 4
        %v6660 = vrot.slane %v6531, 5
        %v6661 = vsel %vm1653, %v6659, %v6660
        %v6662 = vrot.slane %v6660, 4
        %v6663 = vrot.slane %v6532, 5
        %v6664 = vsel %vm1653, %v6662, %v6663
        %v6665 = vrot.slane %v6533, 5
        %v6666 = vrot.slane %v6665, 4
        %v6667 = vrot.slane %v6534, 5
        %v6668 = vsel %vm1653, %v6666, %v6667
        %v6669 = vrot.slane %v6667, 4
        %v6670 = vrot.slane %v6535, 5
        %v6671 = vsel %vm1653, %v6669, %v6670
        %v6672 = vrot.slane %v6536, 5
        %v6673 = vrot.slane %v6672, 4
        %v6674 = vrot.slane %v6537, 5
        %v6675 = vsel %vm1653, %v6673, %v6674
        %v6676 = vrot.slane %v6674, 4
        %v6677 = vrot.slane %v6538, 5
        %v6678 = vsel %vm1653, %v6676, %v6677
        %v6679 = vrot.slane %v6539, 5
        %v6680 = vrot.slane %v6679, 4
        %v6681 = vrot.slane %v6540, 5
        %v6682 = vsel %vm1653, %v6680, %v6681
        %v6683 = vrot.slane %v6681, 4
        %v6684 = vrot.slane %v6541, 5
        %v6685 = vsel %vm1653, %v6683, %v6684
        %v6686 = vrot.slane %v6542, 5
        %v6687 = vrot.slane %v6686, 4
        %v6688 = vrot.slane %v6543, 5
        %v6689 = vsel %vm1653, %v6687, %v6688
        %v6690 = vrot.slane %v6688, 4
        %v6691 = vrot.slane %v6544, 5
        %v6692 = vsel %vm1653, %v6690, %v6691
        %v6693 = vrot.slane %v6545, 5
        %v6694 = vrot.slane %v6693, 4
        %v6695 = vrot.slane %v6546, 5
        %v6696 = vsel %vm1653, %v6694, %v6695
        %v6697 = vrot.slane %v6695, 4
        %v6698 = vrot.slane %v6547, 5
        %v6699 = vsel %vm1653, %v6697, %v6698
        %v6700 = vrot.slane %v6548, 5
        %v6701 = vrot.slane %v6700, 4
        %v6702 = vrot.slane %v6549, 5
        %v6703 = vsel %vm1653, %v6701, %v6702
        %v6704 = vrot.slane %v6702, 4
        %v6705 = vrot.slane %v6550, 5
        %v6706 = vsel %vm1653, %v6704, %v6705
        %v6707 = vrot.slane %v6551, 5
        %v6708 = vrot.slane %v6707, 4
        %v6709 = vrot.slane %v6552, 5
        %v6710 = vsel %vm1653, %v6708, %v6709
        %v6711 = vrot.slane %v6709, 4
        %v6712 = vrot.slane %v6553, 5
        %v6713 = vsel %vm1653, %v6711, %v6712
        %v6714 = vunpack.c.l.b16 %v6605
        %v6715 = vunpack.c.l.b16 %v6608
        %v6716 = vunpack.c.l.b16 %v6612
        %v6717 = vunpack.c.l.b16 %v6615
        %v6718 = vunpack.c.l.b16 %v6619
        %v6719 = vunpack.c.l.b16 %v6622
        %v6720 = vunpack.c.l.b16 %v6626
        %v6721 = vunpack.c.l.b16 %v6629
        %v6722 = vunpack.c.l.b16 %v6633
        %v6723 = vunpack.c.l.b16 %v6636
        %v6724 = vunpack.c.l.b16 %v6640
        %v6725 = vunpack.c.l.b16 %v6643
        %v6726 = vunpack.c.l.b16 %v6647
        %v6727 = vunpack.c.l.b16 %v6650
        %v6728 = vunpack.c.l.b16 %v6654
        %v6729 = vunpack.c.l.b16 %v6657
        %v6730 = vunpack.c.l.b16 %v6661
        %v6731 = vunpack.c.l.b16 %v6664
        %v6732 = vunpack.c.l.b16 %v6668
        %v6733 = vunpack.c.l.b16 %v6671
        %v6734 = vunpack.c.l.b16 %v6675
        %v6735 = vunpack.c.l.b16 %v6678
        %v6736 = vunpack.c.l.b16 %v6682
        %v6737 = vunpack.c.l.b16 %v6685
        %v6738 = vunpack.c.l.b16 %v6689
        %v6739 = vunpack.c.l.b16 %v6692
        %v6740 = vunpack.c.l.b16 %v6696
        %v6741 = vunpack.c.l.b16 %v6699
        %v6742 = vunpack.c.l.b16 %v6703
        %v6743 = vunpack.c.l.b16 %v6706
        %v6744 = vunpack.c.l.b16 %v6710
        %v6745 = vunpack.c.l.b16 %v6713
        %v6746 = vpack.c.b16 %v6715, %v6714
        %v6747 = vpack.c.b16 %v6717, %v6716
        %v6748 = vpack.c.b16 %v6719, %v6718
        %v6749 = vpack.c.b16 %v6721, %v6720
        %v6750 = vpack.c.b16 %v6723, %v6722
        %v6751 = vpack.c.b16 %v6725, %v6724
        %v6752 = vpack.c.b16 %v6727, %v6726
        %v6753 = vpack.c.b16 %v6729, %v6728
        %v6754 = vpack.c.b16 %v6731, %v6730
        %v6755 = vpack.c.b16 %v6733, %v6732
        %v6756 = vpack.c.b16 %v6735, %v6734
        %v6757 = vpack.c.b16 %v6737, %v6736
        %v6758 = vpack.c.b16 %v6739, %v6738
        %v6759 = vpack.c.b16 %v6741, %v6740
        %v6760 = vpack.c.b16 %v6743, %v6742
        %v6761 = vpack.c.b16 %v6745, %v6744
        %6778 = vst [vmem:[#allocation4 + $0x10] sm:$0xff] %v6746
        %6779 = vst [vmem:[#allocation4 + $0x58] sm:$0xff] %v6747
        %6780 = vst [vmem:[#allocation4 + $0xa0] sm:$0xff] %v6748
        %6781 = vst [vmem:[#allocation4 + $0xe8] sm:$0xff] %v6749
        %6782 = vst [vmem:[#allocation4 + $0x130] sm:$0xff] %v6750
        %6783 = vst [vmem:[#allocation4 + $0x178] sm:$0xff] %v6751
        %6784 = vst [vmem:[#allocation4 + $0x1c0] sm:$0xff] %v6752
        %6785 = vst [vmem:[#allocation4 + $0x208] sm:$0xff] %v6753
        %6786 = vst [vmem:[#allocation4 + $0x250] sm:$0xff] %v6754
        %6787 = vst [vmem:[#allocation4 + $0x298] sm:$0xff] %v6755
        %6788 = vst [vmem:[#allocation4 + $0x2e0] sm:$0xff] %v6756
        %6789 = vst [vmem:[#allocation4 + $0x328] sm:$0xff] %v6757
        %6790 = vst [vmem:[#allocation4 + $0x370] sm:$0xff] %v6758
        %6791 = vst [vmem:[#allocation4 + $0x3b8] sm:$0xff] %v6759
        %6792 = vst [vmem:[#allocation4 + $0x400] sm:$0xff] %v6760
        %6793 = vst [vmem:[#allocation4 + $0x448] sm:$0xff] %v6761
        %v6794 = vld [vmem:[%s5737] sm:$0xf]
        %v6795 = vld [vmem:[%s5737 + $0x4] sm:$0xf]
        %v6796 = vld [vmem:[%s5737 + $0xc] sm:$0xf]
        %v6797 = vld [vmem:[%s5737 + $0x10] sm:$0xf]
        %v6798 = vld [vmem:[%s5737 + $0x18] sm:$0xf]
        %v6799 = vld [vmem:[%s5737 + $0x1c] sm:$0xf]
        %v6800 = vld [vmem:[%s5737 + $0x24] sm:$0xf]
        %v6801 = vld [vmem:[%s5737 + $0x28] sm:$0xf]
        %v6802 = vld [vmem:[%s5737 + $0x30] sm:$0xf]
        %v6803 = vld [vmem:[%s5737 + $0x34] sm:$0xf]
        %v6804 = vld [vmem:[%s5737 + $0x3c] sm:$0xf]
        %v6805 = vld [vmem:[%s5737 + $0x40] sm:$0xf]
        %v6806 = vld [vmem:[%s5737 + $0x48] sm:$0xf]
        %v6807 = vld [vmem:[%s5737 + $0x4c] sm:$0xf]
        %v6808 = vld [vmem:[%s5737 + $0x54] sm:$0xf]
        %v6809 = vld [vmem:[%s5737 + $0x58] sm:$0xf]
        %v6810 = vld [vmem:[%s5737 + $0x60] sm:$0xf]
        %v6811 = vld [vmem:[%s5737 + $0x64] sm:$0xf]
        %v6812 = vld [vmem:[%s5737 + $0x6c] sm:$0xf]
        %v6813 = vld [vmem:[%s5737 + $0x70] sm:$0xf]
        %v6814 = vld [vmem:[%s5737 + $0x78] sm:$0xf]
        %v6815 = vld [vmem:[%s5737 + $0x7c] sm:$0xf]
        %v6816 = vld [vmem:[%s5737 + $0x84] sm:$0xf]
        %v6817 = vld [vmem:[%s5737 + $0x88] sm:$0xf]
        %v6818 = vld [vmem:[%s5737 + $0x90] sm:$0xf]
        %v6819 = vld [vmem:[%s5737 + $0x94] sm:$0xf]
        %v6820 = vld [vmem:[%s5737 + $0x9c] sm:$0xf]
        %v6821 = vld [vmem:[%s5737 + $0xa0] sm:$0xf]
        %v6822 = vld [vmem:[%s5737 + $0xa8] sm:$0xf]
        %v6823 = vld [vmem:[%s5737 + $0xac] sm:$0xf]
        %v6824 = vld [vmem:[%s5737 + $0xb4] sm:$0xf]
        %v6825 = vld [vmem:[%s5737 + $0xb8] sm:$0xf]
        %v6858 = vunpack.c.l.b16 %v6794
        %v6859 = vunpack.c.l.b16 %v6795
        %v6860 = vunpack.c.l.b16 %v6796
        %v6861 = vunpack.c.l.b16 %v6797
        %v6862 = vunpack.c.l.b16 %v6798
        %v6863 = vunpack.c.l.b16 %v6799
        %v6864 = vunpack.c.l.b16 %v6800
        %v6865 = vunpack.c.l.b16 %v6801
        %v6866 = vunpack.c.l.b16 %v6802
        %v6867 = vunpack.c.l.b16 %v6803
        %v6868 = vunpack.c.l.b16 %v6804
        %v6869 = vunpack.c.l.b16 %v6805
        %v6870 = vunpack.c.l.b16 %v6806
        %v6871 = vunpack.c.l.b16 %v6807
        %v6872 = vunpack.c.l.b16 %v6808
        %v6873 = vunpack.c.l.b16 %v6809
        %v6874 = vunpack.c.l.b16 %v6810
        %v6875 = vunpack.c.l.b16 %v6811
        %v6876 = vunpack.c.l.b16 %v6812
        %v6877 = vunpack.c.l.b16 %v6813
        %v6878 = vunpack.c.l.b16 %v6814
        %v6879 = vunpack.c.l.b16 %v6815
        %v6880 = vunpack.c.l.b16 %v6816
        %v6881 = vunpack.c.l.b16 %v6817
        %v6882 = vunpack.c.l.b16 %v6818
        %v6883 = vunpack.c.l.b16 %v6819
        %v6884 = vunpack.c.l.b16 %v6820
        %v6885 = vunpack.c.l.b16 %v6821
        %v6886 = vunpack.c.l.b16 %v6822
        %v6887 = vunpack.c.l.b16 %v6823
        %v6888 = vunpack.c.l.b16 %v6824
        %v6889 = vunpack.c.l.b16 %v6825
        %v6890 = vpack.c.b16 %v6859, %v6858
        %v6891 = vpack.c.b16 %v6861, %v6860
        %v6892 = vpack.c.b16 %v6863, %v6862
        %v6893 = vpack.c.b16 %v6865, %v6864
        %v6894 = vpack.c.b16 %v6867, %v6866
        %v6895 = vpack.c.b16 %v6869, %v6868
        %v6896 = vpack.c.b16 %v6871, %v6870
        %v6897 = vpack.c.b16 %v6873, %v6872
        %v6898 = vpack.c.b16 %v6875, %v6874
        %v6899 = vpack.c.b16 %v6877, %v6876
        %v6900 = vpack.c.b16 %v6879, %v6878
        %v6901 = vpack.c.b16 %v6881, %v6880
        %v6902 = vpack.c.b16 %v6883, %v6882
        %v6903 = vpack.c.b16 %v6885, %v6884
        %v6904 = vpack.c.b16 %v6887, %v6886
        %v6905 = vpack.c.b16 %v6889, %v6888
        %6922 = vst [vmem:[#allocation4 + $0x18] sm:$0xff] %v6890
        %6923 = vst [vmem:[#allocation4 + $0x60] sm:$0xff] %v6891
        %6924 = vst [vmem:[#allocation4 + $0xa8] sm:$0xff] %v6892
        %6925 = vst [vmem:[#allocation4 + $0xf0] sm:$0xff] %v6893
        %6926 = vst [vmem:[#allocation4 + $0x138] sm:$0xff] %v6894
        %6927 = vst [vmem:[#allocation4 + $0x180] sm:$0xff] %v6895
        %6928 = vst [vmem:[#allocation4 + $0x1c8] sm:$0xff] %v6896
        %6929 = vst [vmem:[#allocation4 + $0x210] sm:$0xff] %v6897
        %6930 = vst [vmem:[#allocation4 + $0x258] sm:$0xff] %v6898
        %6931 = vst [vmem:[#allocation4 + $0x2a0] sm:$0xff] %v6899
        %6932 = vst [vmem:[#allocation4 + $0x2e8] sm:$0xff] %v6900
        %6933 = vst [vmem:[#allocation4 + $0x330] sm:$0xff] %v6901
        %6934 = vst [vmem:[#allocation4 + $0x378] sm:$0xff] %v6902
        %6935 = vst [vmem:[#allocation4 + $0x3c0] sm:$0xff] %v6903
        %6936 = vst [vmem:[#allocation4 + $0x408] sm:$0xff] %v6904
        %6937 = vst [vmem:[#allocation4 + $0x450] sm:$0xff] %v6905
        %v6938 = vld [vmem:[%s5737] sm:$0xf]
        %v6939 = vld [vmem:[%s5737 + $0x4] sm:$0xf]
        %v6940 = vld [vmem:[%s5737 + $0x8] sm:$0x1]
        %v6941 = vld [vmem:[%s5737 + $0xc] sm:$0xf]
        %v6942 = vld [vmem:[%s5737 + $0x10] sm:$0xf]
        %v6943 = vld [vmem:[%s5737 + $0x14] sm:$0x1]
        %v6944 = vld [vmem:[%s5737 + $0x18] sm:$0xf]
        %v6945 = vld [vmem:[%s5737 + $0x1c] sm:$0xf]
        %v6946 = vld [vmem:[%s5737 + $0x20] sm:$0x1]
        %v6947 = vld [vmem:[%s5737 + $0x24] sm:$0xf]
        %v6948 = vld [vmem:[%s5737 + $0x28] sm:$0xf]
        %v6949 = vld [vmem:[%s5737 + $0x2c] sm:$0x1]
        %v6950 = vld [vmem:[%s5737 + $0x30] sm:$0xf]
        %v6951 = vld [vmem:[%s5737 + $0x34] sm:$0xf]
        %v6952 = vld [vmem:[%s5737 + $0x38] sm:$0x1]
        %v6953 = vld [vmem:[%s5737 + $0x3c] sm:$0xf]
        %v6954 = vld [vmem:[%s5737 + $0x40] sm:$0xf]
        %v6955 = vld [vmem:[%s5737 + $0x44] sm:$0x1]
        %v6956 = vld [vmem:[%s5737 + $0x48] sm:$0xf]
        %v6957 = vld [vmem:[%s5737 + $0x4c] sm:$0xf]
        %v6958 = vld [vmem:[%s5737 + $0x50] sm:$0x1]
        %v6959 = vld [vmem:[%s5737 + $0x54] sm:$0xf]
        %v6960 = vld [vmem:[%s5737 + $0x58] sm:$0xf]
        %v6961 = vld [vmem:[%s5737 + $0x5c] sm:$0x1]
        %v6962 = vld [vmem:[%s5737 + $0x60] sm:$0xf]
        %v6963 = vld [vmem:[%s5737 + $0x64] sm:$0xf]
        %v6964 = vld [vmem:[%s5737 + $0x68] sm:$0x1]
        %v6965 = vld [vmem:[%s5737 + $0x6c] sm:$0xf]
        %v6966 = vld [vmem:[%s5737 + $0x70] sm:$0xf]
        %v6967 = vld [vmem:[%s5737 + $0x74] sm:$0x1]
        %v6968 = vld [vmem:[%s5737 + $0x78] sm:$0xf]
        %v6969 = vld [vmem:[%s5737 + $0x7c] sm:$0xf]
        %v6970 = vld [vmem:[%s5737 + $0x80] sm:$0x1]
        %v6971 = vld [vmem:[%s5737 + $0x84] sm:$0xf]
        %v6972 = vld [vmem:[%s5737 + $0x88] sm:$0xf]
        %v6973 = vld [vmem:[%s5737 + $0x8c] sm:$0x1]
        %v6974 = vld [vmem:[%s5737 + $0x90] sm:$0xf]
        %v6975 = vld [vmem:[%s5737 + $0x94] sm:$0xf]
        %v6976 = vld [vmem:[%s5737 + $0x98] sm:$0x1]
        %v6977 = vld [vmem:[%s5737 + $0x9c] sm:$0xf]
        %v6978 = vld [vmem:[%s5737 + $0xa0] sm:$0xf]
        %v6979 = vld [vmem:[%s5737 + $0xa4] sm:$0x1]
        %v6980 = vld [vmem:[%s5737 + $0xa8] sm:$0xf]
        %v6981 = vld [vmem:[%s5737 + $0xac] sm:$0xf]
        %v6982 = vld [vmem:[%s5737 + $0xb0] sm:$0x1]
        %v6983 = vld [vmem:[%s5737 + $0xb4] sm:$0xf]
        %v6984 = vld [vmem:[%s5737 + $0xb8] sm:$0xf]
        %v6985 = vld [vmem:[%s5737 + $0xbc] sm:$0x1]
        %v6987 = vshrl.u32 %v6938, 16
        %v6989 = vrot.slane %v6987, 4
        %v6990 = vshll.u32 %v6938, 16
        %v6992 = vrot.slane %v6990, 5
        %v6993 = vor.u32 %v6989, %v6992
        %v6994 = vrot.slane %v6993, 4
        %v6996 = vshll.u32 %v6939, 16
        %v6998 = vrot.slane %v6996, 5
        %v6999 = vsel %vm1090, %v6994, %v6998
        %v7000 = vshrl.u32 %v6939, 16
        %v7002 = vrot.slane %v7000, 4
        %v7003 = vor.u32 %v7002, %v6998
        %v7004 = vrot.slane %v7003, 4
        %v7006 = vshll.u32 %v6940, 16
        %v7008 = vrot.slane %v7006, 5
        %v7009 = vsel %vm1090, %v7004, %v7008
        %v7011 = vshrl.u32 %v6941, 16
        %v7013 = vrot.slane %v7011, 4
        %v7014 = vshll.u32 %v6941, 16
        %v7016 = vrot.slane %v7014, 5
        %v7017 = vor.u32 %v7013, %v7016
        %v7018 = vrot.slane %v7017, 4
        %v7020 = vshll.u32 %v6942, 16
        %v7022 = vrot.slane %v7020, 5
        %v7023 = vsel %vm1090, %v7018, %v7022
        %v7024 = vshrl.u32 %v6942, 16
        %v7026 = vrot.slane %v7024, 4
        %v7027 = vor.u32 %v7026, %v7022
        %v7028 = vrot.slane %v7027, 4
        %v7030 = vshll.u32 %v6943, 16
        %v7032 = vrot.slane %v7030, 5
        %v7033 = vsel %vm1090, %v7028, %v7032
        %v7035 = vshrl.u32 %v6944, 16
        %v7037 = vrot.slane %v7035, 4
        %v7038 = vshll.u32 %v6944, 16
        %v7040 = vrot.slane %v7038, 5
        %v7041 = vor.u32 %v7037, %v7040
        %v7042 = vrot.slane %v7041, 4
        %v7044 = vshll.u32 %v6945, 16
        %v7046 = vrot.slane %v7044, 5
        %v7047 = vsel %vm1090, %v7042, %v7046
        %v7048 = vshrl.u32 %v6945, 16
        %v7050 = vrot.slane %v7048, 4
        %v7051 = vor.u32 %v7050, %v7046
        %v7052 = vrot.slane %v7051, 4
        %v7054 = vshll.u32 %v6946, 16
        %v7056 = vrot.slane %v7054, 5
        %v7057 = vsel %vm1090, %v7052, %v7056
        %v7059 = vshrl.u32 %v6947, 16
        %v7061 = vrot.slane %v7059, 4
        %v7062 = vshll.u32 %v6947, 16
        %v7064 = vrot.slane %v7062, 5
        %v7065 = vor.u32 %v7061, %v7064
        %v7066 = vrot.slane %v7065, 4
        %v7068 = vshll.u32 %v6948, 16
        %v7070 = vrot.slane %v7068, 5
        %v7071 = vsel %vm1090, %v7066, %v7070
        %v7072 = vshrl.u32 %v6948, 16
        %v7074 = vrot.slane %v7072, 4
        %v7075 = vor.u32 %v7074, %v7070
        %v7076 = vrot.slane %v7075, 4
        %v7078 = vshll.u32 %v6949, 16
        %v7080 = vrot.slane %v7078, 5
        %v7081 = vsel %vm1090, %v7076, %v7080
        %v7083 = vshrl.u32 %v6950, 16
        %v7085 = vrot.slane %v7083, 4
        %v7086 = vshll.u32 %v6950, 16
        %v7088 = vrot.slane %v7086, 5
        %v7089 = vor.u32 %v7085, %v7088
        %v7090 = vrot.slane %v7089, 4
        %v7092 = vshll.u32 %v6951, 16
        %v7094 = vrot.slane %v7092, 5
        %v7095 = vsel %vm1090, %v7090, %v7094
        %v7096 = vshrl.u32 %v6951, 16
        %v7098 = vrot.slane %v7096, 4
        %v7099 = vor.u32 %v7098, %v7094
        %v7100 = vrot.slane %v7099, 4
        %v7102 = vshll.u32 %v6952, 16
        %v7104 = vrot.slane %v7102, 5
        %v7105 = vsel %vm1090, %v7100, %v7104
        %v7107 = vshrl.u32 %v6953, 16
        %v7109 = vrot.slane %v7107, 4
        %v7110 = vshll.u32 %v6953, 16
        %v7112 = vrot.slane %v7110, 5
        %v7113 = vor.u32 %v7109, %v7112
        %v7114 = vrot.slane %v7113, 4
        %v7116 = vshll.u32 %v6954, 16
        %v7118 = vrot.slane %v7116, 5
        %v7119 = vsel %vm1090, %v7114, %v7118
        %v7120 = vshrl.u32 %v6954, 16
        %v7122 = vrot.slane %v7120, 4
        %v7123 = vor.u32 %v7122, %v7118
        %v7124 = vrot.slane %v7123, 4
        %v7126 = vshll.u32 %v6955, 16
        %v7128 = vrot.slane %v7126, 5
        %v7129 = vsel %vm1090, %v7124, %v7128
        %v7131 = vshrl.u32 %v6956, 16
        %v7133 = vrot.slane %v7131, 4
        %v7134 = vshll.u32 %v6956, 16
        %v7136 = vrot.slane %v7134, 5
        %v7137 = vor.u32 %v7133, %v7136
        %v7138 = vrot.slane %v7137, 4
        %v7140 = vshll.u32 %v6957, 16
        %v7142 = vrot.slane %v7140, 5
        %v7143 = vsel %vm1090, %v7138, %v7142
        %v7144 = vshrl.u32 %v6957, 16
        %v7146 = vrot.slane %v7144, 4
        %v7147 = vor.u32 %v7146, %v7142
        %v7148 = vrot.slane %v7147, 4
        %v7150 = vshll.u32 %v6958, 16
        %v7152 = vrot.slane %v7150, 5
        %v7153 = vsel %vm1090, %v7148, %v7152
        %v7155 = vshrl.u32 %v6959, 16
        %v7157 = vrot.slane %v7155, 4
        %v7158 = vshll.u32 %v6959, 16
        %v7160 = vrot.slane %v7158, 5
        %v7161 = vor.u32 %v7157, %v7160
        %v7162 = vrot.slane %v7161, 4
        %v7164 = vshll.u32 %v6960, 16
        %v7166 = vrot.slane %v7164, 5
        %v7167 = vsel %vm1090, %v7162, %v7166
        %v7168 = vshrl.u32 %v6960, 16
        %v7170 = vrot.slane %v7168, 4
        %v7171 = vor.u32 %v7170, %v7166
        %v7172 = vrot.slane %v7171, 4
        %v7174 = vshll.u32 %v6961, 16
        %v7176 = vrot.slane %v7174, 5
        %v7177 = vsel %vm1090, %v7172, %v7176
        %v7179 = vshrl.u32 %v6962, 16
        %v7181 = vrot.slane %v7179, 4
        %v7182 = vshll.u32 %v6962, 16
        %v7184 = vrot.slane %v7182, 5
        %v7185 = vor.u32 %v7181, %v7184
        %v7186 = vrot.slane %v7185, 4
        %v7188 = vshll.u32 %v6963, 16
        %v7190 = vrot.slane %v7188, 5
        %v7191 = vsel %vm1090, %v7186, %v7190
        %v7192 = vshrl.u32 %v6963, 16
        %v7194 = vrot.slane %v7192, 4
        %v7195 = vor.u32 %v7194, %v7190
        %v7196 = vrot.slane %v7195, 4
        %v7198 = vshll.u32 %v6964, 16
        %v7200 = vrot.slane %v7198, 5
        %v7201 = vsel %vm1090, %v7196, %v7200
        %v7203 = vshrl.u32 %v6965, 16
        %v7205 = vrot.slane %v7203, 4
        %v7206 = vshll.u32 %v6965, 16
        %v7208 = vrot.slane %v7206, 5
        %v7209 = vor.u32 %v7205, %v7208
        %v7210 = vrot.slane %v7209, 4
        %v7212 = vshll.u32 %v6966, 16
        %v7214 = vrot.slane %v7212, 5
        %v7215 = vsel %vm1090, %v7210, %v7214
        %v7216 = vshrl.u32 %v6966, 16
        %v7218 = vrot.slane %v7216, 4
        %v7219 = vor.u32 %v7218, %v7214
        %v7220 = vrot.slane %v7219, 4
        %v7222 = vshll.u32 %v6967, 16
        %v7224 = vrot.slane %v7222, 5
        %v7225 = vsel %vm1090, %v7220, %v7224
        %v7227 = vshrl.u32 %v6968, 16
        %v7229 = vrot.slane %v7227, 4
        %v7230 = vshll.u32 %v6968, 16
        %v7232 = vrot.slane %v7230, 5
        %v7233 = vor.u32 %v7229, %v7232
        %v7234 = vrot.slane %v7233, 4
        %v7236 = vshll.u32 %v6969, 16
        %v7238 = vrot.slane %v7236, 5
        %v7239 = vsel %vm1090, %v7234, %v7238
        %v7240 = vshrl.u32 %v6969, 16
        %v7242 = vrot.slane %v7240, 4
        %v7243 = vor.u32 %v7242, %v7238
        %v7244 = vrot.slane %v7243, 4
        %v7246 = vshll.u32 %v6970, 16
        %v7248 = vrot.slane %v7246, 5
        %v7249 = vsel %vm1090, %v7244, %v7248
        %v7251 = vshrl.u32 %v6971, 16
        %v7253 = vrot.slane %v7251, 4
        %v7254 = vshll.u32 %v6971, 16
        %v7256 = vrot.slane %v7254, 5
        %v7257 = vor.u32 %v7253, %v7256
        %v7258 = vrot.slane %v7257, 4
        %v7260 = vshll.u32 %v6972, 16
        %v7262 = vrot.slane %v7260, 5
        %v7263 = vsel %vm1090, %v7258, %v7262
        %v7264 = vshrl.u32 %v6972, 16
        %v7266 = vrot.slane %v7264, 4
        %v7267 = vor.u32 %v7266, %v7262
        %v7268 = vrot.slane %v7267, 4
        %v7270 = vshll.u32 %v6973, 16
        %v7272 = vrot.slane %v7270, 5
        %v7273 = vsel %vm1090, %v7268, %v7272
        %v7275 = vshrl.u32 %v6974, 16
        %v7277 = vrot.slane %v7275, 4
        %v7278 = vshll.u32 %v6974, 16
        %v7280 = vrot.slane %v7278, 5
        %v7281 = vor.u32 %v7277, %v7280
        %v7282 = vrot.slane %v7281, 4
        %v7284 = vshll.u32 %v6975, 16
        %v7286 = vrot.slane %v7284, 5
        %v7287 = vsel %vm1090, %v7282, %v7286
        %v7288 = vshrl.u32 %v6975, 16
        %v7290 = vrot.slane %v7288, 4
        %v7291 = vor.u32 %v7290, %v7286
        %v7292 = vrot.slane %v7291, 4
        %v7294 = vshll.u32 %v6976, 16
        %v7296 = vrot.slane %v7294, 5
        %v7297 = vsel %vm1090, %v7292, %v7296
        %v7299 = vshrl.u32 %v6977, 16
        %v7301 = vrot.slane %v7299, 4
        %v7302 = vshll.u32 %v6977, 16
        %v7304 = vrot.slane %v7302, 5
        %v7305 = vor.u32 %v7301, %v7304
        %v7306 = vrot.slane %v7305, 4
        %v7308 = vshll.u32 %v6978, 16
        %v7310 = vrot.slane %v7308, 5
        %v7311 = vsel %vm1090, %v7306, %v7310
        %v7312 = vshrl.u32 %v6978, 16
        %v7314 = vrot.slane %v7312, 4
        %v7315 = vor.u32 %v7314, %v7310
        %v7316 = vrot.slane %v7315, 4
        %v7318 = vshll.u32 %v6979, 16
        %v7320 = vrot.slane %v7318, 5
        %v7321 = vsel %vm1090, %v7316, %v7320
        %v7323 = vshrl.u32 %v6980, 16
        %v7325 = vrot.slane %v7323, 4
        %v7326 = vshll.u32 %v6980, 16
        %v7328 = vrot.slane %v7326, 5
        %v7329 = vor.u32 %v7325, %v7328
        %v7330 = vrot.slane %v7329, 4
        %v7332 = vshll.u32 %v6981, 16
        %v7334 = vrot.slane %v7332, 5
        %v7335 = vsel %vm1090, %v7330, %v7334
        %v7336 = vshrl.u32 %v6981, 16
        %v7338 = vrot.slane %v7336, 4
        %v7339 = vor.u32 %v7338, %v7334
        %v7340 = vrot.slane %v7339, 4
        %v7342 = vshll.u32 %v6982, 16
        %v7344 = vrot.slane %v7342, 5
        %v7345 = vsel %vm1090, %v7340, %v7344
        %v7347 = vshrl.u32 %v6983, 16
        %v7349 = vrot.slane %v7347, 4
        %v7350 = vshll.u32 %v6983, 16
        %v7352 = vrot.slane %v7350, 5
        %v7353 = vor.u32 %v7349, %v7352
        %v7354 = vrot.slane %v7353, 4
        %v7356 = vshll.u32 %v6984, 16
        %v7358 = vrot.slane %v7356, 5
        %v7359 = vsel %vm1090, %v7354, %v7358
        %v7360 = vshrl.u32 %v6984, 16
        %v7362 = vrot.slane %v7360, 4
        %v7363 = vor.u32 %v7362, %v7358
        %v7364 = vrot.slane %v7363, 4
        %v7366 = vshll.u32 %v6985, 16
        %v7368 = vrot.slane %v7366, 5
        %v7369 = vsel %vm1090, %v7364, %v7368
        %v7370 = vunpack.c.l.b16 %v6999
        %v7371 = vunpack.c.l.b16 %v7009
        %v7372 = vunpack.c.l.b16 %v7023
        %v7373 = vunpack.c.l.b16 %v7033
        %v7374 = vunpack.c.l.b16 %v7047
        %v7375 = vunpack.c.l.b16 %v7057
        %v7376 = vunpack.c.l.b16 %v7071
        %v7377 = vunpack.c.l.b16 %v7081
        %v7378 = vunpack.c.l.b16 %v7095
        %v7379 = vunpack.c.l.b16 %v7105
        %v7380 = vunpack.c.l.b16 %v7119
        %v7381 = vunpack.c.l.b16 %v7129
        %v7382 = vunpack.c.l.b16 %v7143
        %v7383 = vunpack.c.l.b16 %v7153
        %v7384 = vunpack.c.l.b16 %v7167
        %v7385 = vunpack.c.l.b16 %v7177
        %v7386 = vunpack.c.l.b16 %v7191
        %v7387 = vunpack.c.l.b16 %v7201
        %v7388 = vunpack.c.l.b16 %v7215
        %v7389 = vunpack.c.l.b16 %v7225
        %v7390 = vunpack.c.l.b16 %v7239
        %v7391 = vunpack.c.l.b16 %v7249
        %v7392 = vunpack.c.l.b16 %v7263
        %v7393 = vunpack.c.l.b16 %v7273
        %v7394 = vunpack.c.l.b16 %v7287
        %v7395 = vunpack.c.l.b16 %v7297
        %v7396 = vunpack.c.l.b16 %v7311
        %v7397 = vunpack.c.l.b16 %v7321
        %v7398 = vunpack.c.l.b16 %v7335
        %v7399 = vunpack.c.l.b16 %v7345
        %v7400 = vunpack.c.l.b16 %v7359
        %v7401 = vunpack.c.l.b16 %v7369
        %v7402 = vpack.c.b16 %v7371, %v7370
        %v7403 = vpack.c.b16 %v7373, %v7372
        %v7404 = vpack.c.b16 %v7375, %v7374
        %v7405 = vpack.c.b16 %v7377, %v7376
        %v7406 = vpack.c.b16 %v7379, %v7378
        %v7407 = vpack.c.b16 %v7381, %v7380
        %v7408 = vpack.c.b16 %v7383, %v7382
        %v7409 = vpack.c.b16 %v7385, %v7384
        %v7410 = vpack.c.b16 %v7387, %v7386
        %v7411 = vpack.c.b16 %v7389, %v7388
        %v7412 = vpack.c.b16 %v7391, %v7390
        %v7413 = vpack.c.b16 %v7393, %v7392
        %v7414 = vpack.c.b16 %v7395, %v7394
        %v7415 = vpack.c.b16 %v7397, %v7396
        %v7416 = vpack.c.b16 %v7399, %v7398
        %v7417 = vpack.c.b16 %v7401, %v7400
        %7434 = vst [vmem:[#allocation4 + $0x20] sm:$0xff] %v7402
        %7435 = vst [vmem:[#allocation4 + $0x68] sm:$0xff] %v7403
        %7436 = vst [vmem:[#allocation4 + $0xb0] sm:$0xff] %v7404
        %7437 = vst [vmem:[#allocation4 + $0xf8] sm:$0xff] %v7405
        %7438 = vst [vmem:[#allocation4 + $0x140] sm:$0xff] %v7406
        %7439 = vst [vmem:[#allocation4 + $0x188] sm:$0xff] %v7407
        %7440 = vst [vmem:[#allocation4 + $0x1d0] sm:$0xff] %v7408
        %7441 = vst [vmem:[#allocation4 + $0x218] sm:$0xff] %v7409
        %7442 = vst [vmem:[#allocation4 + $0x260] sm:$0xff] %v7410
        %7443 = vst [vmem:[#allocation4 + $0x2a8] sm:$0xff] %v7411
        %7444 = vst [vmem:[#allocation4 + $0x2f0] sm:$0xff] %v7412
        %7445 = vst [vmem:[#allocation4 + $0x338] sm:$0xff] %v7413
        %7446 = vst [vmem:[#allocation4 + $0x380] sm:$0xff] %v7414
        %7447 = vst [vmem:[#allocation4 + $0x3c8] sm:$0xff] %v7415
        %7448 = vst [vmem:[#allocation4 + $0x410] sm:$0xff] %v7416
        %7449 = vst [vmem:[#allocation4 + $0x458] sm:$0xff] %v7417
        %v7450 = vld [vmem:[%s5737] sm:$0xe]
        %v7451 = vld [vmem:[%s5737 + $0x4] sm:$0xf]
        %v7452 = vld [vmem:[%s5737 + $0x8] sm:$0x1]
        %v7453 = vld [vmem:[%s5737 + $0xc] sm:$0xe]
        %v7454 = vld [vmem:[%s5737 + $0x10] sm:$0xf]
        %v7455 = vld [vmem:[%s5737 + $0x14] sm:$0x1]
        %v7456 = vld [vmem:[%s5737 + $0x18] sm:$0xe]
        %v7457 = vld [vmem:[%s5737 + $0x1c] sm:$0xf]
        %v7458 = vld [vmem:[%s5737 + $0x20] sm:$0x1]
        %v7459 = vld [vmem:[%s5737 + $0x24] sm:$0xe]
        %v7460 = vld [vmem:[%s5737 + $0x28] sm:$0xf]
        %v7461 = vld [vmem:[%s5737 + $0x2c] sm:$0x1]
        %v7462 = vld [vmem:[%s5737 + $0x30] sm:$0xe]
        %v7463 = vld [vmem:[%s5737 + $0x34] sm:$0xf]
        %v7464 = vld [vmem:[%s5737 + $0x38] sm:$0x1]
        %v7465 = vld [vmem:[%s5737 + $0x3c] sm:$0xe]
        %v7466 = vld [vmem:[%s5737 + $0x40] sm:$0xf]
        %v7467 = vld [vmem:[%s5737 + $0x44] sm:$0x1]
        %v7468 = vld [vmem:[%s5737 + $0x48] sm:$0xe]
        %v7469 = vld [vmem:[%s5737 + $0x4c] sm:$0xf]
        %v7470 = vld [vmem:[%s5737 + $0x50] sm:$0x1]
        %v7471 = vld [vmem:[%s5737 + $0x54] sm:$0xe]
        %v7472 = vld [vmem:[%s5737 + $0x58] sm:$0xf]
        %v7473 = vld [vmem:[%s5737 + $0x5c] sm:$0x1]
        %v7474 = vld [vmem:[%s5737 + $0x60] sm:$0xe]
        %v7475 = vld [vmem:[%s5737 + $0x64] sm:$0xf]
        %v7476 = vld [vmem:[%s5737 + $0x68] sm:$0x1]
        %v7477 = vld [vmem:[%s5737 + $0x6c] sm:$0xe]
        %v7478 = vld [vmem:[%s5737 + $0x70] sm:$0xf]
        %v7479 = vld [vmem:[%s5737 + $0x74] sm:$0x1]
        %v7480 = vld [vmem:[%s5737 + $0x78] sm:$0xe]
        %v7481 = vld [vmem:[%s5737 + $0x7c] sm:$0xf]
        %v7482 = vld [vmem:[%s5737 + $0x80] sm:$0x1]
        %v7483 = vld [vmem:[%s5737 + $0x84] sm:$0xe]
        %v7484 = vld [vmem:[%s5737 + $0x88] sm:$0xf]
        %v7485 = vld [vmem:[%s5737 + $0x8c] sm:$0x1]
        %v7486 = vld [vmem:[%s5737 + $0x90] sm:$0xe]
        %v7487 = vld [vmem:[%s5737 + $0x94] sm:$0xf]
        %v7488 = vld [vmem:[%s5737 + $0x98] sm:$0x1]
        %v7489 = vld [vmem:[%s5737 + $0x9c] sm:$0xe]
        %v7490 = vld [vmem:[%s5737 + $0xa0] sm:$0xf]
        %v7491 = vld [vmem:[%s5737 + $0xa4] sm:$0x1]
        %v7492 = vld [vmem:[%s5737 + $0xa8] sm:$0xe]
        %v7493 = vld [vmem:[%s5737 + $0xac] sm:$0xf]
        %v7494 = vld [vmem:[%s5737 + $0xb0] sm:$0x1]
        %v7495 = vld [vmem:[%s5737 + $0xb4] sm:$0xe]
        %v7496 = vld [vmem:[%s5737 + $0xb8] sm:$0xf]
        %v7497 = vld [vmem:[%s5737 + $0xbc] sm:$0x1]
        %v7546 = vrot.slane %v7450, 5
        %v7547 = vrot.slane %v7546, 4
        %v7548 = vrot.slane %v7451, 5
        %v7549 = vsel %vm1653, %v7547, %v7548
        %v7550 = vrot.slane %v7548, 4
        %v7551 = vrot.slane %v7452, 5
        %v7552 = vsel %vm1653, %v7550, %v7551
        %v7553 = vrot.slane %v7453, 5
        %v7554 = vrot.slane %v7553, 4
        %v7555 = vrot.slane %v7454, 5
        %v7556 = vsel %vm1653, %v7554, %v7555
        %v7557 = vrot.slane %v7555, 4
        %v7558 = vrot.slane %v7455, 5
        %v7559 = vsel %vm1653, %v7557, %v7558
        %v7560 = vrot.slane %v7456, 5
        %v7561 = vrot.slane %v7560, 4
        %v7562 = vrot.slane %v7457, 5
        %v7563 = vsel %vm1653, %v7561, %v7562
        %v7564 = vrot.slane %v7562, 4
        %v7565 = vrot.slane %v7458, 5
        %v7566 = vsel %vm1653, %v7564, %v7565
        %v7567 = vrot.slane %v7459, 5
        %v7568 = vrot.slane %v7567, 4
        %v7569 = vrot.slane %v7460, 5
        %v7570 = vsel %vm1653, %v7568, %v7569
        %v7571 = vrot.slane %v7569, 4
        %v7572 = vrot.slane %v7461, 5
        %v7573 = vsel %vm1653, %v7571, %v7572
        %v7574 = vrot.slane %v7462, 5
        %v7575 = vrot.slane %v7574, 4
        %v7576 = vrot.slane %v7463, 5
        %v7577 = vsel %vm1653, %v7575, %v7576
        %v7578 = vrot.slane %v7576, 4
        %v7579 = vrot.slane %v7464, 5
        %v7580 = vsel %vm1653, %v7578, %v7579
        %v7581 = vrot.slane %v7465, 5
        %v7582 = vrot.slane %v7581, 4
        %v7583 = vrot.slane %v7466, 5
        %v7584 = vsel %vm1653, %v7582, %v7583
        %v7585 = vrot.slane %v7583, 4
        %v7586 = vrot.slane %v7467, 5
        %v7587 = vsel %vm1653, %v7585, %v7586
        %v7588 = vrot.slane %v7468, 5
        %v7589 = vrot.slane %v7588, 4
        %v7590 = vrot.slane %v7469, 5
        %v7591 = vsel %vm1653, %v7589, %v7590
        %v7592 = vrot.slane %v7590, 4
        %v7593 = vrot.slane %v7470, 5
        %v7594 = vsel %vm1653, %v7592, %v7593
        %v7595 = vrot.slane %v7471, 5
        %v7596 = vrot.slane %v7595, 4
        %v7597 = vrot.slane %v7472, 5
        %v7598 = vsel %vm1653, %v7596, %v7597
        %v7599 = vrot.slane %v7597, 4
        %v7600 = vrot.slane %v7473, 5
        %v7601 = vsel %vm1653, %v7599, %v7600
        %v7602 = vrot.slane %v7474, 5
        %v7603 = vrot.slane %v7602, 4
        %v7604 = vrot.slane %v7475, 5
        %v7605 = vsel %vm1653, %v7603, %v7604
        %v7606 = vrot.slane %v7604, 4
        %v7607 = vrot.slane %v7476, 5
        %v7608 = vsel %vm1653, %v7606, %v7607
        %v7609 = vrot.slane %v7477, 5
        %v7610 = vrot.slane %v7609, 4
        %v7611 = vrot.slane %v7478, 5
        %v7612 = vsel %vm1653, %v7610, %v7611
        %v7613 = vrot.slane %v7611, 4
        %v7614 = vrot.slane %v7479, 5
        %v7615 = vsel %vm1653, %v7613, %v7614
        %v7616 = vrot.slane %v7480, 5
        %v7617 = vrot.slane %v7616, 4
        %v7618 = vrot.slane %v7481, 5
        %v7619 = vsel %vm1653, %v7617, %v7618
        %v7620 = vrot.slane %v7618, 4
        %v7621 = vrot.slane %v7482, 5
        %v7622 = vsel %vm1653, %v7620, %v7621
        %v7623 = vrot.slane %v7483, 5
        %v7624 = vrot.slane %v7623, 4
        %v7625 = vrot.slane %v7484, 5
        %v7626 = vsel %vm1653, %v7624, %v7625
        %v7627 = vrot.slane %v7625, 4
        %v7628 = vrot.slane %v7485, 5
        %v7629 = vsel %vm1653, %v7627, %v7628
        %v7630 = vrot.slane %v7486, 5
        %v7631 = vrot.slane %v7630, 4
        %v7632 = vrot.slane %v7487, 5
        %v7633 = vsel %vm1653, %v7631, %v7632
        %v7634 = vrot.slane %v7632, 4
        %v7635 = vrot.slane %v7488, 5
        %v7636 = vsel %vm1653, %v7634, %v7635
        %v7637 = vrot.slane %v7489, 5
        %v7638 = vrot.slane %v7637, 4
        %v7639 = vrot.slane %v7490, 5
        %v7640 = vsel %vm1653, %v7638, %v7639
        %v7641 = vrot.slane %v7639, 4
        %v7642 = vrot.slane %v7491, 5
        %v7643 = vsel %vm1653, %v7641, %v7642
        %v7644 = vrot.slane %v7492, 5
        %v7645 = vrot.slane %v7644, 4
        %v7646 = vrot.slane %v7493, 5
        %v7647 = vsel %vm1653, %v7645, %v7646
        %v7648 = vrot.slane %v7646, 4
        %v7649 = vrot.slane %v7494, 5
        %v7650 = vsel %vm1653, %v7648, %v7649
        %v7651 = vrot.slane %v7495, 5
        %v7652 = vrot.slane %v7651, 4
        %v7653 = vrot.slane %v7496, 5
        %v7654 = vsel %vm1653, %v7652, %v7653
        %v7655 = vrot.slane %v7653, 4
        %v7656 = vrot.slane %v7497, 5
        %v7657 = vsel %vm1653, %v7655, %v7656
        %v7658 = vunpack.c.l.b16 %v7549
        %v7659 = vunpack.c.l.b16 %v7552
        %v7660 = vunpack.c.l.b16 %v7556
        %v7661 = vunpack.c.l.b16 %v7559
        %v7662 = vunpack.c.l.b16 %v7563
        %v7663 = vunpack.c.l.b16 %v7566
        %v7664 = vunpack.c.l.b16 %v7570
        %v7665 = vunpack.c.l.b16 %v7573
        %v7666 = vunpack.c.l.b16 %v7577
        %v7667 = vunpack.c.l.b16 %v7580
        %v7668 = vunpack.c.l.b16 %v7584
        %v7669 = vunpack.c.l.b16 %v7587
        %v7670 = vunpack.c.l.b16 %v7591
        %v7671 = vunpack.c.l.b16 %v7594
        %v7672 = vunpack.c.l.b16 %v7598
        %v7673 = vunpack.c.l.b16 %v7601
        %v7674 = vunpack.c.l.b16 %v7605
        %v7675 = vunpack.c.l.b16 %v7608
        %v7676 = vunpack.c.l.b16 %v7612
        %v7677 = vunpack.c.l.b16 %v7615
        %v7678 = vunpack.c.l.b16 %v7619
        %v7679 = vunpack.c.l.b16 %v7622
        %v7680 = vunpack.c.l.b16 %v7626
        %v7681 = vunpack.c.l.b16 %v7629
        %v7682 = vunpack.c.l.b16 %v7633
        %v7683 = vunpack.c.l.b16 %v7636
        %v7684 = vunpack.c.l.b16 %v7640
        %v7685 = vunpack.c.l.b16 %v7643
        %v7686 = vunpack.c.l.b16 %v7647
        %v7687 = vunpack.c.l.b16 %v7650
        %v7688 = vunpack.c.l.b16 %v7654
        %v7689 = vunpack.c.l.b16 %v7657
        %v7690 = vpack.c.b16 %v7659, %v7658
        %v7691 = vpack.c.b16 %v7661, %v7660
        %v7692 = vpack.c.b16 %v7663, %v7662
        %v7693 = vpack.c.b16 %v7665, %v7664
        %v7694 = vpack.c.b16 %v7667, %v7666
        %v7695 = vpack.c.b16 %v7669, %v7668
        %v7696 = vpack.c.b16 %v7671, %v7670
        %v7697 = vpack.c.b16 %v7673, %v7672
        %v7698 = vpack.c.b16 %v7675, %v7674
        %v7699 = vpack.c.b16 %v7677, %v7676
        %v7700 = vpack.c.b16 %v7679, %v7678
        %v7701 = vpack.c.b16 %v7681, %v7680
        %v7702 = vpack.c.b16 %v7683, %v7682
        %v7703 = vpack.c.b16 %v7685, %v7684
        %v7704 = vpack.c.b16 %v7687, %v7686
        %v7705 = vpack.c.b16 %v7689, %v7688
        %7722 = vst [vmem:[#allocation4 + $0x28] sm:$0xff] %v7690
        %7723 = vst [vmem:[#allocation4 + $0x70] sm:$0xff] %v7691
        %7724 = vst [vmem:[#allocation4 + $0xb8] sm:$0xff] %v7692
        %7725 = vst [vmem:[#allocation4 + $0x100] sm:$0xff] %v7693
        %7726 = vst [vmem:[#allocation4 + $0x148] sm:$0xff] %v7694
        %7727 = vst [vmem:[#allocation4 + $0x190] sm:$0xff] %v7695
        %7728 = vst [vmem:[#allocation4 + $0x1d8] sm:$0xff] %v7696
        %7729 = vst [vmem:[#allocation4 + $0x220] sm:$0xff] %v7697
        %7730 = vst [vmem:[#allocation4 + $0x268] sm:$0xff] %v7698
        %7731 = vst [vmem:[#allocation4 + $0x2b0] sm:$0xff] %v7699
        %7732 = vst [vmem:[#allocation4 + $0x2f8] sm:$0xff] %v7700
        %7733 = vst [vmem:[#allocation4 + $0x340] sm:$0xff] %v7701
        %7734 = vst [vmem:[#allocation4 + $0x388] sm:$0xff] %v7702
        %7735 = vst [vmem:[#allocation4 + $0x3d0] sm:$0xff] %v7703
        %7736 = vst [vmem:[#allocation4 + $0x418] sm:$0xff] %v7704
        %7737 = vst [vmem:[#allocation4 + $0x460] sm:$0xff] %v7705
        %s7738 = scalar_lea.vmem [#allocation3], 24
        %v7739 = vld [vmem:[%s7738] sm:$0xf]
        %v7740 = vld [vmem:[%s7738 + $0x4] sm:$0xf]
        %v7741 = vld [vmem:[%s7738 + $0xc] sm:$0xf]
        %v7742 = vld [vmem:[%s7738 + $0x10] sm:$0xf]
        %v7743 = vld [vmem:[%s7738 + $0x18] sm:$0xf]
        %v7744 = vld [vmem:[%s7738 + $0x1c] sm:$0xf]
        %v7745 = vld [vmem:[%s7738 + $0x24] sm:$0xf]
        %v7746 = vld [vmem:[%s7738 + $0x28] sm:$0xf]
        %v7747 = vld [vmem:[%s7738 + $0x30] sm:$0xf]
        %v7748 = vld [vmem:[%s7738 + $0x34] sm:$0xf]
        %v7749 = vld [vmem:[%s7738 + $0x3c] sm:$0xf]
        %v7750 = vld [vmem:[%s7738 + $0x40] sm:$0xf]
        %v7751 = vld [vmem:[%s7738 + $0x48] sm:$0xf]
        %v7752 = vld [vmem:[%s7738 + $0x4c] sm:$0xf]
        %v7753 = vld [vmem:[%s7738 + $0x54] sm:$0xf]
        %v7754 = vld [vmem:[%s7738 + $0x58] sm:$0xf]
        %v7755 = vld [vmem:[%s7738 + $0x60] sm:$0xf]
        %v7756 = vld [vmem:[%s7738 + $0x64] sm:$0xf]
        %v7757 = vld [vmem:[%s7738 + $0x6c] sm:$0xf]
        %v7758 = vld [vmem:[%s7738 + $0x70] sm:$0xf]
        %v7759 = vld [vmem:[%s7738 + $0x78] sm:$0xf]
        %v7760 = vld [vmem:[%s7738 + $0x7c] sm:$0xf]
        %v7761 = vld [vmem:[%s7738 + $0x84] sm:$0xf]
        %v7762 = vld [vmem:[%s7738 + $0x88] sm:$0xf]
        %v7763 = vld [vmem:[%s7738 + $0x90] sm:$0xf]
        %v7764 = vld [vmem:[%s7738 + $0x94] sm:$0xf]
        %v7765 = vld [vmem:[%s7738 + $0x9c] sm:$0xf]
        %v7766 = vld [vmem:[%s7738 + $0xa0] sm:$0xf]
        %v7767 = vld [vmem:[%s7738 + $0xa8] sm:$0xf]
        %v7768 = vld [vmem:[%s7738 + $0xac] sm:$0xf]
        %v7769 = vld [vmem:[%s7738 + $0xb4] sm:$0xf]
        %v7770 = vld [vmem:[%s7738 + $0xb8] sm:$0xf]
        %v7803 = vunpack.c.l.b16 %v7739
        %v7804 = vunpack.c.l.b16 %v7740
        %v7805 = vunpack.c.l.b16 %v7741
        %v7806 = vunpack.c.l.b16 %v7742
        %v7807 = vunpack.c.l.b16 %v7743
        %v7808 = vunpack.c.l.b16 %v7744
        %v7809 = vunpack.c.l.b16 %v7745
        %v7810 = vunpack.c.l.b16 %v7746
        %v7811 = vunpack.c.l.b16 %v7747
        %v7812 = vunpack.c.l.b16 %v7748
        %v7813 = vunpack.c.l.b16 %v7749
        %v7814 = vunpack.c.l.b16 %v7750
        %v7815 = vunpack.c.l.b16 %v7751
        %v7816 = vunpack.c.l.b16 %v7752
        %v7817 = vunpack.c.l.b16 %v7753
        %v7818 = vunpack.c.l.b16 %v7754
        %v7819 = vunpack.c.l.b16 %v7755
        %v7820 = vunpack.c.l.b16 %v7756
        %v7821 = vunpack.c.l.b16 %v7757
        %v7822 = vunpack.c.l.b16 %v7758
        %v7823 = vunpack.c.l.b16 %v7759
        %v7824 = vunpack.c.l.b16 %v7760
        %v7825 = vunpack.c.l.b16 %v7761
        %v7826 = vunpack.c.l.b16 %v7762
        %v7827 = vunpack.c.l.b16 %v7763
        %v7828 = vunpack.c.l.b16 %v7764
        %v7829 = vunpack.c.l.b16 %v7765
        %v7830 = vunpack.c.l.b16 %v7766
        %v7831 = vunpack.c.l.b16 %v7767
        %v7832 = vunpack.c.l.b16 %v7768
        %v7833 = vunpack.c.l.b16 %v7769
        %v7834 = vunpack.c.l.b16 %v7770
        %v7835 = vpack.c.b16 %v7804, %v7803
        %v7836 = vpack.c.b16 %v7806, %v7805
        %v7837 = vpack.c.b16 %v7808, %v7807
        %v7838 = vpack.c.b16 %v7810, %v7809
        %v7839 = vpack.c.b16 %v7812, %v7811
        %v7840 = vpack.c.b16 %v7814, %v7813
        %v7841 = vpack.c.b16 %v7816, %v7815
        %v7842 = vpack.c.b16 %v7818, %v7817
        %v7843 = vpack.c.b16 %v7820, %v7819
        %v7844 = vpack.c.b16 %v7822, %v7821
        %v7845 = vpack.c.b16 %v7824, %v7823
        %v7846 = vpack.c.b16 %v7826, %v7825
        %v7847 = vpack.c.b16 %v7828, %v7827
        %v7848 = vpack.c.b16 %v7830, %v7829
        %v7849 = vpack.c.b16 %v7832, %v7831
        %v7850 = vpack.c.b16 %v7834, %v7833
        %7867 = vst [vmem:[#allocation4 + $0x30] sm:$0xff] %v7835
        %7868 = vst [vmem:[#allocation4 + $0x78] sm:$0xff] %v7836
        %7869 = vst [vmem:[#allocation4 + $0xc0] sm:$0xff] %v7837
        %7870 = vst [vmem:[#allocation4 + $0x108] sm:$0xff] %v7838
        %7871 = vst [vmem:[#allocation4 + $0x150] sm:$0xff] %v7839
        %7872 = vst [vmem:[#allocation4 + $0x198] sm:$0xff] %v7840
        %7873 = vst [vmem:[#allocation4 + $0x1e0] sm:$0xff] %v7841
        %7874 = vst [vmem:[#allocation4 + $0x228] sm:$0xff] %v7842
        %7875 = vst [vmem:[#allocation4 + $0x270] sm:$0xff] %v7843
        %7876 = vst [vmem:[#allocation4 + $0x2b8] sm:$0xff] %v7844
        %7877 = vst [vmem:[#allocation4 + $0x300] sm:$0xff] %v7845
        %7878 = vst [vmem:[#allocation4 + $0x348] sm:$0xff] %v7846
        %7879 = vst [vmem:[#allocation4 + $0x390] sm:$0xff] %v7847
        %7880 = vst [vmem:[#allocation4 + $0x3d8] sm:$0xff] %v7848
        %7881 = vst [vmem:[#allocation4 + $0x420] sm:$0xff] %v7849
        %7882 = vst [vmem:[#allocation4 + $0x468] sm:$0xff] %v7850
        %v7883 = vld [vmem:[%s7738] sm:$0xf]
        %v7884 = vld [vmem:[%s7738 + $0x4] sm:$0xf]
        %v7885 = vld [vmem:[%s7738 + $0x8] sm:$0x1]
        %v7886 = vld [vmem:[%s7738 + $0xc] sm:$0xf]
        %v7887 = vld [vmem:[%s7738 + $0x10] sm:$0xf]
        %v7888 = vld [vmem:[%s7738 + $0x14] sm:$0x1]
        %v7889 = vld [vmem:[%s7738 + $0x18] sm:$0xf]
        %v7890 = vld [vmem:[%s7738 + $0x1c] sm:$0xf]
        %v7891 = vld [vmem:[%s7738 + $0x20] sm:$0x1]
        %v7892 = vld [vmem:[%s7738 + $0x24] sm:$0xf]
        %v7893 = vld [vmem:[%s7738 + $0x28] sm:$0xf]
        %v7894 = vld [vmem:[%s7738 + $0x2c] sm:$0x1]
        %v7895 = vld [vmem:[%s7738 + $0x30] sm:$0xf]
        %v7896 = vld [vmem:[%s7738 + $0x34] sm:$0xf]
        %v7897 = vld [vmem:[%s7738 + $0x38] sm:$0x1]
        %v7898 = vld [vmem:[%s7738 + $0x3c] sm:$0xf]
        %v7899 = vld [vmem:[%s7738 + $0x40] sm:$0xf]
        %v7900 = vld [vmem:[%s7738 + $0x44] sm:$0x1]
        %v7901 = vld [vmem:[%s7738 + $0x48] sm:$0xf]
        %v7902 = vld [vmem:[%s7738 + $0x4c] sm:$0xf]
        %v7903 = vld [vmem:[%s7738 + $0x50] sm:$0x1]
        %v7904 = vld [vmem:[%s7738 + $0x54] sm:$0xf]
        %v7905 = vld [vmem:[%s7738 + $0x58] sm:$0xf]
        %v7906 = vld [vmem:[%s7738 + $0x5c] sm:$0x1]
        %v7907 = vld [vmem:[%s7738 + $0x60] sm:$0xf]
        %v7908 = vld [vmem:[%s7738 + $0x64] sm:$0xf]
        %v7909 = vld [vmem:[%s7738 + $0x68] sm:$0x1]
        %v7910 = vld [vmem:[%s7738 + $0x6c] sm:$0xf]
        %v7911 = vld [vmem:[%s7738 + $0x70] sm:$0xf]
        %v7912 = vld [vmem:[%s7738 + $0x74] sm:$0x1]
        %v7913 = vld [vmem:[%s7738 + $0x78] sm:$0xf]
        %v7914 = vld [vmem:[%s7738 + $0x7c] sm:$0xf]
        %v7915 = vld [vmem:[%s7738 + $0x80] sm:$0x1]
        %v7916 = vld [vmem:[%s7738 + $0x84] sm:$0xf]
        %v7917 = vld [vmem:[%s7738 + $0x88] sm:$0xf]
        %v7918 = vld [vmem:[%s7738 + $0x8c] sm:$0x1]
        %v7919 = vld [vmem:[%s7738 + $0x90] sm:$0xf]
        %v7920 = vld [vmem:[%s7738 + $0x94] sm:$0xf]
        %v7921 = vld [vmem:[%s7738 + $0x98] sm:$0x1]
        %v7922 = vld [vmem:[%s7738 + $0x9c] sm:$0xf]
        %v7923 = vld [vmem:[%s7738 + $0xa0] sm:$0xf]
        %v7924 = vld [vmem:[%s7738 + $0xa4] sm:$0x1]
        %v7925 = vld [vmem:[%s7738 + $0xa8] sm:$0xf]
        %v7926 = vld [vmem:[%s7738 + $0xac] sm:$0xf]
        %v7927 = vld [vmem:[%s7738 + $0xb0] sm:$0x1]
        %v7928 = vld [vmem:[%s7738 + $0xb4] sm:$0xf]
        %v7929 = vld [vmem:[%s7738 + $0xb8] sm:$0xf]
        %v7930 = vld [vmem:[%s7738 + $0xbc] sm:$0x1]
        %v7932 = vshrl.u32 %v7883, 16
        %v7934 = vrot.slane %v7932, 4
        %v7935 = vshll.u32 %v7883, 16
        %v7937 = vrot.slane %v7935, 5
        %v7938 = vor.u32 %v7934, %v7937
        %v7939 = vrot.slane %v7938, 4
        %v7941 = vshll.u32 %v7884, 16
        %v7943 = vrot.slane %v7941, 5
        %v7944 = vsel %vm1090, %v7939, %v7943
        %v7945 = vshrl.u32 %v7884, 16
        %v7947 = vrot.slane %v7945, 4
        %v7948 = vor.u32 %v7947, %v7943
        %v7949 = vrot.slane %v7948, 4
        %v7951 = vshll.u32 %v7885, 16
        %v7953 = vrot.slane %v7951, 5
        %v7954 = vsel %vm1090, %v7949, %v7953
        %v7956 = vshrl.u32 %v7886, 16
        %v7958 = vrot.slane %v7956, 4
        %v7959 = vshll.u32 %v7886, 16
        %v7961 = vrot.slane %v7959, 5
        %v7962 = vor.u32 %v7958, %v7961
        %v7963 = vrot.slane %v7962, 4
        %v7965 = vshll.u32 %v7887, 16
        %v7967 = vrot.slane %v7965, 5
        %v7968 = vsel %vm1090, %v7963, %v7967
        %v7969 = vshrl.u32 %v7887, 16
        %v7971 = vrot.slane %v7969, 4
        %v7972 = vor.u32 %v7971, %v7967
        %v7973 = vrot.slane %v7972, 4
        %v7975 = vshll.u32 %v7888, 16
        %v7977 = vrot.slane %v7975, 5
        %v7978 = vsel %vm1090, %v7973, %v7977
        %v7980 = vshrl.u32 %v7889, 16
        %v7982 = vrot.slane %v7980, 4
        %v7983 = vshll.u32 %v7889, 16
        %v7985 = vrot.slane %v7983, 5
        %v7986 = vor.u32 %v7982, %v7985
        %v7987 = vrot.slane %v7986, 4
        %v7989 = vshll.u32 %v7890, 16
        %v7991 = vrot.slane %v7989, 5
        %v7992 = vsel %vm1090, %v7987, %v7991
        %v7993 = vshrl.u32 %v7890, 16
        %v7995 = vrot.slane %v7993, 4
        %v7996 = vor.u32 %v7995, %v7991
        %v7997 = vrot.slane %v7996, 4
        %v7999 = vshll.u32 %v7891, 16
        %v8001 = vrot.slane %v7999, 5
        %v8002 = vsel %vm1090, %v7997, %v8001
        %v8004 = vshrl.u32 %v7892, 16
        %v8006 = vrot.slane %v8004, 4
        %v8007 = vshll.u32 %v7892, 16
        %v8009 = vrot.slane %v8007, 5
        %v8010 = vor.u32 %v8006, %v8009
        %v8011 = vrot.slane %v8010, 4
        %v8013 = vshll.u32 %v7893, 16
        %v8015 = vrot.slane %v8013, 5
        %v8016 = vsel %vm1090, %v8011, %v8015
        %v8017 = vshrl.u32 %v7893, 16
        %v8019 = vrot.slane %v8017, 4
        %v8020 = vor.u32 %v8019, %v8015
        %v8021 = vrot.slane %v8020, 4
        %v8023 = vshll.u32 %v7894, 16
        %v8025 = vrot.slane %v8023, 5
        %v8026 = vsel %vm1090, %v8021, %v8025
        %v8028 = vshrl.u32 %v7895, 16
        %v8030 = vrot.slane %v8028, 4
        %v8031 = vshll.u32 %v7895, 16
        %v8033 = vrot.slane %v8031, 5
        %v8034 = vor.u32 %v8030, %v8033
        %v8035 = vrot.slane %v8034, 4
        %v8037 = vshll.u32 %v7896, 16
        %v8039 = vrot.slane %v8037, 5
        %v8040 = vsel %vm1090, %v8035, %v8039
        %v8041 = vshrl.u32 %v7896, 16
        %v8043 = vrot.slane %v8041, 4
        %v8044 = vor.u32 %v8043, %v8039
        %v8045 = vrot.slane %v8044, 4
        %v8047 = vshll.u32 %v7897, 16
        %v8049 = vrot.slane %v8047, 5
        %v8050 = vsel %vm1090, %v8045, %v8049
        %v8052 = vshrl.u32 %v7898, 16
        %v8054 = vrot.slane %v8052, 4
        %v8055 = vshll.u32 %v7898, 16
        %v8057 = vrot.slane %v8055, 5
        %v8058 = vor.u32 %v8054, %v8057
        %v8059 = vrot.slane %v8058, 4
        %v8061 = vshll.u32 %v7899, 16
        %v8063 = vrot.slane %v8061, 5
        %v8064 = vsel %vm1090, %v8059, %v8063
        %v8065 = vshrl.u32 %v7899, 16
        %v8067 = vrot.slane %v8065, 4
        %v8068 = vor.u32 %v8067, %v8063
        %v8069 = vrot.slane %v8068, 4
        %v8071 = vshll.u32 %v7900, 16
        %v8073 = vrot.slane %v8071, 5
        %v8074 = vsel %vm1090, %v8069, %v8073
        %v8076 = vshrl.u32 %v7901, 16
        %v8078 = vrot.slane %v8076, 4
        %v8079 = vshll.u32 %v7901, 16
        %v8081 = vrot.slane %v8079, 5
        %v8082 = vor.u32 %v8078, %v8081
        %v8083 = vrot.slane %v8082, 4
        %v8085 = vshll.u32 %v7902, 16
        %v8087 = vrot.slane %v8085, 5
        %v8088 = vsel %vm1090, %v8083, %v8087
        %v8089 = vshrl.u32 %v7902, 16
        %v8091 = vrot.slane %v8089, 4
        %v8092 = vor.u32 %v8091, %v8087
        %v8093 = vrot.slane %v8092, 4
        %v8095 = vshll.u32 %v7903, 16
        %v8097 = vrot.slane %v8095, 5
        %v8098 = vsel %vm1090, %v8093, %v8097
        %v8100 = vshrl.u32 %v7904, 16
        %v8102 = vrot.slane %v8100, 4
        %v8103 = vshll.u32 %v7904, 16
        %v8105 = vrot.slane %v8103, 5
        %v8106 = vor.u32 %v8102, %v8105
        %v8107 = vrot.slane %v8106, 4
        %v8109 = vshll.u32 %v7905, 16
        %v8111 = vrot.slane %v8109, 5
        %v8112 = vsel %vm1090, %v8107, %v8111
        %v8113 = vshrl.u32 %v7905, 16
        %v8115 = vrot.slane %v8113, 4
        %v8116 = vor.u32 %v8115, %v8111
        %v8117 = vrot.slane %v8116, 4
        %v8119 = vshll.u32 %v7906, 16
        %v8121 = vrot.slane %v8119, 5
        %v8122 = vsel %vm1090, %v8117, %v8121
        %v8124 = vshrl.u32 %v7907, 16
        %v8126 = vrot.slane %v8124, 4
        %v8127 = vshll.u32 %v7907, 16
        %v8129 = vrot.slane %v8127, 5
        %v8130 = vor.u32 %v8126, %v8129
        %v8131 = vrot.slane %v8130, 4
        %v8133 = vshll.u32 %v7908, 16
        %v8135 = vrot.slane %v8133, 5
        %v8136 = vsel %vm1090, %v8131, %v8135
        %v8137 = vshrl.u32 %v7908, 16
        %v8139 = vrot.slane %v8137, 4
        %v8140 = vor.u32 %v8139, %v8135
        %v8141 = vrot.slane %v8140, 4
        %v8143 = vshll.u32 %v7909, 16
        %v8145 = vrot.slane %v8143, 5
        %v8146 = vsel %vm1090, %v8141, %v8145
        %v8148 = vshrl.u32 %v7910, 16
        %v8150 = vrot.slane %v8148, 4
        %v8151 = vshll.u32 %v7910, 16
        %v8153 = vrot.slane %v8151, 5
        %v8154 = vor.u32 %v8150, %v8153
        %v8155 = vrot.slane %v8154, 4
        %v8157 = vshll.u32 %v7911, 16
        %v8159 = vrot.slane %v8157, 5
        %v8160 = vsel %vm1090, %v8155, %v8159
        %v8161 = vshrl.u32 %v7911, 16
        %v8163 = vrot.slane %v8161, 4
        %v8164 = vor.u32 %v8163, %v8159
        %v8165 = vrot.slane %v8164, 4
        %v8167 = vshll.u32 %v7912, 16
        %v8169 = vrot.slane %v8167, 5
        %v8170 = vsel %vm1090, %v8165, %v8169
        %v8172 = vshrl.u32 %v7913, 16
        %v8174 = vrot.slane %v8172, 4
        %v8175 = vshll.u32 %v7913, 16
        %v8177 = vrot.slane %v8175, 5
        %v8178 = vor.u32 %v8174, %v8177
        %v8179 = vrot.slane %v8178, 4
        %v8181 = vshll.u32 %v7914, 16
        %v8183 = vrot.slane %v8181, 5
        %v8184 = vsel %vm1090, %v8179, %v8183
        %v8185 = vshrl.u32 %v7914, 16
        %v8187 = vrot.slane %v8185, 4
        %v8188 = vor.u32 %v8187, %v8183
        %v8189 = vrot.slane %v8188, 4
        %v8191 = vshll.u32 %v7915, 16
        %v8193 = vrot.slane %v8191, 5
        %v8194 = vsel %vm1090, %v8189, %v8193
        %v8196 = vshrl.u32 %v7916, 16
        %v8198 = vrot.slane %v8196, 4
        %v8199 = vshll.u32 %v7916, 16
        %v8201 = vrot.slane %v8199, 5
        %v8202 = vor.u32 %v8198, %v8201
        %v8203 = vrot.slane %v8202, 4
        %v8205 = vshll.u32 %v7917, 16
        %v8207 = vrot.slane %v8205, 5
        %v8208 = vsel %vm1090, %v8203, %v8207
        %v8209 = vshrl.u32 %v7917, 16
        %v8211 = vrot.slane %v8209, 4
        %v8212 = vor.u32 %v8211, %v8207
        %v8213 = vrot.slane %v8212, 4
        %v8215 = vshll.u32 %v7918, 16
        %v8217 = vrot.slane %v8215, 5
        %v8218 = vsel %vm1090, %v8213, %v8217
        %v8220 = vshrl.u32 %v7919, 16
        %v8222 = vrot.slane %v8220, 4
        %v8223 = vshll.u32 %v7919, 16
        %v8225 = vrot.slane %v8223, 5
        %v8226 = vor.u32 %v8222, %v8225
        %v8227 = vrot.slane %v8226, 4
        %v8229 = vshll.u32 %v7920, 16
        %v8231 = vrot.slane %v8229, 5
        %v8232 = vsel %vm1090, %v8227, %v8231
        %v8233 = vshrl.u32 %v7920, 16
        %v8235 = vrot.slane %v8233, 4
        %v8236 = vor.u32 %v8235, %v8231
        %v8237 = vrot.slane %v8236, 4
        %v8239 = vshll.u32 %v7921, 16
        %v8241 = vrot.slane %v8239, 5
        %v8242 = vsel %vm1090, %v8237, %v8241
        %v8244 = vshrl.u32 %v7922, 16
        %v8246 = vrot.slane %v8244, 4
        %v8247 = vshll.u32 %v7922, 16
        %v8249 = vrot.slane %v8247, 5
        %v8250 = vor.u32 %v8246, %v8249
        %v8251 = vrot.slane %v8250, 4
        %v8253 = vshll.u32 %v7923, 16
        %v8255 = vrot.slane %v8253, 5
        %v8256 = vsel %vm1090, %v8251, %v8255
        %v8257 = vshrl.u32 %v7923, 16
        %v8259 = vrot.slane %v8257, 4
        %v8260 = vor.u32 %v8259, %v8255
        %v8261 = vrot.slane %v8260, 4
        %v8263 = vshll.u32 %v7924, 16
        %v8265 = vrot.slane %v8263, 5
        %v8266 = vsel %vm1090, %v8261, %v8265
        %v8268 = vshrl.u32 %v7925, 16
        %v8270 = vrot.slane %v8268, 4
        %v8271 = vshll.u32 %v7925, 16
        %v8273 = vrot.slane %v8271, 5
        %v8274 = vor.u32 %v8270, %v8273
        %v8275 = vrot.slane %v8274, 4
        %v8277 = vshll.u32 %v7926, 16
        %v8279 = vrot.slane %v8277, 5
        %v8280 = vsel %vm1090, %v8275, %v8279
        %v8281 = vshrl.u32 %v7926, 16
        %v8283 = vrot.slane %v8281, 4
        %v8284 = vor.u32 %v8283, %v8279
        %v8285 = vrot.slane %v8284, 4
        %v8287 = vshll.u32 %v7927, 16
        %v8289 = vrot.slane %v8287, 5
        %v8290 = vsel %vm1090, %v8285, %v8289
        %v8292 = vshrl.u32 %v7928, 16
        %v8294 = vrot.slane %v8292, 4
        %v8295 = vshll.u32 %v7928, 16
        %v8297 = vrot.slane %v8295, 5
        %v8298 = vor.u32 %v8294, %v8297
        %v8299 = vrot.slane %v8298, 4
        %v8301 = vshll.u32 %v7929, 16
        %v8303 = vrot.slane %v8301, 5
        %v8304 = vsel %vm1090, %v8299, %v8303
        %v8305 = vshrl.u32 %v7929, 16
        %v8307 = vrot.slane %v8305, 4
        %v8308 = vor.u32 %v8307, %v8303
        %v8309 = vrot.slane %v8308, 4
        %v8311 = vshll.u32 %v7930, 16
        %v8313 = vrot.slane %v8311, 5
        %v8314 = vsel %vm1090, %v8309, %v8313
        %v8315 = vunpack.c.l.b16 %v7944
        %v8316 = vunpack.c.l.b16 %v7954
        %v8317 = vunpack.c.l.b16 %v7968
        %v8318 = vunpack.c.l.b16 %v7978
        %v8319 = vunpack.c.l.b16 %v7992
        %v8320 = vunpack.c.l.b16 %v8002
        %v8321 = vunpack.c.l.b16 %v8016
        %v8322 = vunpack.c.l.b16 %v8026
        %v8323 = vunpack.c.l.b16 %v8040
        %v8324 = vunpack.c.l.b16 %v8050
        %v8325 = vunpack.c.l.b16 %v8064
        %v8326 = vunpack.c.l.b16 %v8074
        %v8327 = vunpack.c.l.b16 %v8088
        %v8328 = vunpack.c.l.b16 %v8098
        %v8329 = vunpack.c.l.b16 %v8112
        %v8330 = vunpack.c.l.b16 %v8122
        %v8331 = vunpack.c.l.b16 %v8136
        %v8332 = vunpack.c.l.b16 %v8146
        %v8333 = vunpack.c.l.b16 %v8160
        %v8334 = vunpack.c.l.b16 %v8170
        %v8335 = vunpack.c.l.b16 %v8184
        %v8336 = vunpack.c.l.b16 %v8194
        %v8337 = vunpack.c.l.b16 %v8208
        %v8338 = vunpack.c.l.b16 %v8218
        %v8339 = vunpack.c.l.b16 %v8232
        %v8340 = vunpack.c.l.b16 %v8242
        %v8341 = vunpack.c.l.b16 %v8256
        %v8342 = vunpack.c.l.b16 %v8266
        %v8343 = vunpack.c.l.b16 %v8280
        %v8344 = vunpack.c.l.b16 %v8290
        %v8345 = vunpack.c.l.b16 %v8304
        %v8346 = vunpack.c.l.b16 %v8314
        %v8347 = vpack.c.b16 %v8316, %v8315
        %v8348 = vpack.c.b16 %v8318, %v8317
        %v8349 = vpack.c.b16 %v8320, %v8319
        %v8350 = vpack.c.b16 %v8322, %v8321
        %v8351 = vpack.c.b16 %v8324, %v8323
        %v8352 = vpack.c.b16 %v8326, %v8325
        %v8353 = vpack.c.b16 %v8328, %v8327
        %v8354 = vpack.c.b16 %v8330, %v8329
        %v8355 = vpack.c.b16 %v8332, %v8331
        %v8356 = vpack.c.b16 %v8334, %v8333
        %v8357 = vpack.c.b16 %v8336, %v8335
        %v8358 = vpack.c.b16 %v8338, %v8337
        %v8359 = vpack.c.b16 %v8340, %v8339
        %v8360 = vpack.c.b16 %v8342, %v8341
        %v8361 = vpack.c.b16 %v8344, %v8343
        %v8362 = vpack.c.b16 %v8346, %v8345
        %8379 = vst [vmem:[#allocation4 + $0x38] sm:$0xff] %v8347
        %8380 = vst [vmem:[#allocation4 + $0x80] sm:$0xff] %v8348
        %8381 = vst [vmem:[#allocation4 + $0xc8] sm:$0xff] %v8349
        %8382 = vst [vmem:[#allocation4 + $0x110] sm:$0xff] %v8350
        %8383 = vst [vmem:[#allocation4 + $0x158] sm:$0xff] %v8351
        %8384 = vst [vmem:[#allocation4 + $0x1a0] sm:$0xff] %v8352
        %8385 = vst [vmem:[#allocation4 + $0x1e8] sm:$0xff] %v8353
        %8386 = vst [vmem:[#allocation4 + $0x230] sm:$0xff] %v8354
        %8387 = vst [vmem:[#allocation4 + $0x278] sm:$0xff] %v8355
        %8388 = vst [vmem:[#allocation4 + $0x2c0] sm:$0xff] %v8356
        %8389 = vst [vmem:[#allocation4 + $0x308] sm:$0xff] %v8357
        %8390 = vst [vmem:[#allocation4 + $0x350] sm:$0xff] %v8358
        %8391 = vst [vmem:[#allocation4 + $0x398] sm:$0xff] %v8359
        %8392 = vst [vmem:[#allocation4 + $0x3e0] sm:$0xff] %v8360
        %8393 = vst [vmem:[#allocation4 + $0x428] sm:$0xff] %v8361
        %8394 = vst [vmem:[#allocation4 + $0x470] sm:$0xff] %v8362
        %v8395 = vld [vmem:[%s7738] sm:$0xe]
        %v8396 = vld [vmem:[%s7738 + $0x4] sm:$0xf]
        %v8397 = vld [vmem:[%s7738 + $0x8] sm:$0x1]
        %v8398 = vld [vmem:[%s7738 + $0xc] sm:$0xe]
        %v8399 = vld [vmem:[%s7738 + $0x10] sm:$0xf]
        %v8400 = vld [vmem:[%s7738 + $0x14] sm:$0x1]
        %v8401 = vld [vmem:[%s7738 + $0x18] sm:$0xe]
        %v8402 = vld [vmem:[%s7738 + $0x1c] sm:$0xf]
        %v8403 = vld [vmem:[%s7738 + $0x20] sm:$0x1]
        %v8404 = vld [vmem:[%s7738 + $0x24] sm:$0xe]
        %v8405 = vld [vmem:[%s7738 + $0x28] sm:$0xf]
        %v8406 = vld [vmem:[%s7738 + $0x2c] sm:$0x1]
        %v8407 = vld [vmem:[%s7738 + $0x30] sm:$0xe]
        %v8408 = vld [vmem:[%s7738 + $0x34] sm:$0xf]
        %v8409 = vld [vmem:[%s7738 + $0x38] sm:$0x1]
        %v8410 = vld [vmem:[%s7738 + $0x3c] sm:$0xe]
        %v8411 = vld [vmem:[%s7738 + $0x40] sm:$0xf]
        %v8412 = vld [vmem:[%s7738 + $0x44] sm:$0x1]
        %v8413 = vld [vmem:[%s7738 + $0x48] sm:$0xe]
        %v8414 = vld [vmem:[%s7738 + $0x4c] sm:$0xf]
        %v8415 = vld [vmem:[%s7738 + $0x50] sm:$0x1]
        %v8416 = vld [vmem:[%s7738 + $0x54] sm:$0xe]
        %v8417 = vld [vmem:[%s7738 + $0x58] sm:$0xf]
        %v8418 = vld [vmem:[%s7738 + $0x5c] sm:$0x1]
        %v8419 = vld [vmem:[%s7738 + $0x60] sm:$0xe]
        %v8420 = vld [vmem:[%s7738 + $0x64] sm:$0xf]
        %v8421 = vld [vmem:[%s7738 + $0x68] sm:$0x1]
        %v8422 = vld [vmem:[%s7738 + $0x6c] sm:$0xe]
        %v8423 = vld [vmem:[%s7738 + $0x70] sm:$0xf]
        %v8424 = vld [vmem:[%s7738 + $0x74] sm:$0x1]
        %v8425 = vld [vmem:[%s7738 + $0x78] sm:$0xe]
        %v8426 = vld [vmem:[%s7738 + $0x7c] sm:$0xf]
        %v8427 = vld [vmem:[%s7738 + $0x80] sm:$0x1]
        %v8428 = vld [vmem:[%s7738 + $0x84] sm:$0xe]
        %v8429 = vld [vmem:[%s7738 + $0x88] sm:$0xf]
        %v8430 = vld [vmem:[%s7738 + $0x8c] sm:$0x1]
        %v8431 = vld [vmem:[%s7738 + $0x90] sm:$0xe]
        %v8432 = vld [vmem:[%s7738 + $0x94] sm:$0xf]
        %v8433 = vld [vmem:[%s7738 + $0x98] sm:$0x1]
        %v8434 = vld [vmem:[%s7738 + $0x9c] sm:$0xe]
        %v8435 = vld [vmem:[%s7738 + $0xa0] sm:$0xf]
        %v8436 = vld [vmem:[%s7738 + $0xa4] sm:$0x1]
        %v8437 = vld [vmem:[%s7738 + $0xa8] sm:$0xe]
        %v8438 = vld [vmem:[%s7738 + $0xac] sm:$0xf]
        %v8439 = vld [vmem:[%s7738 + $0xb0] sm:$0x1]
        %v8440 = vld [vmem:[%s7738 + $0xb4] sm:$0xe]
        %v8441 = vld [vmem:[%s7738 + $0xb8] sm:$0xf]
        %v8442 = vld [vmem:[%s7738 + $0xbc] sm:$0x1]
        %v8491 = vrot.slane %v8395, 5
        %v8492 = vrot.slane %v8491, 4
        %v8493 = vrot.slane %v8396, 5
        %v8494 = vsel %vm1653, %v8492, %v8493
        %v8495 = vrot.slane %v8493, 4
        %v8496 = vrot.slane %v8397, 5
        %v8497 = vsel %vm1653, %v8495, %v8496
        %v8498 = vrot.slane %v8398, 5
        %v8499 = vrot.slane %v8498, 4
        %v8500 = vrot.slane %v8399, 5
        %v8501 = vsel %vm1653, %v8499, %v8500
        %v8502 = vrot.slane %v8500, 4
        %v8503 = vrot.slane %v8400, 5
        %v8504 = vsel %vm1653, %v8502, %v8503
        %v8505 = vrot.slane %v8401, 5
        %v8506 = vrot.slane %v8505, 4
        %v8507 = vrot.slane %v8402, 5
        %v8508 = vsel %vm1653, %v8506, %v8507
        %v8509 = vrot.slane %v8507, 4
        %v8510 = vrot.slane %v8403, 5
        %v8511 = vsel %vm1653, %v8509, %v8510
        %v8512 = vrot.slane %v8404, 5
        %v8513 = vrot.slane %v8512, 4
        %v8514 = vrot.slane %v8405, 5
        %v8515 = vsel %vm1653, %v8513, %v8514
        %v8516 = vrot.slane %v8514, 4
        %v8517 = vrot.slane %v8406, 5
        %v8518 = vsel %vm1653, %v8516, %v8517
        %v8519 = vrot.slane %v8407, 5
        %v8520 = vrot.slane %v8519, 4
        %v8521 = vrot.slane %v8408, 5
        %v8522 = vsel %vm1653, %v8520, %v8521
        %v8523 = vrot.slane %v8521, 4
        %v8524 = vrot.slane %v8409, 5
        %v8525 = vsel %vm1653, %v8523, %v8524
        %v8526 = vrot.slane %v8410, 5
        %v8527 = vrot.slane %v8526, 4
        %v8528 = vrot.slane %v8411, 5
        %v8529 = vsel %vm1653, %v8527, %v8528
        %v8530 = vrot.slane %v8528, 4
        %v8531 = vrot.slane %v8412, 5
        %v8532 = vsel %vm1653, %v8530, %v8531
        %v8533 = vrot.slane %v8413, 5
        %v8534 = vrot.slane %v8533, 4
        %v8535 = vrot.slane %v8414, 5
        %v8536 = vsel %vm1653, %v8534, %v8535
        %v8537 = vrot.slane %v8535, 4
        %v8538 = vrot.slane %v8415, 5
        %v8539 = vsel %vm1653, %v8537, %v8538
        %v8540 = vrot.slane %v8416, 5
        %v8541 = vrot.slane %v8540, 4
        %v8542 = vrot.slane %v8417, 5
        %v8543 = vsel %vm1653, %v8541, %v8542
        %v8544 = vrot.slane %v8542, 4
        %v8545 = vrot.slane %v8418, 5
        %v8546 = vsel %vm1653, %v8544, %v8545
        %v8547 = vrot.slane %v8419, 5
        %v8548 = vrot.slane %v8547, 4
        %v8549 = vrot.slane %v8420, 5
        %v8550 = vsel %vm1653, %v8548, %v8549
        %v8551 = vrot.slane %v8549, 4
        %v8552 = vrot.slane %v8421, 5
        %v8553 = vsel %vm1653, %v8551, %v8552
        %v8554 = vrot.slane %v8422, 5
        %v8555 = vrot.slane %v8554, 4
        %v8556 = vrot.slane %v8423, 5
        %v8557 = vsel %vm1653, %v8555, %v8556
        %v8558 = vrot.slane %v8556, 4
        %v8559 = vrot.slane %v8424, 5
        %v8560 = vsel %vm1653, %v8558, %v8559
        %v8561 = vrot.slane %v8425, 5
        %v8562 = vrot.slane %v8561, 4
        %v8563 = vrot.slane %v8426, 5
        %v8564 = vsel %vm1653, %v8562, %v8563
        %v8565 = vrot.slane %v8563, 4
        %v8566 = vrot.slane %v8427, 5
        %v8567 = vsel %vm1653, %v8565, %v8566
        %v8568 = vrot.slane %v8428, 5
        %v8569 = vrot.slane %v8568, 4
        %v8570 = vrot.slane %v8429, 5
        %v8571 = vsel %vm1653, %v8569, %v8570
        %v8572 = vrot.slane %v8570, 4
        %v8573 = vrot.slane %v8430, 5
        %v8574 = vsel %vm1653, %v8572, %v8573
        %v8575 = vrot.slane %v8431, 5
        %v8576 = vrot.slane %v8575, 4
        %v8577 = vrot.slane %v8432, 5
        %v8578 = vsel %vm1653, %v8576, %v8577
        %v8579 = vrot.slane %v8577, 4
        %v8580 = vrot.slane %v8433, 5
        %v8581 = vsel %vm1653, %v8579, %v8580
        %v8582 = vrot.slane %v8434, 5
        %v8583 = vrot.slane %v8582, 4
        %v8584 = vrot.slane %v8435, 5
        %v8585 = vsel %vm1653, %v8583, %v8584
        %v8586 = vrot.slane %v8584, 4
        %v8587 = vrot.slane %v8436, 5
        %v8588 = vsel %vm1653, %v8586, %v8587
        %v8589 = vrot.slane %v8437, 5
        %v8590 = vrot.slane %v8589, 4
        %v8591 = vrot.slane %v8438, 5
        %v8592 = vsel %vm1653, %v8590, %v8591
        %v8593 = vrot.slane %v8591, 4
        %v8594 = vrot.slane %v8439, 5
        %v8595 = vsel %vm1653, %v8593, %v8594
        %v8596 = vrot.slane %v8440, 5
        %v8597 = vrot.slane %v8596, 4
        %v8598 = vrot.slane %v8441, 5
        %v8599 = vsel %vm1653, %v8597, %v8598
        %v8600 = vrot.slane %v8598, 4
        %v8601 = vrot.slane %v8442, 5
        %v8602 = vsel %vm1653, %v8600, %v8601
        %v8603 = vunpack.c.l.b16 %v8494
        %v8604 = vunpack.c.l.b16 %v8497
        %v8605 = vunpack.c.l.b16 %v8501
        %v8606 = vunpack.c.l.b16 %v8504
        %v8607 = vunpack.c.l.b16 %v8508
        %v8608 = vunpack.c.l.b16 %v8511
        %v8609 = vunpack.c.l.b16 %v8515
        %v8610 = vunpack.c.l.b16 %v8518
        %v8611 = vunpack.c.l.b16 %v8522
        %v8612 = vunpack.c.l.b16 %v8525
        %v8613 = vunpack.c.l.b16 %v8529
        %v8614 = vunpack.c.l.b16 %v8532
        %v8615 = vunpack.c.l.b16 %v8536
        %v8616 = vunpack.c.l.b16 %v8539
        %v8617 = vunpack.c.l.b16 %v8543
        %v8618 = vunpack.c.l.b16 %v8546
        %v8619 = vunpack.c.l.b16 %v8550
        %v8620 = vunpack.c.l.b16 %v8553
        %v8621 = vunpack.c.l.b16 %v8557
        %v8622 = vunpack.c.l.b16 %v8560
        %v8623 = vunpack.c.l.b16 %v8564
        %v8624 = vunpack.c.l.b16 %v8567
        %v8625 = vunpack.c.l.b16 %v8571
        %v8626 = vunpack.c.l.b16 %v8574
        %v8627 = vunpack.c.l.b16 %v8578
        %v8628 = vunpack.c.l.b16 %v8581
        %v8629 = vunpack.c.l.b16 %v8585
        %v8630 = vunpack.c.l.b16 %v8588
        %v8631 = vunpack.c.l.b16 %v8592
        %v8632 = vunpack.c.l.b16 %v8595
        %v8633 = vunpack.c.l.b16 %v8599
        %v8634 = vunpack.c.l.b16 %v8602
        %v8635 = vpack.c.b16 %v8604, %v8603
        %v8636 = vpack.c.b16 %v8606, %v8605
        %v8637 = vpack.c.b16 %v8608, %v8607
        %v8638 = vpack.c.b16 %v8610, %v8609
        %v8639 = vpack.c.b16 %v8612, %v8611
        %v8640 = vpack.c.b16 %v8614, %v8613
        %v8641 = vpack.c.b16 %v8616, %v8615
        %v8642 = vpack.c.b16 %v8618, %v8617
        %v8643 = vpack.c.b16 %v8620, %v8619
        %v8644 = vpack.c.b16 %v8622, %v8621
        %v8645 = vpack.c.b16 %v8624, %v8623
        %v8646 = vpack.c.b16 %v8626, %v8625
        %v8647 = vpack.c.b16 %v8628, %v8627
        %v8648 = vpack.c.b16 %v8630, %v8629
        %v8649 = vpack.c.b16 %v8632, %v8631
        %v8650 = vpack.c.b16 %v8634, %v8633
        %8667 = vst [vmem:[#allocation4 + $0x40] sm:$0xff] %v8635
        %8668 = vst [vmem:[#allocation4 + $0x88] sm:$0xff] %v8636
        %8669 = vst [vmem:[#allocation4 + $0xd0] sm:$0xff] %v8637
        %8670 = vst [vmem:[#allocation4 + $0x118] sm:$0xff] %v8638
        %8671 = vst [vmem:[#allocation4 + $0x160] sm:$0xff] %v8639
        %8672 = vst [vmem:[#allocation4 + $0x1a8] sm:$0xff] %v8640
        %8673 = vst [vmem:[#allocation4 + $0x1f0] sm:$0xff] %v8641
        %8674 = vst [vmem:[#allocation4 + $0x238] sm:$0xff] %v8642
        %8675 = vst [vmem:[#allocation4 + $0x280] sm:$0xff] %v8643
        %8676 = vst [vmem:[#allocation4 + $0x2c8] sm:$0xff] %v8644
        %8677 = vst [vmem:[#allocation4 + $0x310] sm:$0xff] %v8645
        %8678 = vst [vmem:[#allocation4 + $0x358] sm:$0xff] %v8646
        %8679 = vst [vmem:[#allocation4 + $0x3a0] sm:$0xff] %v8647
        %8680 = vst [vmem:[#allocation4 + $0x3e8] sm:$0xff] %v8648
        %8681 = vst [vmem:[#allocation4 + $0x430] sm:$0xff] %v8649
        %8682 = vst [vmem:[#allocation4 + $0x478] sm:$0xff] %v8650
        %v8683 = vld [vmem:[#allocation4] sm:$0xff]
        %v8684 = vld [vmem:[#allocation4 + $0x8] sm:$0xff]
        %v8685 = vld [vmem:[#allocation4 + $0x10] sm:$0xff]
        %v8686 = vld [vmem:[#allocation4 + $0x18] sm:$0xff]
        %v8687 = vld [vmem:[#allocation4 + $0x20] sm:$0xff]
        %v8688 = vld [vmem:[#allocation4 + $0x28] sm:$0xff]
        %v8689 = vld [vmem:[#allocation4 + $0x30] sm:$0xff]
        %v8690 = vld [vmem:[#allocation4 + $0x38] sm:$0xff]
        %v8691 = vld [vmem:[#allocation4 + $0x40] sm:$0xff]
        %v8692 = vld [vmem:[#allocation4 + $0x48] sm:$0xff]
        %v8693 = vld [vmem:[#allocation4 + $0x50] sm:$0xff]
        %v8694 = vld [vmem:[#allocation4 + $0x58] sm:$0xff]
        %v8695 = vld [vmem:[#allocation4 + $0x60] sm:$0xff]
        %v8696 = vld [vmem:[#allocation4 + $0x68] sm:$0xff]
        %v8697 = vld [vmem:[#allocation4 + $0x70] sm:$0xff]
        %v8698 = vld [vmem:[#allocation4 + $0x78] sm:$0xff]
        %v8699 = vld [vmem:[#allocation4 + $0x80] sm:$0xff]
        %v8700 = vld [vmem:[#allocation4 + $0x88] sm:$0xff]
        %v8701 = vld [vmem:[#allocation4 + $0x90] sm:$0xff]
        %v8702 = vld [vmem:[#allocation4 + $0x98] sm:$0xff]
        %v8703 = vld [vmem:[#allocation4 + $0xa0] sm:$0xff]
        %v8704 = vld [vmem:[#allocation4 + $0xa8] sm:$0xff]
        %v8705 = vld [vmem:[#allocation4 + $0xb0] sm:$0xff]
        %v8706 = vld [vmem:[#allocation4 + $0xb8] sm:$0xff]
        %v8707 = vld [vmem:[#allocation4 + $0xc0] sm:$0xff]
        %v8708 = vld [vmem:[#allocation4 + $0xc8] sm:$0xff]
        %v8709 = vld [vmem:[#allocation4 + $0xd0] sm:$0xff]
        %v8710 = vld [vmem:[#allocation4 + $0xd8] sm:$0xff]
        %v8711 = vld [vmem:[#allocation4 + $0xe0] sm:$0xff]
        %v8712 = vld [vmem:[#allocation4 + $0xe8] sm:$0xff]
        %v8713 = vld [vmem:[#allocation4 + $0xf0] sm:$0xff]
        %v8714 = vld [vmem:[#allocation4 + $0xf8] sm:$0xff]
        %v8715 = vld [vmem:[#allocation4 + $0x100] sm:$0xff]
        %v8716 = vld [vmem:[#allocation4 + $0x108] sm:$0xff]
        %v8717 = vld [vmem:[#allocation4 + $0x110] sm:$0xff]
        %v8718 = vld [vmem:[#allocation4 + $0x118] sm:$0xff]
        %v8719 = vld [vmem:[#allocation4 + $0x120] sm:$0xff]
        %v8720 = vld [vmem:[#allocation4 + $0x128] sm:$0xff]
        %v8721 = vld [vmem:[#allocation4 + $0x130] sm:$0xff]
        %v8722 = vld [vmem:[#allocation4 + $0x138] sm:$0xff]
        %v8723 = vld [vmem:[#allocation4 + $0x140] sm:$0xff]
        %v8724 = vld [vmem:[#allocation4 + $0x148] sm:$0xff]
        %v8725 = vld [vmem:[#allocation4 + $0x150] sm:$0xff]
        %v8726 = vld [vmem:[#allocation4 + $0x158] sm:$0xff]
        %v8727 = vld [vmem:[#allocation4 + $0x160] sm:$0xff]
        %v8728 = vld [vmem:[#allocation4 + $0x168] sm:$0xff]
        %v8729 = vld [vmem:[#allocation4 + $0x170] sm:$0xff]
        %v8730 = vld [vmem:[#allocation4 + $0x178] sm:$0xff]
        %v8731 = vld [vmem:[#allocation4 + $0x180] sm:$0xff]
        %v8732 = vld [vmem:[#allocation4 + $0x188] sm:$0xff]
        %v8733 = vld [vmem:[#allocation4 + $0x190] sm:$0xff]
        %v8734 = vld [vmem:[#allocation4 + $0x198] sm:$0xff]
        %v8735 = vld [vmem:[#allocation4 + $0x1a0] sm:$0xff]
        %v8736 = vld [vmem:[#allocation4 + $0x1a8] sm:$0xff]
        %v8737 = vld [vmem:[#allocation4 + $0x1b0] sm:$0xff]
        %v8738 = vld [vmem:[#allocation4 + $0x1b8] sm:$0xff]
        %v8739 = vld [vmem:[#allocation4 + $0x1c0] sm:$0xff]
        %v8740 = vld [vmem:[#allocation4 + $0x1c8] sm:$0xff]
        %v8741 = vld [vmem:[#allocation4 + $0x1d0] sm:$0xff]
        %v8742 = vld [vmem:[#allocation4 + $0x1d8] sm:$0xff]
        %v8743 = vld [vmem:[#allocation4 + $0x1e0] sm:$0xff]
        %v8744 = vld [vmem:[#allocation4 + $0x1e8] sm:$0xff]
        %v8745 = vld [vmem:[#allocation4 + $0x1f0] sm:$0xff]
        %v8746 = vld [vmem:[#allocation4 + $0x1f8] sm:$0xff]
        %v8747 = vld [vmem:[#allocation4 + $0x200] sm:$0xff]
        %v8748 = vld [vmem:[#allocation4 + $0x208] sm:$0xff]
        %v8749 = vld [vmem:[#allocation4 + $0x210] sm:$0xff]
        %v8750 = vld [vmem:[#allocation4 + $0x218] sm:$0xff]
        %v8751 = vld [vmem:[#allocation4 + $0x220] sm:$0xff]
        %v8752 = vld [vmem:[#allocation4 + $0x228] sm:$0xff]
        %v8753 = vld [vmem:[#allocation4 + $0x230] sm:$0xff]
        %v8754 = vld [vmem:[#allocation4 + $0x238] sm:$0xff]
        %v8755 = vld [vmem:[#allocation4 + $0x240] sm:$0xff]
        %v8756 = vld [vmem:[#allocation4 + $0x248] sm:$0xff]
        %v8757 = vld [vmem:[#allocation4 + $0x250] sm:$0xff]
        %v8758 = vld [vmem:[#allocation4 + $0x258] sm:$0xff]
        %v8759 = vld [vmem:[#allocation4 + $0x260] sm:$0xff]
        %v8760 = vld [vmem:[#allocation4 + $0x268] sm:$0xff]
        %v8761 = vld [vmem:[#allocation4 + $0x270] sm:$0xff]
        %v8762 = vld [vmem:[#allocation4 + $0x278] sm:$0xff]
        %v8763 = vld [vmem:[#allocation4 + $0x280] sm:$0xff]
        %v8764 = vld [vmem:[#allocation4 + $0x288] sm:$0xff]
        %v8765 = vld [vmem:[#allocation4 + $0x290] sm:$0xff]
        %v8766 = vld [vmem:[#allocation4 + $0x298] sm:$0xff]
        %v8767 = vld [vmem:[#allocation4 + $0x2a0] sm:$0xff]
        %v8768 = vld [vmem:[#allocation4 + $0x2a8] sm:$0xff]
        %v8769 = vld [vmem:[#allocation4 + $0x2b0] sm:$0xff]
        %v8770 = vld [vmem:[#allocation4 + $0x2b8] sm:$0xff]
        %v8771 = vld [vmem:[#allocation4 + $0x2c0] sm:$0xff]
        %v8772 = vld [vmem:[#allocation4 + $0x2c8] sm:$0xff]
        %v8773 = vld [vmem:[#allocation4 + $0x2d0] sm:$0xff]
        %v8774 = vld [vmem:[#allocation4 + $0x2d8] sm:$0xff]
        %v8775 = vld [vmem:[#allocation4 + $0x2e0] sm:$0xff]
        %v8776 = vld [vmem:[#allocation4 + $0x2e8] sm:$0xff]
        %v8777 = vld [vmem:[#allocation4 + $0x2f0] sm:$0xff]
        %v8778 = vld [vmem:[#allocation4 + $0x2f8] sm:$0xff]
        %v8779 = vld [vmem:[#allocation4 + $0x300] sm:$0xff]
        %v8780 = vld [vmem:[#allocation4 + $0x308] sm:$0xff]
        %v8781 = vld [vmem:[#allocation4 + $0x310] sm:$0xff]
        %v8782 = vld [vmem:[#allocation4 + $0x318] sm:$0xff]
        %v8783 = vld [vmem:[#allocation4 + $0x320] sm:$0xff]
        %v8784 = vld [vmem:[#allocation4 + $0x328] sm:$0xff]
        %v8785 = vld [vmem:[#allocation4 + $0x330] sm:$0xff]
        %v8786 = vld [vmem:[#allocation4 + $0x338] sm:$0xff]
        %v8787 = vld [vmem:[#allocation4 + $0x340] sm:$0xff]
        %v8788 = vld [vmem:[#allocation4 + $0x348] sm:$0xff]
        %v8789 = vld [vmem:[#allocation4 + $0x350] sm:$0xff]
        %v8790 = vld [vmem:[#allocation4 + $0x358] sm:$0xff]
        %v8791 = vld [vmem:[#allocation4 + $0x360] sm:$0xff]
        %v8792 = vld [vmem:[#allocation4 + $0x368] sm:$0xff]
        %v8793 = vld [vmem:[#allocation4 + $0x370] sm:$0xff]
        %v8794 = vld [vmem:[#allocation4 + $0x378] sm:$0xff]
        %v8795 = vld [vmem:[#allocation4 + $0x380] sm:$0xff]
        %v8796 = vld [vmem:[#allocation4 + $0x388] sm:$0xff]
        %v8797 = vld [vmem:[#allocation4 + $0x390] sm:$0xff]
        %v8798 = vld [vmem:[#allocation4 + $0x398] sm:$0xff]
        %v8799 = vld [vmem:[#allocation4 + $0x3a0] sm:$0xff]
        %v8800 = vld [vmem:[#allocation4 + $0x3a8] sm:$0xff]
        %v8801 = vld [vmem:[#allocation4 + $0x3b0] sm:$0xff]
        %v8802 = vld [vmem:[#allocation4 + $0x3b8] sm:$0xff]
        %v8803 = vld [vmem:[#allocation4 + $0x3c0] sm:$0xff]
        %v8804 = vld [vmem:[#allocation4 + $0x3c8] sm:$0xff]
        %v8805 = vld [vmem:[#allocation4 + $0x3d0] sm:$0xff]
        %v8806 = vld [vmem:[#allocation4 + $0x3d8] sm:$0xff]
        %v8807 = vld [vmem:[#allocation4 + $0x3e0] sm:$0xff]
        %v8808 = vld [vmem:[#allocation4 + $0x3e8] sm:$0xff]
        %v8809 = vld [vmem:[#allocation4 + $0x3f0] sm:$0xff]
        %v8810 = vld [vmem:[#allocation4 + $0x3f8] sm:$0xff]
        %v8811 = vld [vmem:[#allocation4 + $0x400] sm:$0xff]
        %v8812 = vld [vmem:[#allocation4 + $0x408] sm:$0xff]
        %v8813 = vld [vmem:[#allocation4 + $0x410] sm:$0xff]
        %v8814 = vld [vmem:[#allocation4 + $0x418] sm:$0xff]
        %v8815 = vld [vmem:[#allocation4 + $0x420] sm:$0xff]
        %v8816 = vld [vmem:[#allocation4 + $0x428] sm:$0xff]
        %v8817 = vld [vmem:[#allocation4 + $0x430] sm:$0xff]
        %v8818 = vld [vmem:[#allocation4 + $0x438] sm:$0xff]
        %v8819 = vld [vmem:[#allocation4 + $0x440] sm:$0xff]
        %v8820 = vld [vmem:[#allocation4 + $0x448] sm:$0xff]
        %v8821 = vld [vmem:[#allocation4 + $0x450] sm:$0xff]
        %v8822 = vld [vmem:[#allocation4 + $0x458] sm:$0xff]
        %v8823 = vld [vmem:[#allocation4 + $0x460] sm:$0xff]
        %v8824 = vld [vmem:[#allocation4 + $0x468] sm:$0xff]
        %v8825 = vld [vmem:[#allocation4 + $0x470] sm:$0xff]
        %v8826 = vld [vmem:[#allocation4 + $0x478] sm:$0xff]
        %v8827 = vld [vmem:[#allocation10] sm:$0xf]
        %v8828 = vld [vmem:[#allocation10 + $0x4] sm:$0xf]
        %v8829 = vld [vmem:[#allocation10 + $0x8] sm:$0xf]
        %v8830 = vld [vmem:[#allocation10 + $0xc] sm:$0xf]
        %v8831 = vld [vmem:[#allocation10 + $0x10] sm:$0xf]
        %v8832 = vld [vmem:[#allocation10 + $0x14] sm:$0xf]
        %v8833 = vld [vmem:[#allocation10 + $0x18] sm:$0xf]
        %v8834 = vld [vmem:[#allocation10 + $0x1c] sm:$0xf]
        %v8835 = vld [vmem:[#allocation10 + $0x20] sm:$0xf]
        %v8836 = vld [vmem:[#allocation10 + $0x24] sm:$0xf]
        %v8837 = vld [vmem:[#allocation10 + $0x28] sm:$0xf]
        %v8838 = vld [vmem:[#allocation10 + $0x2c] sm:$0xf]
        %v8839 = vld [vmem:[#allocation10 + $0x30] sm:$0xf]
        %v8840 = vld [vmem:[#allocation10 + $0x34] sm:$0xf]
        %v8841 = vld [vmem:[#allocation10 + $0x38] sm:$0xf]
        %v8842 = vld [vmem:[#allocation10 + $0x3c] sm:$0xf]
        %v8843 = vld [vmem:[#allocation10 + $0x40] sm:$0xf]
        %v8844 = vld [vmem:[#allocation10 + $0x44] sm:$0xf]
        %v8845 = vld [vmem:[#allocation10 + $0x48] sm:$0xf]
        %v8846 = vld [vmem:[#allocation10 + $0x4c] sm:$0xf]
        %v8847 = vld [vmem:[#allocation10 + $0x50] sm:$0xf]
        %v8848 = vld [vmem:[#allocation10 + $0x54] sm:$0xf]
        %v8849 = vld [vmem:[#allocation10 + $0x58] sm:$0xf]
        %v8850 = vld [vmem:[#allocation10 + $0x5c] sm:$0xf]
        %v8851 = vld [vmem:[#allocation10 + $0x60] sm:$0xf]
        %v8852 = vld [vmem:[#allocation10 + $0x64] sm:$0xf]
        %v8853 = vld [vmem:[#allocation10 + $0x68] sm:$0xf]
        %v8854 = vld [vmem:[#allocation10 + $0x6c] sm:$0xf]
        %v8855 = vld [vmem:[#allocation10 + $0x70] sm:$0xf]
        %v8856 = vld [vmem:[#allocation10 + $0x74] sm:$0xf]
        %v8857 = vld [vmem:[#allocation10 + $0x78] sm:$0xf]
        %v8858 = vld [vmem:[#allocation10 + $0x7c] sm:$0xf]
        %v8859 = vld [vmem:[#allocation10 + $0x80] sm:$0xf]
        %v8860 = vld [vmem:[#allocation10 + $0x84] sm:$0xf]
        %v8861 = vld [vmem:[#allocation10 + $0x88] sm:$0xf]
        %v8862 = vld [vmem:[#allocation10 + $0x8c] sm:$0xf]
        %v8863 = vld [vmem:[#allocation10 + $0x90] sm:$0xf]
        %v8864 = vld [vmem:[#allocation10 + $0x94] sm:$0xf]
        %v8865 = vld [vmem:[#allocation10 + $0x98] sm:$0xf]
        %v8866 = vld [vmem:[#allocation10 + $0x9c] sm:$0xf]
        %v8867 = vld [vmem:[#allocation10 + $0xa0] sm:$0xf]
        %v8868 = vld [vmem:[#allocation10 + $0xa4] sm:$0xf]
        %v8869 = vld [vmem:[#allocation10 + $0xa8] sm:$0xf]
        %v8870 = vld [vmem:[#allocation10 + $0xac] sm:$0xf]
        %v8871 = vld [vmem:[#allocation10 + $0xb0] sm:$0xf]
        %v8872 = vld [vmem:[#allocation10 + $0xb4] sm:$0xf]
        %v8873 = vld [vmem:[#allocation10 + $0xb8] sm:$0xf]
        %v8874 = vld [vmem:[#allocation10 + $0xbc] sm:$0xf]
        %v8875 = vld [vmem:[#allocation10 + $0xc0] sm:$0xf]
        %v8876 = vld [vmem:[#allocation10 + $0xc4] sm:$0xf]
        %v8877 = vld [vmem:[#allocation10 + $0xc8] sm:$0xf]
        %v8878 = vld [vmem:[#allocation10 + $0xcc] sm:$0xf]
        %v8879 = vld [vmem:[#allocation10 + $0xd0] sm:$0xf]
        %v8880 = vld [vmem:[#allocation10 + $0xd4] sm:$0xf]
        %v8881 = vld [vmem:[#allocation10 + $0xd8] sm:$0xf]
        %v8882 = vld [vmem:[#allocation10 + $0xdc] sm:$0xf]
        %v8883 = vld [vmem:[#allocation10 + $0xe0] sm:$0xf]
        %v8884 = vld [vmem:[#allocation10 + $0xe4] sm:$0xf]
        %v8885 = vld [vmem:[#allocation10 + $0xe8] sm:$0xf]
        %v8886 = vld [vmem:[#allocation10 + $0xec] sm:$0xf]
        %v8887 = vld [vmem:[#allocation10 + $0xf0] sm:$0xf]
        %v8888 = vld [vmem:[#allocation10 + $0xf4] sm:$0xf]
        %v8889 = vld [vmem:[#allocation10 + $0xf8] sm:$0xf]
        %v8890 = vld [vmem:[#allocation10 + $0xfc] sm:$0xf]
        %v8891 = vld [vmem:[#allocation10 + $0x100] sm:$0xf]
        %v8892 = vld [vmem:[#allocation10 + $0x104] sm:$0xf]
        %v8893 = vld [vmem:[#allocation10 + $0x108] sm:$0xf]
        %v8894 = vld [vmem:[#allocation10 + $0x10c] sm:$0xf]
        %v8895 = vld [vmem:[#allocation10 + $0x110] sm:$0xf]
        %v8896 = vld [vmem:[#allocation10 + $0x114] sm:$0xf]
        %v8897 = vld [vmem:[#allocation10 + $0x118] sm:$0xf]
        %v8898 = vld [vmem:[#allocation10 + $0x11c] sm:$0xf]
        %v8899 = vld [vmem:[#allocation10 + $0x120] sm:$0xf]
        %v8900 = vld [vmem:[#allocation10 + $0x124] sm:$0xf]
        %v8901 = vld [vmem:[#allocation10 + $0x128] sm:$0xf]
        %v8902 = vld [vmem:[#allocation10 + $0x12c] sm:$0xf]
        %v8903 = vld [vmem:[#allocation10 + $0x130] sm:$0xf]
        %v8904 = vld [vmem:[#allocation10 + $0x134] sm:$0xf]
        %v8905 = vld [vmem:[#allocation10 + $0x138] sm:$0xf]
        %v8906 = vld [vmem:[#allocation10 + $0x13c] sm:$0xf]
        %v8907 = vld [vmem:[#allocation10 + $0x140] sm:$0xf]
        %v8908 = vld [vmem:[#allocation10 + $0x144] sm:$0xf]
        %v8909 = vld [vmem:[#allocation10 + $0x148] sm:$0xf]
        %v8910 = vld [vmem:[#allocation10 + $0x14c] sm:$0xf]
        %v8911 = vld [vmem:[#allocation10 + $0x150] sm:$0xf]
        %v8912 = vld [vmem:[#allocation10 + $0x154] sm:$0xf]
        %v8913 = vld [vmem:[#allocation10 + $0x158] sm:$0xf]
        %v8914 = vld [vmem:[#allocation10 + $0x15c] sm:$0xf]
        %v8915 = vld [vmem:[#allocation10 + $0x160] sm:$0xf]
        %v8916 = vld [vmem:[#allocation10 + $0x164] sm:$0xf]
        %v8917 = vld [vmem:[#allocation10 + $0x168] sm:$0xf]
        %v8918 = vld [vmem:[#allocation10 + $0x16c] sm:$0xf]
        %v8919 = vld [vmem:[#allocation10 + $0x170] sm:$0xf]
        %v8920 = vld [vmem:[#allocation10 + $0x174] sm:$0xf]
        %v8921 = vld [vmem:[#allocation10 + $0x178] sm:$0xf]
        %v8922 = vld [vmem:[#allocation10 + $0x17c] sm:$0xf]
        %v8923 = vld [vmem:[#allocation10 + $0x180] sm:$0xf]
        %v8924 = vld [vmem:[#allocation10 + $0x184] sm:$0xf]
        %v8925 = vld [vmem:[#allocation10 + $0x188] sm:$0xf]
        %v8926 = vld [vmem:[#allocation10 + $0x18c] sm:$0xf]
        %v8927 = vld [vmem:[#allocation10 + $0x190] sm:$0xf]
        %v8928 = vld [vmem:[#allocation10 + $0x194] sm:$0xf]
        %v8929 = vld [vmem:[#allocation10 + $0x198] sm:$0xf]
        %v8930 = vld [vmem:[#allocation10 + $0x19c] sm:$0xf]
        %v8931 = vld [vmem:[#allocation10 + $0x1a0] sm:$0xf]
        %v8932 = vld [vmem:[#allocation10 + $0x1a4] sm:$0xf]
        %v8933 = vld [vmem:[#allocation10 + $0x1a8] sm:$0xf]
        %v8934 = vld [vmem:[#allocation10 + $0x1ac] sm:$0xf]
        %v8935 = vld [vmem:[#allocation10 + $0x1b0] sm:$0xf]
        %v8936 = vld [vmem:[#allocation10 + $0x1b4] sm:$0xf]
        %v8937 = vld [vmem:[#allocation10 + $0x1b8] sm:$0xf]
        %v8938 = vld [vmem:[#allocation10 + $0x1bc] sm:$0xf]
        %v8939 = vld [vmem:[#allocation10 + $0x1c0] sm:$0xf]
        %v8940 = vld [vmem:[#allocation10 + $0x1c4] sm:$0xf]
        %v8941 = vld [vmem:[#allocation10 + $0x1c8] sm:$0xf]
        %v8942 = vld [vmem:[#allocation10 + $0x1cc] sm:$0xf]
        %v8943 = vld [vmem:[#allocation10 + $0x1d0] sm:$0xf]
        %v8944 = vld [vmem:[#allocation10 + $0x1d4] sm:$0xf]
        %v8945 = vld [vmem:[#allocation10 + $0x1d8] sm:$0xf]
        %v8946 = vld [vmem:[#allocation10 + $0x1dc] sm:$0xf]
        %v8947 = vld [vmem:[#allocation10 + $0x1e0] sm:$0xf]
        %v8948 = vld [vmem:[#allocation10 + $0x1e4] sm:$0xf]
        %v8949 = vld [vmem:[#allocation10 + $0x1e8] sm:$0xf]
        %v8950 = vld [vmem:[#allocation10 + $0x1ec] sm:$0xf]
        %v8951 = vld [vmem:[#allocation10 + $0x1f0] sm:$0xf]
        %v8952 = vld [vmem:[#allocation10 + $0x1f4] sm:$0xf]
        %v8953 = vld [vmem:[#allocation10 + $0x1f8] sm:$0xf]
        %v8954 = vld [vmem:[#allocation10 + $0x1fc] sm:$0xf]
        %v8955 = vld [vmem:[#allocation10 + $0x200] sm:$0xf]
        %v8956 = vld [vmem:[#allocation10 + $0x204] sm:$0xf]
        %v8957 = vld [vmem:[#allocation10 + $0x208] sm:$0xf]
        %v8958 = vld [vmem:[#allocation10 + $0x20c] sm:$0xf]
        %v8959 = vld [vmem:[#allocation10 + $0x210] sm:$0xf]
        %v8960 = vld [vmem:[#allocation10 + $0x214] sm:$0xf]
        %v8961 = vld [vmem:[#allocation10 + $0x218] sm:$0xf]
        %v8962 = vld [vmem:[#allocation10 + $0x21c] sm:$0xf]
        %v8963 = vld [vmem:[#allocation10 + $0x220] sm:$0xf]
        %v8964 = vld [vmem:[#allocation10 + $0x224] sm:$0xf]
        %v8965 = vld [vmem:[#allocation10 + $0x228] sm:$0xf]
        %v8966 = vld [vmem:[#allocation10 + $0x22c] sm:$0xf]
        %v8967 = vld [vmem:[#allocation10 + $0x230] sm:$0xf]
        %v8968 = vld [vmem:[#allocation10 + $0x234] sm:$0xf]
        %v8969 = vld [vmem:[#allocation10 + $0x238] sm:$0xf]
        %v8970 = vld [vmem:[#allocation10 + $0x23c] sm:$0xf]
        %v8971 = vld [vmem:[%s4] sm:$0x1]
        %v8973 = vlaneseq
        %v8974 = vshrl.u32 %v8973, 7
        %v8975 = vsub.s32 0, %v8974
        %v8976 = vrot.slane %v8971, %v8975
        %v9122 = vunpack.c.l.b16 %v8827
        %v9123 = vunpack.c.l.b16 %v8828
        %v9124 = vunpack.c.l.b16 %v8829
        %v9125 = vunpack.c.l.b16 %v8830
        %v9126 = vunpack.c.l.b16 %v8831
        %v9127 = vunpack.c.l.b16 %v8832
        %v9128 = vunpack.c.l.b16 %v8833
        %v9129 = vunpack.c.l.b16 %v8834
        %v9130 = vunpack.c.l.b16 %v8835
        %v9131 = vunpack.c.l.b16 %v8836
        %v9132 = vunpack.c.l.b16 %v8837
        %v9133 = vunpack.c.l.b16 %v8838
        %v9134 = vunpack.c.l.b16 %v8839
        %v9135 = vunpack.c.l.b16 %v8840
        %v9136 = vunpack.c.l.b16 %v8841
        %v9137 = vunpack.c.l.b16 %v8842
        %v9138 = vunpack.c.l.b16 %v8843
        %v9139 = vunpack.c.l.b16 %v8844
        %v9140 = vunpack.c.l.b16 %v8845
        %v9141 = vunpack.c.l.b16 %v8846
        %v9142 = vunpack.c.l.b16 %v8847
        %v9143 = vunpack.c.l.b16 %v8848
        %v9144 = vunpack.c.l.b16 %v8849
        %v9145 = vunpack.c.l.b16 %v8850
        %v9146 = vunpack.c.l.b16 %v8851
        %v9147 = vunpack.c.l.b16 %v8852
        %v9148 = vunpack.c.l.b16 %v8853
        %v9149 = vunpack.c.l.b16 %v8854
        %v9150 = vunpack.c.l.b16 %v8855
        %v9151 = vunpack.c.l.b16 %v8856
        %v9152 = vunpack.c.l.b16 %v8857
        %v9153 = vunpack.c.l.b16 %v8858
        %v9154 = vunpack.c.l.b16 %v8859
        %v9155 = vunpack.c.l.b16 %v8860
        %v9156 = vunpack.c.l.b16 %v8861
        %v9157 = vunpack.c.l.b16 %v8862
        %v9158 = vunpack.c.l.b16 %v8863
        %v9159 = vunpack.c.l.b16 %v8864
        %v9160 = vunpack.c.l.b16 %v8865
        %v9161 = vunpack.c.l.b16 %v8866
        %v9162 = vunpack.c.l.b16 %v8867
        %v9163 = vunpack.c.l.b16 %v8868
        %v9164 = vunpack.c.l.b16 %v8869
        %v9165 = vunpack.c.l.b16 %v8870
        %v9166 = vunpack.c.l.b16 %v8871
        %v9167 = vunpack.c.l.b16 %v8872
        %v9168 = vunpack.c.l.b16 %v8873
        %v9169 = vunpack.c.l.b16 %v8874
        %v9170 = vunpack.c.l.b16 %v8875
        %v9171 = vunpack.c.l.b16 %v8876
        %v9172 = vunpack.c.l.b16 %v8877
        %v9173 = vunpack.c.l.b16 %v8878
        %v9174 = vunpack.c.l.b16 %v8879
        %v9175 = vunpack.c.l.b16 %v8880
        %v9176 = vunpack.c.l.b16 %v8881
        %v9177 = vunpack.c.l.b16 %v8882
        %v9178 = vunpack.c.l.b16 %v8883
        %v9179 = vunpack.c.l.b16 %v8884
        %v9180 = vunpack.c.l.b16 %v8885
        %v9181 = vunpack.c.l.b16 %v8886
        %v9182 = vunpack.c.l.b16 %v8887
        %v9183 = vunpack.c.l.b16 %v8888
        %v9184 = vunpack.c.l.b16 %v8889
        %v9185 = vunpack.c.l.b16 %v8890
        %v9186 = vunpack.c.l.b16 %v8891
        %v9187 = vunpack.c.l.b16 %v8892
        %v9188 = vunpack.c.l.b16 %v8893
        %v9189 = vunpack.c.l.b16 %v8894
        %v9190 = vunpack.c.l.b16 %v8895
        %v9191 = vunpack.c.l.b16 %v8896
        %v9192 = vunpack.c.l.b16 %v8897
        %v9193 = vunpack.c.l.b16 %v8898
        %v9194 = vunpack.c.l.b16 %v8899
        %v9195 = vunpack.c.l.b16 %v8900
        %v9196 = vunpack.c.l.b16 %v8901
        %v9197 = vunpack.c.l.b16 %v8902
        %v9198 = vunpack.c.l.b16 %v8903
        %v9199 = vunpack.c.l.b16 %v8904
        %v9200 = vunpack.c.l.b16 %v8905
        %v9201 = vunpack.c.l.b16 %v8906
        %v9202 = vunpack.c.l.b16 %v8907
        %v9203 = vunpack.c.l.b16 %v8908
        %v9204 = vunpack.c.l.b16 %v8909
        %v9205 = vunpack.c.l.b16 %v8910
        %v9206 = vunpack.c.l.b16 %v8911
        %v9207 = vunpack.c.l.b16 %v8912
        %v9208 = vunpack.c.l.b16 %v8913
        %v9209 = vunpack.c.l.b16 %v8914
        %v9210 = vunpack.c.l.b16 %v8915
        %v9211 = vunpack.c.l.b16 %v8916
        %v9212 = vunpack.c.l.b16 %v8917
        %v9213 = vunpack.c.l.b16 %v8918
        %v9214 = vunpack.c.l.b16 %v8919
        %v9215 = vunpack.c.l.b16 %v8920
        %v9216 = vunpack.c.l.b16 %v8921
        %v9217 = vunpack.c.l.b16 %v8922
        %v9218 = vunpack.c.l.b16 %v8923
        %v9219 = vunpack.c.l.b16 %v8924
        %v9220 = vunpack.c.l.b16 %v8925
        %v9221 = vunpack.c.l.b16 %v8926
        %v9222 = vunpack.c.l.b16 %v8927
        %v9223 = vunpack.c.l.b16 %v8928
        %v9224 = vunpack.c.l.b16 %v8929
        %v9225 = vunpack.c.l.b16 %v8930
        %v9226 = vunpack.c.l.b16 %v8931
        %v9227 = vunpack.c.l.b16 %v8932
        %v9228 = vunpack.c.l.b16 %v8933
        %v9229 = vunpack.c.l.b16 %v8934
        %v9230 = vunpack.c.l.b16 %v8935
        %v9231 = vunpack.c.l.b16 %v8936
        %v9232 = vunpack.c.l.b16 %v8937
        %v9233 = vunpack.c.l.b16 %v8938
        %v9234 = vunpack.c.l.b16 %v8939
        %v9235 = vunpack.c.l.b16 %v8940
        %v9236 = vunpack.c.l.b16 %v8941
        %v9237 = vunpack.c.l.b16 %v8942
        %v9238 = vunpack.c.l.b16 %v8943
        %v9239 = vunpack.c.l.b16 %v8944
        %v9240 = vunpack.c.l.b16 %v8945
        %v9241 = vunpack.c.l.b16 %v8946
        %v9242 = vunpack.c.l.b16 %v8947
        %v9243 = vunpack.c.l.b16 %v8948
        %v9244 = vunpack.c.l.b16 %v8949
        %v9245 = vunpack.c.l.b16 %v8950
        %v9246 = vunpack.c.l.b16 %v8951
        %v9247 = vunpack.c.l.b16 %v8952
        %v9248 = vunpack.c.l.b16 %v8953
        %v9249 = vunpack.c.l.b16 %v8954
        %v9250 = vunpack.c.l.b16 %v8955
        %v9251 = vunpack.c.l.b16 %v8956
        %v9252 = vunpack.c.l.b16 %v8957
        %v9253 = vunpack.c.l.b16 %v8958
        %v9254 = vunpack.c.l.b16 %v8959
        %v9255 = vunpack.c.l.b16 %v8960
        %v9256 = vunpack.c.l.b16 %v8961
        %v9257 = vunpack.c.l.b16 %v8962
        %v9258 = vunpack.c.l.b16 %v8963
        %v9259 = vunpack.c.l.b16 %v8964
        %v9260 = vunpack.c.l.b16 %v8965
        %v9261 = vunpack.c.l.b16 %v8966
        %v9262 = vunpack.c.l.b16 %v8967
        %v9263 = vunpack.c.l.b16 %v8968
        %v9264 = vunpack.c.l.b16 %v8969
        %v9265 = vunpack.c.l.b16 %v8970
        %v9266 = vpack.c.b16 %v9123, %v9122
        %v9267 = vpack.c.b16 %v9125, %v9124
        %v9268 = vpack.c.b16 %v9127, %v9126
        %v9269 = vpack.c.b16 %v9129, %v9128
        %v9270 = vpack.c.b16 %v9131, %v9130
        %v9271 = vpack.c.b16 %v9133, %v9132
        %v9272 = vpack.c.b16 %v9135, %v9134
        %v9273 = vpack.c.b16 %v9137, %v9136
        %v9274 = vpack.c.b16 %v9139, %v9138
        %v9275 = vpack.c.b16 %v9141, %v9140
        %v9276 = vpack.c.b16 %v9143, %v9142
        %v9277 = vpack.c.b16 %v9145, %v9144
        %v9278 = vpack.c.b16 %v9147, %v9146
        %v9279 = vpack.c.b16 %v9149, %v9148
        %v9280 = vpack.c.b16 %v9151, %v9150
        %v9281 = vpack.c.b16 %v9153, %v9152
        %v9282 = vpack.c.b16 %v9155, %v9154
        %v9283 = vpack.c.b16 %v9157, %v9156
        %v9284 = vpack.c.b16 %v9159, %v9158
        %v9285 = vpack.c.b16 %v9161, %v9160
        %v9286 = vpack.c.b16 %v9163, %v9162
        %v9287 = vpack.c.b16 %v9165, %v9164
        %v9288 = vpack.c.b16 %v9167, %v9166
        %v9289 = vpack.c.b16 %v9169, %v9168
        %v9290 = vpack.c.b16 %v9171, %v9170
        %v9291 = vpack.c.b16 %v9173, %v9172
        %v9292 = vpack.c.b16 %v9175, %v9174
        %v9293 = vpack.c.b16 %v9177, %v9176
        %v9294 = vpack.c.b16 %v9179, %v9178
        %v9295 = vpack.c.b16 %v9181, %v9180
        %v9296 = vpack.c.b16 %v9183, %v9182
        %v9297 = vpack.c.b16 %v9185, %v9184
        %v9298 = vpack.c.b16 %v9187, %v9186
        %v9299 = vpack.c.b16 %v9189, %v9188
        %v9300 = vpack.c.b16 %v9191, %v9190
        %v9301 = vpack.c.b16 %v9193, %v9192
        %v9302 = vpack.c.b16 %v9195, %v9194
        %v9303 = vpack.c.b16 %v9197, %v9196
        %v9304 = vpack.c.b16 %v9199, %v9198
        %v9305 = vpack.c.b16 %v9201, %v9200
        %v9306 = vpack.c.b16 %v9203, %v9202
        %v9307 = vpack.c.b16 %v9205, %v9204
        %v9308 = vpack.c.b16 %v9207, %v9206
        %v9309 = vpack.c.b16 %v9209, %v9208
        %v9310 = vpack.c.b16 %v9211, %v9210
        %v9311 = vpack.c.b16 %v9213, %v9212
        %v9312 = vpack.c.b16 %v9215, %v9214
        %v9313 = vpack.c.b16 %v9217, %v9216
        %v9314 = vpack.c.b16 %v9219, %v9218
        %v9315 = vpack.c.b16 %v9221, %v9220
        %v9316 = vpack.c.b16 %v9223, %v9222
        %v9317 = vpack.c.b16 %v9225, %v9224
        %v9318 = vpack.c.b16 %v9227, %v9226
        %v9319 = vpack.c.b16 %v9229, %v9228
        %v9320 = vpack.c.b16 %v9231, %v9230
        %v9321 = vpack.c.b16 %v9233, %v9232
        %v9322 = vpack.c.b16 %v9235, %v9234
        %v9323 = vpack.c.b16 %v9237, %v9236
        %v9324 = vpack.c.b16 %v9239, %v9238
        %v9325 = vpack.c.b16 %v9241, %v9240
        %v9326 = vpack.c.b16 %v9243, %v9242
        %v9327 = vpack.c.b16 %v9245, %v9244
        %v9328 = vpack.c.b16 %v9247, %v9246
        %v9329 = vpack.c.b16 %v9249, %v9248
        %v9330 = vpack.c.b16 %v9251, %v9250
        %v9331 = vpack.c.b16 %v9253, %v9252
        %v9332 = vpack.c.b16 %v9255, %v9254
        %v9333 = vpack.c.b16 %v9257, %v9256
        %v9334 = vpack.c.b16 %v9259, %v9258
        %v9335 = vpack.c.b16 %v9261, %v9260
        %v9336 = vpack.c.b16 %v9263, %v9262
        %v9337 = vpack.c.b16 %v9265, %v9264
        %9410 = vmatprep.subr.bf16.mxu0 0
        %9411 = vmatpush1.bf16.msra.mxu0 %v9266
        %9412 = vmatprep.subr.bf16.mxu0 0
        %9413 = vmatpush1.bf16.msra.mxu0 %v9267
        %9414 = vmatprep.subr.bf16.mxu0 0
        %9415 = vmatpush1.bf16.msra.mxu0 %v9268
        %9416 = vmatprep.subr.bf16.mxu0 0
        %9417 = vmatpush1.bf16.msra.mxu0 %v9269
        %9418 = vmatprep.subr.bf16.mxu0 0
        %9419 = vmatpush1.bf16.msra.mxu0 %v9270
        %9420 = vmatprep.subr.bf16.mxu0 0
        %9421 = vmatpush1.bf16.msra.mxu0 %v9271
        %9422 = vmatprep.subr.bf16.mxu0 0
        %9423 = vmatpush1.bf16.msra.mxu0 %v9272
        %9424 = vmatprep.subr.bf16.mxu0 0
        %9425 = vmatpush1.bf16.msra.mxu0 %v9273
        %9426 = vmatprep.subr.bf16.mxu0 0
        %9427 = vmatpush1.bf16.msra.mxu0 %v9274
        %9428 = vmatprep.subr.bf16.mxu0 0
        %9429 = vmatpush1.bf16.msra.mxu0 %v9275
        %9430 = vmatprep.subr.bf16.mxu0 0
        %9431 = vmatpush1.bf16.msra.mxu0 %v9276
        %9432 = vmatprep.subr.bf16.mxu0 0
        %9433 = vmatpush1.bf16.msra.mxu0 %v9277
        %9434 = vmatprep.subr.bf16.mxu0 0
        %9435 = vmatpush1.bf16.msra.mxu0 %v9278
        %9436 = vmatprep.subr.bf16.mxu0 0
        %9437 = vmatpush1.bf16.msra.mxu0 %v9279
        %9438 = vmatprep.subr.bf16.mxu0 0
        %9439 = vmatpush1.bf16.msra.mxu0 %v9280
        %9440 = vmatprep.subr.bf16.mxu0 0
        %9441 = vmatpush1.bf16.msra.mxu0 %v9281
        %9442 = vmatprep.mubr.bf16.mxu0 %v8684
        %9443 = vmatmul.mubr.bf16.gmra.mrb[0].mxu0 %v8683
        %v9444 = vpop.f32.mrb[0].mxu0
        %v9445 = vadd.f32 %v8976, %v9444
        %v9446 = vpop.f32.mrb[0].mxu0
        %v9447 = vpop.f32.mrb[0].mxu0
        %v9448 = vadd.f32 %v8976, %v9447
        %v9449 = vpop.f32.mrb[0].mxu0
        %9450 = vmatprep.mubr.bf16.mxu0 %v8693
        %9451 = vmatmul.mubr.bf16.gmra.mrb[0].mxu0 %v8692
        %v9452 = vpop.f32.mrb[0].mxu0
        %v9453 = vadd.f32 %v8976, %v9452
        %v9454 = vpop.f32.mrb[0].mxu0
        %v9455 = vpop.f32.mrb[0].mxu0
        %v9456 = vadd.f32 %v8976, %v9455
        %v9457 = vpop.f32.mrb[0].mxu0
        %9458 = vmatprep.mubr.bf16.mxu0 %v8702
        %9459 = vmatmul.mubr.bf16.gmra.mrb[0].mxu0 %v8701
        %v9460 = vpop.f32.mrb[0].mxu0
        %v9461 = vadd.f32 %v8976, %v9460
        %v9462 = vpop.f32.mrb[0].mxu0
        %v9463 = vpop.f32.mrb[0].mxu0
        %v9464 = vadd.f32 %v8976, %v9463
        %v9465 = vpop.f32.mrb[0].mxu0
        %9466 = vmatprep.mubr.bf16.mxu0 %v8711
        %9467 = vmatmul.mubr.bf16.gmra.mrb[0].mxu0 %v8710
        %v9468 = vpop.f32.mrb[0].mxu0
        %v9469 = vadd.f32 %v8976, %v9468
        %v9470 = vpop.f32.mrb[0].mxu0
        %v9471 = vpop.f32.mrb[0].mxu0
        %v9472 = vadd.f32 %v8976, %v9471
        %v9473 = vpop.f32.mrb[0].mxu0
        %9474 = vmatprep.mubr.bf16.mxu0 %v8720
        %9475 = vmatmul.mubr.bf16.gmra.mrb[0].mxu0 %v8719
        %v9476 = vpop.f32.mrb[0].mxu0
        %v9477 = vadd.f32 %v8976, %v9476
        %v9478 = vpop.f32.mrb[0].mxu0
        %v9479 = vpop.f32.mrb[0].mxu0
        %v9480 = vadd.f32 %v8976, %v9479
        %v9481 = vpop.f32.mrb[0].mxu0
        %9482 = vmatprep.mubr.bf16.mxu0 %v8729
        %9483 = vmatmul.mubr.bf16.gmra.mrb[0].mxu0 %v8728
        %v9484 = vpop.f32.mrb[0].mxu0
        %v9485 = vadd.f32 %v8976, %v9484
        %v9486 = vpop.f32.mrb[0].mxu0
        %v9487 = vpop.f32.mrb[0].mxu0
        %v9488 = vadd.f32 %v8976, %v9487
        %v9489 = vpop.f32.mrb[0].mxu0
        %9490 = vmatprep.mubr.bf16.mxu0 %v8738
        %9491 = vmatmul.mubr.bf16.gmra.mrb[0].mxu0 %v8737
        %v9492 = vpop.f32.mrb[0].mxu0
        %v9493 = vadd.f32 %v8976, %v9492
        %v9494 = vpop.f32.mrb[0].mxu0
        %v9495 = vpop.f32.mrb[0].mxu0
        %v9496 = vadd.f32 %v8976, %v9495
        %v9497 = vpop.f32.mrb[0].mxu0
        %9498 = vmatprep.mubr.bf16.mxu0 %v8747
        %9499 = vmatmul.mubr.bf16.gmra.mrb[0].mxu0 %v8746
        %v9500 = vpop.f32.mrb[0].mxu0
        %v9501 = vadd.f32 %v8976, %v9500
        %v9502 = vpop.f32.mrb[0].mxu0
        %v9503 = vpop.f32.mrb[0].mxu0
        %v9504 = vadd.f32 %v8976, %v9503
        %v9505 = vpop.f32.mrb[0].mxu0
        %9506 = vmatprep.mubr.bf16.mxu0 %v8756
        %9507 = vmatmul.mubr.bf16.gmra.mrb[0].mxu0 %v8755
        %v9508 = vpop.f32.mrb[0].mxu0
        %v9509 = vadd.f32 %v8976, %v9508
        %v9510 = vpop.f32.mrb[0].mxu0
        %v9511 = vpop.f32.mrb[0].mxu0
        %v9512 = vadd.f32 %v8976, %v9511
        %v9513 = vpop.f32.mrb[0].mxu0
        %9514 = vmatprep.mubr.bf16.mxu0 %v8765
        %9515 = vmatmul.mubr.bf16.gmra.mrb[0].mxu0 %v8764
        %v9516 = vpop.f32.mrb[0].mxu0
        %v9517 = vadd.f32 %v8976, %v9516
        %v9518 = vpop.f32.mrb[0].mxu0
        %v9519 = vpop.f32.mrb[0].mxu0
        %v9520 = vadd.f32 %v8976, %v9519
        %v9521 = vpop.f32.mrb[0].mxu0
        %9522 = vmatprep.mubr.bf16.mxu0 %v8774
        %9523 = vmatmul.mubr.bf16.gmra.mrb[0].mxu0 %v8773
        %v9524 = vpop.f32.mrb[0].mxu0
        %v9525 = vadd.f32 %v8976, %v9524
        %v9526 = vpop.f32.mrb[0].mxu0
        %v9527 = vpop.f32.mrb[0].mxu0
        %v9528 = vadd.f32 %v8976, %v9527
        %v9529 = vpop.f32.mrb[0].mxu0
        %9530 = vmatprep.mubr.bf16.mxu0 %v8783
        %9531 = vmatmul.mubr.bf16.gmra.mrb[0].mxu0 %v8782
        %v9532 = vpop.f32.mrb[0].mxu0
        %v9533 = vadd.f32 %v8976, %v9532
        %v9534 = vpop.f32.mrb[0].mxu0
        %v9535 = vpop.f32.mrb[0].mxu0
        %v9536 = vadd.f32 %v8976, %v9535
        %v9537 = vpop.f32.mrb[0].mxu0
        %9538 = vmatprep.mubr.bf16.mxu0 %v8792
        %9539 = vmatmul.mubr.bf16.gmra.mrb[0].mxu0 %v8791
        %v9540 = vpop.f32.mrb[0].mxu0
        %v9541 = vadd.f32 %v8976, %v9540
        %v9542 = vpop.f32.mrb[0].mxu0
        %v9543 = vpop.f32.mrb[0].mxu0
        %v9544 = vadd.f32 %v8976, %v9543
        %v9545 = vpop.f32.mrb[0].mxu0
        %9546 = vmatprep.mubr.bf16.mxu0 %v8801
        %9547 = vmatmul.mubr.bf16.gmra.mrb[0].mxu0 %v8800
        %v9548 = vpop.f32.mrb[0].mxu0
        %v9549 = vadd.f32 %v8976, %v9548
        %v9550 = vpop.f32.mrb[0].mxu0
        %v9551 = vpop.f32.mrb[0].mxu0
        %v9552 = vadd.f32 %v8976, %v9551
        %v9553 = vpop.f32.mrb[0].mxu0
        %9554 = vmatprep.mubr.bf16.mxu0 %v8810
        %9555 = vmatmul.mubr.bf16.gmra.mrb[0].mxu0 %v8809
        %v9556 = vpop.f32.mrb[0].mxu0
        %v9557 = vadd.f32 %v8976, %v9556
        %v9558 = vpop.f32.mrb[0].mxu0
        %v9559 = vpop.f32.mrb[0].mxu0
        %v9560 = vadd.f32 %v8976, %v9559
        %v9561 = vpop.f32.mrb[0].mxu0
        %9562 = vmatprep.mubr.bf16.mxu0 %v8819
        %9563 = vmatmul.mubr.bf16.gmra.mrb[0].mxu0 %v8818
        %v9564 = vpop.f32.mrb[0].mxu0
        %v9565 = vadd.f32 %v8976, %v9564
        %v9566 = vpop.f32.mrb[0].mxu0
        %v9567 = vpop.f32.mrb[0].mxu0
        %v9568 = vadd.f32 %v8976, %v9567
        %v9569 = vpop.f32.mrb[0].mxu0
        %9570 = vdwg.mxu0
        %9571 = vmatprep.subr.bf16.mxu0 0
        %9572 = vmatpush1.bf16.msra.mxu0 %v9282
        %9573 = vmatprep.subr.bf16.mxu0 0
        %9574 = vmatpush1.bf16.msra.mxu0 %v9283
        %9575 = vmatprep.subr.bf16.mxu0 0
        %9576 = vmatpush1.bf16.msra.mxu0 %v9284
        %9577 = vmatprep.subr.bf16.mxu0 0
        %9578 = vmatpush1.bf16.msra.mxu0 %v9285
        %9579 = vmatprep.subr.bf16.mxu0 0
        %9580 = vmatpush1.bf16.msra.mxu0 %v9286
        %9581 = vmatprep.subr.bf16.mxu0 0
        %9582 = vmatpush1.bf16.msra.mxu0 %v9287
        %9583 = vmatprep.subr.bf16.mxu0 0
        %9584 = vmatpush1.bf16.msra.mxu0 %v9288
        %9585 = vmatprep.subr.bf16.mxu0 0
        %9586 = vmatpush1.bf16.msra.mxu0 %v9289
        %9587 = vmatprep.subr.bf16.mxu0 0
        %9588 = vmatpush1.bf16.msra.mxu0 %v9290
        %9589 = vmatprep.subr.bf16.mxu0 0
        %9590 = vmatpush1.bf16.msra.mxu0 %v9291
        %9591 = vmatprep.subr.bf16.mxu0 0
        %9592 = vmatpush1.bf16.msra.mxu0 %v9292
        %9593 = vmatprep.subr.bf16.mxu0 0
        %9594 = vmatpush1.bf16.msra.mxu0 %v9293
        %9595 = vmatprep.subr.bf16.mxu0 0
        %9596 = vmatpush1.bf16.msra.mxu0 %v9294
        %9597 = vmatprep.subr.bf16.mxu0 0
        %9598 = vmatpush1.bf16.msra.mxu0 %v9295
        %9599 = vmatprep.subr.bf16.mxu0 0
        %9600 = vmatpush1.bf16.msra.mxu0 %v9296
        %9601 = vmatprep.subr.bf16.mxu0 0
        %9602 = vmatpush1.bf16.msra.mxu0 %v9297
        %9603 = vmatprep.mubr.bf16.mxu0 %v8686
        %9604 = vmatmul.mubr.bf16.gmra.mrb[0].mxu0 %v8685
        %v9605 = vpop.f32.mrb[0].mxu0
        %v9606 = vadd.f32 %v9445, %v9605
        %v9607 = vpop.f32.mrb[0].mxu0
        %v9608 = vpop.f32.mrb[0].mxu0
        %v9609 = vadd.f32 %v9448, %v9608
        %v9610 = vpop.f32.mrb[0].mxu0
        %9611 = vmatprep.mubr.bf16.mxu0 %v8695
        %9612 = vmatmul.mubr.bf16.gmra.mrb[0].mxu0 %v8694
        %v9613 = vpop.f32.mrb[0].mxu0
        %v9614 = vadd.f32 %v9453, %v9613
        %v9615 = vpop.f32.mrb[0].mxu0
        %v9616 = vpop.f32.mrb[0].mxu0
        %v9617 = vadd.f32 %v9456, %v9616
        %v9618 = vpop.f32.mrb[0].mxu0
        %9619 = vmatprep.mubr.bf16.mxu0 %v8704
        %9620 = vmatmul.mubr.bf16.gmra.mrb[0].mxu0 %v8703
        %v9621 = vpop.f32.mrb[0].mxu0
        %v9622 = vadd.f32 %v9461, %v9621
        %v9623 = vpop.f32.mrb[0].mxu0
        %v9624 = vpop.f32.mrb[0].mxu0
        %v9625 = vadd.f32 %v9464, %v9624
        %v9626 = vpop.f32.mrb[0].mxu0
        %9627 = vmatprep.mubr.bf16.mxu0 %v8713
        %9628 = vmatmul.mubr.bf16.gmra.mrb[0].mxu0 %v8712
        %v9629 = vpop.f32.mrb[0].mxu0
        %v9630 = vadd.f32 %v9469, %v9629
        %v9631 = vpop.f32.mrb[0].mxu0
        %v9632 = vpop.f32.mrb[0].mxu0
        %v9633 = vadd.f32 %v9472, %v9632
        %v9634 = vpop.f32.mrb[0].mxu0
        %9635 = vmatprep.mubr.bf16.mxu0 %v8722
        %9636 = vmatmul.mubr.bf16.gmra.mrb[0].mxu0 %v8721
        %v9637 = vpop.f32.mrb[0].mxu0
        %v9638 = vadd.f32 %v9477, %v9637
        %v9639 = vpop.f32.mrb[0].mxu0
        %v9640 = vpop.f32.mrb[0].mxu0
        %v9641 = vadd.f32 %v9480, %v9640
        %v9642 = vpop.f32.mrb[0].mxu0
        %9643 = vmatprep.mubr.bf16.mxu0 %v8731
        %9644 = vmatmul.mubr.bf16.gmra.mrb[0].mxu0 %v8730
        %v9645 = vpop.f32.mrb[0].mxu0
        %v9646 = vadd.f32 %v9485, %v9645
        %v9647 = vpop.f32.mrb[0].mxu0
        %v9648 = vpop.f32.mrb[0].mxu0
        %v9649 = vadd.f32 %v9488, %v9648
        %v9650 = vpop.f32.mrb[0].mxu0
        %9651 = vmatprep.mubr.bf16.mxu0 %v8740
        %9652 = vmatmul.mubr.bf16.gmra.mrb[0].mxu0 %v8739
        %v9653 = vpop.f32.mrb[0].mxu0
        %v9654 = vadd.f32 %v9493, %v9653
        %v9655 = vpop.f32.mrb[0].mxu0
        %v9656 = vpop.f32.mrb[0].mxu0
        %v9657 = vadd.f32 %v9496, %v9656
        %v9658 = vpop.f32.mrb[0].mxu0
        %9659 = vmatprep.mubr.bf16.mxu0 %v8749
        %9660 = vmatmul.mubr.bf16.gmra.mrb[0].mxu0 %v8748
        %v9661 = vpop.f32.mrb[0].mxu0
        %v9662 = vadd.f32 %v9501, %v9661
        %v9663 = vpop.f32.mrb[0].mxu0
        %v9664 = vpop.f32.mrb[0].mxu0
        %v9665 = vadd.f32 %v9504, %v9664
        %v9666 = vpop.f32.mrb[0].mxu0
        %9667 = vmatprep.mubr.bf16.mxu0 %v8758
        %9668 = vmatmul.mubr.bf16.gmra.mrb[0].mxu0 %v8757
        %v9669 = vpop.f32.mrb[0].mxu0
        %v9670 = vadd.f32 %v9509, %v9669
        %v9671 = vpop.f32.mrb[0].mxu0
        %v9672 = vpop.f32.mrb[0].mxu0
        %v9673 = vadd.f32 %v9512, %v9672
        %v9674 = vpop.f32.mrb[0].mxu0
        %9675 = vmatprep.mubr.bf16.mxu0 %v8767
        %9676 = vmatmul.mubr.bf16.gmra.mrb[0].mxu0 %v8766
        %v9677 = vpop.f32.mrb[0].mxu0
        %v9678 = vadd.f32 %v9517, %v9677
        %v9679 = vpop.f32.mrb[0].mxu0
        %v9680 = vpop.f32.mrb[0].mxu0
        %v9681 = vadd.f32 %v9520, %v9680
        %v9682 = vpop.f32.mrb[0].mxu0
        %9683 = vmatprep.mubr.bf16.mxu0 %v8776
        %9684 = vmatmul.mubr.bf16.gmra.mrb[0].mxu0 %v8775
        %v9685 = vpop.f32.mrb[0].mxu0
        %v9686 = vadd.f32 %v9525, %v9685
        %v9687 = vpop.f32.mrb[0].mxu0
        %v9688 = vpop.f32.mrb[0].mxu0
        %v9689 = vadd.f32 %v9528, %v9688
        %v9690 = vpop.f32.mrb[0].mxu0
        %9691 = vmatprep.mubr.bf16.mxu0 %v8785
        %9692 = vmatmul.mubr.bf16.gmra.mrb[0].mxu0 %v8784
        %v9693 = vpop.f32.mrb[0].mxu0
        %v9694 = vadd.f32 %v9533, %v9693
        %v9695 = vpop.f32.mrb[0].mxu0
        %v9696 = vpop.f32.mrb[0].mxu0
        %v9697 = vadd.f32 %v9536, %v9696
        %v9698 = vpop.f32.mrb[0].mxu0
        %9699 = vmatprep.mubr.bf16.mxu0 %v8794
        %9700 = vmatmul.mubr.bf16.gmra.mrb[0].mxu0 %v8793
        %v9701 = vpop.f32.mrb[0].mxu0
        %v9702 = vadd.f32 %v9541, %v9701
        %v9703 = vpop.f32.mrb[0].mxu0
        %v9704 = vpop.f32.mrb[0].mxu0
        %v9705 = vadd.f32 %v9544, %v9704
        %v9706 = vpop.f32.mrb[0].mxu0
        %9707 = vmatprep.mubr.bf16.mxu0 %v8803
        %9708 = vmatmul.mubr.bf16.gmra.mrb[0].mxu0 %v8802
        %v9709 = vpop.f32.mrb[0].mxu0
        %v9710 = vadd.f32 %v9549, %v9709
        %v9711 = vpop.f32.mrb[0].mxu0
        %v9712 = vpop.f32.mrb[0].mxu0
        %v9713 = vadd.f32 %v9552, %v9712
        %v9714 = vpop.f32.mrb[0].mxu0
        %9715 = vmatprep.mubr.bf16.mxu0 %v8812
        %9716 = vmatmul.mubr.bf16.gmra.mrb[0].mxu0 %v8811
        %v9717 = vpop.f32.mrb[0].mxu0
        %v9718 = vadd.f32 %v9557, %v9717
        %v9719 = vpop.f32.mrb[0].mxu0
        %v9720 = vpop.f32.mrb[0].mxu0
        %v9721 = vadd.f32 %v9560, %v9720
        %v9722 = vpop.f32.mrb[0].mxu0
        %9723 = vmatprep.mubr.bf16.mxu0 %v8821
        %9724 = vmatmul.mubr.bf16.gmra.mrb[0].mxu0 %v8820
        %v9725 = vpop.f32.mrb[0].mxu0
        %v9726 = vadd.f32 %v9565, %v9725
        %v9727 = vpop.f32.mrb[0].mxu0
        %v9728 = vpop.f32.mrb[0].mxu0
        %v9729 = vadd.f32 %v9568, %v9728
        %v9730 = vpop.f32.mrb[0].mxu0
        %9731 = vdwg.mxu0
        %9732 = vmatprep.subr.bf16.mxu0 0
        %9733 = vmatpush1.bf16.msra.mxu0 %v9298
        %9734 = vmatprep.subr.bf16.mxu0 0
        %9735 = vmatpush1.bf16.msra.mxu0 %v9299
        %9736 = vmatprep.subr.bf16.mxu0 0
        %9737 = vmatpush1.bf16.msra.mxu0 %v9300
        %9738 = vmatprep.subr.bf16.mxu0 0
        %9739 = vmatpush1.bf16.msra.mxu0 %v9301
        %9740 = vmatprep.subr.bf16.mxu0 0
        %9741 = vmatpush1.bf16.msra.mxu0 %v9302
        %9742 = vmatprep.subr.bf16.mxu0 0
        %9743 = vmatpush1.bf16.msra.mxu0 %v9303
        %9744 = vmatprep.subr.bf16.mxu0 0
        %9745 = vmatpush1.bf16.msra.mxu0 %v9304
        %9746 = vmatprep.subr.bf16.mxu0 0
        %9747 = vmatpush1.bf16.msra.mxu0 %v9305
        %9748 = vmatprep.subr.bf16.mxu0 0
        %9749 = vmatpush1.bf16.msra.mxu0 %v9306
        %9750 = vmatprep.subr.bf16.mxu0 0
        %9751 = vmatpush1.bf16.msra.mxu0 %v9307
        %9752 = vmatprep.subr.bf16.mxu0 0
        %9753 = vmatpush1.bf16.msra.mxu0 %v9308
        %9754 = vmatprep.subr.bf16.mxu0 0
        %9755 = vmatpush1.bf16.msra.mxu0 %v9309
        %9756 = vmatprep.subr.bf16.mxu0 0
        %9757 = vmatpush1.bf16.msra.mxu0 %v9310
        %9758 = vmatprep.subr.bf16.mxu0 0
        %9759 = vmatpush1.bf16.msra.mxu0 %v9311
        %9760 = vmatprep.subr.bf16.mxu0 0
        %9761 = vmatpush1.bf16.msra.mxu0 %v9312
        %9762 = vmatprep.subr.bf16.mxu0 0
        %9763 = vmatpush1.bf16.msra.mxu0 %v9313
        %9764 = vmatprep.mubr.bf16.mxu0 %v8688
        %9765 = vmatmul.mubr.bf16.gmra.mrb[0].mxu0 %v8687
        %v9766 = vpop.f32.mrb[0].mxu0
        %v9767 = vadd.f32 %v9606, %v9766
        %v9768 = vpop.f32.mrb[0].mxu0
        %v9769 = vpop.f32.mrb[0].mxu0
        %v9770 = vadd.f32 %v9609, %v9769
        %v9771 = vpop.f32.mrb[0].mxu0
        %9772 = vmatprep.mubr.bf16.mxu0 %v8697
        %9773 = vmatmul.mubr.bf16.gmra.mrb[0].mxu0 %v8696
        %v9774 = vpop.f32.mrb[0].mxu0
        %v9775 = vadd.f32 %v9614, %v9774
        %v9776 = vpop.f32.mrb[0].mxu0
        %v9777 = vpop.f32.mrb[0].mxu0
        %v9778 = vadd.f32 %v9617, %v9777
        %v9779 = vpop.f32.mrb[0].mxu0
        %9780 = vmatprep.mubr.bf16.mxu0 %v8706
        %9781 = vmatmul.mubr.bf16.gmra.mrb[0].mxu0 %v8705
        %v9782 = vpop.f32.mrb[0].mxu0
        %v9783 = vadd.f32 %v9622, %v9782
        %v9784 = vpop.f32.mrb[0].mxu0
        %v9785 = vpop.f32.mrb[0].mxu0
        %v9786 = vadd.f32 %v9625, %v9785
        %v9787 = vpop.f32.mrb[0].mxu0
        %9788 = vmatprep.mubr.bf16.mxu0 %v8715
        %9789 = vmatmul.mubr.bf16.gmra.mrb[0].mxu0 %v8714
        %v9790 = vpop.f32.mrb[0].mxu0
        %v9791 = vadd.f32 %v9630, %v9790
        %v9792 = vpop.f32.mrb[0].mxu0
        %v9793 = vpop.f32.mrb[0].mxu0
        %v9794 = vadd.f32 %v9633, %v9793
        %v9795 = vpop.f32.mrb[0].mxu0
        %9796 = vmatprep.mubr.bf16.mxu0 %v8724
        %9797 = vmatmul.mubr.bf16.gmra.mrb[0].mxu0 %v8723
        %v9798 = vpop.f32.mrb[0].mxu0
        %v9799 = vadd.f32 %v9638, %v9798
        %v9800 = vpop.f32.mrb[0].mxu0
        %v9801 = vpop.f32.mrb[0].mxu0
        %v9802 = vadd.f32 %v9641, %v9801
        %v9803 = vpop.f32.mrb[0].mxu0
        %9804 = vmatprep.mubr.bf16.mxu0 %v8733
        %9805 = vmatmul.mubr.bf16.gmra.mrb[0].mxu0 %v8732
        %v9806 = vpop.f32.mrb[0].mxu0
        %v9807 = vadd.f32 %v9646, %v9806
        %v9808 = vpop.f32.mrb[0].mxu0
        %v9809 = vpop.f32.mrb[0].mxu0
        %v9810 = vadd.f32 %v9649, %v9809
        %v9811 = vpop.f32.mrb[0].mxu0
        %9812 = vmatprep.mubr.bf16.mxu0 %v8742
        %9813 = vmatmul.mubr.bf16.gmra.mrb[0].mxu0 %v8741
        %v9814 = vpop.f32.mrb[0].mxu0
        %v9815 = vadd.f32 %v9654, %v9814
        %v9816 = vpop.f32.mrb[0].mxu0
        %v9817 = vpop.f32.mrb[0].mxu0
        %v9818 = vadd.f32 %v9657, %v9817
        %v9819 = vpop.f32.mrb[0].mxu0
        %9820 = vmatprep.mubr.bf16.mxu0 %v8751
        %9821 = vmatmul.mubr.bf16.gmra.mrb[0].mxu0 %v8750
        %v9822 = vpop.f32.mrb[0].mxu0
        %v9823 = vadd.f32 %v9662, %v9822
        %v9824 = vpop.f32.mrb[0].mxu0
        %v9825 = vpop.f32.mrb[0].mxu0
        %v9826 = vadd.f32 %v9665, %v9825
        %v9827 = vpop.f32.mrb[0].mxu0
        %9828 = vmatprep.mubr.bf16.mxu0 %v8760
        %9829 = vmatmul.mubr.bf16.gmra.mrb[0].mxu0 %v8759
        %v9830 = vpop.f32.mrb[0].mxu0
        %v9831 = vadd.f32 %v9670, %v9830
        %v9832 = vpop.f32.mrb[0].mxu0
        %v9833 = vpop.f32.mrb[0].mxu0
        %v9834 = vadd.f32 %v9673, %v9833
        %v9835 = vpop.f32.mrb[0].mxu0
        %9836 = vmatprep.mubr.bf16.mxu0 %v8769
        %9837 = vmatmul.mubr.bf16.gmra.mrb[0].mxu0 %v8768
        %v9838 = vpop.f32.mrb[0].mxu0
        %v9839 = vadd.f32 %v9678, %v9838
        %v9840 = vpop.f32.mrb[0].mxu0
        %v9841 = vpop.f32.mrb[0].mxu0
        %v9842 = vadd.f32 %v9681, %v9841
        %v9843 = vpop.f32.mrb[0].mxu0
        %9844 = vmatprep.mubr.bf16.mxu0 %v8778
        %9845 = vmatmul.mubr.bf16.gmra.mrb[0].mxu0 %v8777
        %v9846 = vpop.f32.mrb[0].mxu0
        %v9847 = vadd.f32 %v9686, %v9846
        %v9848 = vpop.f32.mrb[0].mxu0
        %v9849 = vpop.f32.mrb[0].mxu0
        %v9850 = vadd.f32 %v9689, %v9849
        %v9851 = vpop.f32.mrb[0].mxu0
        %9852 = vmatprep.mubr.bf16.mxu0 %v8787
        %9853 = vmatmul.mubr.bf16.gmra.mrb[0].mxu0 %v8786
        %v9854 = vpop.f32.mrb[0].mxu0
        %v9855 = vadd.f32 %v9694, %v9854
        %v9856 = vpop.f32.mrb[0].mxu0
        %v9857 = vpop.f32.mrb[0].mxu0
        %v9858 = vadd.f32 %v9697, %v9857
        %v9859 = vpop.f32.mrb[0].mxu0
        %9860 = vmatprep.mubr.bf16.mxu0 %v8796
        %9861 = vmatmul.mubr.bf16.gmra.mrb[0].mxu0 %v8795
        %v9862 = vpop.f32.mrb[0].mxu0
        %v9863 = vadd.f32 %v9702, %v9862
        %v9864 = vpop.f32.mrb[0].mxu0
        %v9865 = vpop.f32.mrb[0].mxu0
        %v9866 = vadd.f32 %v9705, %v9865
        %v9867 = vpop.f32.mrb[0].mxu0
        %9868 = vmatprep.mubr.bf16.mxu0 %v8805
        %9869 = vmatmul.mubr.bf16.gmra.mrb[0].mxu0 %v8804
        %v9870 = vpop.f32.mrb[0].mxu0
        %v9871 = vadd.f32 %v9710, %v9870
        %v9872 = vpop.f32.mrb[0].mxu0
        %v9873 = vpop.f32.mrb[0].mxu0
        %v9874 = vadd.f32 %v9713, %v9873
        %v9875 = vpop.f32.mrb[0].mxu0
        %9876 = vmatprep.mubr.bf16.mxu0 %v8814
        %9877 = vmatmul.mubr.bf16.gmra.mrb[0].mxu0 %v8813
        %v9878 = vpop.f32.mrb[0].mxu0
        %v9879 = vadd.f32 %v9718, %v9878
        %v9880 = vpop.f32.mrb[0].mxu0
        %v9881 = vpop.f32.mrb[0].mxu0
        %v9882 = vadd.f32 %v9721, %v9881
        %v9883 = vpop.f32.mrb[0].mxu0
        %9884 = vmatprep.mubr.bf16.mxu0 %v8823
        %9885 = vmatmul.mubr.bf16.gmra.mrb[0].mxu0 %v8822
        %v9886 = vpop.f32.mrb[0].mxu0
        %v9887 = vadd.f32 %v9726, %v9886
        %v9888 = vpop.f32.mrb[0].mxu0
        %v9889 = vpop.f32.mrb[0].mxu0
        %v9890 = vadd.f32 %v9729, %v9889
        %v9891 = vpop.f32.mrb[0].mxu0
        %9892 = vdwg.mxu0
        %9893 = vmatprep.subr.bf16.mxu0 0
        %9894 = vmatpush1.bf16.msra.mxu0 %v9314
        %9895 = vmatprep.subr.bf16.mxu0 0
        %9896 = vmatpush1.bf16.msra.mxu0 %v9315
        %9897 = vmatprep.subr.bf16.mxu0 0
        %9898 = vmatpush1.bf16.msra.mxu0 %v9316
        %9899 = vmatprep.subr.bf16.mxu0 0
        %9900 = vmatpush1.bf16.msra.mxu0 %v9317
        %9901 = vmatprep.subr.bf16.mxu0 0
        %9902 = vmatpush1.bf16.msra.mxu0 %v9318
        %9903 = vmatprep.subr.bf16.mxu0 0
        %9904 = vmatpush1.bf16.msra.mxu0 %v9319
        %9905 = vmatprep.subr.bf16.mxu0 0
        %9906 = vmatpush1.bf16.msra.mxu0 %v9320
        %9907 = vmatprep.subr.bf16.mxu0 0
        %9908 = vmatpush1.bf16.msra.mxu0 %v9321
        %9909 = vmatprep.subr.bf16.mxu0 0
        %9910 = vmatpush1.bf16.msra.mxu0 %v9322
        %9911 = vmatprep.subr.bf16.mxu0 0
        %9912 = vmatpush1.bf16.msra.mxu0 %v9323
        %9913 = vmatprep.subr.bf16.mxu0 0
        %9914 = vmatpush1.bf16.msra.mxu0 %v9324
        %9915 = vmatprep.subr.bf16.mxu0 0
        %9916 = vmatpush1.bf16.msra.mxu0 %v9325
        %9917 = vmatprep.subr.bf16.mxu0 0
        %9918 = vmatpush1.bf16.msra.mxu0 %v9326
        %9919 = vmatprep.subr.bf16.mxu0 0
        %9920 = vmatpush1.bf16.msra.mxu0 %v9327
        %9921 = vmatprep.subr.bf16.mxu0 0
        %9922 = vmatpush1.bf16.msra.mxu0 %v9328
        %9923 = vmatprep.subr.bf16.mxu0 0
        %9924 = vmatpush1.bf16.msra.mxu0 %v9329
        %9925 = vmatprep.mubr.bf16.mxu0 %v8690
        %9926 = vmatmul.mubr.bf16.gmra.mrb[0].mxu0 %v8689
        %v9927 = vpop.f32.mrb[0].mxu0
        %v9928 = vadd.f32 %v9767, %v9927
        %v9929 = vpop.f32.mrb[0].mxu0
        %v9930 = vpop.f32.mrb[0].mxu0
        %v9931 = vadd.f32 %v9770, %v9930
        %v9932 = vpop.f32.mrb[0].mxu0
        %9933 = vmatprep.mubr.bf16.mxu0 %v8699
        %9934 = vmatmul.mubr.bf16.gmra.mrb[0].mxu0 %v8698
        %v9935 = vpop.f32.mrb[0].mxu0
        %v9936 = vadd.f32 %v9775, %v9935
        %v9937 = vpop.f32.mrb[0].mxu0
        %v9938 = vpop.f32.mrb[0].mxu0
        %v9939 = vadd.f32 %v9778, %v9938
        %v9940 = vpop.f32.mrb[0].mxu0
        %9941 = vmatprep.mubr.bf16.mxu0 %v8708
        %9942 = vmatmul.mubr.bf16.gmra.mrb[0].mxu0 %v8707
        %v9943 = vpop.f32.mrb[0].mxu0
        %v9944 = vadd.f32 %v9783, %v9943
        %v9945 = vpop.f32.mrb[0].mxu0
        %v9946 = vpop.f32.mrb[0].mxu0
        %v9947 = vadd.f32 %v9786, %v9946
        %v9948 = vpop.f32.mrb[0].mxu0
        %9949 = vmatprep.mubr.bf16.mxu0 %v8717
        %9950 = vmatmul.mubr.bf16.gmra.mrb[0].mxu0 %v8716
        %v9951 = vpop.f32.mrb[0].mxu0
        %v9952 = vadd.f32 %v9791, %v9951
        %v9953 = vpop.f32.mrb[0].mxu0
        %v9954 = vpop.f32.mrb[0].mxu0
        %v9955 = vadd.f32 %v9794, %v9954
        %v9956 = vpop.f32.mrb[0].mxu0
        %9957 = vmatprep.mubr.bf16.mxu0 %v8726
        %9958 = vmatmul.mubr.bf16.gmra.mrb[0].mxu0 %v8725
        %v9959 = vpop.f32.mrb[0].mxu0
        %v9960 = vadd.f32 %v9799, %v9959
        %v9961 = vpop.f32.mrb[0].mxu0
        %v9962 = vpop.f32.mrb[0].mxu0
        %v9963 = vadd.f32 %v9802, %v9962
        %v9964 = vpop.f32.mrb[0].mxu0
        %9965 = vmatprep.mubr.bf16.mxu0 %v8735
        %9966 = vmatmul.mubr.bf16.gmra.mrb[0].mxu0 %v8734
        %v9967 = vpop.f32.mrb[0].mxu0
        %v9968 = vadd.f32 %v9807, %v9967
        %v9969 = vpop.f32.mrb[0].mxu0
        %v9970 = vpop.f32.mrb[0].mxu0
        %v9971 = vadd.f32 %v9810, %v9970
        %v9972 = vpop.f32.mrb[0].mxu0
        %9973 = vmatprep.mubr.bf16.mxu0 %v8744
        %9974 = vmatmul.mubr.bf16.gmra.mrb[0].mxu0 %v8743
        %v9975 = vpop.f32.mrb[0].mxu0
        %v9976 = vadd.f32 %v9815, %v9975
        %v9977 = vpop.f32.mrb[0].mxu0
        %v9978 = vpop.f32.mrb[0].mxu0
        %v9979 = vadd.f32 %v9818, %v9978
        %v9980 = vpop.f32.mrb[0].mxu0
        %9981 = vmatprep.mubr.bf16.mxu0 %v8753
        %9982 = vmatmul.mubr.bf16.gmra.mrb[0].mxu0 %v8752
        %v9983 = vpop.f32.mrb[0].mxu0
        %v9984 = vadd.f32 %v9823, %v9983
        %v9985 = vpop.f32.mrb[0].mxu0
        %v9986 = vpop.f32.mrb[0].mxu0
        %v9987 = vadd.f32 %v9826, %v9986
        %v9988 = vpop.f32.mrb[0].mxu0
        %9989 = vmatprep.mubr.bf16.mxu0 %v8762
        %9990 = vmatmul.mubr.bf16.gmra.mrb[0].mxu0 %v8761
        %v9991 = vpop.f32.mrb[0].mxu0
        %v9992 = vadd.f32 %v9831, %v9991
        %v9993 = vpop.f32.mrb[0].mxu0
        %v9994 = vpop.f32.mrb[0].mxu0
        %v9995 = vadd.f32 %v9834, %v9994
        %v9996 = vpop.f32.mrb[0].mxu0
        %9997 = vmatprep.mubr.bf16.mxu0 %v8771
        %9998 = vmatmul.mubr.bf16.gmra.mrb[0].mxu0 %v8770
        %v9999 = vpop.f32.mrb[0].mxu0
        %v10000 = vadd.f32 %v9839, %v9999
        %v10001 = vpop.f32.mrb[0].mxu0
        %v10002 = vpop.f32.mrb[0].mxu0
        %v10003 = vadd.f32 %v9842, %v10002
        %v10004 = vpop.f32.mrb[0].mxu0
        %10005 = vmatprep.mubr.bf16.mxu0 %v8780
        %10006 = vmatmul.mubr.bf16.gmra.mrb[0].mxu0 %v8779
        %v10007 = vpop.f32.mrb[0].mxu0
        %v10008 = vadd.f32 %v9847, %v10007
        %v10009 = vpop.f32.mrb[0].mxu0
        %v10010 = vpop.f32.mrb[0].mxu0
        %v10011 = vadd.f32 %v9850, %v10010
        %v10012 = vpop.f32.mrb[0].mxu0
        %10013 = vmatprep.mubr.bf16.mxu0 %v8789
        %10014 = vmatmul.mubr.bf16.gmra.mrb[0].mxu0 %v8788
        %v10015 = vpop.f32.mrb[0].mxu0
        %v10016 = vadd.f32 %v9855, %v10015
        %v10017 = vpop.f32.mrb[0].mxu0
        %v10018 = vpop.f32.mrb[0].mxu0
        %v10019 = vadd.f32 %v9858, %v10018
        %v10020 = vpop.f32.mrb[0].mxu0
        %10021 = vmatprep.mubr.bf16.mxu0 %v8798
        %10022 = vmatmul.mubr.bf16.gmra.mrb[0].mxu0 %v8797
        %v10023 = vpop.f32.mrb[0].mxu0
        %v10024 = vadd.f32 %v9863, %v10023
        %v10025 = vpop.f32.mrb[0].mxu0
        %v10026 = vpop.f32.mrb[0].mxu0
        %v10027 = vadd.f32 %v9866, %v10026
        %v10028 = vpop.f32.mrb[0].mxu0
        %10029 = vmatprep.mubr.bf16.mxu0 %v8807
        %10030 = vmatmul.mubr.bf16.gmra.mrb[0].mxu0 %v8806
        %v10031 = vpop.f32.mrb[0].mxu0
        %v10032 = vadd.f32 %v9871, %v10031
        %v10033 = vpop.f32.mrb[0].mxu0
        %v10034 = vpop.f32.mrb[0].mxu0
        %v10035 = vadd.f32 %v9874, %v10034
        %v10036 = vpop.f32.mrb[0].mxu0
        %10037 = vmatprep.mubr.bf16.mxu0 %v8816
        %10038 = vmatmul.mubr.bf16.gmra.mrb[0].mxu0 %v8815
        %v10039 = vpop.f32.mrb[0].mxu0
        %v10040 = vadd.f32 %v9879, %v10039
        %v10041 = vpop.f32.mrb[0].mxu0
        %v10042 = vpop.f32.mrb[0].mxu0
        %v10043 = vadd.f32 %v9882, %v10042
        %v10044 = vpop.f32.mrb[0].mxu0
        %10045 = vmatprep.mubr.bf16.mxu0 %v8825
        %10046 = vmatmul.mubr.bf16.gmra.mrb[0].mxu0 %v8824
        %v10047 = vpop.f32.mrb[0].mxu0
        %v10048 = vadd.f32 %v9887, %v10047
        %v10049 = vpop.f32.mrb[0].mxu0
        %v10050 = vpop.f32.mrb[0].mxu0
        %v10051 = vadd.f32 %v9890, %v10050
        %v10052 = vpop.f32.mrb[0].mxu0
        %10053 = vdwg.mxu0
        %10054 = vmatprep.subr.bf16.mxu0 0
        %10055 = vmatpush1.bf16.msra.mxu0 %v9330
        %10056 = vmatprep.subr.bf16.mxu0 0
        %10057 = vmatpush1.bf16.msra.mxu0 %v9331
        %10058 = vmatprep.subr.bf16.mxu0 0
        %10059 = vmatpush1.bf16.msra.mxu0 %v9332
        %10060 = vmatprep.subr.bf16.mxu0 0
        %10061 = vmatpush1.bf16.msra.mxu0 %v9333
        %10062 = vmatprep.subr.bf16.mxu0 0
        %10063 = vmatpush1.bf16.msra.mxu0 %v9334
        %10064 = vmatprep.subr.bf16.mxu0 0
        %10065 = vmatpush1.bf16.msra.mxu0 %v9335
        %10066 = vmatprep.subr.bf16.mxu0 0
        %10067 = vmatpush1.bf16.msra.mxu0 %v9336
        %10068 = vmatprep.subr.bf16.mxu0 0
        %10069 = vmatpush1.bf16.msra.mxu0 %v9337
        %10070 = vmatprep.subr.bf16.mxu0 0
        %10071 = vmatpush1.bf16.msra.mxu0 0
        %10072 = vmatprep.subr.bf16.mxu0 0
        %10073 = vmatpush1.bf16.msra.mxu0 0
        %10074 = vmatprep.subr.bf16.mxu0 0
        %10075 = vmatpush1.bf16.msra.mxu0 0
        %10076 = vmatprep.subr.bf16.mxu0 0
        %10077 = vmatpush1.bf16.msra.mxu0 0
        %10078 = vmatprep.subr.bf16.mxu0 0
        %10079 = vmatpush1.bf16.msra.mxu0 0
        %10080 = vmatprep.subr.bf16.mxu0 0
        %10081 = vmatpush1.bf16.msra.mxu0 0
        %10082 = vmatprep.subr.bf16.mxu0 0
        %10083 = vmatpush1.bf16.msra.mxu0 0
        %10084 = vmatprep.subr.bf16.mxu0 0
        %10085 = vmatpush1.bf16.msra.mxu0 0
        %10086 = vmatprep.mubr.bf16.mxu0 0
        %10087 = vmatmul.mubr.bf16.gmra.mrb[0].mxu0 %v8691
        %v10088 = vpop.f32.mrb[0].mxu0
        %v10089 = vadd.f32 %v9928, %v10088
        %v10090 = vpop.f32.mrb[0].mxu0
        %v10091 = vpop.f32.mrb[0].mxu0
        %v10092 = vadd.f32 %v9931, %v10091
        %v10093 = vpop.f32.mrb[0].mxu0
        %10094 = vmatprep.mubr.bf16.mxu0 0
        %10095 = vmatmul.mubr.bf16.gmra.mrb[0].mxu0 %v8700
        %v10096 = vpop.f32.mrb[0].mxu0
        %v10097 = vadd.f32 %v9936, %v10096
        %v10098 = vpop.f32.mrb[0].mxu0
        %v10099 = vpop.f32.mrb[0].mxu0
        %v10100 = vadd.f32 %v9939, %v10099
        %v10101 = vpop.f32.mrb[0].mxu0
        %10102 = vmatprep.mubr.bf16.mxu0 0
        %10103 = vmatmul.mubr.bf16.gmra.mrb[0].mxu0 %v8709
        %v10104 = vpop.f32.mrb[0].mxu0
        %v10105 = vadd.f32 %v9944, %v10104
        %v10106 = vpop.f32.mrb[0].mxu0
        %v10107 = vpop.f32.mrb[0].mxu0
        %v10108 = vadd.f32 %v9947, %v10107
        %v10109 = vpop.f32.mrb[0].mxu0
        %10110 = vmatprep.mubr.bf16.mxu0 0
        %10111 = vmatmul.mubr.bf16.gmra.mrb[0].mxu0 %v8718
        %v10112 = vpop.f32.mrb[0].mxu0
        %v10113 = vadd.f32 %v9952, %v10112
        %v10114 = vpop.f32.mrb[0].mxu0
        %v10115 = vpop.f32.mrb[0].mxu0
        %v10116 = vadd.f32 %v9955, %v10115
        %v10117 = vpop.f32.mrb[0].mxu0
        %10118 = vmatprep.mubr.bf16.mxu0 0
        %10119 = vmatmul.mubr.bf16.gmra.mrb[0].mxu0 %v8727
        %v10120 = vpop.f32.mrb[0].mxu0
        %v10121 = vadd.f32 %v9960, %v10120
        %v10122 = vpop.f32.mrb[0].mxu0
        %v10123 = vpop.f32.mrb[0].mxu0
        %v10124 = vadd.f32 %v9963, %v10123
        %v10125 = vpop.f32.mrb[0].mxu0
        %10126 = vmatprep.mubr.bf16.mxu0 0
        %10127 = vmatmul.mubr.bf16.gmra.mrb[0].mxu0 %v8736
        %v10128 = vpop.f32.mrb[0].mxu0
        %v10129 = vadd.f32 %v9968, %v10128
        %v10130 = vpop.f32.mrb[0].mxu0
        %v10131 = vpop.f32.mrb[0].mxu0
        %v10132 = vadd.f32 %v9971, %v10131
        %v10133 = vpop.f32.mrb[0].mxu0
        %10134 = vmatprep.mubr.bf16.mxu0 0
        %10135 = vmatmul.mubr.bf16.gmra.mrb[0].mxu0 %v8745
        %v10136 = vpop.f32.mrb[0].mxu0
        %v10137 = vadd.f32 %v9976, %v10136
        %v10138 = vpop.f32.mrb[0].mxu0
        %v10139 = vpop.f32.mrb[0].mxu0
        %v10140 = vadd.f32 %v9979, %v10139
        %v10141 = vpop.f32.mrb[0].mxu0
        %10142 = vmatprep.mubr.bf16.mxu0 0
        %10143 = vmatmul.mubr.bf16.gmra.mrb[0].mxu0 %v8754
        %v10144 = vpop.f32.mrb[0].mxu0
        %v10145 = vadd.f32 %v9984, %v10144
        %v10146 = vpop.f32.mrb[0].mxu0
        %v10147 = vpop.f32.mrb[0].mxu0
        %v10148 = vadd.f32 %v9987, %v10147
        %v10149 = vpop.f32.mrb[0].mxu0
        %10150 = vmatprep.mubr.bf16.mxu0 0
        %10151 = vmatmul.mubr.bf16.gmra.mrb[0].mxu0 %v8763
        %v10152 = vpop.f32.mrb[0].mxu0
        %v10153 = vadd.f32 %v9992, %v10152
        %v10154 = vpop.f32.mrb[0].mxu0
        %v10155 = vpop.f32.mrb[0].mxu0
        %v10156 = vadd.f32 %v9995, %v10155
        %v10157 = vpop.f32.mrb[0].mxu0
        %10158 = vmatprep.mubr.bf16.mxu0 0
        %10159 = vmatmul.mubr.bf16.gmra.mrb[0].mxu0 %v8772
        %v10160 = vpop.f32.mrb[0].mxu0
        %v10161 = vadd.f32 %v10000, %v10160
        %v10162 = vpop.f32.mrb[0].mxu0
        %v10163 = vpop.f32.mrb[0].mxu0
        %v10164 = vadd.f32 %v10003, %v10163
        %v10165 = vpop.f32.mrb[0].mxu0
        %10166 = vmatprep.mubr.bf16.mxu0 0
        %10167 = vmatmul.mubr.bf16.gmra.mrb[0].mxu0 %v8781
        %v10168 = vpop.f32.mrb[0].mxu0
        %v10169 = vadd.f32 %v10008, %v10168
        %v10170 = vpop.f32.mrb[0].mxu0
        %v10171 = vpop.f32.mrb[0].mxu0
        %v10172 = vadd.f32 %v10011, %v10171
        %v10173 = vpop.f32.mrb[0].mxu0
        %10174 = vmatprep.mubr.bf16.mxu0 0
        %10175 = vmatmul.mubr.bf16.gmra.mrb[0].mxu0 %v8790
        %v10176 = vpop.f32.mrb[0].mxu0
        %v10177 = vadd.f32 %v10016, %v10176
        %v10178 = vpop.f32.mrb[0].mxu0
        %v10179 = vpop.f32.mrb[0].mxu0
        %v10180 = vadd.f32 %v10019, %v10179
        %v10181 = vpop.f32.mrb[0].mxu0
        %10182 = vmatprep.mubr.bf16.mxu0 0
        %10183 = vmatmul.mubr.bf16.gmra.mrb[0].mxu0 %v8799
        %v10184 = vpop.f32.mrb[0].mxu0
        %v10185 = vadd.f32 %v10024, %v10184
        %v10186 = vpop.f32.mrb[0].mxu0
        %v10187 = vpop.f32.mrb[0].mxu0
        %v10188 = vadd.f32 %v10027, %v10187
        %v10189 = vpop.f32.mrb[0].mxu0
        %10190 = vmatprep.mubr.bf16.mxu0 0
        %10191 = vmatmul.mubr.bf16.gmra.mrb[0].mxu0 %v8808
        %v10192 = vpop.f32.mrb[0].mxu0
        %v10193 = vadd.f32 %v10032, %v10192
        %v10194 = vpop.f32.mrb[0].mxu0
        %v10195 = vpop.f32.mrb[0].mxu0
        %v10196 = vadd.f32 %v10035, %v10195
        %v10197 = vpop.f32.mrb[0].mxu0
        %10198 = vmatprep.mubr.bf16.mxu0 0
        %10199 = vmatmul.mubr.bf16.gmra.mrb[0].mxu0 %v8817
        %v10200 = vpop.f32.mrb[0].mxu0
        %v10201 = vadd.f32 %v10040, %v10200
        %v10202 = vpop.f32.mrb[0].mxu0
        %v10203 = vpop.f32.mrb[0].mxu0
        %v10204 = vadd.f32 %v10043, %v10203
        %v10205 = vpop.f32.mrb[0].mxu0
        %10206 = vmatprep.mubr.bf16.mxu0 0
        %10207 = vmatmul.mubr.bf16.gmra.mrb[0].mxu0 %v8826
        %v10208 = vpop.f32.mrb[0].mxu0
        %v10209 = vadd.f32 %v10048, %v10208
        %v10210 = vpop.f32.mrb[0].mxu0
        %v10211 = vpop.f32.mrb[0].mxu0
        %v10212 = vadd.f32 %v10051, %v10211
        %v10213 = vpop.f32.mrb[0].mxu0
        %10214 = vdwg.mxu0
        %v10215 = vmax.f32 %v10089, 0.0
        %v10216 = vmax.f32 %v10092, 0.0
        %v10217 = vmax.f32 %v10097, 0.0
        %v10218 = vmax.f32 %v10100, 0.0
        %v10219 = vmax.f32 %v10105, 0.0
        %v10220 = vmax.f32 %v10108, 0.0
        %v10221 = vmax.f32 %v10113, 0.0
        %v10222 = vmax.f32 %v10116, 0.0
        %v10223 = vmax.f32 %v10121, 0.0
        %v10224 = vmax.f32 %v10124, 0.0
        %v10225 = vmax.f32 %v10129, 0.0
        %v10226 = vmax.f32 %v10132, 0.0
        %v10227 = vmax.f32 %v10137, 0.0
        %v10228 = vmax.f32 %v10140, 0.0
        %v10229 = vmax.f32 %v10145, 0.0
        %v10230 = vmax.f32 %v10148, 0.0
        %v10231 = vmax.f32 %v10153, 0.0
        %v10232 = vmax.f32 %v10156, 0.0
        %v10233 = vmax.f32 %v10161, 0.0
        %v10234 = vmax.f32 %v10164, 0.0
        %v10235 = vmax.f32 %v10169, 0.0
        %v10236 = vmax.f32 %v10172, 0.0
        %v10237 = vmax.f32 %v10177, 0.0
        %v10238 = vmax.f32 %v10180, 0.0
        %v10239 = vmax.f32 %v10185, 0.0
        %v10240 = vmax.f32 %v10188, 0.0
        %v10241 = vmax.f32 %v10193, 0.0
        %v10242 = vmax.f32 %v10196, 0.0
        %v10243 = vmax.f32 %v10201, 0.0
        %v10244 = vmax.f32 %v10204, 0.0
        %v10245 = vmax.f32 %v10209, 0.0
        %v10246 = vmax.f32 %v10212, 0.0
        %10247 = vst [vmem:[%s271] sm:$0xff] %v10215
        %10248 = vst [vmem:[%s271 + $0x8] sm:$0xff] %v10216
        %10249 = vst [vmem:[%s271 + $0x10] sm:$0xff] %v10217
        %10250 = vst [vmem:[%s271 + $0x18] sm:$0xff] %v10218
        %10251 = vst [vmem:[%s271 + $0x20] sm:$0xff] %v10219
        %10252 = vst [vmem:[%s271 + $0x28] sm:$0xff] %v10220
        %10253 = vst [vmem:[%s271 + $0x30] sm:$0xff] %v10221
        %10254 = vst [vmem:[%s271 + $0x38] sm:$0xff] %v10222
        %10255 = vst [vmem:[%s271 + $0x40] sm:$0xff] %v10223
        %10256 = vst [vmem:[%s271 + $0x48] sm:$0xff] %v10224
        %10257 = vst [vmem:[%s271 + $0x50] sm:$0xff] %v10225
        %10258 = vst [vmem:[%s271 + $0x58] sm:$0xff] %v10226
        %10259 = vst [vmem:[%s271 + $0x60] sm:$0xff] %v10227
        %10260 = vst [vmem:[%s271 + $0x68] sm:$0xff] %v10228
        %10261 = vst [vmem:[%s271 + $0x70] sm:$0xff] %v10229
        %10262 = vst [vmem:[%s271 + $0x78] sm:$0xff] %v10230
        %10263 = vst [vmem:[%s271 + $0x80] sm:$0xff] %v10231
        %10264 = vst [vmem:[%s271 + $0x88] sm:$0xff] %v10232
        %10265 = vst [vmem:[%s271 + $0x90] sm:$0xff] %v10233
        %10266 = vst [vmem:[%s271 + $0x98] sm:$0xff] %v10234
        %10267 = vst [vmem:[%s271 + $0xa0] sm:$0xff] %v10235
        %10268 = vst [vmem:[%s271 + $0xa8] sm:$0xff] %v10236
        %10269 = vst [vmem:[%s271 + $0xb0] sm:$0xff] %v10237
        %10270 = vst [vmem:[%s271 + $0xb8] sm:$0xff] %v10238
        %10271 = vst [vmem:[%s271 + $0xc0] sm:$0xff] %v10239
        %10272 = vst [vmem:[%s271 + $0xc8] sm:$0xff] %v10240
        %10273 = vst [vmem:[%s271 + $0xd0] sm:$0xff] %v10241
        %10274 = vst [vmem:[%s271 + $0xd8] sm:$0xff] %v10242
        %10275 = vst [vmem:[%s271 + $0xe0] sm:$0xff] %v10243
        %10276 = vst [vmem:[%s271 + $0xe8] sm:$0xff] %v10244
        %10277 = vst [vmem:[%s271 + $0xf0] sm:$0xff] %v10245
        %10278 = vst [vmem:[%s271 + $0xf8] sm:$0xff] %v10246
        %s10279 = sand.u32 %s141, 1
        %s10280 = scalar_lea.sflag [#allocation7], %s10279
        %s10281 = sand.u32 %s141, 1
        %s10282 = smul.addr %s10281, 256
        %s10283 = scalar_lea.vmem [#allocation11], %s10282
        // Predicated region
        $region53: #{conv3_forward.1} parent=39 // pred_check
          %p10284 = pneg %p151
        $region54: #{conv3_forward.1} parent=39 // pred_check_branch
          %10286 = sbr.rel (%p10284) target = $region56
        $region55: #{conv3_forward.1} parent=39 // pred_region
          %s10288 = ssub.s32 4096, 4096
          %10289 = vsyncadd %s10280, %s10288
          %s10290 = smul.addr %s23, 32
          %s10291 = smul.addr %s10290, 128
          %s10292 = scalar_lea.hbm %s5, %s10291
          %s10293 = sshll.u32 %s10283, 4
          %s10294 = int_to_ptr.vmem [resolvable:$true] %s10293
          %10299 = dma.vmem_to_hbm [thread:$0]  %s10294, 4096, %s10292, %s10280, 128, 128, 8
        $region56: #{conv3_forward.1} parent=39 // pred_fallthru
          _
      $region40: #{conv3_forward.1} parent=5 // pred_fallthru
        _
      %p10300 = scmp.le.s32.totalorder 2, %s18
      // Predicated region
      $region57: #{conv3_forward.1} parent=5 // pred_check
        %p10301 = pneg %p10300
      $region58: #{conv3_forward.1} parent=5 // pred_check_branch
        %10303 = sbr.rel (%p10301) target = $region60
      $region59: #{conv3_forward.1} parent=5 // pred_region
        %s10304 = ssub.s32 %s18, 2
        // Predicated region
        $region61: #{conv3_forward.1} parent=59 // pred_check
          %p10305 = pneg %p157
        $region62: #{conv3_forward.1} parent=59 // pred_check_branch
          %10307 = sbr.rel (%p10305) target = $region64
        $region63: #{conv3_forward.1} parent=59 // pred_region
          %s10308 = sand.u32 %s142, 1
          %s10309 = scalar_lea.sflag [#allocation7], %s10308
          %s10310 = sand.u32 %s142, 1
          %s10311 = smul.addr %s10310, 256
          %s10312 = scalar_lea.vmem [#allocation11], %s10311
          %10313 = dma.done %s10309, 4096
        $region64: #{conv3_forward.1} parent=59 // pred_fallthru
          _
      $region60: #{conv3_forward.1} parent=5 // pred_fallthru
        _
    $region6: #{conv3_forward.1} parent=1 // loop_footer
      %s22 = sadd.s32 1, %s18
    $region7: #{conv3_forward.1} parent=1 // loop_footer_branch
      %17 = sbr.rel target = $region3
    $region8: #{conv3_forward.1} parent=1 // loop_exit
      _
    %10314 = vsyncpa [#allocation6], 1
    %s10315 = scalar_lea.sflag [#allocation6], 1
    %10316 = vsyncpa %s10315, 1
    %10317 = vsyncpa [#allocation9], 1
    %10318 = vsyncpa [#allocation7], 1
    %s10319 = scalar_lea.sflag [#allocation7], 1
    %10320 = vsyncpa %s10319, 1

</llo_original>
